<compile_context>
chip_gen: v5e
topology: v5e:2x2
jax: 0.10.0
libtpu: 0.0.40
codegen_flags: <defaults>
</compile_context>

<pallas_src>
import functools

import numpy as np
import jax
import jax.numpy as jnp
from jax import lax
from jax.experimental import pallas as pl
from jax.experimental.pallas import tpu as pltpu


def _gelu_exact(x):
    # PyTorch nn.GELU() default = exact (erf-based) GELU.
    return 0.5 * x * (1.0 + lax.erf(x * (1.0 / np.sqrt(2.0))))


def _cross_conv_kernel(xp_ref, w1_ref, s1_ref, b1_ref, w2_ref, s2_ref, b2_ref,
                       o_ref, y1pad_ref, *, add, compute_dtype):
    """One batch tile (Bt images) per grid step.

    xp_ref : (Bt, H+2, W+2, C1)  zero-padded input tile (NHWC, f32)
    w1_ref : (9*C1, Cm)          cv1 conv weight, im2col layout (kh,kw,ci major->minor)
    s1/b1  : (1, Cm)             cv1 folded BatchNorm scale / bias (f32)
    w2_ref : (9*Cm, C2)          cv2 conv weight, im2col layout
    s2/b2  : (1, C2)             cv2 folded BatchNorm scale / bias (f32)
    o_ref  : (Bt, H, W, C2)      output tile (f32)
    y1pad_ref : VMEM scratch (Bt, H+2, W+2, Cm), f32, padded intermediate
    """
    Bt, Hp, Wp, C1 = xp_ref.shape
    H, W = Hp - 2, Wp - 2
    Cm = w1_ref.shape[1]
    C2 = w2_ref.shape[1]
    rows = Bt * H * W

    # Zero only the 4 thin border strips of the padded-intermediate scratch.
    # The interior is fully overwritten below every grid step, so this keeps
    # cv2's zero-padding semantics without re-zeroing the whole buffer.
    zrow = jnp.zeros((Bt, 1, Wp, Cm), y1pad_ref.dtype)
    zcol = jnp.zeros((Bt, Hp, 1, Cm), y1pad_ref.dtype)
    y1pad_ref[:, 0:1, :, :] = zrow
    y1pad_ref[:, Hp - 1:Hp, :, :] = zrow
    y1pad_ref[:, :, 0:1, :] = zcol
    y1pad_ref[:, :, Wp - 1:Wp, :] = zcol

    # ---- cv1: im2col (9 shifted taps concatenated on channels) + 1 matmul ----
    taps1 = [xp_ref[:, kh:kh + H, kw:kw + W, :]
             for kh in range(3) for kw in range(3)]
    patches1 = (jnp.concatenate(taps1, axis=-1)
                .reshape(rows, 9 * C1)
                .astype(compute_dtype))
    acc1 = jnp.dot(patches1, w1_ref[...],
                   preferred_element_type=jnp.float32)          # (rows, Cm) f32
    # folded BatchNorm (inference) + exact GELU, in f32
    y1 = _gelu_exact(acc1 * s1_ref[...] + b1_ref[...])

    # stage the intermediate into the padded scratch (interior only)
    y1pad_ref[:, 1:H + 1, 1:W + 1, :] = (
        y1.reshape(Bt, H, W, Cm).astype(y1pad_ref.dtype))

    # ---- cv2: im2col + 1 matmul ----
    taps2 = [y1pad_ref[:, kh:kh + H, kw:kw + W, :]
             for kh in range(3) for kw in range(3)]
    patches2 = (jnp.concatenate(taps2, axis=-1)
                .reshape(rows, 9 * Cm)
                .astype(compute_dtype))
    acc2 = jnp.dot(patches2, w2_ref[...],
                   preferred_element_type=jnp.float32)          # (rows, C2) f32
    y2 = _gelu_exact(acc2 * s2_ref[...] + b2_ref[...])

    out = y2.reshape(Bt, H, W, C2)
    if add:                                                     # shortcut and c1 == c2
        out = out + xp_ref[:, 1:H + 1, 1:W + 1, :].astype(jnp.float32)
    o_ref[...] = out.astype(o_ref.dtype)


def _fold_bn(gamma, beta, mean, var, eps=1e-5):
    scale = gamma / jnp.sqrt(var + eps)
    bias = beta - mean * scale
    return scale.astype(jnp.float32), bias.astype(jnp.float32)


def _pick_block_b(B, H, W, Hp, Wp, C1, Cm, C2, compute_dtype,
                  vmem_budget_bytes=36 * 1024 * 1024):
    """Pick how many batch elements to process per grid step from a VMEM budget."""
    cb = jnp.dtype(compute_dtype).itemsize
    per_b = (
        2 * Hp * Wp * C1 * 4            # double-buffered input block (f32)
        + 2 * H * W * C2 * 4            # double-buffered output block (f32)
        + Hp * Wp * Cm * 4              # padded-intermediate scratch (f32)
        + H * W * 9 * C1 * cb           # im2col patches for cv1
        + H * W * 9 * Cm * cb           # im2col patches for cv2
        + H * W * (Cm + C2) * 4         # f32 accumulators / activations
    )
    bt = max(1, int(vmem_budget_bytes // max(per_b, 1)))
    return int(min(B, bt))


def cross_conv_forward(x_nchw, params, *, shortcut=False,
                       compute_dtype=jnp.float32, block_b=None):
    """CrossConv forward.  x_nchw: (B, C1, H, W) float32 (PyTorch layout)."""
    B, C1, H, W = x_nchw.shape

    # cv1 / cv2 conv weights: OIHW -> HWIO -> (9*Cin, Cout) im2col layout.
    w1_hwio = jnp.transpose(params["w1_oihw"], (2, 3, 1, 0))
    w2_hwio = jnp.transpose(params["w2_oihw"], (2, 3, 1, 0))
    Cm = w1_hwio.shape[3]
    C2 = w2_hwio.shape[3]
    w1 = w1_hwio.reshape(9 * C1, Cm).astype(compute_dtype)
    w2 = w2_hwio.reshape(9 * Cm, C2).astype(compute_dtype)
    add = bool(shortcut) and (C1 == C2)

    s1, b1 = _fold_bn(params["bn1_gamma"], params["bn1_beta"],
                      params["bn1_mean"], params["bn1_var"])
    s2, b2 = _fold_bn(params["bn2_gamma"], params["bn2_beta"],
                      params["bn2_mean"], params["bn2_var"])
    s1, b1 = s1.reshape(1, Cm), b1.reshape(1, Cm)
    s2, b2 = s2.reshape(1, C2), b2.reshape(1, C2)

    # NCHW -> NHWC, then zero-pad H/W by 1 (autopad(3) == 1) in plain JAX glue.
    x = jnp.transpose(x_nchw, (0, 2, 3, 1)).astype(jnp.float32)
    x_pad = jnp.pad(x, ((0, 0), (1, 1), (1, 1), (0, 0)))
    Hp, Wp = H + 2, W + 2

    if block_b is None:
        block_b = _pick_block_b(B, H, W, Hp, Wp, C1, Cm, C2, compute_dtype)
    Bt = int(block_b)
    grid = (pl.cdiv(B, Bt),)

    kernel = functools.partial(_cross_conv_kernel, add=add,
                               compute_dtype=compute_dtype)
    out_nhwc = pl.pallas_call(
        kernel,
        out_shape=jax.ShapeDtypeStruct((B, H, W, C2), jnp.float32),
        grid_spec=pltpu.PrefetchScalarGridSpec(
            num_scalar_prefetch=0,
            grid=grid,
            in_specs=[
                pl.BlockSpec((Bt, Hp, Wp, C1), lambda b: (b, 0, 0, 0)),
                pl.BlockSpec((9 * C1, Cm), lambda b: (0, 0)),
                pl.BlockSpec((1, Cm), lambda b: (0, 0)),
                pl.BlockSpec((1, Cm), lambda b: (0, 0)),
                pl.BlockSpec((9 * Cm, C2), lambda b: (0, 0)),
                pl.BlockSpec((1, C2), lambda b: (0, 0)),
                pl.BlockSpec((1, C2), lambda b: (0, 0)),
            ],
            out_specs=pl.BlockSpec((Bt, H, W, C2), lambda b: (b, 0, 0, 0)),
            scratch_shapes=[pltpu.VMEM((Bt, Hp, Wp, Cm), jnp.float32)],
        ),
        compiler_params=pltpu.CompilerParams(
            dimension_semantics=("parallel",),      # batch blocks independent
            vmem_limit_bytes=48 * 1024 * 1024),
    )(x_pad, w1, s1, b1, w2, s2, b2)

    # back to NCHW (PyTorch convention)
    return jnp.transpose(out_nhwc, (0, 3, 1, 2))


# ---------------------------------------------------------------------------
# Pure-JAX reference (mirrors PyTorch semantics, eval-mode BN) for checking.
# ---------------------------------------------------------------------------
def _ref_conv_bn_gelu(x_nchw, w_oihw, gamma, beta, mean, var, eps=1e-5):
    y = lax.conv_general_dilated(
        x_nchw, w_oihw, window_strides=(1, 1), padding=((1, 1), (1, 1)),
        dimension_numbers=("NCHW", "OIHW", "NCHW"))
    y = (y - mean[None, :, None, None]) / jnp.sqrt(var + eps)[None, :, None, None]
    y = y * gamma[None, :, None, None] + beta[None, :, None, None]
    return jax.nn.gelu(y, approximate=False)


def cross_conv_reference(x_nchw, params, *, shortcut=False):
    c1 = x_nchw.shape[1]
    c2 = params["w2_oihw"].shape[0]
    y = _ref_conv_bn_gelu(x_nchw, params["w1_oihw"], params["bn1_gamma"],
                          params["bn1_beta"], params["bn1_mean"], params["bn1_var"])
    y = _ref_conv_bn_gelu(y, params["w2_oihw"], params["bn2_gamma"],
                          params["bn2_beta"], params["bn2_mean"], params["bn2_var"])
    if shortcut and c1 == c2:
        y = x_nchw + y
    return y


def make_params(key, c1, c2, e=1.0):
    c_ = int(c2 * e)
    ks = jax.random.split(key, 10)
    return {
        # nn.Conv2d(c1, c_, 3, 1, 1, bias=False) -> weight (c_, c1, 3, 3)
        "w1_oihw": 0.2 * jax.random.normal(ks[0], (c_, c1, 3, 3), jnp.float32),
        "bn1_gamma": 1.0 + 0.1 * jax.random.normal(ks[1], (c_,), jnp.float32),
        "bn1_beta": 0.1 * jax.random.normal(ks[2], (c_,), jnp.float32),
        "bn1_mean": 0.1 * jax.random.normal(ks[3], (c_,), jnp.float32),
        "bn1_var": 0.5 + jax.random.uniform(ks[4], (c_,), jnp.float32),
        # nn.Conv2d(c_, c2, 3, 1, 1, bias=False) -> weight (c2, c_, 3, 3)
        "w2_oihw": 0.2 * jax.random.normal(ks[5], (c2, c_, 3, 3), jnp.float32),
        "bn2_gamma": 1.0 + 0.1 * jax.random.normal(ks[6], (c2,), jnp.float32),
        "bn2_beta": 0.1 * jax.random.normal(ks[7], (c2,), jnp.float32),
        "bn2_mean": 0.1 * jax.random.normal(ks[8], (c2,), jnp.float32),
        "bn2_var": 0.5 + jax.random.uniform(ks[9], (c2,), jnp.float32),
    }


if __name__ == "__main__":
    key = jax.random.PRNGKey(0)
    kx, kp = jax.random.split(key)

    B, C1, C2, H, W = 2, 4, 4, 16, 16
    x = jax.random.normal(kx, (B, C1, H, W), jnp.float32)
    params = make_params(kp, C1, C2, e=1.0)

    # 1) f32 matmul operands, no shortcut (module default) — tight tolerance.
    out = jax.block_until_ready(
        cross_conv_forward(x, params, shortcut=False, compute_dtype=jnp.float32))
    ref = jax.block_until_ready(cross_conv_reference(x, params, shortcut=False))
    np.testing.assert_allclose(np.asarray(out), np.asarray(ref),
                               rtol=1e-4, atol=1e-4)

    # 2) shortcut path (c1 == c2) — tight tolerance.
    out_sc = jax.block_until_ready(
        cross_conv_forward(x, params, shortcut=True, compute_dtype=jnp.float32))
    ref_sc = jax.block_until_ready(cross_conv_reference(x, params, shortcut=True))
    np.testing.assert_allclose(np.asarray(out_sc), np.asarray(ref_sc),
                               rtol=1e-4, atol=1e-4)

    # 3) bf16 MXU operands with f32 accumulation — looser tolerance.
    out_bf = jax.block_until_ready(
        cross_conv_forward(x, params, shortcut=False, compute_dtype=jnp.bfloat16))
    np.testing.assert_allclose(np.asarray(out_bf), np.asarray(ref),
                               rtol=5e-2, atol=5e-2)

    print("KERNEL_OK")
</pallas_src>

<mosaic_0001>
module attributes {stable_mosaic.version = 11 : i64} {
  func.func @_cross_conv_kernel(%arg0: i32, %arg1: memref<2x18x18x4xf32, #tpu.memory_space<vmem>>, %arg2: memref<36x4xf32, #tpu.memory_space<vmem>>, %arg3: memref<1x4xf32, #tpu.memory_space<vmem>>, %arg4: memref<1x4xf32, #tpu.memory_space<vmem>>, %arg5: memref<36x4xf32, #tpu.memory_space<vmem>>, %arg6: memref<1x4xf32, #tpu.memory_space<vmem>>, %arg7: memref<1x4xf32, #tpu.memory_space<vmem>>, %arg8: memref<2x16x16x4xf32, #tpu.memory_space<vmem>>, %arg9: memref<2x18x18x4xf32, #tpu.memory_space<vmem>>) attributes {dimension_semantics = [#tpu.dimension_semantics<parallel>], iteration_bounds = array<i64: 1>, scalar_prefetch = 0 : i64, scratch_operands = 1 : i64, tpu.core_type = #tpu.core_type<tc>, window_params = [{transform_indices = @transform_0, window_bounds = array<i64: 2, 18, 18, 4>}, {pipeline_mode = #tpu.pipeline_mode<synchronous>, transform_indices = @transform_1, window_bounds = array<i64: 36, 4>}, {pipeline_mode = #tpu.pipeline_mode<synchronous>, transform_indices = @transform_2, window_bounds = array<i64: 1, 4>}, {pipeline_mode = #tpu.pipeline_mode<synchronous>, transform_indices = @transform_3, window_bounds = array<i64: 1, 4>}, {pipeline_mode = #tpu.pipeline_mode<synchronous>, transform_indices = @transform_4, window_bounds = array<i64: 36, 4>}, {pipeline_mode = #tpu.pipeline_mode<synchronous>, transform_indices = @transform_5, window_bounds = array<i64: 1, 4>}, {pipeline_mode = #tpu.pipeline_mode<synchronous>, transform_indices = @transform_6, window_bounds = array<i64: 1, 4>}, {transform_indices = @transform_7, window_bounds = array<i64: 2, 16, 16, 4>}]} {
    %cst = arith.constant 0.000000e+00 : f32
    %0 = vector.broadcast %cst : f32 to vector<2x1x18x4xf32>
    %cst_0 = arith.constant 0.000000e+00 : f32
    %1 = vector.broadcast %cst_0 : f32 to vector<2x18x1x4xf32>
    %c0 = arith.constant 0 : index
    %c0_1 = arith.constant 0 : index
    %c0_2 = arith.constant 0 : index
    %c0_3 = arith.constant 0 : index
    %2 = vector.load %arg9[%c0, %c0_1, %c0_2, %c0_3] : memref<2x18x18x4xf32, #tpu.memory_space<vmem>>, vector<2x1x18x4xf32>
    tpu.vector_store %arg9[%c0, %c0_1, %c0_2, %c0_3], %0 {strides = array<i32>} : memref<2x18x18x4xf32, #tpu.memory_space<vmem>>, vector<2x1x18x4xf32>,
    %c0_4 = arith.constant 0 : index
    %c17 = arith.constant 17 : index
    %c0_5 = arith.constant 0 : index
    %c0_6 = arith.constant 0 : index
    %3 = vector.load %arg9[%c0_4, %c17, %c0_5, %c0_6] : memref<2x18x18x4xf32, #tpu.memory_space<vmem>>, vector<2x1x18x4xf32>
    tpu.vector_store %arg9[%c0_4, %c17, %c0_5, %c0_6], %0 {strides = array<i32>} : memref<2x18x18x4xf32, #tpu.memory_space<vmem>>, vector<2x1x18x4xf32>,
    %c0_7 = arith.constant 0 : index
    %c0_8 = arith.constant 0 : index
    %c0_9 = arith.constant 0 : index
    %c0_10 = arith.constant 0 : index
    %4 = vector.load %arg9[%c0_7, %c0_8, %c0_9, %c0_10] : memref<2x18x18x4xf32, #tpu.memory_space<vmem>>, vector<2x18x1x4xf32>
    tpu.vector_store %arg9[%c0_7, %c0_8, %c0_9, %c0_10], %1 {strides = array<i32>} : memref<2x18x18x4xf32, #tpu.memory_space<vmem>>, vector<2x18x1x4xf32>,
    %c0_11 = arith.constant 0 : index
    %c0_12 = arith.constant 0 : index
    %c17_13 = arith.constant 17 : index
    %c0_14 = arith.constant 0 : index
    %5 = vector.load %arg9[%c0_11, %c0_12, %c17_13, %c0_14] : memref<2x18x18x4xf32, #tpu.memory_space<vmem>>, vector<2x18x1x4xf32>
    tpu.vector_store %arg9[%c0_11, %c0_12, %c17_13, %c0_14], %1 {strides = array<i32>} : memref<2x18x18x4xf32, #tpu.memory_space<vmem>>, vector<2x18x1x4xf32>,
    %c0_15 = arith.constant 0 : index
    %c0_16 = arith.constant 0 : index
    %c0_17 = arith.constant 0 : index
    %c0_18 = arith.constant 0 : index
    %6 = vector.load %arg1[%c0_15, %c0_16, %c0_17, %c0_18] : memref<2x18x18x4xf32, #tpu.memory_space<vmem>>, vector<2x16x16x4xf32>
    %c0_19 = arith.constant 0 : index
    %c0_20 = arith.constant 0 : index
    %c1 = arith.constant 1 : index
    %c0_21 = arith.constant 0 : index
    %7 = vector.load %arg1[%c0_19, %c0_20, %c1, %c0_21] : memref<2x18x18x4xf32, #tpu.memory_space<vmem>>, vector<2x16x16x4xf32>
    %c0_22 = arith.constant 0 : index
    %c0_23 = arith.constant 0 : index
    %c2 = arith.constant 2 : index
    %c0_24 = arith.constant 0 : index
    %8 = vector.load %arg1[%c0_22, %c0_23, %c2, %c0_24] : memref<2x18x18x4xf32, #tpu.memory_space<vmem>>, vector<2x16x16x4xf32>
    %c0_25 = arith.constant 0 : index
    %c1_26 = arith.constant 1 : index
    %c0_27 = arith.constant 0 : index
    %c0_28 = arith.constant 0 : index
    %9 = vector.load %arg1[%c0_25, %c1_26, %c0_27, %c0_28] : memref<2x18x18x4xf32, #tpu.memory_space<vmem>>, vector<2x16x16x4xf32>
    %c0_29 = arith.constant 0 : index
    %c1_30 = arith.constant 1 : index
    %c1_31 = arith.constant 1 : index
    %c0_32 = arith.constant 0 : index
    %10 = vector.load %arg1[%c0_29, %c1_30, %c1_31, %c0_32] : memref<2x18x18x4xf32, #tpu.memory_space<vmem>>, vector<2x16x16x4xf32>
    %c0_33 = arith.constant 0 : index
    %c1_34 = arith.constant 1 : index
    %c2_35 = arith.constant 2 : index
    %c0_36 = arith.constant 0 : index
    %11 = vector.load %arg1[%c0_33, %c1_34, %c2_35, %c0_36] : memref<2x18x18x4xf32, #tpu.memory_space<vmem>>, vector<2x16x16x4xf32>
    %c0_37 = arith.constant 0 : index
    %c2_38 = arith.constant 2 : index
    %c0_39 = arith.constant 0 : index
    %c0_40 = arith.constant 0 : index
    %12 = vector.load %arg1[%c0_37, %c2_38, %c0_39, %c0_40] : memref<2x18x18x4xf32, #tpu.memory_space<vmem>>, vector<2x16x16x4xf32>
    %c0_41 = arith.constant 0 : index
    %c2_42 = arith.constant 2 : index
    %c1_43 = arith.constant 1 : index
    %c0_44 = arith.constant 0 : index
    %13 = vector.load %arg1[%c0_41, %c2_42, %c1_43, %c0_44] : memref<2x18x18x4xf32, #tpu.memory_space<vmem>>, vector<2x16x16x4xf32>
    %c0_45 = arith.constant 0 : index
    %c2_46 = arith.constant 2 : index
    %c2_47 = arith.constant 2 : index
    %c0_48 = arith.constant 0 : index
    %14 = vector.load %arg1[%c0_45, %c2_46, %c2_47, %c0_48] : memref<2x18x18x4xf32, #tpu.memory_space<vmem>>, vector<2x16x16x4xf32>
    %15 = tpu.concatenate %6, %7, %8, %9, %10, %11, %12, %13, %14 in 3 : vector<2x16x16x4xf32>, vector<2x16x16x4xf32>, vector<2x16x16x4xf32>, vector<2x16x16x4xf32>, vector<2x16x16x4xf32>, vector<2x16x16x4xf32>, vector<2x16x16x4xf32>, vector<2x16x16x4xf32>, vector<2x16x16x4xf32> -> vector<2x16x16x36xf32>
    %16 = vector.shape_cast %15 : vector<2x16x16x36xf32> to vector<512x36xf32>
    %c0_49 = arith.constant 0 : index
    %c0_50 = arith.constant 0 : index
    %17 = vector.load %arg2[%c0_49, %c0_50] : memref<36x4xf32, #tpu.memory_space<vmem>>, vector<36x4xf32>
    %cst_51 = arith.constant dense<0.000000e+00> : vector<512x4xf32>
    %18 = tpu.matmul %16, %17, %cst_51 {dimension_numbers = #tpu.dot_dimension_numbers<[1], [0], [0], [1], [0, 0, 1, 1], [], []>} : vector<512x36xf32>, vector<36x4xf32>, vector<512x4xf32> -> vector<512x4xf32>
    %c0_52 = arith.constant 0 : index
    %c0_53 = arith.constant 0 : index
    %19 = vector.load %arg3[%c0_52, %c0_53] : memref<1x4xf32, #tpu.memory_space<vmem>>, vector<1x4xf32>
    %20 = vector.broadcast %19 : vector<1x4xf32> to vector<512x4xf32>
    %21 = arith.mulf %18, %20 : vector<512x4xf32>
    %c0_54 = arith.constant 0 : index
    %c0_55 = arith.constant 0 : index
    %22 = vector.load %arg4[%c0_54, %c0_55] : memref<1x4xf32, #tpu.memory_space<vmem>>, vector<1x4xf32>
    %23 = vector.broadcast %22 : vector<1x4xf32> to vector<512x4xf32>
    %24 = arith.addf %21, %23 : vector<512x4xf32>
    %cst_56 = arith.constant 5.000000e-01 : f32
    %25 = vector.broadcast %cst_56 : f32 to vector<512x4xf32>
    %26 = arith.mulf %25, %24 : vector<512x4xf32>
    %cst_57 = arith.constant 0.707106769 : f32
    %27 = vector.broadcast %cst_57 : f32 to vector<512x4xf32>
    %28 = arith.mulf %24, %27 : vector<512x4xf32>
    %29 = math.erf %28 : vector<512x4xf32>
    %cst_58 = arith.constant 1.000000e+00 : f32
    %30 = vector.broadcast %cst_58 : f32 to vector<512x4xf32>
    %31 = arith.addf %30, %29 : vector<512x4xf32>
    %32 = arith.mulf %26, %31 : vector<512x4xf32>
    %33 = vector.shape_cast %32 : vector<512x4xf32> to vector<2x16x16x4xf32>
    %c0_59 = arith.constant 0 : index
    %c1_60 = arith.constant 1 : index
    %c1_61 = arith.constant 1 : index
    %c0_62 = arith.constant 0 : index
    %34 = vector.load %arg9[%c0_59, %c1_60, %c1_61, %c0_62] : memref<2x18x18x4xf32, #tpu.memory_space<vmem>>, vector<2x16x16x4xf32>
    tpu.vector_store %arg9[%c0_59, %c1_60, %c1_61, %c0_62], %33 {strides = array<i32>} : memref<2x18x18x4xf32, #tpu.memory_space<vmem>>, vector<2x16x16x4xf32>,
    %c0_63 = arith.constant 0 : index
    %c0_64 = arith.constant 0 : index
    %c0_65 = arith.constant 0 : index
    %c0_66 = arith.constant 0 : index
    %35 = vector.load %arg9[%c0_63, %c0_64, %c0_65, %c0_66] : memref<2x18x18x4xf32, #tpu.memory_space<vmem>>, vector<2x16x16x4xf32>
    %c0_67 = arith.constant 0 : index
    %c0_68 = arith.constant 0 : index
    %c1_69 = arith.constant 1 : index
    %c0_70 = arith.constant 0 : index
    %36 = vector.load %arg9[%c0_67, %c0_68, %c1_69, %c0_70] : memref<2x18x18x4xf32, #tpu.memory_space<vmem>>, vector<2x16x16x4xf32>
    %c0_71 = arith.constant 0 : index
    %c0_72 = arith.constant 0 : index
    %c2_73 = arith.constant 2 : index
    %c0_74 = arith.constant 0 : index
    %37 = vector.load %arg9[%c0_71, %c0_72, %c2_73, %c0_74] : memref<2x18x18x4xf32, #tpu.memory_space<vmem>>, vector<2x16x16x4xf32>
    %c0_75 = arith.constant 0 : index
    %c1_76 = arith.constant 1 : index
    %c0_77 = arith.constant 0 : index
    %c0_78 = arith.constant 0 : index
    %38 = vector.load %arg9[%c0_75, %c1_76, %c0_77, %c0_78] : memref<2x18x18x4xf32, #tpu.memory_space<vmem>>, vector<2x16x16x4xf32>
    %c0_79 = arith.constant 0 : index
    %c1_80 = arith.constant 1 : index
    %c1_81 = arith.constant 1 : index
    %c0_82 = arith.constant 0 : index
    %39 = vector.load %arg9[%c0_79, %c1_80, %c1_81, %c0_82] : memref<2x18x18x4xf32, #tpu.memory_space<vmem>>, vector<2x16x16x4xf32>
    %c0_83 = arith.constant 0 : index
    %c1_84 = arith.constant 1 : index
    %c2_85 = arith.constant 2 : index
    %c0_86 = arith.constant 0 : index
    %40 = vector.load %arg9[%c0_83, %c1_84, %c2_85, %c0_86] : memref<2x18x18x4xf32, #tpu.memory_space<vmem>>, vector<2x16x16x4xf32>
    %c0_87 = arith.constant 0 : index
    %c2_88 = arith.constant 2 : index
    %c0_89 = arith.constant 0 : index
    %c0_90 = arith.constant 0 : index
    %41 = vector.load %arg9[%c0_87, %c2_88, %c0_89, %c0_90] : memref<2x18x18x4xf32, #tpu.memory_space<vmem>>, vector<2x16x16x4xf32>
    %c0_91 = arith.constant 0 : index
    %c2_92 = arith.constant 2 : index
    %c1_93 = arith.constant 1 : index
    %c0_94 = arith.constant 0 : index
    %42 = vector.load %arg9[%c0_91, %c2_92, %c1_93, %c0_94] : memref<2x18x18x4xf32, #tpu.memory_space<vmem>>, vector<2x16x16x4xf32>
    %c0_95 = arith.constant 0 : index
    %c2_96 = arith.constant 2 : index
    %c2_97 = arith.constant 2 : index
    %c0_98 = arith.constant 0 : index
    %43 = vector.load %arg9[%c0_95, %c2_96, %c2_97, %c0_98] : memref<2x18x18x4xf32, #tpu.memory_space<vmem>>, vector<2x16x16x4xf32>
    %44 = tpu.concatenate %35, %36, %37, %38, %39, %40, %41, %42, %43 in 3 : vector<2x16x16x4xf32>, vector<2x16x16x4xf32>, vector<2x16x16x4xf32>, vector<2x16x16x4xf32>, vector<2x16x16x4xf32>, vector<2x16x16x4xf32>, vector<2x16x16x4xf32>, vector<2x16x16x4xf32>, vector<2x16x16x4xf32> -> vector<2x16x16x36xf32>
    %45 = vector.shape_cast %44 : vector<2x16x16x36xf32> to vector<512x36xf32>
    %c0_99 = arith.constant 0 : index
    %c0_100 = arith.constant 0 : index
    %46 = vector.load %arg5[%c0_99, %c0_100] : memref<36x4xf32, #tpu.memory_space<vmem>>, vector<36x4xf32>
    %cst_101 = arith.constant dense<0.000000e+00> : vector<512x4xf32>
    %47 = tpu.matmul %45, %46, %cst_101 {dimension_numbers = #tpu.dot_dimension_numbers<[1], [0], [0], [1], [0, 0, 1, 1], [], []>} : vector<512x36xf32>, vector<36x4xf32>, vector<512x4xf32> -> vector<512x4xf32>
    %c0_102 = arith.constant 0 : index
    %c0_103 = arith.constant 0 : index
    %48 = vector.load %arg6[%c0_102, %c0_103] : memref<1x4xf32, #tpu.memory_space<vmem>>, vector<1x4xf32>
    %49 = vector.broadcast %48 : vector<1x4xf32> to vector<512x4xf32>
    %50 = arith.mulf %47, %49 : vector<512x4xf32>
    %c0_104 = arith.constant 0 : index
    %c0_105 = arith.constant 0 : index
    %51 = vector.load %arg7[%c0_104, %c0_105] : memref<1x4xf32, #tpu.memory_space<vmem>>, vector<1x4xf32>
    %52 = vector.broadcast %51 : vector<1x4xf32> to vector<512x4xf32>
    %53 = arith.addf %50, %52 : vector<512x4xf32>
    %cst_106 = arith.constant 5.000000e-01 : f32
    %54 = vector.broadcast %cst_106 : f32 to vector<512x4xf32>
    %55 = arith.mulf %54, %53 : vector<512x4xf32>
    %cst_107 = arith.constant 0.707106769 : f32
    %56 = vector.broadcast %cst_107 : f32 to vector<512x4xf32>
    %57 = arith.mulf %53, %56 : vector<512x4xf32>
    %58 = math.erf %57 : vector<512x4xf32>
    %cst_108 = arith.constant 1.000000e+00 : f32
    %59 = vector.broadcast %cst_108 : f32 to vector<512x4xf32>
    %60 = arith.addf %59, %58 : vector<512x4xf32>
    %61 = arith.mulf %55, %60 : vector<512x4xf32>
    %62 = vector.shape_cast %61 : vector<512x4xf32> to vector<2x16x16x4xf32>
    %c0_109 = arith.constant 0 : index
    %c0_110 = arith.constant 0 : index
    %c0_111 = arith.constant 0 : index
    %c0_112 = arith.constant 0 : index
    %63 = vector.load %arg8[%c0_109, %c0_110, %c0_111, %c0_112] : memref<2x16x16x4xf32, #tpu.memory_space<vmem>>, vector<2x16x16x4xf32>
    tpu.vector_store %arg8[%c0_109, %c0_110, %c0_111, %c0_112], %62 {strides = array<i32>} : memref<2x16x16x4xf32, #tpu.memory_space<vmem>>, vector<2x16x16x4xf32>,
    return
  }
  func.func @transform_0(%arg0: i32) -> (i32, i32, i32, i32) {
    %c0_i32 = arith.constant 0 : i32
    %c0_i32_0 = arith.constant 0 : i32
    %c0_i32_1 = arith.constant 0 : i32
    %c0_i32_2 = arith.constant 0 : i32
    return %arg0, %c0_i32, %c0_i32_0, %c0_i32_1 : i32, i32, i32, i32
  }
  func.func @transform_1(%arg0: i32) -> (i32, i32) {
    %c0_i32 = arith.constant 0 : i32
    %c0_i32_0 = arith.constant 0 : i32
    %c0_i32_1 = arith.constant 0 : i32
    return %c0_i32, %c0_i32_0 : i32, i32
  }
  func.func @transform_2(%arg0: i32) -> (i32, i32) {
    %c0_i32 = arith.constant 0 : i32
    %c0_i32_0 = arith.constant 0 : i32
    %c0_i32_1 = arith.constant 0 : i32
    return %c0_i32, %c0_i32_0 : i32, i32
  }
  func.func @transform_3(%arg0: i32) -> (i32, i32) {
    %c0_i32 = arith.constant 0 : i32
    %c0_i32_0 = arith.constant 0 : i32
    %c0_i32_1 = arith.constant 0 : i32
    return %c0_i32, %c0_i32_0 : i32, i32
  }
  func.func @transform_4(%arg0: i32) -> (i32, i32) {
    %c0_i32 = arith.constant 0 : i32
    %c0_i32_0 = arith.constant 0 : i32
    %c0_i32_1 = arith.constant 0 : i32
    return %c0_i32, %c0_i32_0 : i32, i32
  }
  func.func @transform_5(%arg0: i32) -> (i32, i32) {
    %c0_i32 = arith.constant 0 : i32
    %c0_i32_0 = arith.constant 0 : i32
    %c0_i32_1 = arith.constant 0 : i32
    return %c0_i32, %c0_i32_0 : i32, i32
  }
  func.func @transform_6(%arg0: i32) -> (i32, i32) {
    %c0_i32 = arith.constant 0 : i32
    %c0_i32_0 = arith.constant 0 : i32
    %c0_i32_1 = arith.constant 0 : i32
    return %c0_i32, %c0_i32_0 : i32, i32
  }
  func.func @transform_7(%arg0: i32) -> (i32, i32, i32, i32) {
    %c0_i32 = arith.constant 0 : i32
    %c0_i32_0 = arith.constant 0 : i32
    %c0_i32_1 = arith.constant 0 : i32
    %c0_i32_2 = arith.constant 0 : i32
    return %arg0, %c0_i32, %c0_i32_0, %c0_i32_1 : i32, i32, i32, i32
  }
}

</mosaic_0001>

<llo_original>
// kernel: tpu_custom_call.1
$region0: #{tpu_custom_call.1}
  #allocation0 [shape = 'u32[]', space=smem, size = 0x4, offset = 0x4, fixed_abs, tag = 'smem constant byte address 0x4 - core index']
  #allocation1 [shape = 'u32[72,128]{1,0:T(1,128)}', space=vmem, size = 0x9000, scoped, tag = 'internal scratch']
  #allocation2 [shape = 'f32[2,18,18,4]{3,2,1,0:T(8,128)}', space=vmem, size = 0x6c000, scoped, tag = 'scratch operand']
  %s0 = inlined_call_operand.vmem [shape: f32[2,18,18,4], index: 0, kind: input, shape index: {}]
  %s1 = inlined_call_operand.vmem [shape: f32[36,4], index: 1, kind: input, shape index: {}]
  %s2 = inlined_call_operand.vmem [shape: f32[1,4], index: 2, kind: input, shape index: {}]
  %s3 = inlined_call_operand.vmem [shape: f32[1,4], index: 3, kind: input, shape index: {}]
  %s4 = inlined_call_operand.vmem [shape: f32[36,4], index: 4, kind: input, shape index: {}]
  %s5 = inlined_call_operand.vmem [shape: f32[1,4], index: 5, kind: input, shape index: {}]
  %s6 = inlined_call_operand.vmem [shape: f32[1,4], index: 6, kind: input, shape index: {}]
  %s7 = inlined_call_operand.vmem [shape: f32[2,16,16,4], index: 7, kind: output, shape index: {}]
  %s8 = sld [smem:[#allocation0]]
  $region38: #{tpu_custom_call.1} parent=0
    _
  %s10 = ssub.s32 1, %s8
  %s11 = scalar_select 0, %s10, %s8
  // Predicated region
  $region2: #{tpu_custom_call.1} parent=0 // pred_check
    _
  $region3: #{tpu_custom_call.1} parent=0 // pred_check_branch
    %13 = sbr.rel (0) target = $region5
  $region4: #{tpu_custom_call.1} parent=0 // pred_region
    _
  $region5: #{tpu_custom_call.1} parent=0 // pred_fallthru
    _
  // Predicated region
  $region6: #{tpu_custom_call.1} parent=0 // pred_check
    _
  $region7: #{tpu_custom_call.1} parent=0 // pred_check_branch
    %15 = sbr.rel (0) target = $region9
  $region8: #{tpu_custom_call.1} parent=0 // pred_region
    _
  $region9: #{tpu_custom_call.1} parent=0 // pred_fallthru
    _
  // Predicated region
  $region10: #{tpu_custom_call.1} parent=0 // pred_check
    _
  $region11: #{tpu_custom_call.1} parent=0 // pred_check_branch
    %17 = sbr.rel (0) target = $region13
  $region12: #{tpu_custom_call.1} parent=0 // pred_region
    _
  $region13: #{tpu_custom_call.1} parent=0 // pred_fallthru
    _
  // Predicated region
  $region14: #{tpu_custom_call.1} parent=0 // pred_check
    _
  $region15: #{tpu_custom_call.1} parent=0 // pred_check_branch
    %19 = sbr.rel (0) target = $region17
  $region16: #{tpu_custom_call.1} parent=0 // pred_region
    _
  $region17: #{tpu_custom_call.1} parent=0 // pred_fallthru
    _
  // Predicated region
  $region18: #{tpu_custom_call.1} parent=0 // pred_check
    _
  $region19: #{tpu_custom_call.1} parent=0 // pred_check_branch
    %21 = sbr.rel (0) target = $region21
  $region20: #{tpu_custom_call.1} parent=0 // pred_region
    _
  $region21: #{tpu_custom_call.1} parent=0 // pred_fallthru
    _
  // Predicated region
  $region22: #{tpu_custom_call.1} parent=0 // pred_check
    _
  $region23: #{tpu_custom_call.1} parent=0 // pred_check_branch
    %23 = sbr.rel (0) target = $region25
  $region24: #{tpu_custom_call.1} parent=0 // pred_region
    _
  $region25: #{tpu_custom_call.1} parent=0 // pred_fallthru
    _
  // Predicated region
  $region26: #{tpu_custom_call.1} parent=0 // pred_check
    _
  $region27: #{tpu_custom_call.1} parent=0 // pred_check_branch
    %25 = sbr.rel (0) target = $region29
  $region28: #{tpu_custom_call.1} parent=0 // pred_region
    _
  $region29: #{tpu_custom_call.1} parent=0 // pred_fallthru
    _
  %vm26 = vcmask 31744
  %27 = vst.msk [vmem:[#allocation2] sm:$0xff] %vm26, 0.0
  %28 = vst.msk [vmem:[#allocation2 + $0x8] sm:$0xff] %vm26, 0.0
  %vm29 = vcmask 25600
  %30 = vst.msk [vmem:[#allocation2 + $0x10] sm:$0x3] %vm29, 0.0
  %31 = vst.msk [vmem:[#allocation2 + $0x1b0] sm:$0xff] %vm26, 0.0
  %32 = vst.msk [vmem:[#allocation2 + $0x1b8] sm:$0xff] %vm26, 0.0
  %33 = vst.msk [vmem:[#allocation2 + $0x1c0] sm:$0x3] %vm29, 0.0
  %s34 = scalar_lea.vmem [#allocation2], 408
  %35 = vst.msk [vmem:[%s34] sm:$0xff] %vm26, 0.0
  %36 = vst.msk [vmem:[%s34 + $0x8] sm:$0xff] %vm26, 0.0
  %37 = vst.msk [vmem:[%s34 + $0x10] sm:$0x3] %vm29, 0.0
  %38 = vst.msk [vmem:[%s34 + $0x1b0] sm:$0xff] %vm26, 0.0
  %39 = vst.msk [vmem:[%s34 + $0x1b8] sm:$0xff] %vm26, 0.0
  %40 = vst.msk [vmem:[%s34 + $0x1c0] sm:$0x3] %vm29, 0.0
  %vm41 = vcmask 24576
  %42 = vst.msk [vmem:[#allocation2] sm:$0x1] %vm41, 0.0
  %43 = vst.msk [vmem:[#allocation2 + $0x18] sm:$0x1] %vm41, 0.0
  %44 = vst.msk [vmem:[#allocation2 + $0x30] sm:$0x1] %vm41, 0.0
  %45 = vst.msk [vmem:[#allocation2 + $0x48] sm:$0x1] %vm41, 0.0
  %46 = vst.msk [vmem:[#allocation2 + $0x60] sm:$0x1] %vm41, 0.0
  %47 = vst.msk [vmem:[#allocation2 + $0x78] sm:$0x1] %vm41, 0.0
  %48 = vst.msk [vmem:[#allocation2 + $0x90] sm:$0x1] %vm41, 0.0
  %49 = vst.msk [vmem:[#allocation2 + $0xa8] sm:$0x1] %vm41, 0.0
  %50 = vst.msk [vmem:[#allocation2 + $0xc0] sm:$0x1] %vm41, 0.0
  %51 = vst.msk [vmem:[#allocation2 + $0xd8] sm:$0x1] %vm41, 0.0
  %52 = vst.msk [vmem:[#allocation2 + $0xf0] sm:$0x1] %vm41, 0.0
  %53 = vst.msk [vmem:[#allocation2 + $0x108] sm:$0x1] %vm41, 0.0
  %54 = vst.msk [vmem:[#allocation2 + $0x120] sm:$0x1] %vm41, 0.0
  %55 = vst.msk [vmem:[#allocation2 + $0x138] sm:$0x1] %vm41, 0.0
  %56 = vst.msk [vmem:[#allocation2 + $0x150] sm:$0x1] %vm41, 0.0
  %57 = vst.msk [vmem:[#allocation2 + $0x168] sm:$0x1] %vm41, 0.0
  %58 = vst.msk [vmem:[#allocation2 + $0x180] sm:$0x1] %vm41, 0.0
  %59 = vst.msk [vmem:[#allocation2 + $0x198] sm:$0x1] %vm41, 0.0
  %60 = vst.msk [vmem:[#allocation2 + $0x1b0] sm:$0x1] %vm41, 0.0
  %61 = vst.msk [vmem:[#allocation2 + $0x1c8] sm:$0x1] %vm41, 0.0
  %62 = vst.msk [vmem:[#allocation2 + $0x1e0] sm:$0x1] %vm41, 0.0
  %63 = vst.msk [vmem:[#allocation2 + $0x1f8] sm:$0x1] %vm41, 0.0
  %64 = vst.msk [vmem:[#allocation2 + $0x210] sm:$0x1] %vm41, 0.0
  %65 = vst.msk [vmem:[#allocation2 + $0x228] sm:$0x1] %vm41, 0.0
  %66 = vst.msk [vmem:[#allocation2 + $0x240] sm:$0x1] %vm41, 0.0
  %67 = vst.msk [vmem:[#allocation2 + $0x258] sm:$0x1] %vm41, 0.0
  %68 = vst.msk [vmem:[#allocation2 + $0x270] sm:$0x1] %vm41, 0.0
  %69 = vst.msk [vmem:[#allocation2 + $0x288] sm:$0x1] %vm41, 0.0
  %70 = vst.msk [vmem:[#allocation2 + $0x2a0] sm:$0x1] %vm41, 0.0
  %71 = vst.msk [vmem:[#allocation2 + $0x2b8] sm:$0x1] %vm41, 0.0
  %72 = vst.msk [vmem:[#allocation2 + $0x2d0] sm:$0x1] %vm41, 0.0
  %73 = vst.msk [vmem:[#allocation2 + $0x2e8] sm:$0x1] %vm41, 0.0
  %74 = vst.msk [vmem:[#allocation2 + $0x300] sm:$0x1] %vm41, 0.0
  %75 = vst.msk [vmem:[#allocation2 + $0x318] sm:$0x1] %vm41, 0.0
  %76 = vst.msk [vmem:[#allocation2 + $0x330] sm:$0x1] %vm41, 0.0
  %77 = vst.msk [vmem:[#allocation2 + $0x348] sm:$0x1] %vm41, 0.0
  %78 = vst.msk [vmem:[#allocation2 + $0x11] sm:$0x1] %vm41, 0.0
  %79 = vst.msk [vmem:[#allocation2 + $0x29] sm:$0x1] %vm41, 0.0
  %80 = vst.msk [vmem:[#allocation2 + $0x41] sm:$0x1] %vm41, 0.0
  %81 = vst.msk [vmem:[#allocation2 + $0x59] sm:$0x1] %vm41, 0.0
  %82 = vst.msk [vmem:[#allocation2 + $0x71] sm:$0x1] %vm41, 0.0
  %83 = vst.msk [vmem:[#allocation2 + $0x89] sm:$0x1] %vm41, 0.0
  %84 = vst.msk [vmem:[#allocation2 + $0xa1] sm:$0x1] %vm41, 0.0
  %85 = vst.msk [vmem:[#allocation2 + $0xb9] sm:$0x1] %vm41, 0.0
  %86 = vst.msk [vmem:[#allocation2 + $0xd1] sm:$0x1] %vm41, 0.0
  %87 = vst.msk [vmem:[#allocation2 + $0xe9] sm:$0x1] %vm41, 0.0
  %88 = vst.msk [vmem:[#allocation2 + $0x101] sm:$0x1] %vm41, 0.0
  %89 = vst.msk [vmem:[#allocation2 + $0x119] sm:$0x1] %vm41, 0.0
  %90 = vst.msk [vmem:[#allocation2 + $0x131] sm:$0x1] %vm41, 0.0
  %91 = vst.msk [vmem:[#allocation2 + $0x149] sm:$0x1] %vm41, 0.0
  %92 = vst.msk [vmem:[#allocation2 + $0x161] sm:$0x1] %vm41, 0.0
  %93 = vst.msk [vmem:[#allocation2 + $0x179] sm:$0x1] %vm41, 0.0
  %94 = vst.msk [vmem:[#allocation2 + $0x191] sm:$0x1] %vm41, 0.0
  %95 = vst.msk [vmem:[#allocation2 + $0x1a9] sm:$0x1] %vm41, 0.0
  %96 = vst.msk [vmem:[#allocation2 + $0x1c1] sm:$0x1] %vm41, 0.0
  %97 = vst.msk [vmem:[#allocation2 + $0x1d9] sm:$0x1] %vm41, 0.0
  %98 = vst.msk [vmem:[#allocation2 + $0x1f1] sm:$0x1] %vm41, 0.0
  %99 = vst.msk [vmem:[#allocation2 + $0x209] sm:$0x1] %vm41, 0.0
  %100 = vst.msk [vmem:[#allocation2 + $0x221] sm:$0x1] %vm41, 0.0
  %101 = vst.msk [vmem:[#allocation2 + $0x239] sm:$0x1] %vm41, 0.0
  %102 = vst.msk [vmem:[#allocation2 + $0x251] sm:$0x1] %vm41, 0.0
  %103 = vst.msk [vmem:[#allocation2 + $0x269] sm:$0x1] %vm41, 0.0
  %104 = vst.msk [vmem:[#allocation2 + $0x281] sm:$0x1] %vm41, 0.0
  %105 = vst.msk [vmem:[#allocation2 + $0x299] sm:$0x1] %vm41, 0.0
  %106 = vst.msk [vmem:[#allocation2 + $0x2b1] sm:$0x1] %vm41, 0.0
  %107 = vst.msk [vmem:[#allocation2 + $0x2c9] sm:$0x1] %vm41, 0.0
  %108 = vst.msk [vmem:[#allocation2 + $0x2e1] sm:$0x1] %vm41, 0.0
  %109 = vst.msk [vmem:[#allocation2 + $0x2f9] sm:$0x1] %vm41, 0.0
  %110 = vst.msk [vmem:[#allocation2 + $0x311] sm:$0x1] %vm41, 0.0
  %111 = vst.msk [vmem:[#allocation2 + $0x329] sm:$0x1] %vm41, 0.0
  %112 = vst.msk [vmem:[#allocation2 + $0x341] sm:$0x1] %vm41, 0.0
  %113 = vst.msk [vmem:[#allocation2 + $0x359] sm:$0x1] %vm41, 0.0
  %v114 = vld [vmem:[%s0] sm:$0xff]
  %v115 = vld [vmem:[%s0 + $0x8] sm:$0xff]
  %v116 = vld [vmem:[%s0 + $0x18] sm:$0xff]
  %v117 = vld [vmem:[%s0 + $0x20] sm:$0xff]
  %v118 = vld [vmem:[%s0 + $0x30] sm:$0xff]
  %v119 = vld [vmem:[%s0 + $0x38] sm:$0xff]
  %v120 = vld [vmem:[%s0 + $0x48] sm:$0xff]
  %v121 = vld [vmem:[%s0 + $0x50] sm:$0xff]
  %v122 = vld [vmem:[%s0 + $0x60] sm:$0xff]
  %v123 = vld [vmem:[%s0 + $0x68] sm:$0xff]
  %v124 = vld [vmem:[%s0 + $0x78] sm:$0xff]
  %v125 = vld [vmem:[%s0 + $0x80] sm:$0xff]
  %v126 = vld [vmem:[%s0 + $0x90] sm:$0xff]
  %v127 = vld [vmem:[%s0 + $0x98] sm:$0xff]
  %v128 = vld [vmem:[%s0 + $0xa8] sm:$0xff]
  %v129 = vld [vmem:[%s0 + $0xb0] sm:$0xff]
  %v130 = vld [vmem:[%s0 + $0xc0] sm:$0xff]
  %v131 = vld [vmem:[%s0 + $0xc8] sm:$0xff]
  %v132 = vld [vmem:[%s0 + $0xd8] sm:$0xff]
  %v133 = vld [vmem:[%s0 + $0xe0] sm:$0xff]
  %v134 = vld [vmem:[%s0 + $0xf0] sm:$0xff]
  %v135 = vld [vmem:[%s0 + $0xf8] sm:$0xff]
  %v136 = vld [vmem:[%s0 + $0x108] sm:$0xff]
  %v137 = vld [vmem:[%s0 + $0x110] sm:$0xff]
  %v138 = vld [vmem:[%s0 + $0x120] sm:$0xff]
  %v139 = vld [vmem:[%s0 + $0x128] sm:$0xff]
  %v140 = vld [vmem:[%s0 + $0x138] sm:$0xff]
  %v141 = vld [vmem:[%s0 + $0x140] sm:$0xff]
  %v142 = vld [vmem:[%s0 + $0x150] sm:$0xff]
  %v143 = vld [vmem:[%s0 + $0x158] sm:$0xff]
  %v144 = vld [vmem:[%s0 + $0x168] sm:$0xff]
  %v145 = vld [vmem:[%s0 + $0x170] sm:$0xff]
  %v146 = vld [vmem:[%s0 + $0x1b0] sm:$0xff]
  %v147 = vld [vmem:[%s0 + $0x1b8] sm:$0xff]
  %v148 = vld [vmem:[%s0 + $0x1c8] sm:$0xff]
  %v149 = vld [vmem:[%s0 + $0x1d0] sm:$0xff]
  %v150 = vld [vmem:[%s0 + $0x1e0] sm:$0xff]
  %v151 = vld [vmem:[%s0 + $0x1e8] sm:$0xff]
  %v152 = vld [vmem:[%s0 + $0x1f8] sm:$0xff]
  %v153 = vld [vmem:[%s0 + $0x200] sm:$0xff]
  %v154 = vld [vmem:[%s0 + $0x210] sm:$0xff]
  %v155 = vld [vmem:[%s0 + $0x218] sm:$0xff]
  %v156 = vld [vmem:[%s0 + $0x228] sm:$0xff]
  %v157 = vld [vmem:[%s0 + $0x230] sm:$0xff]
  %v158 = vld [vmem:[%s0 + $0x240] sm:$0xff]
  %v159 = vld [vmem:[%s0 + $0x248] sm:$0xff]
  %v160 = vld [vmem:[%s0 + $0x258] sm:$0xff]
  %v161 = vld [vmem:[%s0 + $0x260] sm:$0xff]
  %v162 = vld [vmem:[%s0 + $0x270] sm:$0xff]
  %v163 = vld [vmem:[%s0 + $0x278] sm:$0xff]
  %v164 = vld [vmem:[%s0 + $0x288] sm:$0xff]
  %v165 = vld [vmem:[%s0 + $0x290] sm:$0xff]
  %v166 = vld [vmem:[%s0 + $0x2a0] sm:$0xff]
  %v167 = vld [vmem:[%s0 + $0x2a8] sm:$0xff]
  %v168 = vld [vmem:[%s0 + $0x2b8] sm:$0xff]
  %v169 = vld [vmem:[%s0 + $0x2c0] sm:$0xff]
  %v170 = vld [vmem:[%s0 + $0x2d0] sm:$0xff]
  %v171 = vld [vmem:[%s0 + $0x2d8] sm:$0xff]
  %v172 = vld [vmem:[%s0 + $0x2e8] sm:$0xff]
  %v173 = vld [vmem:[%s0 + $0x2f0] sm:$0xff]
  %v174 = vld [vmem:[%s0 + $0x300] sm:$0xff]
  %v175 = vld [vmem:[%s0 + $0x308] sm:$0xff]
  %v176 = vld [vmem:[%s0 + $0x318] sm:$0xff]
  %v177 = vld [vmem:[%s0 + $0x320] sm:$0xff]
  %v178 = vld [vmem:[%s0 + $0x1] sm:$0xff]
  %v179 = vld [vmem:[%s0 + $0x9] sm:$0xff]
  %v180 = vld [vmem:[%s0 + $0x19] sm:$0xff]
  %v181 = vld [vmem:[%s0 + $0x21] sm:$0xff]
  %v182 = vld [vmem:[%s0 + $0x31] sm:$0xff]
  %v183 = vld [vmem:[%s0 + $0x39] sm:$0xff]
  %v184 = vld [vmem:[%s0 + $0x49] sm:$0xff]
  %v185 = vld [vmem:[%s0 + $0x51] sm:$0xff]
  %v186 = vld [vmem:[%s0 + $0x61] sm:$0xff]
  %v187 = vld [vmem:[%s0 + $0x69] sm:$0xff]
  %v188 = vld [vmem:[%s0 + $0x79] sm:$0xff]
  %v189 = vld [vmem:[%s0 + $0x81] sm:$0xff]
  %v190 = vld [vmem:[%s0 + $0x91] sm:$0xff]
  %v191 = vld [vmem:[%s0 + $0x99] sm:$0xff]
  %v192 = vld [vmem:[%s0 + $0xa9] sm:$0xff]
  %v193 = vld [vmem:[%s0 + $0xb1] sm:$0xff]
  %v194 = vld [vmem:[%s0 + $0xc1] sm:$0xff]
  %v195 = vld [vmem:[%s0 + $0xc9] sm:$0xff]
  %v196 = vld [vmem:[%s0 + $0xd9] sm:$0xff]
  %v197 = vld [vmem:[%s0 + $0xe1] sm:$0xff]
  %v198 = vld [vmem:[%s0 + $0xf1] sm:$0xff]
  %v199 = vld [vmem:[%s0 + $0xf9] sm:$0xff]
  %v200 = vld [vmem:[%s0 + $0x109] sm:$0xff]
  %v201 = vld [vmem:[%s0 + $0x111] sm:$0xff]
  %v202 = vld [vmem:[%s0 + $0x121] sm:$0xff]
  %v203 = vld [vmem:[%s0 + $0x129] sm:$0xff]
  %v204 = vld [vmem:[%s0 + $0x139] sm:$0xff]
  %v205 = vld [vmem:[%s0 + $0x141] sm:$0xff]
  %v206 = vld [vmem:[%s0 + $0x151] sm:$0xff]
  %v207 = vld [vmem:[%s0 + $0x159] sm:$0xff]
  %v208 = vld [vmem:[%s0 + $0x169] sm:$0xff]
  %v209 = vld [vmem:[%s0 + $0x171] sm:$0xff]
  %v210 = vld [vmem:[%s0 + $0x1b1] sm:$0xff]
  %v211 = vld [vmem:[%s0 + $0x1b9] sm:$0xff]
  %v212 = vld [vmem:[%s0 + $0x1c9] sm:$0xff]
  %v213 = vld [vmem:[%s0 + $0x1d1] sm:$0xff]
  %v214 = vld [vmem:[%s0 + $0x1e1] sm:$0xff]
  %v215 = vld [vmem:[%s0 + $0x1e9] sm:$0xff]
  %v216 = vld [vmem:[%s0 + $0x1f9] sm:$0xff]
  %v217 = vld [vmem:[%s0 + $0x201] sm:$0xff]
  %v218 = vld [vmem:[%s0 + $0x211] sm:$0xff]
  %v219 = vld [vmem:[%s0 + $0x219] sm:$0xff]
  %v220 = vld [vmem:[%s0 + $0x229] sm:$0xff]
  %v221 = vld [vmem:[%s0 + $0x231] sm:$0xff]
  %v222 = vld [vmem:[%s0 + $0x241] sm:$0xff]
  %v223 = vld [vmem:[%s0 + $0x249] sm:$0xff]
  %v224 = vld [vmem:[%s0 + $0x259] sm:$0xff]
  %v225 = vld [vmem:[%s0 + $0x261] sm:$0xff]
  %v226 = vld [vmem:[%s0 + $0x271] sm:$0xff]
  %v227 = vld [vmem:[%s0 + $0x279] sm:$0xff]
  %v228 = vld [vmem:[%s0 + $0x289] sm:$0xff]
  %v229 = vld [vmem:[%s0 + $0x291] sm:$0xff]
  %v230 = vld [vmem:[%s0 + $0x2a1] sm:$0xff]
  %v231 = vld [vmem:[%s0 + $0x2a9] sm:$0xff]
  %v232 = vld [vmem:[%s0 + $0x2b9] sm:$0xff]
  %v233 = vld [vmem:[%s0 + $0x2c1] sm:$0xff]
  %v234 = vld [vmem:[%s0 + $0x2d1] sm:$0xff]
  %v235 = vld [vmem:[%s0 + $0x2d9] sm:$0xff]
  %v236 = vld [vmem:[%s0 + $0x2e9] sm:$0xff]
  %v237 = vld [vmem:[%s0 + $0x2f1] sm:$0xff]
  %v238 = vld [vmem:[%s0 + $0x301] sm:$0xff]
  %v239 = vld [vmem:[%s0 + $0x309] sm:$0xff]
  %v240 = vld [vmem:[%s0 + $0x319] sm:$0xff]
  %v241 = vld [vmem:[%s0 + $0x321] sm:$0xff]
  %v242 = vld [vmem:[%s0 + $0x2] sm:$0xff]
  %v243 = vld [vmem:[%s0 + $0xa] sm:$0xff]
  %v244 = vld [vmem:[%s0 + $0x1a] sm:$0xff]
  %v245 = vld [vmem:[%s0 + $0x22] sm:$0xff]
  %v246 = vld [vmem:[%s0 + $0x32] sm:$0xff]
  %v247 = vld [vmem:[%s0 + $0x3a] sm:$0xff]
  %v248 = vld [vmem:[%s0 + $0x4a] sm:$0xff]
  %v249 = vld [vmem:[%s0 + $0x52] sm:$0xff]
  %v250 = vld [vmem:[%s0 + $0x62] sm:$0xff]
  %v251 = vld [vmem:[%s0 + $0x6a] sm:$0xff]
  %v252 = vld [vmem:[%s0 + $0x7a] sm:$0xff]
  %v253 = vld [vmem:[%s0 + $0x82] sm:$0xff]
  %v254 = vld [vmem:[%s0 + $0x92] sm:$0xff]
  %v255 = vld [vmem:[%s0 + $0x9a] sm:$0xff]
  %v256 = vld [vmem:[%s0 + $0xaa] sm:$0xff]
  %v257 = vld [vmem:[%s0 + $0xb2] sm:$0xff]
  %v258 = vld [vmem:[%s0 + $0xc2] sm:$0xff]
  %v259 = vld [vmem:[%s0 + $0xca] sm:$0xff]
  %v260 = vld [vmem:[%s0 + $0xda] sm:$0xff]
  %v261 = vld [vmem:[%s0 + $0xe2] sm:$0xff]
  %v262 = vld [vmem:[%s0 + $0xf2] sm:$0xff]
  %v263 = vld [vmem:[%s0 + $0xfa] sm:$0xff]
  %v264 = vld [vmem:[%s0 + $0x10a] sm:$0xff]
  %v265 = vld [vmem:[%s0 + $0x112] sm:$0xff]
  %v266 = vld [vmem:[%s0 + $0x122] sm:$0xff]
  %v267 = vld [vmem:[%s0 + $0x12a] sm:$0xff]
  %v268 = vld [vmem:[%s0 + $0x13a] sm:$0xff]
  %v269 = vld [vmem:[%s0 + $0x142] sm:$0xff]
  %v270 = vld [vmem:[%s0 + $0x152] sm:$0xff]
  %v271 = vld [vmem:[%s0 + $0x15a] sm:$0xff]
  %v272 = vld [vmem:[%s0 + $0x16a] sm:$0xff]
  %v273 = vld [vmem:[%s0 + $0x172] sm:$0xff]
  %v274 = vld [vmem:[%s0 + $0x1b2] sm:$0xff]
  %v275 = vld [vmem:[%s0 + $0x1ba] sm:$0xff]
  %v276 = vld [vmem:[%s0 + $0x1ca] sm:$0xff]
  %v277 = vld [vmem:[%s0 + $0x1d2] sm:$0xff]
  %v278 = vld [vmem:[%s0 + $0x1e2] sm:$0xff]
  %v279 = vld [vmem:[%s0 + $0x1ea] sm:$0xff]
  %v280 = vld [vmem:[%s0 + $0x1fa] sm:$0xff]
  %v281 = vld [vmem:[%s0 + $0x202] sm:$0xff]
  %v282 = vld [vmem:[%s0 + $0x212] sm:$0xff]
  %v283 = vld [vmem:[%s0 + $0x21a] sm:$0xff]
  %v284 = vld [vmem:[%s0 + $0x22a] sm:$0xff]
  %v285 = vld [vmem:[%s0 + $0x232] sm:$0xff]
  %v286 = vld [vmem:[%s0 + $0x242] sm:$0xff]
  %v287 = vld [vmem:[%s0 + $0x24a] sm:$0xff]
  %v288 = vld [vmem:[%s0 + $0x25a] sm:$0xff]
  %v289 = vld [vmem:[%s0 + $0x262] sm:$0xff]
  %v290 = vld [vmem:[%s0 + $0x272] sm:$0xff]
  %v291 = vld [vmem:[%s0 + $0x27a] sm:$0xff]
  %v292 = vld [vmem:[%s0 + $0x28a] sm:$0xff]
  %v293 = vld [vmem:[%s0 + $0x292] sm:$0xff]
  %v294 = vld [vmem:[%s0 + $0x2a2] sm:$0xff]
  %v295 = vld [vmem:[%s0 + $0x2aa] sm:$0xff]
  %v296 = vld [vmem:[%s0 + $0x2ba] sm:$0xff]
  %v297 = vld [vmem:[%s0 + $0x2c2] sm:$0xff]
  %v298 = vld [vmem:[%s0 + $0x2d2] sm:$0xff]
  %v299 = vld [vmem:[%s0 + $0x2da] sm:$0xff]
  %v300 = vld [vmem:[%s0 + $0x2ea] sm:$0xff]
  %v301 = vld [vmem:[%s0 + $0x2f2] sm:$0xff]
  %v302 = vld [vmem:[%s0 + $0x302] sm:$0xff]
  %v303 = vld [vmem:[%s0 + $0x30a] sm:$0xff]
  %v304 = vld [vmem:[%s0 + $0x31a] sm:$0xff]
  %v305 = vld [vmem:[%s0 + $0x322] sm:$0xff]
  %s306 = scalar_lea.vmem %s0, 24
  %v307 = vld [vmem:[%s306] sm:$0xff]
  %v308 = vld [vmem:[%s306 + $0x8] sm:$0xff]
  %v309 = vld [vmem:[%s306 + $0x18] sm:$0xff]
  %v310 = vld [vmem:[%s306 + $0x20] sm:$0xff]
  %v311 = vld [vmem:[%s306 + $0x30] sm:$0xff]
  %v312 = vld [vmem:[%s306 + $0x38] sm:$0xff]
  %v313 = vld [vmem:[%s306 + $0x48] sm:$0xff]
  %v314 = vld [vmem:[%s306 + $0x50] sm:$0xff]
  %v315 = vld [vmem:[%s306 + $0x60] sm:$0xff]
  %v316 = vld [vmem:[%s306 + $0x68] sm:$0xff]
  %v317 = vld [vmem:[%s306 + $0x78] sm:$0xff]
  %v318 = vld [vmem:[%s306 + $0x80] sm:$0xff]
  %v319 = vld [vmem:[%s306 + $0x90] sm:$0xff]
  %v320 = vld [vmem:[%s306 + $0x98] sm:$0xff]
  %v321 = vld [vmem:[%s306 + $0xa8] sm:$0xff]
  %v322 = vld [vmem:[%s306 + $0xb0] sm:$0xff]
  %v323 = vld [vmem:[%s306 + $0xc0] sm:$0xff]
  %v324 = vld [vmem:[%s306 + $0xc8] sm:$0xff]
  %v325 = vld [vmem:[%s306 + $0xd8] sm:$0xff]
  %v326 = vld [vmem:[%s306 + $0xe0] sm:$0xff]
  %v327 = vld [vmem:[%s306 + $0xf0] sm:$0xff]
  %v328 = vld [vmem:[%s306 + $0xf8] sm:$0xff]
  %v329 = vld [vmem:[%s306 + $0x108] sm:$0xff]
  %v330 = vld [vmem:[%s306 + $0x110] sm:$0xff]
  %v331 = vld [vmem:[%s306 + $0x120] sm:$0xff]
  %v332 = vld [vmem:[%s306 + $0x128] sm:$0xff]
  %v333 = vld [vmem:[%s306 + $0x138] sm:$0xff]
  %v334 = vld [vmem:[%s306 + $0x140] sm:$0xff]
  %v335 = vld [vmem:[%s306 + $0x150] sm:$0xff]
  %v336 = vld [vmem:[%s306 + $0x158] sm:$0xff]
  %v337 = vld [vmem:[%s306 + $0x168] sm:$0xff]
  %v338 = vld [vmem:[%s306 + $0x170] sm:$0xff]
  %v339 = vld [vmem:[%s306 + $0x1b0] sm:$0xff]
  %v340 = vld [vmem:[%s306 + $0x1b8] sm:$0xff]
  %v341 = vld [vmem:[%s306 + $0x1c8] sm:$0xff]
  %v342 = vld [vmem:[%s306 + $0x1d0] sm:$0xff]
  %v343 = vld [vmem:[%s306 + $0x1e0] sm:$0xff]
  %v344 = vld [vmem:[%s306 + $0x1e8] sm:$0xff]
  %v345 = vld [vmem:[%s306 + $0x1f8] sm:$0xff]
  %v346 = vld [vmem:[%s306 + $0x200] sm:$0xff]
  %v347 = vld [vmem:[%s306 + $0x210] sm:$0xff]
  %v348 = vld [vmem:[%s306 + $0x218] sm:$0xff]
  %v349 = vld [vmem:[%s306 + $0x228] sm:$0xff]
  %v350 = vld [vmem:[%s306 + $0x230] sm:$0xff]
  %v351 = vld [vmem:[%s306 + $0x240] sm:$0xff]
  %v352 = vld [vmem:[%s306 + $0x248] sm:$0xff]
  %v353 = vld [vmem:[%s306 + $0x258] sm:$0xff]
  %v354 = vld [vmem:[%s306 + $0x260] sm:$0xff]
  %v355 = vld [vmem:[%s306 + $0x270] sm:$0xff]
  %v356 = vld [vmem:[%s306 + $0x278] sm:$0xff]
  %v357 = vld [vmem:[%s306 + $0x288] sm:$0xff]
  %v358 = vld [vmem:[%s306 + $0x290] sm:$0xff]
  %v359 = vld [vmem:[%s306 + $0x2a0] sm:$0xff]
  %v360 = vld [vmem:[%s306 + $0x2a8] sm:$0xff]
  %v361 = vld [vmem:[%s306 + $0x2b8] sm:$0xff]
  %v362 = vld [vmem:[%s306 + $0x2c0] sm:$0xff]
  %v363 = vld [vmem:[%s306 + $0x2d0] sm:$0xff]
  %v364 = vld [vmem:[%s306 + $0x2d8] sm:$0xff]
  %v365 = vld [vmem:[%s306 + $0x2e8] sm:$0xff]
  %v366 = vld [vmem:[%s306 + $0x2f0] sm:$0xff]
  %v367 = vld [vmem:[%s306 + $0x300] sm:$0xff]
  %v368 = vld [vmem:[%s306 + $0x308] sm:$0xff]
  %v369 = vld [vmem:[%s306 + $0x318] sm:$0xff]
  %v370 = vld [vmem:[%s306 + $0x320] sm:$0xff]
  %v371 = vld [vmem:[%s306 + $0x1] sm:$0xff]
  %v372 = vld [vmem:[%s306 + $0x9] sm:$0xff]
  %v373 = vld [vmem:[%s306 + $0x19] sm:$0xff]
  %v374 = vld [vmem:[%s306 + $0x21] sm:$0xff]
  %v375 = vld [vmem:[%s306 + $0x31] sm:$0xff]
  %v376 = vld [vmem:[%s306 + $0x39] sm:$0xff]
  %v377 = vld [vmem:[%s306 + $0x49] sm:$0xff]
  %v378 = vld [vmem:[%s306 + $0x51] sm:$0xff]
  %v379 = vld [vmem:[%s306 + $0x61] sm:$0xff]
  %v380 = vld [vmem:[%s306 + $0x69] sm:$0xff]
  %v381 = vld [vmem:[%s306 + $0x79] sm:$0xff]
  %v382 = vld [vmem:[%s306 + $0x81] sm:$0xff]
  %v383 = vld [vmem:[%s306 + $0x91] sm:$0xff]
  %v384 = vld [vmem:[%s306 + $0x99] sm:$0xff]
  %v385 = vld [vmem:[%s306 + $0xa9] sm:$0xff]
  %v386 = vld [vmem:[%s306 + $0xb1] sm:$0xff]
  %v387 = vld [vmem:[%s306 + $0xc1] sm:$0xff]
  %v388 = vld [vmem:[%s306 + $0xc9] sm:$0xff]
  %v389 = vld [vmem:[%s306 + $0xd9] sm:$0xff]
  %v390 = vld [vmem:[%s306 + $0xe1] sm:$0xff]
  %v391 = vld [vmem:[%s306 + $0xf1] sm:$0xff]
  %v392 = vld [vmem:[%s306 + $0xf9] sm:$0xff]
  %v393 = vld [vmem:[%s306 + $0x109] sm:$0xff]
  %v394 = vld [vmem:[%s306 + $0x111] sm:$0xff]
  %v395 = vld [vmem:[%s306 + $0x121] sm:$0xff]
  %v396 = vld [vmem:[%s306 + $0x129] sm:$0xff]
  %v397 = vld [vmem:[%s306 + $0x139] sm:$0xff]
  %v398 = vld [vmem:[%s306 + $0x141] sm:$0xff]
  %v399 = vld [vmem:[%s306 + $0x151] sm:$0xff]
  %v400 = vld [vmem:[%s306 + $0x159] sm:$0xff]
  %v401 = vld [vmem:[%s306 + $0x169] sm:$0xff]
  %v402 = vld [vmem:[%s306 + $0x171] sm:$0xff]
  %v403 = vld [vmem:[%s306 + $0x1b1] sm:$0xff]
  %v404 = vld [vmem:[%s306 + $0x1b9] sm:$0xff]
  %v405 = vld [vmem:[%s306 + $0x1c9] sm:$0xff]
  %v406 = vld [vmem:[%s306 + $0x1d1] sm:$0xff]
  %v407 = vld [vmem:[%s306 + $0x1e1] sm:$0xff]
  %v408 = vld [vmem:[%s306 + $0x1e9] sm:$0xff]
  %v409 = vld [vmem:[%s306 + $0x1f9] sm:$0xff]
  %v410 = vld [vmem:[%s306 + $0x201] sm:$0xff]
  %v411 = vld [vmem:[%s306 + $0x211] sm:$0xff]
  %v412 = vld [vmem:[%s306 + $0x219] sm:$0xff]
  %v413 = vld [vmem:[%s306 + $0x229] sm:$0xff]
  %v414 = vld [vmem:[%s306 + $0x231] sm:$0xff]
  %v415 = vld [vmem:[%s306 + $0x241] sm:$0xff]
  %v416 = vld [vmem:[%s306 + $0x249] sm:$0xff]
  %v417 = vld [vmem:[%s306 + $0x259] sm:$0xff]
  %v418 = vld [vmem:[%s306 + $0x261] sm:$0xff]
  %v419 = vld [vmem:[%s306 + $0x271] sm:$0xff]
  %v420 = vld [vmem:[%s306 + $0x279] sm:$0xff]
  %v421 = vld [vmem:[%s306 + $0x289] sm:$0xff]
  %v422 = vld [vmem:[%s306 + $0x291] sm:$0xff]
  %v423 = vld [vmem:[%s306 + $0x2a1] sm:$0xff]
  %v424 = vld [vmem:[%s306 + $0x2a9] sm:$0xff]
  %v425 = vld [vmem:[%s306 + $0x2b9] sm:$0xff]
  %v426 = vld [vmem:[%s306 + $0x2c1] sm:$0xff]
  %v427 = vld [vmem:[%s306 + $0x2d1] sm:$0xff]
  %v428 = vld [vmem:[%s306 + $0x2d9] sm:$0xff]
  %v429 = vld [vmem:[%s306 + $0x2e9] sm:$0xff]
  %v430 = vld [vmem:[%s306 + $0x2f1] sm:$0xff]
  %v431 = vld [vmem:[%s306 + $0x301] sm:$0xff]
  %v432 = vld [vmem:[%s306 + $0x309] sm:$0xff]
  %v433 = vld [vmem:[%s306 + $0x319] sm:$0xff]
  %v434 = vld [vmem:[%s306 + $0x321] sm:$0xff]
  %v435 = vld [vmem:[%s306 + $0x2] sm:$0xff]
  %v436 = vld [vmem:[%s306 + $0xa] sm:$0xff]
  %v437 = vld [vmem:[%s306 + $0x1a] sm:$0xff]
  %v438 = vld [vmem:[%s306 + $0x22] sm:$0xff]
  %v439 = vld [vmem:[%s306 + $0x32] sm:$0xff]
  %v440 = vld [vmem:[%s306 + $0x3a] sm:$0xff]
  %v441 = vld [vmem:[%s306 + $0x4a] sm:$0xff]
  %v442 = vld [vmem:[%s306 + $0x52] sm:$0xff]
  %v443 = vld [vmem:[%s306 + $0x62] sm:$0xff]
  %v444 = vld [vmem:[%s306 + $0x6a] sm:$0xff]
  %v445 = vld [vmem:[%s306 + $0x7a] sm:$0xff]
  %v446 = vld [vmem:[%s306 + $0x82] sm:$0xff]
  %v447 = vld [vmem:[%s306 + $0x92] sm:$0xff]
  %v448 = vld [vmem:[%s306 + $0x9a] sm:$0xff]
  %v449 = vld [vmem:[%s306 + $0xaa] sm:$0xff]
  %v450 = vld [vmem:[%s306 + $0xb2] sm:$0xff]
  %v451 = vld [vmem:[%s306 + $0xc2] sm:$0xff]
  %v452 = vld [vmem:[%s306 + $0xca] sm:$0xff]
  %v453 = vld [vmem:[%s306 + $0xda] sm:$0xff]
  %v454 = vld [vmem:[%s306 + $0xe2] sm:$0xff]
  %v455 = vld [vmem:[%s306 + $0xf2] sm:$0xff]
  %v456 = vld [vmem:[%s306 + $0xfa] sm:$0xff]
  %v457 = vld [vmem:[%s306 + $0x10a] sm:$0xff]
  %v458 = vld [vmem:[%s306 + $0x112] sm:$0xff]
  %v459 = vld [vmem:[%s306 + $0x122] sm:$0xff]
  %v460 = vld [vmem:[%s306 + $0x12a] sm:$0xff]
  %v461 = vld [vmem:[%s306 + $0x13a] sm:$0xff]
  %v462 = vld [vmem:[%s306 + $0x142] sm:$0xff]
  %v463 = vld [vmem:[%s306 + $0x152] sm:$0xff]
  %v464 = vld [vmem:[%s306 + $0x15a] sm:$0xff]
  %v465 = vld [vmem:[%s306 + $0x16a] sm:$0xff]
  %v466 = vld [vmem:[%s306 + $0x172] sm:$0xff]
  %v467 = vld [vmem:[%s306 + $0x1b2] sm:$0xff]
  %v468 = vld [vmem:[%s306 + $0x1ba] sm:$0xff]
  %v469 = vld [vmem:[%s306 + $0x1ca] sm:$0xff]
  %v470 = vld [vmem:[%s306 + $0x1d2] sm:$0xff]
  %v471 = vld [vmem:[%s306 + $0x1e2] sm:$0xff]
  %v472 = vld [vmem:[%s306 + $0x1ea] sm:$0xff]
  %v473 = vld [vmem:[%s306 + $0x1fa] sm:$0xff]
  %v474 = vld [vmem:[%s306 + $0x202] sm:$0xff]
  %v475 = vld [vmem:[%s306 + $0x212] sm:$0xff]
  %v476 = vld [vmem:[%s306 + $0x21a] sm:$0xff]
  %v477 = vld [vmem:[%s306 + $0x22a] sm:$0xff]
  %v478 = vld [vmem:[%s306 + $0x232] sm:$0xff]
  %v479 = vld [vmem:[%s306 + $0x242] sm:$0xff]
  %v480 = vld [vmem:[%s306 + $0x24a] sm:$0xff]
  %v481 = vld [vmem:[%s306 + $0x25a] sm:$0xff]
  %v482 = vld [vmem:[%s306 + $0x262] sm:$0xff]
  %v483 = vld [vmem:[%s306 + $0x272] sm:$0xff]
  %v484 = vld [vmem:[%s306 + $0x27a] sm:$0xff]
  %v485 = vld [vmem:[%s306 + $0x28a] sm:$0xff]
  %v486 = vld [vmem:[%s306 + $0x292] sm:$0xff]
  %v487 = vld [vmem:[%s306 + $0x2a2] sm:$0xff]
  %v488 = vld [vmem:[%s306 + $0x2aa] sm:$0xff]
  %v489 = vld [vmem:[%s306 + $0x2ba] sm:$0xff]
  %v490 = vld [vmem:[%s306 + $0x2c2] sm:$0xff]
  %v491 = vld [vmem:[%s306 + $0x2d2] sm:$0xff]
  %v492 = vld [vmem:[%s306 + $0x2da] sm:$0xff]
  %v493 = vld [vmem:[%s306 + $0x2ea] sm:$0xff]
  %v494 = vld [vmem:[%s306 + $0x2f2] sm:$0xff]
  %v495 = vld [vmem:[%s306 + $0x302] sm:$0xff]
  %v496 = vld [vmem:[%s306 + $0x30a] sm:$0xff]
  %v497 = vld [vmem:[%s306 + $0x31a] sm:$0xff]
  %v498 = vld [vmem:[%s306 + $0x322] sm:$0xff]
  %s499 = scalar_lea.vmem %s0, 48
  %v500 = vld [vmem:[%s499] sm:$0xff]
  %v501 = vld [vmem:[%s499 + $0x8] sm:$0xff]
  %v502 = vld [vmem:[%s499 + $0x18] sm:$0xff]
  %v503 = vld [vmem:[%s499 + $0x20] sm:$0xff]
  %v504 = vld [vmem:[%s499 + $0x30] sm:$0xff]
  %v505 = vld [vmem:[%s499 + $0x38] sm:$0xff]
  %v506 = vld [vmem:[%s499 + $0x48] sm:$0xff]
  %v507 = vld [vmem:[%s499 + $0x50] sm:$0xff]
  %v508 = vld [vmem:[%s499 + $0x60] sm:$0xff]
  %v509 = vld [vmem:[%s499 + $0x68] sm:$0xff]
  %v510 = vld [vmem:[%s499 + $0x78] sm:$0xff]
  %v511 = vld [vmem:[%s499 + $0x80] sm:$0xff]
  %v512 = vld [vmem:[%s499 + $0x90] sm:$0xff]
  %v513 = vld [vmem:[%s499 + $0x98] sm:$0xff]
  %v514 = vld [vmem:[%s499 + $0xa8] sm:$0xff]
  %v515 = vld [vmem:[%s499 + $0xb0] sm:$0xff]
  %v516 = vld [vmem:[%s499 + $0xc0] sm:$0xff]
  %v517 = vld [vmem:[%s499 + $0xc8] sm:$0xff]
  %v518 = vld [vmem:[%s499 + $0xd8] sm:$0xff]
  %v519 = vld [vmem:[%s499 + $0xe0] sm:$0xff]
  %v520 = vld [vmem:[%s499 + $0xf0] sm:$0xff]
  %v521 = vld [vmem:[%s499 + $0xf8] sm:$0xff]
  %v522 = vld [vmem:[%s499 + $0x108] sm:$0xff]
  %v523 = vld [vmem:[%s499 + $0x110] sm:$0xff]
  %v524 = vld [vmem:[%s499 + $0x120] sm:$0xff]
  %v525 = vld [vmem:[%s499 + $0x128] sm:$0xff]
  %v526 = vld [vmem:[%s499 + $0x138] sm:$0xff]
  %v527 = vld [vmem:[%s499 + $0x140] sm:$0xff]
  %v528 = vld [vmem:[%s499 + $0x150] sm:$0xff]
  %v529 = vld [vmem:[%s499 + $0x158] sm:$0xff]
  %v530 = vld [vmem:[%s499 + $0x168] sm:$0xff]
  %v531 = vld [vmem:[%s499 + $0x170] sm:$0xff]
  %v532 = vld [vmem:[%s499 + $0x1b0] sm:$0xff]
  %v533 = vld [vmem:[%s499 + $0x1b8] sm:$0xff]
  %v534 = vld [vmem:[%s499 + $0x1c8] sm:$0xff]
  %v535 = vld [vmem:[%s499 + $0x1d0] sm:$0xff]
  %v536 = vld [vmem:[%s499 + $0x1e0] sm:$0xff]
  %v537 = vld [vmem:[%s499 + $0x1e8] sm:$0xff]
  %v538 = vld [vmem:[%s499 + $0x1f8] sm:$0xff]
  %v539 = vld [vmem:[%s499 + $0x200] sm:$0xff]
  %v540 = vld [vmem:[%s499 + $0x210] sm:$0xff]
  %v541 = vld [vmem:[%s499 + $0x218] sm:$0xff]
  %v542 = vld [vmem:[%s499 + $0x228] sm:$0xff]
  %v543 = vld [vmem:[%s499 + $0x230] sm:$0xff]
  %v544 = vld [vmem:[%s499 + $0x240] sm:$0xff]
  %v545 = vld [vmem:[%s499 + $0x248] sm:$0xff]
  %v546 = vld [vmem:[%s499 + $0x258] sm:$0xff]
  %v547 = vld [vmem:[%s499 + $0x260] sm:$0xff]
  %v548 = vld [vmem:[%s499 + $0x270] sm:$0xff]
  %v549 = vld [vmem:[%s499 + $0x278] sm:$0xff]
  %v550 = vld [vmem:[%s499 + $0x288] sm:$0xff]
  %v551 = vld [vmem:[%s499 + $0x290] sm:$0xff]
  %v552 = vld [vmem:[%s499 + $0x2a0] sm:$0xff]
  %v553 = vld [vmem:[%s499 + $0x2a8] sm:$0xff]
  %v554 = vld [vmem:[%s499 + $0x2b8] sm:$0xff]
  %v555 = vld [vmem:[%s499 + $0x2c0] sm:$0xff]
  %v556 = vld [vmem:[%s499 + $0x2d0] sm:$0xff]
  %v557 = vld [vmem:[%s499 + $0x2d8] sm:$0xff]
  %v558 = vld [vmem:[%s499 + $0x2e8] sm:$0xff]
  %v559 = vld [vmem:[%s499 + $0x2f0] sm:$0xff]
  %v560 = vld [vmem:[%s499 + $0x300] sm:$0xff]
  %v561 = vld [vmem:[%s499 + $0x308] sm:$0xff]
  %v562 = vld [vmem:[%s499 + $0x318] sm:$0xff]
  %v563 = vld [vmem:[%s499 + $0x320] sm:$0xff]
  %v564 = vld [vmem:[%s499 + $0x1] sm:$0xff]
  %v565 = vld [vmem:[%s499 + $0x9] sm:$0xff]
  %v566 = vld [vmem:[%s499 + $0x19] sm:$0xff]
  %v567 = vld [vmem:[%s499 + $0x21] sm:$0xff]
  %v568 = vld [vmem:[%s499 + $0x31] sm:$0xff]
  %v569 = vld [vmem:[%s499 + $0x39] sm:$0xff]
  %v570 = vld [vmem:[%s499 + $0x49] sm:$0xff]
  %v571 = vld [vmem:[%s499 + $0x51] sm:$0xff]
  %v572 = vld [vmem:[%s499 + $0x61] sm:$0xff]
  %v573 = vld [vmem:[%s499 + $0x69] sm:$0xff]
  %v574 = vld [vmem:[%s499 + $0x79] sm:$0xff]
  %v575 = vld [vmem:[%s499 + $0x81] sm:$0xff]
  %v576 = vld [vmem:[%s499 + $0x91] sm:$0xff]
  %v577 = vld [vmem:[%s499 + $0x99] sm:$0xff]
  %v578 = vld [vmem:[%s499 + $0xa9] sm:$0xff]
  %v579 = vld [vmem:[%s499 + $0xb1] sm:$0xff]
  %v580 = vld [vmem:[%s499 + $0xc1] sm:$0xff]
  %v581 = vld [vmem:[%s499 + $0xc9] sm:$0xff]
  %v582 = vld [vmem:[%s499 + $0xd9] sm:$0xff]
  %v583 = vld [vmem:[%s499 + $0xe1] sm:$0xff]
  %v584 = vld [vmem:[%s499 + $0xf1] sm:$0xff]
  %v585 = vld [vmem:[%s499 + $0xf9] sm:$0xff]
  %v586 = vld [vmem:[%s499 + $0x109] sm:$0xff]
  %v587 = vld [vmem:[%s499 + $0x111] sm:$0xff]
  %v588 = vld [vmem:[%s499 + $0x121] sm:$0xff]
  %v589 = vld [vmem:[%s499 + $0x129] sm:$0xff]
  %v590 = vld [vmem:[%s499 + $0x139] sm:$0xff]
  %v591 = vld [vmem:[%s499 + $0x141] sm:$0xff]
  %v592 = vld [vmem:[%s499 + $0x151] sm:$0xff]
  %v593 = vld [vmem:[%s499 + $0x159] sm:$0xff]
  %v594 = vld [vmem:[%s499 + $0x169] sm:$0xff]
  %v595 = vld [vmem:[%s499 + $0x171] sm:$0xff]
  %v596 = vld [vmem:[%s499 + $0x1b1] sm:$0xff]
  %v597 = vld [vmem:[%s499 + $0x1b9] sm:$0xff]
  %v598 = vld [vmem:[%s499 + $0x1c9] sm:$0xff]
  %v599 = vld [vmem:[%s499 + $0x1d1] sm:$0xff]
  %v600 = vld [vmem:[%s499 + $0x1e1] sm:$0xff]
  %v601 = vld [vmem:[%s499 + $0x1e9] sm:$0xff]
  %v602 = vld [vmem:[%s499 + $0x1f9] sm:$0xff]
  %v603 = vld [vmem:[%s499 + $0x201] sm:$0xff]
  %v604 = vld [vmem:[%s499 + $0x211] sm:$0xff]
  %v605 = vld [vmem:[%s499 + $0x219] sm:$0xff]
  %v606 = vld [vmem:[%s499 + $0x229] sm:$0xff]
  %v607 = vld [vmem:[%s499 + $0x231] sm:$0xff]
  %v608 = vld [vmem:[%s499 + $0x241] sm:$0xff]
  %v609 = vld [vmem:[%s499 + $0x249] sm:$0xff]
  %v610 = vld [vmem:[%s499 + $0x259] sm:$0xff]
  %v611 = vld [vmem:[%s499 + $0x261] sm:$0xff]
  %v612 = vld [vmem:[%s499 + $0x271] sm:$0xff]
  %v613 = vld [vmem:[%s499 + $0x279] sm:$0xff]
  %v614 = vld [vmem:[%s499 + $0x289] sm:$0xff]
  %v615 = vld [vmem:[%s499 + $0x291] sm:$0xff]
  %v616 = vld [vmem:[%s499 + $0x2a1] sm:$0xff]
  %v617 = vld [vmem:[%s499 + $0x2a9] sm:$0xff]
  %v618 = vld [vmem:[%s499 + $0x2b9] sm:$0xff]
  %v619 = vld [vmem:[%s499 + $0x2c1] sm:$0xff]
  %v620 = vld [vmem:[%s499 + $0x2d1] sm:$0xff]
  %v621 = vld [vmem:[%s499 + $0x2d9] sm:$0xff]
  %v622 = vld [vmem:[%s499 + $0x2e9] sm:$0xff]
  %v623 = vld [vmem:[%s499 + $0x2f1] sm:$0xff]
  %v624 = vld [vmem:[%s499 + $0x301] sm:$0xff]
  %v625 = vld [vmem:[%s499 + $0x309] sm:$0xff]
  %v626 = vld [vmem:[%s499 + $0x319] sm:$0xff]
  %v627 = vld [vmem:[%s499 + $0x321] sm:$0xff]
  %v628 = vld [vmem:[%s499 + $0x2] sm:$0xff]
  %v629 = vld [vmem:[%s499 + $0xa] sm:$0xff]
  %v630 = vld [vmem:[%s499 + $0x1a] sm:$0xff]
  %v631 = vld [vmem:[%s499 + $0x22] sm:$0xff]
  %v632 = vld [vmem:[%s499 + $0x32] sm:$0xff]
  %v633 = vld [vmem:[%s499 + $0x3a] sm:$0xff]
  %v634 = vld [vmem:[%s499 + $0x4a] sm:$0xff]
  %v635 = vld [vmem:[%s499 + $0x52] sm:$0xff]
  %v636 = vld [vmem:[%s499 + $0x62] sm:$0xff]
  %v637 = vld [vmem:[%s499 + $0x6a] sm:$0xff]
  %v638 = vld [vmem:[%s499 + $0x7a] sm:$0xff]
  %v639 = vld [vmem:[%s499 + $0x82] sm:$0xff]
  %v640 = vld [vmem:[%s499 + $0x92] sm:$0xff]
  %v641 = vld [vmem:[%s499 + $0x9a] sm:$0xff]
  %v642 = vld [vmem:[%s499 + $0xaa] sm:$0xff]
  %v643 = vld [vmem:[%s499 + $0xb2] sm:$0xff]
  %v644 = vld [vmem:[%s499 + $0xc2] sm:$0xff]
  %v645 = vld [vmem:[%s499 + $0xca] sm:$0xff]
  %v646 = vld [vmem:[%s499 + $0xda] sm:$0xff]
  %v647 = vld [vmem:[%s499 + $0xe2] sm:$0xff]
  %v648 = vld [vmem:[%s499 + $0xf2] sm:$0xff]
  %v649 = vld [vmem:[%s499 + $0xfa] sm:$0xff]
  %v650 = vld [vmem:[%s499 + $0x10a] sm:$0xff]
  %v651 = vld [vmem:[%s499 + $0x112] sm:$0xff]
  %v652 = vld [vmem:[%s499 + $0x122] sm:$0xff]
  %v653 = vld [vmem:[%s499 + $0x12a] sm:$0xff]
  %v654 = vld [vmem:[%s499 + $0x13a] sm:$0xff]
  %v655 = vld [vmem:[%s499 + $0x142] sm:$0xff]
  %v656 = vld [vmem:[%s499 + $0x152] sm:$0xff]
  %v657 = vld [vmem:[%s499 + $0x15a] sm:$0xff]
  %v658 = vld [vmem:[%s499 + $0x16a] sm:$0xff]
  %v659 = vld [vmem:[%s499 + $0x172] sm:$0xff]
  %v660 = vld [vmem:[%s499 + $0x1b2] sm:$0xff]
  %v661 = vld [vmem:[%s499 + $0x1ba] sm:$0xff]
  %v662 = vld [vmem:[%s499 + $0x1ca] sm:$0xff]
  %v663 = vld [vmem:[%s499 + $0x1d2] sm:$0xff]
  %v664 = vld [vmem:[%s499 + $0x1e2] sm:$0xff]
  %v665 = vld [vmem:[%s499 + $0x1ea] sm:$0xff]
  %v666 = vld [vmem:[%s499 + $0x1fa] sm:$0xff]
  %v667 = vld [vmem:[%s499 + $0x202] sm:$0xff]
  %v668 = vld [vmem:[%s499 + $0x212] sm:$0xff]
  %v669 = vld [vmem:[%s499 + $0x21a] sm:$0xff]
  %v670 = vld [vmem:[%s499 + $0x22a] sm:$0xff]
  %v671 = vld [vmem:[%s499 + $0x232] sm:$0xff]
  %v672 = vld [vmem:[%s499 + $0x242] sm:$0xff]
  %v673 = vld [vmem:[%s499 + $0x24a] sm:$0xff]
  %v674 = vld [vmem:[%s499 + $0x25a] sm:$0xff]
  %v675 = vld [vmem:[%s499 + $0x262] sm:$0xff]
  %v676 = vld [vmem:[%s499 + $0x272] sm:$0xff]
  %v677 = vld [vmem:[%s499 + $0x27a] sm:$0xff]
  %v678 = vld [vmem:[%s499 + $0x28a] sm:$0xff]
  %v679 = vld [vmem:[%s499 + $0x292] sm:$0xff]
  %v680 = vld [vmem:[%s499 + $0x2a2] sm:$0xff]
  %v681 = vld [vmem:[%s499 + $0x2aa] sm:$0xff]
  %v682 = vld [vmem:[%s499 + $0x2ba] sm:$0xff]
  %v683 = vld [vmem:[%s499 + $0x2c2] sm:$0xff]
  %v684 = vld [vmem:[%s499 + $0x2d2] sm:$0xff]
  %v685 = vld [vmem:[%s499 + $0x2da] sm:$0xff]
  %v686 = vld [vmem:[%s499 + $0x2ea] sm:$0xff]
  %v687 = vld [vmem:[%s499 + $0x2f2] sm:$0xff]
  %v688 = vld [vmem:[%s499 + $0x302] sm:$0xff]
  %v689 = vld [vmem:[%s499 + $0x30a] sm:$0xff]
  %v690 = vld [vmem:[%s499 + $0x31a] sm:$0xff]
  %v691 = vld [vmem:[%s499 + $0x322] sm:$0xff]
  %756 = vrot.lane.b32.xlu0 %v178, 4
  %v757 = vpop.permute.xlu0 %756
  %758 = vrot.lane.b32.xlu0 %v179, 4
  %v759 = vpop.permute.xlu0 %758
  %760 = vrot.lane.b32.xlu0 %v180, 4
  %v761 = vpop.permute.xlu0 %760
  %762 = vrot.lane.b32.xlu0 %v181, 4
  %v763 = vpop.permute.xlu0 %762
  %764 = vrot.lane.b32.xlu0 %v182, 4
  %v765 = vpop.permute.xlu0 %764
  %766 = vrot.lane.b32.xlu0 %v183, 4
  %v767 = vpop.permute.xlu0 %766
  %768 = vrot.lane.b32.xlu0 %v184, 4
  %v769 = vpop.permute.xlu0 %768
  %770 = vrot.lane.b32.xlu0 %v185, 4
  %v771 = vpop.permute.xlu0 %770
  %772 = vrot.lane.b32.xlu0 %v186, 4
  %v773 = vpop.permute.xlu0 %772
  %774 = vrot.lane.b32.xlu0 %v187, 4
  %v775 = vpop.permute.xlu0 %774
  %776 = vrot.lane.b32.xlu0 %v188, 4
  %v777 = vpop.permute.xlu0 %776
  %778 = vrot.lane.b32.xlu0 %v189, 4
  %v779 = vpop.permute.xlu0 %778
  %780 = vrot.lane.b32.xlu0 %v190, 4
  %v781 = vpop.permute.xlu0 %780
  %782 = vrot.lane.b32.xlu0 %v191, 4
  %v783 = vpop.permute.xlu0 %782
  %784 = vrot.lane.b32.xlu0 %v192, 4
  %v785 = vpop.permute.xlu0 %784
  %786 = vrot.lane.b32.xlu0 %v193, 4
  %v787 = vpop.permute.xlu0 %786
  %788 = vrot.lane.b32.xlu0 %v194, 4
  %v789 = vpop.permute.xlu0 %788
  %790 = vrot.lane.b32.xlu0 %v195, 4
  %v791 = vpop.permute.xlu0 %790
  %792 = vrot.lane.b32.xlu0 %v196, 4
  %v793 = vpop.permute.xlu0 %792
  %794 = vrot.lane.b32.xlu0 %v197, 4
  %v795 = vpop.permute.xlu0 %794
  %796 = vrot.lane.b32.xlu0 %v198, 4
  %v797 = vpop.permute.xlu0 %796
  %798 = vrot.lane.b32.xlu0 %v199, 4
  %v799 = vpop.permute.xlu0 %798
  %800 = vrot.lane.b32.xlu0 %v200, 4
  %v801 = vpop.permute.xlu0 %800
  %802 = vrot.lane.b32.xlu0 %v201, 4
  %v803 = vpop.permute.xlu0 %802
  %804 = vrot.lane.b32.xlu0 %v202, 4
  %v805 = vpop.permute.xlu0 %804
  %806 = vrot.lane.b32.xlu0 %v203, 4
  %v807 = vpop.permute.xlu0 %806
  %808 = vrot.lane.b32.xlu0 %v204, 4
  %v809 = vpop.permute.xlu0 %808
  %810 = vrot.lane.b32.xlu0 %v205, 4
  %v811 = vpop.permute.xlu0 %810
  %812 = vrot.lane.b32.xlu0 %v206, 4
  %v813 = vpop.permute.xlu0 %812
  %814 = vrot.lane.b32.xlu0 %v207, 4
  %v815 = vpop.permute.xlu0 %814
  %816 = vrot.lane.b32.xlu0 %v208, 4
  %v817 = vpop.permute.xlu0 %816
  %818 = vrot.lane.b32.xlu0 %v209, 4
  %v819 = vpop.permute.xlu0 %818
  %820 = vrot.lane.b32.xlu0 %v210, 4
  %v821 = vpop.permute.xlu0 %820
  %822 = vrot.lane.b32.xlu0 %v211, 4
  %v823 = vpop.permute.xlu0 %822
  %824 = vrot.lane.b32.xlu0 %v212, 4
  %v825 = vpop.permute.xlu0 %824
  %826 = vrot.lane.b32.xlu0 %v213, 4
  %v827 = vpop.permute.xlu0 %826
  %828 = vrot.lane.b32.xlu0 %v214, 4
  %v829 = vpop.permute.xlu0 %828
  %830 = vrot.lane.b32.xlu0 %v215, 4
  %v831 = vpop.permute.xlu0 %830
  %832 = vrot.lane.b32.xlu0 %v216, 4
  %v833 = vpop.permute.xlu0 %832
  %834 = vrot.lane.b32.xlu0 %v217, 4
  %v835 = vpop.permute.xlu0 %834
  %836 = vrot.lane.b32.xlu0 %v218, 4
  %v837 = vpop.permute.xlu0 %836
  %838 = vrot.lane.b32.xlu0 %v219, 4
  %v839 = vpop.permute.xlu0 %838
  %840 = vrot.lane.b32.xlu0 %v220, 4
  %v841 = vpop.permute.xlu0 %840
  %842 = vrot.lane.b32.xlu0 %v221, 4
  %v843 = vpop.permute.xlu0 %842
  %844 = vrot.lane.b32.xlu0 %v222, 4
  %v845 = vpop.permute.xlu0 %844
  %846 = vrot.lane.b32.xlu0 %v223, 4
  %v847 = vpop.permute.xlu0 %846
  %848 = vrot.lane.b32.xlu0 %v224, 4
  %v849 = vpop.permute.xlu0 %848
  %850 = vrot.lane.b32.xlu0 %v225, 4
  %v851 = vpop.permute.xlu0 %850
  %852 = vrot.lane.b32.xlu0 %v226, 4
  %v853 = vpop.permute.xlu0 %852
  %854 = vrot.lane.b32.xlu0 %v227, 4
  %v855 = vpop.permute.xlu0 %854
  %856 = vrot.lane.b32.xlu0 %v228, 4
  %v857 = vpop.permute.xlu0 %856
  %858 = vrot.lane.b32.xlu0 %v229, 4
  %v859 = vpop.permute.xlu0 %858
  %860 = vrot.lane.b32.xlu0 %v230, 4
  %v861 = vpop.permute.xlu0 %860
  %862 = vrot.lane.b32.xlu0 %v231, 4
  %v863 = vpop.permute.xlu0 %862
  %864 = vrot.lane.b32.xlu0 %v232, 4
  %v865 = vpop.permute.xlu0 %864
  %866 = vrot.lane.b32.xlu0 %v233, 4
  %v867 = vpop.permute.xlu0 %866
  %868 = vrot.lane.b32.xlu0 %v234, 4
  %v869 = vpop.permute.xlu0 %868
  %870 = vrot.lane.b32.xlu0 %v235, 4
  %v871 = vpop.permute.xlu0 %870
  %872 = vrot.lane.b32.xlu0 %v236, 4
  %v873 = vpop.permute.xlu0 %872
  %874 = vrot.lane.b32.xlu0 %v237, 4
  %v875 = vpop.permute.xlu0 %874
  %876 = vrot.lane.b32.xlu0 %v238, 4
  %v877 = vpop.permute.xlu0 %876
  %878 = vrot.lane.b32.xlu0 %v239, 4
  %v879 = vpop.permute.xlu0 %878
  %880 = vrot.lane.b32.xlu0 %v240, 4
  %v881 = vpop.permute.xlu0 %880
  %882 = vrot.lane.b32.xlu0 %v241, 4
  %v883 = vpop.permute.xlu0 %882
  %1012 = vrot.lane.b32.xlu0 %v242, 8
  %v1013 = vpop.permute.xlu0 %1012
  %1014 = vrot.lane.b32.xlu0 %v243, 8
  %v1015 = vpop.permute.xlu0 %1014
  %1016 = vrot.lane.b32.xlu0 %v244, 8
  %v1017 = vpop.permute.xlu0 %1016
  %1018 = vrot.lane.b32.xlu0 %v245, 8
  %v1019 = vpop.permute.xlu0 %1018
  %1020 = vrot.lane.b32.xlu0 %v246, 8
  %v1021 = vpop.permute.xlu0 %1020
  %1022 = vrot.lane.b32.xlu0 %v247, 8
  %v1023 = vpop.permute.xlu0 %1022
  %1024 = vrot.lane.b32.xlu0 %v248, 8
  %v1025 = vpop.permute.xlu0 %1024
  %1026 = vrot.lane.b32.xlu0 %v249, 8
  %v1027 = vpop.permute.xlu0 %1026
  %1028 = vrot.lane.b32.xlu0 %v250, 8
  %v1029 = vpop.permute.xlu0 %1028
  %1030 = vrot.lane.b32.xlu0 %v251, 8
  %v1031 = vpop.permute.xlu0 %1030
  %1032 = vrot.lane.b32.xlu0 %v252, 8
  %v1033 = vpop.permute.xlu0 %1032
  %1034 = vrot.lane.b32.xlu0 %v253, 8
  %v1035 = vpop.permute.xlu0 %1034
  %1036 = vrot.lane.b32.xlu0 %v254, 8
  %v1037 = vpop.permute.xlu0 %1036
  %1038 = vrot.lane.b32.xlu0 %v255, 8
  %v1039 = vpop.permute.xlu0 %1038
  %1040 = vrot.lane.b32.xlu0 %v256, 8
  %v1041 = vpop.permute.xlu0 %1040
  %1042 = vrot.lane.b32.xlu0 %v257, 8
  %v1043 = vpop.permute.xlu0 %1042
  %1044 = vrot.lane.b32.xlu0 %v258, 8
  %v1045 = vpop.permute.xlu0 %1044
  %1046 = vrot.lane.b32.xlu0 %v259, 8
  %v1047 = vpop.permute.xlu0 %1046
  %1048 = vrot.lane.b32.xlu0 %v260, 8
  %v1049 = vpop.permute.xlu0 %1048
  %1050 = vrot.lane.b32.xlu0 %v261, 8
  %v1051 = vpop.permute.xlu0 %1050
  %1052 = vrot.lane.b32.xlu0 %v262, 8
  %v1053 = vpop.permute.xlu0 %1052
  %1054 = vrot.lane.b32.xlu0 %v263, 8
  %v1055 = vpop.permute.xlu0 %1054
  %1056 = vrot.lane.b32.xlu0 %v264, 8
  %v1057 = vpop.permute.xlu0 %1056
  %1058 = vrot.lane.b32.xlu0 %v265, 8
  %v1059 = vpop.permute.xlu0 %1058
  %1060 = vrot.lane.b32.xlu0 %v266, 8
  %v1061 = vpop.permute.xlu0 %1060
  %1062 = vrot.lane.b32.xlu0 %v267, 8
  %v1063 = vpop.permute.xlu0 %1062
  %1064 = vrot.lane.b32.xlu0 %v268, 8
  %v1065 = vpop.permute.xlu0 %1064
  %1066 = vrot.lane.b32.xlu0 %v269, 8
  %v1067 = vpop.permute.xlu0 %1066
  %1068 = vrot.lane.b32.xlu0 %v270, 8
  %v1069 = vpop.permute.xlu0 %1068
  %1070 = vrot.lane.b32.xlu0 %v271, 8
  %v1071 = vpop.permute.xlu0 %1070
  %1072 = vrot.lane.b32.xlu0 %v272, 8
  %v1073 = vpop.permute.xlu0 %1072
  %1074 = vrot.lane.b32.xlu0 %v273, 8
  %v1075 = vpop.permute.xlu0 %1074
  %1076 = vrot.lane.b32.xlu0 %v274, 8
  %v1077 = vpop.permute.xlu0 %1076
  %1078 = vrot.lane.b32.xlu0 %v275, 8
  %v1079 = vpop.permute.xlu0 %1078
  %1080 = vrot.lane.b32.xlu0 %v276, 8
  %v1081 = vpop.permute.xlu0 %1080
  %1082 = vrot.lane.b32.xlu0 %v277, 8
  %v1083 = vpop.permute.xlu0 %1082
  %1084 = vrot.lane.b32.xlu0 %v278, 8
  %v1085 = vpop.permute.xlu0 %1084
  %1086 = vrot.lane.b32.xlu0 %v279, 8
  %v1087 = vpop.permute.xlu0 %1086
  %1088 = vrot.lane.b32.xlu0 %v280, 8
  %v1089 = vpop.permute.xlu0 %1088
  %1090 = vrot.lane.b32.xlu0 %v281, 8
  %v1091 = vpop.permute.xlu0 %1090
  %1092 = vrot.lane.b32.xlu0 %v282, 8
  %v1093 = vpop.permute.xlu0 %1092
  %1094 = vrot.lane.b32.xlu0 %v283, 8
  %v1095 = vpop.permute.xlu0 %1094
  %1096 = vrot.lane.b32.xlu0 %v284, 8
  %v1097 = vpop.permute.xlu0 %1096
  %1098 = vrot.lane.b32.xlu0 %v285, 8
  %v1099 = vpop.permute.xlu0 %1098
  %1100 = vrot.lane.b32.xlu0 %v286, 8
  %v1101 = vpop.permute.xlu0 %1100
  %1102 = vrot.lane.b32.xlu0 %v287, 8
  %v1103 = vpop.permute.xlu0 %1102
  %1104 = vrot.lane.b32.xlu0 %v288, 8
  %v1105 = vpop.permute.xlu0 %1104
  %1106 = vrot.lane.b32.xlu0 %v289, 8
  %v1107 = vpop.permute.xlu0 %1106
  %1108 = vrot.lane.b32.xlu0 %v290, 8
  %v1109 = vpop.permute.xlu0 %1108
  %1110 = vrot.lane.b32.xlu0 %v291, 8
  %v1111 = vpop.permute.xlu0 %1110
  %1112 = vrot.lane.b32.xlu0 %v292, 8
  %v1113 = vpop.permute.xlu0 %1112
  %1114 = vrot.lane.b32.xlu0 %v293, 8
  %v1115 = vpop.permute.xlu0 %1114
  %1116 = vrot.lane.b32.xlu0 %v294, 8
  %v1117 = vpop.permute.xlu0 %1116
  %1118 = vrot.lane.b32.xlu0 %v295, 8
  %v1119 = vpop.permute.xlu0 %1118
  %1120 = vrot.lane.b32.xlu0 %v296, 8
  %v1121 = vpop.permute.xlu0 %1120
  %1122 = vrot.lane.b32.xlu0 %v297, 8
  %v1123 = vpop.permute.xlu0 %1122
  %1124 = vrot.lane.b32.xlu0 %v298, 8
  %v1125 = vpop.permute.xlu0 %1124
  %1126 = vrot.lane.b32.xlu0 %v299, 8
  %v1127 = vpop.permute.xlu0 %1126
  %1128 = vrot.lane.b32.xlu0 %v300, 8
  %v1129 = vpop.permute.xlu0 %1128
  %1130 = vrot.lane.b32.xlu0 %v301, 8
  %v1131 = vpop.permute.xlu0 %1130
  %1132 = vrot.lane.b32.xlu0 %v302, 8
  %v1133 = vpop.permute.xlu0 %1132
  %1134 = vrot.lane.b32.xlu0 %v303, 8
  %v1135 = vpop.permute.xlu0 %1134
  %1136 = vrot.lane.b32.xlu0 %v304, 8
  %v1137 = vpop.permute.xlu0 %1136
  %1138 = vrot.lane.b32.xlu0 %v305, 8
  %v1139 = vpop.permute.xlu0 %1138
  %1268 = vrot.lane.b32.xlu0 %v307, 12
  %v1269 = vpop.permute.xlu0 %1268
  %1270 = vrot.lane.b32.xlu0 %v308, 12
  %v1271 = vpop.permute.xlu0 %1270
  %1272 = vrot.lane.b32.xlu0 %v309, 12
  %v1273 = vpop.permute.xlu0 %1272
  %1274 = vrot.lane.b32.xlu0 %v310, 12
  %v1275 = vpop.permute.xlu0 %1274
  %1276 = vrot.lane.b32.xlu0 %v311, 12
  %v1277 = vpop.permute.xlu0 %1276
  %1278 = vrot.lane.b32.xlu0 %v312, 12
  %v1279 = vpop.permute.xlu0 %1278
  %1280 = vrot.lane.b32.xlu0 %v313, 12
  %v1281 = vpop.permute.xlu0 %1280
  %1282 = vrot.lane.b32.xlu0 %v314, 12
  %v1283 = vpop.permute.xlu0 %1282
  %1284 = vrot.lane.b32.xlu0 %v315, 12
  %v1285 = vpop.permute.xlu0 %1284
  %1286 = vrot.lane.b32.xlu0 %v316, 12
  %v1287 = vpop.permute.xlu0 %1286
  %1288 = vrot.lane.b32.xlu0 %v317, 12
  %v1289 = vpop.permute.xlu0 %1288
  %1290 = vrot.lane.b32.xlu0 %v318, 12
  %v1291 = vpop.permute.xlu0 %1290
  %1292 = vrot.lane.b32.xlu0 %v319, 12
  %v1293 = vpop.permute.xlu0 %1292
  %1294 = vrot.lane.b32.xlu0 %v320, 12
  %v1295 = vpop.permute.xlu0 %1294
  %1296 = vrot.lane.b32.xlu0 %v321, 12
  %v1297 = vpop.permute.xlu0 %1296
  %1298 = vrot.lane.b32.xlu0 %v322, 12
  %v1299 = vpop.permute.xlu0 %1298
  %1300 = vrot.lane.b32.xlu0 %v323, 12
  %v1301 = vpop.permute.xlu0 %1300
  %1302 = vrot.lane.b32.xlu0 %v324, 12
  %v1303 = vpop.permute.xlu0 %1302
  %1304 = vrot.lane.b32.xlu0 %v325, 12
  %v1305 = vpop.permute.xlu0 %1304
  %1306 = vrot.lane.b32.xlu0 %v326, 12
  %v1307 = vpop.permute.xlu0 %1306
  %1308 = vrot.lane.b32.xlu0 %v327, 12
  %v1309 = vpop.permute.xlu0 %1308
  %1310 = vrot.lane.b32.xlu0 %v328, 12
  %v1311 = vpop.permute.xlu0 %1310
  %1312 = vrot.lane.b32.xlu0 %v329, 12
  %v1313 = vpop.permute.xlu0 %1312
  %1314 = vrot.lane.b32.xlu0 %v330, 12
  %v1315 = vpop.permute.xlu0 %1314
  %1316 = vrot.lane.b32.xlu0 %v331, 12
  %v1317 = vpop.permute.xlu0 %1316
  %1318 = vrot.lane.b32.xlu0 %v332, 12
  %v1319 = vpop.permute.xlu0 %1318
  %1320 = vrot.lane.b32.xlu0 %v333, 12
  %v1321 = vpop.permute.xlu0 %1320
  %1322 = vrot.lane.b32.xlu0 %v334, 12
  %v1323 = vpop.permute.xlu0 %1322
  %1324 = vrot.lane.b32.xlu0 %v335, 12
  %v1325 = vpop.permute.xlu0 %1324
  %1326 = vrot.lane.b32.xlu0 %v336, 12
  %v1327 = vpop.permute.xlu0 %1326
  %1328 = vrot.lane.b32.xlu0 %v337, 12
  %v1329 = vpop.permute.xlu0 %1328
  %1330 = vrot.lane.b32.xlu0 %v338, 12
  %v1331 = vpop.permute.xlu0 %1330
  %1332 = vrot.lane.b32.xlu0 %v339, 12
  %v1333 = vpop.permute.xlu0 %1332
  %1334 = vrot.lane.b32.xlu0 %v340, 12
  %v1335 = vpop.permute.xlu0 %1334
  %1336 = vrot.lane.b32.xlu0 %v341, 12
  %v1337 = vpop.permute.xlu0 %1336
  %1338 = vrot.lane.b32.xlu0 %v342, 12
  %v1339 = vpop.permute.xlu0 %1338
  %1340 = vrot.lane.b32.xlu0 %v343, 12
  %v1341 = vpop.permute.xlu0 %1340
  %1342 = vrot.lane.b32.xlu0 %v344, 12
  %v1343 = vpop.permute.xlu0 %1342
  %1344 = vrot.lane.b32.xlu0 %v345, 12
  %v1345 = vpop.permute.xlu0 %1344
  %1346 = vrot.lane.b32.xlu0 %v346, 12
  %v1347 = vpop.permute.xlu0 %1346
  %1348 = vrot.lane.b32.xlu0 %v347, 12
  %v1349 = vpop.permute.xlu0 %1348
  %1350 = vrot.lane.b32.xlu0 %v348, 12
  %v1351 = vpop.permute.xlu0 %1350
  %1352 = vrot.lane.b32.xlu0 %v349, 12
  %v1353 = vpop.permute.xlu0 %1352
  %1354 = vrot.lane.b32.xlu0 %v350, 12
  %v1355 = vpop.permute.xlu0 %1354
  %1356 = vrot.lane.b32.xlu0 %v351, 12
  %v1357 = vpop.permute.xlu0 %1356
  %1358 = vrot.lane.b32.xlu0 %v352, 12
  %v1359 = vpop.permute.xlu0 %1358
  %1360 = vrot.lane.b32.xlu0 %v353, 12
  %v1361 = vpop.permute.xlu0 %1360
  %1362 = vrot.lane.b32.xlu0 %v354, 12
  %v1363 = vpop.permute.xlu0 %1362
  %1364 = vrot.lane.b32.xlu0 %v355, 12
  %v1365 = vpop.permute.xlu0 %1364
  %1366 = vrot.lane.b32.xlu0 %v356, 12
  %v1367 = vpop.permute.xlu0 %1366
  %1368 = vrot.lane.b32.xlu0 %v357, 12
  %v1369 = vpop.permute.xlu0 %1368
  %1370 = vrot.lane.b32.xlu0 %v358, 12
  %v1371 = vpop.permute.xlu0 %1370
  %1372 = vrot.lane.b32.xlu0 %v359, 12
  %v1373 = vpop.permute.xlu0 %1372
  %1374 = vrot.lane.b32.xlu0 %v360, 12
  %v1375 = vpop.permute.xlu0 %1374
  %1376 = vrot.lane.b32.xlu0 %v361, 12
  %v1377 = vpop.permute.xlu0 %1376
  %1378 = vrot.lane.b32.xlu0 %v362, 12
  %v1379 = vpop.permute.xlu0 %1378
  %1380 = vrot.lane.b32.xlu0 %v363, 12
  %v1381 = vpop.permute.xlu0 %1380
  %1382 = vrot.lane.b32.xlu0 %v364, 12
  %v1383 = vpop.permute.xlu0 %1382
  %1384 = vrot.lane.b32.xlu0 %v365, 12
  %v1385 = vpop.permute.xlu0 %1384
  %1386 = vrot.lane.b32.xlu0 %v366, 12
  %v1387 = vpop.permute.xlu0 %1386
  %1388 = vrot.lane.b32.xlu0 %v367, 12
  %v1389 = vpop.permute.xlu0 %1388
  %1390 = vrot.lane.b32.xlu0 %v368, 12
  %v1391 = vpop.permute.xlu0 %1390
  %1392 = vrot.lane.b32.xlu0 %v369, 12
  %v1393 = vpop.permute.xlu0 %1392
  %1394 = vrot.lane.b32.xlu0 %v370, 12
  %v1395 = vpop.permute.xlu0 %1394
  %1524 = vrot.lane.b32.xlu0 %v371, 16
  %v1525 = vpop.permute.xlu0 %1524
  %1526 = vrot.lane.b32.xlu0 %v372, 16
  %v1527 = vpop.permute.xlu0 %1526
  %1528 = vrot.lane.b32.xlu0 %v373, 16
  %v1529 = vpop.permute.xlu0 %1528
  %1530 = vrot.lane.b32.xlu0 %v374, 16
  %v1531 = vpop.permute.xlu0 %1530
  %1532 = vrot.lane.b32.xlu0 %v375, 16
  %v1533 = vpop.permute.xlu0 %1532
  %1534 = vrot.lane.b32.xlu0 %v376, 16
  %v1535 = vpop.permute.xlu0 %1534
  %1536 = vrot.lane.b32.xlu0 %v377, 16
  %v1537 = vpop.permute.xlu0 %1536
  %1538 = vrot.lane.b32.xlu0 %v378, 16
  %v1539 = vpop.permute.xlu0 %1538
  %1540 = vrot.lane.b32.xlu0 %v379, 16
  %v1541 = vpop.permute.xlu0 %1540
  %1542 = vrot.lane.b32.xlu0 %v380, 16
  %v1543 = vpop.permute.xlu0 %1542
  %1544 = vrot.lane.b32.xlu0 %v381, 16
  %v1545 = vpop.permute.xlu0 %1544
  %1546 = vrot.lane.b32.xlu0 %v382, 16
  %v1547 = vpop.permute.xlu0 %1546
  %1548 = vrot.lane.b32.xlu0 %v383, 16
  %v1549 = vpop.permute.xlu0 %1548
  %1550 = vrot.lane.b32.xlu0 %v384, 16
  %v1551 = vpop.permute.xlu0 %1550
  %1552 = vrot.lane.b32.xlu0 %v385, 16
  %v1553 = vpop.permute.xlu0 %1552
  %1554 = vrot.lane.b32.xlu0 %v386, 16
  %v1555 = vpop.permute.xlu0 %1554
  %1556 = vrot.lane.b32.xlu0 %v387, 16
  %v1557 = vpop.permute.xlu0 %1556
  %1558 = vrot.lane.b32.xlu0 %v388, 16
  %v1559 = vpop.permute.xlu0 %1558
  %1560 = vrot.lane.b32.xlu0 %v389, 16
  %v1561 = vpop.permute.xlu0 %1560
  %1562 = vrot.lane.b32.xlu0 %v390, 16
  %v1563 = vpop.permute.xlu0 %1562
  %1564 = vrot.lane.b32.xlu0 %v391, 16
  %v1565 = vpop.permute.xlu0 %1564
  %1566 = vrot.lane.b32.xlu0 %v392, 16
  %v1567 = vpop.permute.xlu0 %1566
  %1568 = vrot.lane.b32.xlu0 %v393, 16
  %v1569 = vpop.permute.xlu0 %1568
  %1570 = vrot.lane.b32.xlu0 %v394, 16
  %v1571 = vpop.permute.xlu0 %1570
  %1572 = vrot.lane.b32.xlu0 %v395, 16
  %v1573 = vpop.permute.xlu0 %1572
  %1574 = vrot.lane.b32.xlu0 %v396, 16
  %v1575 = vpop.permute.xlu0 %1574
  %1576 = vrot.lane.b32.xlu0 %v397, 16
  %v1577 = vpop.permute.xlu0 %1576
  %1578 = vrot.lane.b32.xlu0 %v398, 16
  %v1579 = vpop.permute.xlu0 %1578
  %1580 = vrot.lane.b32.xlu0 %v399, 16
  %v1581 = vpop.permute.xlu0 %1580
  %1582 = vrot.lane.b32.xlu0 %v400, 16
  %v1583 = vpop.permute.xlu0 %1582
  %1584 = vrot.lane.b32.xlu0 %v401, 16
  %v1585 = vpop.permute.xlu0 %1584
  %1586 = vrot.lane.b32.xlu0 %v402, 16
  %v1587 = vpop.permute.xlu0 %1586
  %1588 = vrot.lane.b32.xlu0 %v403, 16
  %v1589 = vpop.permute.xlu0 %1588
  %1590 = vrot.lane.b32.xlu0 %v404, 16
  %v1591 = vpop.permute.xlu0 %1590
  %1592 = vrot.lane.b32.xlu0 %v405, 16
  %v1593 = vpop.permute.xlu0 %1592
  %1594 = vrot.lane.b32.xlu0 %v406, 16
  %v1595 = vpop.permute.xlu0 %1594
  %1596 = vrot.lane.b32.xlu0 %v407, 16
  %v1597 = vpop.permute.xlu0 %1596
  %1598 = vrot.lane.b32.xlu0 %v408, 16
  %v1599 = vpop.permute.xlu0 %1598
  %1600 = vrot.lane.b32.xlu0 %v409, 16
  %v1601 = vpop.permute.xlu0 %1600
  %1602 = vrot.lane.b32.xlu0 %v410, 16
  %v1603 = vpop.permute.xlu0 %1602
  %1604 = vrot.lane.b32.xlu0 %v411, 16
  %v1605 = vpop.permute.xlu0 %1604
  %1606 = vrot.lane.b32.xlu0 %v412, 16
  %v1607 = vpop.permute.xlu0 %1606
  %1608 = vrot.lane.b32.xlu0 %v413, 16
  %v1609 = vpop.permute.xlu0 %1608
  %1610 = vrot.lane.b32.xlu0 %v414, 16
  %v1611 = vpop.permute.xlu0 %1610
  %1612 = vrot.lane.b32.xlu0 %v415, 16
  %v1613 = vpop.permute.xlu0 %1612
  %1614 = vrot.lane.b32.xlu0 %v416, 16
  %v1615 = vpop.permute.xlu0 %1614
  %1616 = vrot.lane.b32.xlu0 %v417, 16
  %v1617 = vpop.permute.xlu0 %1616
  %1618 = vrot.lane.b32.xlu0 %v418, 16
  %v1619 = vpop.permute.xlu0 %1618
  %1620 = vrot.lane.b32.xlu0 %v419, 16
  %v1621 = vpop.permute.xlu0 %1620
  %1622 = vrot.lane.b32.xlu0 %v420, 16
  %v1623 = vpop.permute.xlu0 %1622
  %1624 = vrot.lane.b32.xlu0 %v421, 16
  %v1625 = vpop.permute.xlu0 %1624
  %1626 = vrot.lane.b32.xlu0 %v422, 16
  %v1627 = vpop.permute.xlu0 %1626
  %1628 = vrot.lane.b32.xlu0 %v423, 16
  %v1629 = vpop.permute.xlu0 %1628
  %1630 = vrot.lane.b32.xlu0 %v424, 16
  %v1631 = vpop.permute.xlu0 %1630
  %1632 = vrot.lane.b32.xlu0 %v425, 16
  %v1633 = vpop.permute.xlu0 %1632
  %1634 = vrot.lane.b32.xlu0 %v426, 16
  %v1635 = vpop.permute.xlu0 %1634
  %1636 = vrot.lane.b32.xlu0 %v427, 16
  %v1637 = vpop.permute.xlu0 %1636
  %1638 = vrot.lane.b32.xlu0 %v428, 16
  %v1639 = vpop.permute.xlu0 %1638
  %1640 = vrot.lane.b32.xlu0 %v429, 16
  %v1641 = vpop.permute.xlu0 %1640
  %1642 = vrot.lane.b32.xlu0 %v430, 16
  %v1643 = vpop.permute.xlu0 %1642
  %1644 = vrot.lane.b32.xlu0 %v431, 16
  %v1645 = vpop.permute.xlu0 %1644
  %1646 = vrot.lane.b32.xlu0 %v432, 16
  %v1647 = vpop.permute.xlu0 %1646
  %1648 = vrot.lane.b32.xlu0 %v433, 16
  %v1649 = vpop.permute.xlu0 %1648
  %1650 = vrot.lane.b32.xlu0 %v434, 16
  %v1651 = vpop.permute.xlu0 %1650
  %1780 = vrot.lane.b32.xlu0 %v435, 20
  %v1781 = vpop.permute.xlu0 %1780
  %1782 = vrot.lane.b32.xlu0 %v436, 20
  %v1783 = vpop.permute.xlu0 %1782
  %1784 = vrot.lane.b32.xlu0 %v437, 20
  %v1785 = vpop.permute.xlu0 %1784
  %1786 = vrot.lane.b32.xlu0 %v438, 20
  %v1787 = vpop.permute.xlu0 %1786
  %1788 = vrot.lane.b32.xlu0 %v439, 20
  %v1789 = vpop.permute.xlu0 %1788
  %1790 = vrot.lane.b32.xlu0 %v440, 20
  %v1791 = vpop.permute.xlu0 %1790
  %1792 = vrot.lane.b32.xlu0 %v441, 20
  %v1793 = vpop.permute.xlu0 %1792
  %1794 = vrot.lane.b32.xlu0 %v442, 20
  %v1795 = vpop.permute.xlu0 %1794
  %1796 = vrot.lane.b32.xlu0 %v443, 20
  %v1797 = vpop.permute.xlu0 %1796
  %1798 = vrot.lane.b32.xlu0 %v444, 20
  %v1799 = vpop.permute.xlu0 %1798
  %1800 = vrot.lane.b32.xlu0 %v445, 20
  %v1801 = vpop.permute.xlu0 %1800
  %1802 = vrot.lane.b32.xlu0 %v446, 20
  %v1803 = vpop.permute.xlu0 %1802
  %1804 = vrot.lane.b32.xlu0 %v447, 20
  %v1805 = vpop.permute.xlu0 %1804
  %1806 = vrot.lane.b32.xlu0 %v448, 20
  %v1807 = vpop.permute.xlu0 %1806
  %1808 = vrot.lane.b32.xlu0 %v449, 20
  %v1809 = vpop.permute.xlu0 %1808
  %1810 = vrot.lane.b32.xlu0 %v450, 20
  %v1811 = vpop.permute.xlu0 %1810
  %1812 = vrot.lane.b32.xlu0 %v451, 20
  %v1813 = vpop.permute.xlu0 %1812
  %1814 = vrot.lane.b32.xlu0 %v452, 20
  %v1815 = vpop.permute.xlu0 %1814
  %1816 = vrot.lane.b32.xlu0 %v453, 20
  %v1817 = vpop.permute.xlu0 %1816
  %1818 = vrot.lane.b32.xlu0 %v454, 20
  %v1819 = vpop.permute.xlu0 %1818
  %1820 = vrot.lane.b32.xlu0 %v455, 20
  %v1821 = vpop.permute.xlu0 %1820
  %1822 = vrot.lane.b32.xlu0 %v456, 20
  %v1823 = vpop.permute.xlu0 %1822
  %1824 = vrot.lane.b32.xlu0 %v457, 20
  %v1825 = vpop.permute.xlu0 %1824
  %1826 = vrot.lane.b32.xlu0 %v458, 20
  %v1827 = vpop.permute.xlu0 %1826
  %1828 = vrot.lane.b32.xlu0 %v459, 20
  %v1829 = vpop.permute.xlu0 %1828
  %1830 = vrot.lane.b32.xlu0 %v460, 20
  %v1831 = vpop.permute.xlu0 %1830
  %1832 = vrot.lane.b32.xlu0 %v461, 20
  %v1833 = vpop.permute.xlu0 %1832
  %1834 = vrot.lane.b32.xlu0 %v462, 20
  %v1835 = vpop.permute.xlu0 %1834
  %1836 = vrot.lane.b32.xlu0 %v463, 20
  %v1837 = vpop.permute.xlu0 %1836
  %1838 = vrot.lane.b32.xlu0 %v464, 20
  %v1839 = vpop.permute.xlu0 %1838
  %1840 = vrot.lane.b32.xlu0 %v465, 20
  %v1841 = vpop.permute.xlu0 %1840
  %1842 = vrot.lane.b32.xlu0 %v466, 20
  %v1843 = vpop.permute.xlu0 %1842
  %1844 = vrot.lane.b32.xlu0 %v467, 20
  %v1845 = vpop.permute.xlu0 %1844
  %1846 = vrot.lane.b32.xlu0 %v468, 20
  %v1847 = vpop.permute.xlu0 %1846
  %1848 = vrot.lane.b32.xlu0 %v469, 20
  %v1849 = vpop.permute.xlu0 %1848
  %1850 = vrot.lane.b32.xlu0 %v470, 20
  %v1851 = vpop.permute.xlu0 %1850
  %1852 = vrot.lane.b32.xlu0 %v471, 20
  %v1853 = vpop.permute.xlu0 %1852
  %1854 = vrot.lane.b32.xlu0 %v472, 20
  %v1855 = vpop.permute.xlu0 %1854
  %1856 = vrot.lane.b32.xlu0 %v473, 20
  %v1857 = vpop.permute.xlu0 %1856
  %1858 = vrot.lane.b32.xlu0 %v474, 20
  %v1859 = vpop.permute.xlu0 %1858
  %1860 = vrot.lane.b32.xlu0 %v475, 20
  %v1861 = vpop.permute.xlu0 %1860
  %1862 = vrot.lane.b32.xlu0 %v476, 20
  %v1863 = vpop.permute.xlu0 %1862
  %1864 = vrot.lane.b32.xlu0 %v477, 20
  %v1865 = vpop.permute.xlu0 %1864
  %1866 = vrot.lane.b32.xlu0 %v478, 20
  %v1867 = vpop.permute.xlu0 %1866
  %1868 = vrot.lane.b32.xlu0 %v479, 20
  %v1869 = vpop.permute.xlu0 %1868
  %1870 = vrot.lane.b32.xlu0 %v480, 20
  %v1871 = vpop.permute.xlu0 %1870
  %1872 = vrot.lane.b32.xlu0 %v481, 20
  %v1873 = vpop.permute.xlu0 %1872
  %1874 = vrot.lane.b32.xlu0 %v482, 20
  %v1875 = vpop.permute.xlu0 %1874
  %1876 = vrot.lane.b32.xlu0 %v483, 20
  %v1877 = vpop.permute.xlu0 %1876
  %1878 = vrot.lane.b32.xlu0 %v484, 20
  %v1879 = vpop.permute.xlu0 %1878
  %1880 = vrot.lane.b32.xlu0 %v485, 20
  %v1881 = vpop.permute.xlu0 %1880
  %1882 = vrot.lane.b32.xlu0 %v486, 20
  %v1883 = vpop.permute.xlu0 %1882
  %1884 = vrot.lane.b32.xlu0 %v487, 20
  %v1885 = vpop.permute.xlu0 %1884
  %1886 = vrot.lane.b32.xlu0 %v488, 20
  %v1887 = vpop.permute.xlu0 %1886
  %1888 = vrot.lane.b32.xlu0 %v489, 20
  %v1889 = vpop.permute.xlu0 %1888
  %1890 = vrot.lane.b32.xlu0 %v490, 20
  %v1891 = vpop.permute.xlu0 %1890
  %1892 = vrot.lane.b32.xlu0 %v491, 20
  %v1893 = vpop.permute.xlu0 %1892
  %1894 = vrot.lane.b32.xlu0 %v492, 20
  %v1895 = vpop.permute.xlu0 %1894
  %1896 = vrot.lane.b32.xlu0 %v493, 20
  %v1897 = vpop.permute.xlu0 %1896
  %1898 = vrot.lane.b32.xlu0 %v494, 20
  %v1899 = vpop.permute.xlu0 %1898
  %1900 = vrot.lane.b32.xlu0 %v495, 20
  %v1901 = vpop.permute.xlu0 %1900
  %1902 = vrot.lane.b32.xlu0 %v496, 20
  %v1903 = vpop.permute.xlu0 %1902
  %1904 = vrot.lane.b32.xlu0 %v497, 20
  %v1905 = vpop.permute.xlu0 %1904
  %1906 = vrot.lane.b32.xlu0 %v498, 20
  %v1907 = vpop.permute.xlu0 %1906
  %2036 = vrot.lane.b32.xlu0 %v500, 24
  %v2037 = vpop.permute.xlu0 %2036
  %2038 = vrot.lane.b32.xlu0 %v501, 24
  %v2039 = vpop.permute.xlu0 %2038
  %2040 = vrot.lane.b32.xlu0 %v502, 24
  %v2041 = vpop.permute.xlu0 %2040
  %2042 = vrot.lane.b32.xlu0 %v503, 24
  %v2043 = vpop.permute.xlu0 %2042
  %2044 = vrot.lane.b32.xlu0 %v504, 24
  %v2045 = vpop.permute.xlu0 %2044
  %2046 = vrot.lane.b32.xlu0 %v505, 24
  %v2047 = vpop.permute.xlu0 %2046
  %2048 = vrot.lane.b32.xlu0 %v506, 24
  %v2049 = vpop.permute.xlu0 %2048
  %2050 = vrot.lane.b32.xlu0 %v507, 24
  %v2051 = vpop.permute.xlu0 %2050
  %2052 = vrot.lane.b32.xlu0 %v508, 24
  %v2053 = vpop.permute.xlu0 %2052
  %2054 = vrot.lane.b32.xlu0 %v509, 24
  %v2055 = vpop.permute.xlu0 %2054
  %2056 = vrot.lane.b32.xlu0 %v510, 24
  %v2057 = vpop.permute.xlu0 %2056
  %2058 = vrot.lane.b32.xlu0 %v511, 24
  %v2059 = vpop.permute.xlu0 %2058
  %2060 = vrot.lane.b32.xlu0 %v512, 24
  %v2061 = vpop.permute.xlu0 %2060
  %2062 = vrot.lane.b32.xlu0 %v513, 24
  %v2063 = vpop.permute.xlu0 %2062
  %2064 = vrot.lane.b32.xlu0 %v514, 24
  %v2065 = vpop.permute.xlu0 %2064
  %2066 = vrot.lane.b32.xlu0 %v515, 24
  %v2067 = vpop.permute.xlu0 %2066
  %2068 = vrot.lane.b32.xlu0 %v516, 24
  %v2069 = vpop.permute.xlu0 %2068
  %2070 = vrot.lane.b32.xlu0 %v517, 24
  %v2071 = vpop.permute.xlu0 %2070
  %2072 = vrot.lane.b32.xlu0 %v518, 24
  %v2073 = vpop.permute.xlu0 %2072
  %2074 = vrot.lane.b32.xlu0 %v519, 24
  %v2075 = vpop.permute.xlu0 %2074
  %2076 = vrot.lane.b32.xlu0 %v520, 24
  %v2077 = vpop.permute.xlu0 %2076
  %2078 = vrot.lane.b32.xlu0 %v521, 24
  %v2079 = vpop.permute.xlu0 %2078
  %2080 = vrot.lane.b32.xlu0 %v522, 24
  %v2081 = vpop.permute.xlu0 %2080
  %2082 = vrot.lane.b32.xlu0 %v523, 24
  %v2083 = vpop.permute.xlu0 %2082
  %2084 = vrot.lane.b32.xlu0 %v524, 24
  %v2085 = vpop.permute.xlu0 %2084
  %2086 = vrot.lane.b32.xlu0 %v525, 24
  %v2087 = vpop.permute.xlu0 %2086
  %2088 = vrot.lane.b32.xlu0 %v526, 24
  %v2089 = vpop.permute.xlu0 %2088
  %2090 = vrot.lane.b32.xlu0 %v527, 24
  %v2091 = vpop.permute.xlu0 %2090
  %2092 = vrot.lane.b32.xlu0 %v528, 24
  %v2093 = vpop.permute.xlu0 %2092
  %2094 = vrot.lane.b32.xlu0 %v529, 24
  %v2095 = vpop.permute.xlu0 %2094
  %2096 = vrot.lane.b32.xlu0 %v530, 24
  %v2097 = vpop.permute.xlu0 %2096
  %2098 = vrot.lane.b32.xlu0 %v531, 24
  %v2099 = vpop.permute.xlu0 %2098
  %2100 = vrot.lane.b32.xlu0 %v532, 24
  %v2101 = vpop.permute.xlu0 %2100
  %2102 = vrot.lane.b32.xlu0 %v533, 24
  %v2103 = vpop.permute.xlu0 %2102
  %2104 = vrot.lane.b32.xlu0 %v534, 24
  %v2105 = vpop.permute.xlu0 %2104
  %2106 = vrot.lane.b32.xlu0 %v535, 24
  %v2107 = vpop.permute.xlu0 %2106
  %2108 = vrot.lane.b32.xlu0 %v536, 24
  %v2109 = vpop.permute.xlu0 %2108
  %2110 = vrot.lane.b32.xlu0 %v537, 24
  %v2111 = vpop.permute.xlu0 %2110
  %2112 = vrot.lane.b32.xlu0 %v538, 24
  %v2113 = vpop.permute.xlu0 %2112
  %2114 = vrot.lane.b32.xlu0 %v539, 24
  %v2115 = vpop.permute.xlu0 %2114
  %2116 = vrot.lane.b32.xlu0 %v540, 24
  %v2117 = vpop.permute.xlu0 %2116
  %2118 = vrot.lane.b32.xlu0 %v541, 24
  %v2119 = vpop.permute.xlu0 %2118
  %2120 = vrot.lane.b32.xlu0 %v542, 24
  %v2121 = vpop.permute.xlu0 %2120
  %2122 = vrot.lane.b32.xlu0 %v543, 24
  %v2123 = vpop.permute.xlu0 %2122
  %2124 = vrot.lane.b32.xlu0 %v544, 24
  %v2125 = vpop.permute.xlu0 %2124
  %2126 = vrot.lane.b32.xlu0 %v545, 24
  %v2127 = vpop.permute.xlu0 %2126
  %2128 = vrot.lane.b32.xlu0 %v546, 24
  %v2129 = vpop.permute.xlu0 %2128
  %2130 = vrot.lane.b32.xlu0 %v547, 24
  %v2131 = vpop.permute.xlu0 %2130
  %2132 = vrot.lane.b32.xlu0 %v548, 24
  %v2133 = vpop.permute.xlu0 %2132
  %2134 = vrot.lane.b32.xlu0 %v549, 24
  %v2135 = vpop.permute.xlu0 %2134
  %2136 = vrot.lane.b32.xlu0 %v550, 24
  %v2137 = vpop.permute.xlu0 %2136
  %2138 = vrot.lane.b32.xlu0 %v551, 24
  %v2139 = vpop.permute.xlu0 %2138
  %2140 = vrot.lane.b32.xlu0 %v552, 24
  %v2141 = vpop.permute.xlu0 %2140
  %2142 = vrot.lane.b32.xlu0 %v553, 24
  %v2143 = vpop.permute.xlu0 %2142
  %2144 = vrot.lane.b32.xlu0 %v554, 24
  %v2145 = vpop.permute.xlu0 %2144
  %2146 = vrot.lane.b32.xlu0 %v555, 24
  %v2147 = vpop.permute.xlu0 %2146
  %2148 = vrot.lane.b32.xlu0 %v556, 24
  %v2149 = vpop.permute.xlu0 %2148
  %2150 = vrot.lane.b32.xlu0 %v557, 24
  %v2151 = vpop.permute.xlu0 %2150
  %2152 = vrot.lane.b32.xlu0 %v558, 24
  %v2153 = vpop.permute.xlu0 %2152
  %2154 = vrot.lane.b32.xlu0 %v559, 24
  %v2155 = vpop.permute.xlu0 %2154
  %2156 = vrot.lane.b32.xlu0 %v560, 24
  %v2157 = vpop.permute.xlu0 %2156
  %2158 = vrot.lane.b32.xlu0 %v561, 24
  %v2159 = vpop.permute.xlu0 %2158
  %2160 = vrot.lane.b32.xlu0 %v562, 24
  %v2161 = vpop.permute.xlu0 %2160
  %2162 = vrot.lane.b32.xlu0 %v563, 24
  %v2163 = vpop.permute.xlu0 %2162
  %2292 = vrot.lane.b32.xlu0 %v564, 28
  %v2293 = vpop.permute.xlu0 %2292
  %2294 = vrot.lane.b32.xlu0 %v565, 28
  %v2295 = vpop.permute.xlu0 %2294
  %2296 = vrot.lane.b32.xlu0 %v566, 28
  %v2297 = vpop.permute.xlu0 %2296
  %2298 = vrot.lane.b32.xlu0 %v567, 28
  %v2299 = vpop.permute.xlu0 %2298
  %2300 = vrot.lane.b32.xlu0 %v568, 28
  %v2301 = vpop.permute.xlu0 %2300
  %2302 = vrot.lane.b32.xlu0 %v569, 28
  %v2303 = vpop.permute.xlu0 %2302
  %2304 = vrot.lane.b32.xlu0 %v570, 28
  %v2305 = vpop.permute.xlu0 %2304
  %2306 = vrot.lane.b32.xlu0 %v571, 28
  %v2307 = vpop.permute.xlu0 %2306
  %2308 = vrot.lane.b32.xlu0 %v572, 28
  %v2309 = vpop.permute.xlu0 %2308
  %2310 = vrot.lane.b32.xlu0 %v573, 28
  %v2311 = vpop.permute.xlu0 %2310
  %2312 = vrot.lane.b32.xlu0 %v574, 28
  %v2313 = vpop.permute.xlu0 %2312
  %2314 = vrot.lane.b32.xlu0 %v575, 28
  %v2315 = vpop.permute.xlu0 %2314
  %2316 = vrot.lane.b32.xlu0 %v576, 28
  %v2317 = vpop.permute.xlu0 %2316
  %2318 = vrot.lane.b32.xlu0 %v577, 28
  %v2319 = vpop.permute.xlu0 %2318
  %2320 = vrot.lane.b32.xlu0 %v578, 28
  %v2321 = vpop.permute.xlu0 %2320
  %2322 = vrot.lane.b32.xlu0 %v579, 28
  %v2323 = vpop.permute.xlu0 %2322
  %2324 = vrot.lane.b32.xlu0 %v580, 28
  %v2325 = vpop.permute.xlu0 %2324
  %2326 = vrot.lane.b32.xlu0 %v581, 28
  %v2327 = vpop.permute.xlu0 %2326
  %2328 = vrot.lane.b32.xlu0 %v582, 28
  %v2329 = vpop.permute.xlu0 %2328
  %2330 = vrot.lane.b32.xlu0 %v583, 28
  %v2331 = vpop.permute.xlu0 %2330
  %2332 = vrot.lane.b32.xlu0 %v584, 28
  %v2333 = vpop.permute.xlu0 %2332
  %2334 = vrot.lane.b32.xlu0 %v585, 28
  %v2335 = vpop.permute.xlu0 %2334
  %2336 = vrot.lane.b32.xlu0 %v586, 28
  %v2337 = vpop.permute.xlu0 %2336
  %2338 = vrot.lane.b32.xlu0 %v587, 28
  %v2339 = vpop.permute.xlu0 %2338
  %2340 = vrot.lane.b32.xlu0 %v588, 28
  %v2341 = vpop.permute.xlu0 %2340
  %2342 = vrot.lane.b32.xlu0 %v589, 28
  %v2343 = vpop.permute.xlu0 %2342
  %2344 = vrot.lane.b32.xlu0 %v590, 28
  %v2345 = vpop.permute.xlu0 %2344
  %2346 = vrot.lane.b32.xlu0 %v591, 28
  %v2347 = vpop.permute.xlu0 %2346
  %2348 = vrot.lane.b32.xlu0 %v592, 28
  %v2349 = vpop.permute.xlu0 %2348
  %2350 = vrot.lane.b32.xlu0 %v593, 28
  %v2351 = vpop.permute.xlu0 %2350
  %2352 = vrot.lane.b32.xlu0 %v594, 28
  %v2353 = vpop.permute.xlu0 %2352
  %2354 = vrot.lane.b32.xlu0 %v595, 28
  %v2355 = vpop.permute.xlu0 %2354
  %2356 = vrot.lane.b32.xlu0 %v596, 28
  %v2357 = vpop.permute.xlu0 %2356
  %2358 = vrot.lane.b32.xlu0 %v597, 28
  %v2359 = vpop.permute.xlu0 %2358
  %2360 = vrot.lane.b32.xlu0 %v598, 28
  %v2361 = vpop.permute.xlu0 %2360
  %2362 = vrot.lane.b32.xlu0 %v599, 28
  %v2363 = vpop.permute.xlu0 %2362
  %2364 = vrot.lane.b32.xlu0 %v600, 28
  %v2365 = vpop.permute.xlu0 %2364
  %2366 = vrot.lane.b32.xlu0 %v601, 28
  %v2367 = vpop.permute.xlu0 %2366
  %2368 = vrot.lane.b32.xlu0 %v602, 28
  %v2369 = vpop.permute.xlu0 %2368
  %2370 = vrot.lane.b32.xlu0 %v603, 28
  %v2371 = vpop.permute.xlu0 %2370
  %2372 = vrot.lane.b32.xlu0 %v604, 28
  %v2373 = vpop.permute.xlu0 %2372
  %2374 = vrot.lane.b32.xlu0 %v605, 28
  %v2375 = vpop.permute.xlu0 %2374
  %2376 = vrot.lane.b32.xlu0 %v606, 28
  %v2377 = vpop.permute.xlu0 %2376
  %2378 = vrot.lane.b32.xlu0 %v607, 28
  %v2379 = vpop.permute.xlu0 %2378
  %2380 = vrot.lane.b32.xlu0 %v608, 28
  %v2381 = vpop.permute.xlu0 %2380
  %2382 = vrot.lane.b32.xlu0 %v609, 28
  %v2383 = vpop.permute.xlu0 %2382
  %2384 = vrot.lane.b32.xlu0 %v610, 28
  %v2385 = vpop.permute.xlu0 %2384
  %2386 = vrot.lane.b32.xlu0 %v611, 28
  %v2387 = vpop.permute.xlu0 %2386
  %2388 = vrot.lane.b32.xlu0 %v612, 28
  %v2389 = vpop.permute.xlu0 %2388
  %2390 = vrot.lane.b32.xlu0 %v613, 28
  %v2391 = vpop.permute.xlu0 %2390
  %2392 = vrot.lane.b32.xlu0 %v614, 28
  %v2393 = vpop.permute.xlu0 %2392
  %2394 = vrot.lane.b32.xlu0 %v615, 28
  %v2395 = vpop.permute.xlu0 %2394
  %2396 = vrot.lane.b32.xlu0 %v616, 28
  %v2397 = vpop.permute.xlu0 %2396
  %2398 = vrot.lane.b32.xlu0 %v617, 28
  %v2399 = vpop.permute.xlu0 %2398
  %2400 = vrot.lane.b32.xlu0 %v618, 28
  %v2401 = vpop.permute.xlu0 %2400
  %2402 = vrot.lane.b32.xlu0 %v619, 28
  %v2403 = vpop.permute.xlu0 %2402
  %2404 = vrot.lane.b32.xlu0 %v620, 28
  %v2405 = vpop.permute.xlu0 %2404
  %2406 = vrot.lane.b32.xlu0 %v621, 28
  %v2407 = vpop.permute.xlu0 %2406
  %2408 = vrot.lane.b32.xlu0 %v622, 28
  %v2409 = vpop.permute.xlu0 %2408
  %2410 = vrot.lane.b32.xlu0 %v623, 28
  %v2411 = vpop.permute.xlu0 %2410
  %2412 = vrot.lane.b32.xlu0 %v624, 28
  %v2413 = vpop.permute.xlu0 %2412
  %2414 = vrot.lane.b32.xlu0 %v625, 28
  %v2415 = vpop.permute.xlu0 %2414
  %2416 = vrot.lane.b32.xlu0 %v626, 28
  %v2417 = vpop.permute.xlu0 %2416
  %2418 = vrot.lane.b32.xlu0 %v627, 28
  %v2419 = vpop.permute.xlu0 %2418
  %2548 = vrot.lane.b32.xlu0 %v628, 32
  %v2549 = vpop.permute.xlu0 %2548
  %2550 = vrot.lane.b32.xlu0 %v629, 32
  %v2551 = vpop.permute.xlu0 %2550
  %2552 = vrot.lane.b32.xlu0 %v630, 32
  %v2553 = vpop.permute.xlu0 %2552
  %2554 = vrot.lane.b32.xlu0 %v631, 32
  %v2555 = vpop.permute.xlu0 %2554
  %2556 = vrot.lane.b32.xlu0 %v632, 32
  %v2557 = vpop.permute.xlu0 %2556
  %2558 = vrot.lane.b32.xlu0 %v633, 32
  %v2559 = vpop.permute.xlu0 %2558
  %2560 = vrot.lane.b32.xlu0 %v634, 32
  %v2561 = vpop.permute.xlu0 %2560
  %2562 = vrot.lane.b32.xlu0 %v635, 32
  %v2563 = vpop.permute.xlu0 %2562
  %2564 = vrot.lane.b32.xlu0 %v636, 32
  %v2565 = vpop.permute.xlu0 %2564
  %2566 = vrot.lane.b32.xlu0 %v637, 32
  %v2567 = vpop.permute.xlu0 %2566
  %2568 = vrot.lane.b32.xlu0 %v638, 32
  %v2569 = vpop.permute.xlu0 %2568
  %2570 = vrot.lane.b32.xlu0 %v639, 32
  %v2571 = vpop.permute.xlu0 %2570
  %2572 = vrot.lane.b32.xlu0 %v640, 32
  %v2573 = vpop.permute.xlu0 %2572
  %2574 = vrot.lane.b32.xlu0 %v641, 32
  %v2575 = vpop.permute.xlu0 %2574
  %2576 = vrot.lane.b32.xlu0 %v642, 32
  %v2577 = vpop.permute.xlu0 %2576
  %2578 = vrot.lane.b32.xlu0 %v643, 32
  %v2579 = vpop.permute.xlu0 %2578
  %2580 = vrot.lane.b32.xlu0 %v644, 32
  %v2581 = vpop.permute.xlu0 %2580
  %2582 = vrot.lane.b32.xlu0 %v645, 32
  %v2583 = vpop.permute.xlu0 %2582
  %2584 = vrot.lane.b32.xlu0 %v646, 32
  %v2585 = vpop.permute.xlu0 %2584
  %2586 = vrot.lane.b32.xlu0 %v647, 32
  %v2587 = vpop.permute.xlu0 %2586
  %2588 = vrot.lane.b32.xlu0 %v648, 32
  %v2589 = vpop.permute.xlu0 %2588
  %2590 = vrot.lane.b32.xlu0 %v649, 32
  %v2591 = vpop.permute.xlu0 %2590
  %2592 = vrot.lane.b32.xlu0 %v650, 32
  %v2593 = vpop.permute.xlu0 %2592
  %2594 = vrot.lane.b32.xlu0 %v651, 32
  %v2595 = vpop.permute.xlu0 %2594
  %2596 = vrot.lane.b32.xlu0 %v652, 32
  %v2597 = vpop.permute.xlu0 %2596
  %2598 = vrot.lane.b32.xlu0 %v653, 32
  %v2599 = vpop.permute.xlu0 %2598
  %2600 = vrot.lane.b32.xlu0 %v654, 32
  %v2601 = vpop.permute.xlu0 %2600
  %2602 = vrot.lane.b32.xlu0 %v655, 32
  %v2603 = vpop.permute.xlu0 %2602
  %2604 = vrot.lane.b32.xlu0 %v656, 32
  %v2605 = vpop.permute.xlu0 %2604
  %2606 = vrot.lane.b32.xlu0 %v657, 32
  %v2607 = vpop.permute.xlu0 %2606
  %2608 = vrot.lane.b32.xlu0 %v658, 32
  %v2609 = vpop.permute.xlu0 %2608
  %2610 = vrot.lane.b32.xlu0 %v659, 32
  %v2611 = vpop.permute.xlu0 %2610
  %2612 = vrot.lane.b32.xlu0 %v660, 32
  %v2613 = vpop.permute.xlu0 %2612
  %2614 = vrot.lane.b32.xlu0 %v661, 32
  %v2615 = vpop.permute.xlu0 %2614
  %2616 = vrot.lane.b32.xlu0 %v662, 32
  %v2617 = vpop.permute.xlu0 %2616
  %2618 = vrot.lane.b32.xlu0 %v663, 32
  %v2619 = vpop.permute.xlu0 %2618
  %2620 = vrot.lane.b32.xlu0 %v664, 32
  %v2621 = vpop.permute.xlu0 %2620
  %2622 = vrot.lane.b32.xlu0 %v665, 32
  %v2623 = vpop.permute.xlu0 %2622
  %2624 = vrot.lane.b32.xlu0 %v666, 32
  %v2625 = vpop.permute.xlu0 %2624
  %2626 = vrot.lane.b32.xlu0 %v667, 32
  %v2627 = vpop.permute.xlu0 %2626
  %2628 = vrot.lane.b32.xlu0 %v668, 32
  %v2629 = vpop.permute.xlu0 %2628
  %2630 = vrot.lane.b32.xlu0 %v669, 32
  %v2631 = vpop.permute.xlu0 %2630
  %2632 = vrot.lane.b32.xlu0 %v670, 32
  %v2633 = vpop.permute.xlu0 %2632
  %2634 = vrot.lane.b32.xlu0 %v671, 32
  %v2635 = vpop.permute.xlu0 %2634
  %2636 = vrot.lane.b32.xlu0 %v672, 32
  %v2637 = vpop.permute.xlu0 %2636
  %2638 = vrot.lane.b32.xlu0 %v673, 32
  %v2639 = vpop.permute.xlu0 %2638
  %2640 = vrot.lane.b32.xlu0 %v674, 32
  %v2641 = vpop.permute.xlu0 %2640
  %2642 = vrot.lane.b32.xlu0 %v675, 32
  %v2643 = vpop.permute.xlu0 %2642
  %2644 = vrot.lane.b32.xlu0 %v676, 32
  %v2645 = vpop.permute.xlu0 %2644
  %2646 = vrot.lane.b32.xlu0 %v677, 32
  %v2647 = vpop.permute.xlu0 %2646
  %2648 = vrot.lane.b32.xlu0 %v678, 32
  %v2649 = vpop.permute.xlu0 %2648
  %2650 = vrot.lane.b32.xlu0 %v679, 32
  %v2651 = vpop.permute.xlu0 %2650
  %2652 = vrot.lane.b32.xlu0 %v680, 32
  %v2653 = vpop.permute.xlu0 %2652
  %2654 = vrot.lane.b32.xlu0 %v681, 32
  %v2655 = vpop.permute.xlu0 %2654
  %2656 = vrot.lane.b32.xlu0 %v682, 32
  %v2657 = vpop.permute.xlu0 %2656
  %2658 = vrot.lane.b32.xlu0 %v683, 32
  %v2659 = vpop.permute.xlu0 %2658
  %2660 = vrot.lane.b32.xlu0 %v684, 32
  %v2661 = vpop.permute.xlu0 %2660
  %2662 = vrot.lane.b32.xlu0 %v685, 32
  %v2663 = vpop.permute.xlu0 %2662
  %2664 = vrot.lane.b32.xlu0 %v686, 32
  %v2665 = vpop.permute.xlu0 %2664
  %2666 = vrot.lane.b32.xlu0 %v687, 32
  %v2667 = vpop.permute.xlu0 %2666
  %2668 = vrot.lane.b32.xlu0 %v688, 32
  %v2669 = vpop.permute.xlu0 %2668
  %2670 = vrot.lane.b32.xlu0 %v689, 32
  %v2671 = vpop.permute.xlu0 %2670
  %2672 = vrot.lane.b32.xlu0 %v690, 32
  %v2673 = vpop.permute.xlu0 %2672
  %2674 = vrot.lane.b32.xlu0 %v691, 32
  %v2675 = vpop.permute.xlu0 %2674
  %v2740 = vsel %vm26, %v114, %v757
  %v2741 = vsel %vm26, %v115, %v759
  %v2742 = vsel %vm26, %v116, %v761
  %v2743 = vsel %vm26, %v117, %v763
  %v2744 = vsel %vm26, %v118, %v765
  %v2745 = vsel %vm26, %v119, %v767
  %v2746 = vsel %vm26, %v120, %v769
  %v2747 = vsel %vm26, %v121, %v771
  %v2748 = vsel %vm26, %v122, %v773
  %v2749 = vsel %vm26, %v123, %v775
  %v2750 = vsel %vm26, %v124, %v777
  %v2751 = vsel %vm26, %v125, %v779
  %v2752 = vsel %vm26, %v126, %v781
  %v2753 = vsel %vm26, %v127, %v783
  %v2754 = vsel %vm26, %v128, %v785
  %v2755 = vsel %vm26, %v129, %v787
  %v2756 = vsel %vm26, %v130, %v789
  %v2757 = vsel %vm26, %v131, %v791
  %v2758 = vsel %vm26, %v132, %v793
  %v2759 = vsel %vm26, %v133, %v795
  %v2760 = vsel %vm26, %v134, %v797
  %v2761 = vsel %vm26, %v135, %v799
  %v2762 = vsel %vm26, %v136, %v801
  %v2763 = vsel %vm26, %v137, %v803
  %v2764 = vsel %vm26, %v138, %v805
  %v2765 = vsel %vm26, %v139, %v807
  %v2766 = vsel %vm26, %v140, %v809
  %v2767 = vsel %vm26, %v141, %v811
  %v2768 = vsel %vm26, %v142, %v813
  %v2769 = vsel %vm26, %v143, %v815
  %v2770 = vsel %vm26, %v144, %v817
  %v2771 = vsel %vm26, %v145, %v819
  %v2772 = vsel %vm26, %v146, %v821
  %v2773 = vsel %vm26, %v147, %v823
  %v2774 = vsel %vm26, %v148, %v825
  %v2775 = vsel %vm26, %v149, %v827
  %v2776 = vsel %vm26, %v150, %v829
  %v2777 = vsel %vm26, %v151, %v831
  %v2778 = vsel %vm26, %v152, %v833
  %v2779 = vsel %vm26, %v153, %v835
  %v2780 = vsel %vm26, %v154, %v837
  %v2781 = vsel %vm26, %v155, %v839
  %v2782 = vsel %vm26, %v156, %v841
  %v2783 = vsel %vm26, %v157, %v843
  %v2784 = vsel %vm26, %v158, %v845
  %v2785 = vsel %vm26, %v159, %v847
  %v2786 = vsel %vm26, %v160, %v849
  %v2787 = vsel %vm26, %v161, %v851
  %v2788 = vsel %vm26, %v162, %v853
  %v2789 = vsel %vm26, %v163, %v855
  %v2790 = vsel %vm26, %v164, %v857
  %v2791 = vsel %vm26, %v165, %v859
  %v2792 = vsel %vm26, %v166, %v861
  %v2793 = vsel %vm26, %v167, %v863
  %v2794 = vsel %vm26, %v168, %v865
  %v2795 = vsel %vm26, %v169, %v867
  %v2796 = vsel %vm26, %v170, %v869
  %v2797 = vsel %vm26, %v171, %v871
  %v2798 = vsel %vm26, %v172, %v873
  %v2799 = vsel %vm26, %v173, %v875
  %v2800 = vsel %vm26, %v174, %v877
  %v2801 = vsel %vm26, %v175, %v879
  %v2802 = vsel %vm26, %v176, %v881
  %v2803 = vsel %vm26, %v177, %v883
  %vm2804 = vcmask 64512
  %v2805 = vsel %vm2804, %v2740, %v1013
  %v2806 = vsel %vm2804, %v2741, %v1015
  %v2807 = vsel %vm2804, %v2742, %v1017
  %v2808 = vsel %vm2804, %v2743, %v1019
  %v2809 = vsel %vm2804, %v2744, %v1021
  %v2810 = vsel %vm2804, %v2745, %v1023
  %v2811 = vsel %vm2804, %v2746, %v1025
  %v2812 = vsel %vm2804, %v2747, %v1027
  %v2813 = vsel %vm2804, %v2748, %v1029
  %v2814 = vsel %vm2804, %v2749, %v1031
  %v2815 = vsel %vm2804, %v2750, %v1033
  %v2816 = vsel %vm2804, %v2751, %v1035
  %v2817 = vsel %vm2804, %v2752, %v1037
  %v2818 = vsel %vm2804, %v2753, %v1039
  %v2819 = vsel %vm2804, %v2754, %v1041
  %v2820 = vsel %vm2804, %v2755, %v1043
  %v2821 = vsel %vm2804, %v2756, %v1045
  %v2822 = vsel %vm2804, %v2757, %v1047
  %v2823 = vsel %vm2804, %v2758, %v1049
  %v2824 = vsel %vm2804, %v2759, %v1051
  %v2825 = vsel %vm2804, %v2760, %v1053
  %v2826 = vsel %vm2804, %v2761, %v1055
  %v2827 = vsel %vm2804, %v2762, %v1057
  %v2828 = vsel %vm2804, %v2763, %v1059
  %v2829 = vsel %vm2804, %v2764, %v1061
  %v2830 = vsel %vm2804, %v2765, %v1063
  %v2831 = vsel %vm2804, %v2766, %v1065
  %v2832 = vsel %vm2804, %v2767, %v1067
  %v2833 = vsel %vm2804, %v2768, %v1069
  %v2834 = vsel %vm2804, %v2769, %v1071
  %v2835 = vsel %vm2804, %v2770, %v1073
  %v2836 = vsel %vm2804, %v2771, %v1075
  %v2837 = vsel %vm2804, %v2772, %v1077
  %v2838 = vsel %vm2804, %v2773, %v1079
  %v2839 = vsel %vm2804, %v2774, %v1081
  %v2840 = vsel %vm2804, %v2775, %v1083
  %v2841 = vsel %vm2804, %v2776, %v1085
  %v2842 = vsel %vm2804, %v2777, %v1087
  %v2843 = vsel %vm2804, %v2778, %v1089
  %v2844 = vsel %vm2804, %v2779, %v1091
  %v2845 = vsel %vm2804, %v2780, %v1093
  %v2846 = vsel %vm2804, %v2781, %v1095
  %v2847 = vsel %vm2804, %v2782, %v1097
  %v2848 = vsel %vm2804, %v2783, %v1099
  %v2849 = vsel %vm2804, %v2784, %v1101
  %v2850 = vsel %vm2804, %v2785, %v1103
  %v2851 = vsel %vm2804, %v2786, %v1105
  %v2852 = vsel %vm2804, %v2787, %v1107
  %v2853 = vsel %vm2804, %v2788, %v1109
  %v2854 = vsel %vm2804, %v2789, %v1111
  %v2855 = vsel %vm2804, %v2790, %v1113
  %v2856 = vsel %vm2804, %v2791, %v1115
  %v2857 = vsel %vm2804, %v2792, %v1117
  %v2858 = vsel %vm2804, %v2793, %v1119
  %v2859 = vsel %vm2804, %v2794, %v1121
  %v2860 = vsel %vm2804, %v2795, %v1123
  %v2861 = vsel %vm2804, %v2796, %v1125
  %v2862 = vsel %vm2804, %v2797, %v1127
  %v2863 = vsel %vm2804, %v2798, %v1129
  %v2864 = vsel %vm2804, %v2799, %v1131
  %v2865 = vsel %vm2804, %v2800, %v1133
  %v2866 = vsel %vm2804, %v2801, %v1135
  %v2867 = vsel %vm2804, %v2802, %v1137
  %v2868 = vsel %vm2804, %v2803, %v1139
  %vm2869 = vcmask 97280
  %v2870 = vsel %vm2869, %v2805, %v1269
  %v2871 = vsel %vm2869, %v2806, %v1271
  %v2872 = vsel %vm2869, %v2807, %v1273
  %v2873 = vsel %vm2869, %v2808, %v1275
  %v2874 = vsel %vm2869, %v2809, %v1277
  %v2875 = vsel %vm2869, %v2810, %v1279
  %v2876 = vsel %vm2869, %v2811, %v1281
  %v2877 = vsel %vm2869, %v2812, %v1283
  %v2878 = vsel %vm2869, %v2813, %v1285
  %v2879 = vsel %vm2869, %v2814, %v1287
  %v2880 = vsel %vm2869, %v2815, %v1289
  %v2881 = vsel %vm2869, %v2816, %v1291
  %v2882 = vsel %vm2869, %v2817, %v1293
  %v2883 = vsel %vm2869, %v2818, %v1295
  %v2884 = vsel %vm2869, %v2819, %v1297
  %v2885 = vsel %vm2869, %v2820, %v1299
  %v2886 = vsel %vm2869, %v2821, %v1301
  %v2887 = vsel %vm2869, %v2822, %v1303
  %v2888 = vsel %vm2869, %v2823, %v1305
  %v2889 = vsel %vm2869, %v2824, %v1307
  %v2890 = vsel %vm2869, %v2825, %v1309
  %v2891 = vsel %vm2869, %v2826, %v1311
  %v2892 = vsel %vm2869, %v2827, %v1313
  %v2893 = vsel %vm2869, %v2828, %v1315
  %v2894 = vsel %vm2869, %v2829, %v1317
  %v2895 = vsel %vm2869, %v2830, %v1319
  %v2896 = vsel %vm2869, %v2831, %v1321
  %v2897 = vsel %vm2869, %v2832, %v1323
  %v2898 = vsel %vm2869, %v2833, %v1325
  %v2899 = vsel %vm2869, %v2834, %v1327
  %v2900 = vsel %vm2869, %v2835, %v1329
  %v2901 = vsel %vm2869, %v2836, %v1331
  %v2902 = vsel %vm2869, %v2837, %v1333
  %v2903 = vsel %vm2869, %v2838, %v1335
  %v2904 = vsel %vm2869, %v2839, %v1337
  %v2905 = vsel %vm2869, %v2840, %v1339
  %v2906 = vsel %vm2869, %v2841, %v1341
  %v2907 = vsel %vm2869, %v2842, %v1343
  %v2908 = vsel %vm2869, %v2843, %v1345
  %v2909 = vsel %vm2869, %v2844, %v1347
  %v2910 = vsel %vm2869, %v2845, %v1349
  %v2911 = vsel %vm2869, %v2846, %v1351
  %v2912 = vsel %vm2869, %v2847, %v1353
  %v2913 = vsel %vm2869, %v2848, %v1355
  %v2914 = vsel %vm2869, %v2849, %v1357
  %v2915 = vsel %vm2869, %v2850, %v1359
  %v2916 = vsel %vm2869, %v2851, %v1361
  %v2917 = vsel %vm2869, %v2852, %v1363
  %v2918 = vsel %vm2869, %v2853, %v1365
  %v2919 = vsel %vm2869, %v2854, %v1367
  %v2920 = vsel %vm2869, %v2855, %v1369
  %v2921 = vsel %vm2869, %v2856, %v1371
  %v2922 = vsel %vm2869, %v2857, %v1373
  %v2923 = vsel %vm2869, %v2858, %v1375
  %v2924 = vsel %vm2869, %v2859, %v1377
  %v2925 = vsel %vm2869, %v2860, %v1379
  %v2926 = vsel %vm2869, %v2861, %v1381
  %v2927 = vsel %vm2869, %v2862, %v1383
  %v2928 = vsel %vm2869, %v2863, %v1385
  %v2929 = vsel %vm2869, %v2864, %v1387
  %v2930 = vsel %vm2869, %v2865, %v1389
  %v2931 = vsel %vm2869, %v2866, %v1391
  %v2932 = vsel %vm2869, %v2867, %v1393
  %v2933 = vsel %vm2869, %v2868, %v1395
  %vm2934 = vcmask 130048
  %v2935 = vsel %vm2934, %v2870, %v1525
  %v2936 = vsel %vm2934, %v2871, %v1527
  %v2937 = vsel %vm2934, %v2872, %v1529
  %v2938 = vsel %vm2934, %v2873, %v1531
  %v2939 = vsel %vm2934, %v2874, %v1533
  %v2940 = vsel %vm2934, %v2875, %v1535
  %v2941 = vsel %vm2934, %v2876, %v1537
  %v2942 = vsel %vm2934, %v2877, %v1539
  %v2943 = vsel %vm2934, %v2878, %v1541
  %v2944 = vsel %vm2934, %v2879, %v1543
  %v2945 = vsel %vm2934, %v2880, %v1545
  %v2946 = vsel %vm2934, %v2881, %v1547
  %v2947 = vsel %vm2934, %v2882, %v1549
  %v2948 = vsel %vm2934, %v2883, %v1551
  %v2949 = vsel %vm2934, %v2884, %v1553
  %v2950 = vsel %vm2934, %v2885, %v1555
  %v2951 = vsel %vm2934, %v2886, %v1557
  %v2952 = vsel %vm2934, %v2887, %v1559
  %v2953 = vsel %vm2934, %v2888, %v1561
  %v2954 = vsel %vm2934, %v2889, %v1563
  %v2955 = vsel %vm2934, %v2890, %v1565
  %v2956 = vsel %vm2934, %v2891, %v1567
  %v2957 = vsel %vm2934, %v2892, %v1569
  %v2958 = vsel %vm2934, %v2893, %v1571
  %v2959 = vsel %vm2934, %v2894, %v1573
  %v2960 = vsel %vm2934, %v2895, %v1575
  %v2961 = vsel %vm2934, %v2896, %v1577
  %v2962 = vsel %vm2934, %v2897, %v1579
  %v2963 = vsel %vm2934, %v2898, %v1581
  %v2964 = vsel %vm2934, %v2899, %v1583
  %v2965 = vsel %vm2934, %v2900, %v1585
  %v2966 = vsel %vm2934, %v2901, %v1587
  %v2967 = vsel %vm2934, %v2902, %v1589
  %v2968 = vsel %vm2934, %v2903, %v1591
  %v2969 = vsel %vm2934, %v2904, %v1593
  %v2970 = vsel %vm2934, %v2905, %v1595
  %v2971 = vsel %vm2934, %v2906, %v1597
  %v2972 = vsel %vm2934, %v2907, %v1599
  %v2973 = vsel %vm2934, %v2908, %v1601
  %v2974 = vsel %vm2934, %v2909, %v1603
  %v2975 = vsel %vm2934, %v2910, %v1605
  %v2976 = vsel %vm2934, %v2911, %v1607
  %v2977 = vsel %vm2934, %v2912, %v1609
  %v2978 = vsel %vm2934, %v2913, %v1611
  %v2979 = vsel %vm2934, %v2914, %v1613
  %v2980 = vsel %vm2934, %v2915, %v1615
  %v2981 = vsel %vm2934, %v2916, %v1617
  %v2982 = vsel %vm2934, %v2917, %v1619
  %v2983 = vsel %vm2934, %v2918, %v1621
  %v2984 = vsel %vm2934, %v2919, %v1623
  %v2985 = vsel %vm2934, %v2920, %v1625
  %v2986 = vsel %vm2934, %v2921, %v1627
  %v2987 = vsel %vm2934, %v2922, %v1629
  %v2988 = vsel %vm2934, %v2923, %v1631
  %v2989 = vsel %vm2934, %v2924, %v1633
  %v2990 = vsel %vm2934, %v2925, %v1635
  %v2991 = vsel %vm2934, %v2926, %v1637
  %v2992 = vsel %vm2934, %v2927, %v1639
  %v2993 = vsel %vm2934, %v2928, %v1641
  %v2994 = vsel %vm2934, %v2929, %v1643
  %v2995 = vsel %vm2934, %v2930, %v1645
  %v2996 = vsel %vm2934, %v2931, %v1647
  %v2997 = vsel %vm2934, %v2932, %v1649
  %v2998 = vsel %vm2934, %v2933, %v1651
  %vm2999 = vcmask 162816
  %v3000 = vsel %vm2999, %v2935, %v1781
  %v3001 = vsel %vm2999, %v2936, %v1783
  %v3002 = vsel %vm2999, %v2937, %v1785
  %v3003 = vsel %vm2999, %v2938, %v1787
  %v3004 = vsel %vm2999, %v2939, %v1789
  %v3005 = vsel %vm2999, %v2940, %v1791
  %v3006 = vsel %vm2999, %v2941, %v1793
  %v3007 = vsel %vm2999, %v2942, %v1795
  %v3008 = vsel %vm2999, %v2943, %v1797
  %v3009 = vsel %vm2999, %v2944, %v1799
  %v3010 = vsel %vm2999, %v2945, %v1801
  %v3011 = vsel %vm2999, %v2946, %v1803
  %v3012 = vsel %vm2999, %v2947, %v1805
  %v3013 = vsel %vm2999, %v2948, %v1807
  %v3014 = vsel %vm2999, %v2949, %v1809
  %v3015 = vsel %vm2999, %v2950, %v1811
  %v3016 = vsel %vm2999, %v2951, %v1813
  %v3017 = vsel %vm2999, %v2952, %v1815
  %v3018 = vsel %vm2999, %v2953, %v1817
  %v3019 = vsel %vm2999, %v2954, %v1819
  %v3020 = vsel %vm2999, %v2955, %v1821
  %v3021 = vsel %vm2999, %v2956, %v1823
  %v3022 = vsel %vm2999, %v2957, %v1825
  %v3023 = vsel %vm2999, %v2958, %v1827
  %v3024 = vsel %vm2999, %v2959, %v1829
  %v3025 = vsel %vm2999, %v2960, %v1831
  %v3026 = vsel %vm2999, %v2961, %v1833
  %v3027 = vsel %vm2999, %v2962, %v1835
  %v3028 = vsel %vm2999, %v2963, %v1837
  %v3029 = vsel %vm2999, %v2964, %v1839
  %v3030 = vsel %vm2999, %v2965, %v1841
  %v3031 = vsel %vm2999, %v2966, %v1843
  %v3032 = vsel %vm2999, %v2967, %v1845
  %v3033 = vsel %vm2999, %v2968, %v1847
  %v3034 = vsel %vm2999, %v2969, %v1849
  %v3035 = vsel %vm2999, %v2970, %v1851
  %v3036 = vsel %vm2999, %v2971, %v1853
  %v3037 = vsel %vm2999, %v2972, %v1855
  %v3038 = vsel %vm2999, %v2973, %v1857
  %v3039 = vsel %vm2999, %v2974, %v1859
  %v3040 = vsel %vm2999, %v2975, %v1861
  %v3041 = vsel %vm2999, %v2976, %v1863
  %v3042 = vsel %vm2999, %v2977, %v1865
  %v3043 = vsel %vm2999, %v2978, %v1867
  %v3044 = vsel %vm2999, %v2979, %v1869
  %v3045 = vsel %vm2999, %v2980, %v1871
  %v3046 = vsel %vm2999, %v2981, %v1873
  %v3047 = vsel %vm2999, %v2982, %v1875
  %v3048 = vsel %vm2999, %v2983, %v1877
  %v3049 = vsel %vm2999, %v2984, %v1879
  %v3050 = vsel %vm2999, %v2985, %v1881
  %v3051 = vsel %vm2999, %v2986, %v1883
  %v3052 = vsel %vm2999, %v2987, %v1885
  %v3053 = vsel %vm2999, %v2988, %v1887
  %v3054 = vsel %vm2999, %v2989, %v1889
  %v3055 = vsel %vm2999, %v2990, %v1891
  %v3056 = vsel %vm2999, %v2991, %v1893
  %v3057 = vsel %vm2999, %v2992, %v1895
  %v3058 = vsel %vm2999, %v2993, %v1897
  %v3059 = vsel %vm2999, %v2994, %v1899
  %v3060 = vsel %vm2999, %v2995, %v1901
  %v3061 = vsel %vm2999, %v2996, %v1903
  %v3062 = vsel %vm2999, %v2997, %v1905
  %v3063 = vsel %vm2999, %v2998, %v1907
  %vm3064 = vcmask 195584
  %v3065 = vsel %vm3064, %v3000, %v2037
  %v3066 = vsel %vm3064, %v3001, %v2039
  %v3067 = vsel %vm3064, %v3002, %v2041
  %v3068 = vsel %vm3064, %v3003, %v2043
  %v3069 = vsel %vm3064, %v3004, %v2045
  %v3070 = vsel %vm3064, %v3005, %v2047
  %v3071 = vsel %vm3064, %v3006, %v2049
  %v3072 = vsel %vm3064, %v3007, %v2051
  %v3073 = vsel %vm3064, %v3008, %v2053
  %v3074 = vsel %vm3064, %v3009, %v2055
  %v3075 = vsel %vm3064, %v3010, %v2057
  %v3076 = vsel %vm3064, %v3011, %v2059
  %v3077 = vsel %vm3064, %v3012, %v2061
  %v3078 = vsel %vm3064, %v3013, %v2063
  %v3079 = vsel %vm3064, %v3014, %v2065
  %v3080 = vsel %vm3064, %v3015, %v2067
  %v3081 = vsel %vm3064, %v3016, %v2069
  %v3082 = vsel %vm3064, %v3017, %v2071
  %v3083 = vsel %vm3064, %v3018, %v2073
  %v3084 = vsel %vm3064, %v3019, %v2075
  %v3085 = vsel %vm3064, %v3020, %v2077
  %v3086 = vsel %vm3064, %v3021, %v2079
  %v3087 = vsel %vm3064, %v3022, %v2081
  %v3088 = vsel %vm3064, %v3023, %v2083
  %v3089 = vsel %vm3064, %v3024, %v2085
  %v3090 = vsel %vm3064, %v3025, %v2087
  %v3091 = vsel %vm3064, %v3026, %v2089
  %v3092 = vsel %vm3064, %v3027, %v2091
  %v3093 = vsel %vm3064, %v3028, %v2093
  %v3094 = vsel %vm3064, %v3029, %v2095
  %v3095 = vsel %vm3064, %v3030, %v2097
  %v3096 = vsel %vm3064, %v3031, %v2099
  %v3097 = vsel %vm3064, %v3032, %v2101
  %v3098 = vsel %vm3064, %v3033, %v2103
  %v3099 = vsel %vm3064, %v3034, %v2105
  %v3100 = vsel %vm3064, %v3035, %v2107
  %v3101 = vsel %vm3064, %v3036, %v2109
  %v3102 = vsel %vm3064, %v3037, %v2111
  %v3103 = vsel %vm3064, %v3038, %v2113
  %v3104 = vsel %vm3064, %v3039, %v2115
  %v3105 = vsel %vm3064, %v3040, %v2117
  %v3106 = vsel %vm3064, %v3041, %v2119
  %v3107 = vsel %vm3064, %v3042, %v2121
  %v3108 = vsel %vm3064, %v3043, %v2123
  %v3109 = vsel %vm3064, %v3044, %v2125
  %v3110 = vsel %vm3064, %v3045, %v2127
  %v3111 = vsel %vm3064, %v3046, %v2129
  %v3112 = vsel %vm3064, %v3047, %v2131
  %v3113 = vsel %vm3064, %v3048, %v2133
  %v3114 = vsel %vm3064, %v3049, %v2135
  %v3115 = vsel %vm3064, %v3050, %v2137
  %v3116 = vsel %vm3064, %v3051, %v2139
  %v3117 = vsel %vm3064, %v3052, %v2141
  %v3118 = vsel %vm3064, %v3053, %v2143
  %v3119 = vsel %vm3064, %v3054, %v2145
  %v3120 = vsel %vm3064, %v3055, %v2147
  %v3121 = vsel %vm3064, %v3056, %v2149
  %v3122 = vsel %vm3064, %v3057, %v2151
  %v3123 = vsel %vm3064, %v3058, %v2153
  %v3124 = vsel %vm3064, %v3059, %v2155
  %v3125 = vsel %vm3064, %v3060, %v2157
  %v3126 = vsel %vm3064, %v3061, %v2159
  %v3127 = vsel %vm3064, %v3062, %v2161
  %v3128 = vsel %vm3064, %v3063, %v2163
  %vm3129 = vcmask 228352
  %v3130 = vsel %vm3129, %v3065, %v2293
  %v3131 = vsel %vm3129, %v3066, %v2295
  %v3132 = vsel %vm3129, %v3067, %v2297
  %v3133 = vsel %vm3129, %v3068, %v2299
  %v3134 = vsel %vm3129, %v3069, %v2301
  %v3135 = vsel %vm3129, %v3070, %v2303
  %v3136 = vsel %vm3129, %v3071, %v2305
  %v3137 = vsel %vm3129, %v3072, %v2307
  %v3138 = vsel %vm3129, %v3073, %v2309
  %v3139 = vsel %vm3129, %v3074, %v2311
  %v3140 = vsel %vm3129, %v3075, %v2313
  %v3141 = vsel %vm3129, %v3076, %v2315
  %v3142 = vsel %vm3129, %v3077, %v2317
  %v3143 = vsel %vm3129, %v3078, %v2319
  %v3144 = vsel %vm3129, %v3079, %v2321
  %v3145 = vsel %vm3129, %v3080, %v2323
  %v3146 = vsel %vm3129, %v3081, %v2325
  %v3147 = vsel %vm3129, %v3082, %v2327
  %v3148 = vsel %vm3129, %v3083, %v2329
  %v3149 = vsel %vm3129, %v3084, %v2331
  %v3150 = vsel %vm3129, %v3085, %v2333
  %v3151 = vsel %vm3129, %v3086, %v2335
  %v3152 = vsel %vm3129, %v3087, %v2337
  %v3153 = vsel %vm3129, %v3088, %v2339
  %v3154 = vsel %vm3129, %v3089, %v2341
  %v3155 = vsel %vm3129, %v3090, %v2343
  %v3156 = vsel %vm3129, %v3091, %v2345
  %v3157 = vsel %vm3129, %v3092, %v2347
  %v3158 = vsel %vm3129, %v3093, %v2349
  %v3159 = vsel %vm3129, %v3094, %v2351
  %v3160 = vsel %vm3129, %v3095, %v2353
  %v3161 = vsel %vm3129, %v3096, %v2355
  %v3162 = vsel %vm3129, %v3097, %v2357
  %v3163 = vsel %vm3129, %v3098, %v2359
  %v3164 = vsel %vm3129, %v3099, %v2361
  %v3165 = vsel %vm3129, %v3100, %v2363
  %v3166 = vsel %vm3129, %v3101, %v2365
  %v3167 = vsel %vm3129, %v3102, %v2367
  %v3168 = vsel %vm3129, %v3103, %v2369
  %v3169 = vsel %vm3129, %v3104, %v2371
  %v3170 = vsel %vm3129, %v3105, %v2373
  %v3171 = vsel %vm3129, %v3106, %v2375
  %v3172 = vsel %vm3129, %v3107, %v2377
  %v3173 = vsel %vm3129, %v3108, %v2379
  %v3174 = vsel %vm3129, %v3109, %v2381
  %v3175 = vsel %vm3129, %v3110, %v2383
  %v3176 = vsel %vm3129, %v3111, %v2385
  %v3177 = vsel %vm3129, %v3112, %v2387
  %v3178 = vsel %vm3129, %v3113, %v2389
  %v3179 = vsel %vm3129, %v3114, %v2391
  %v3180 = vsel %vm3129, %v3115, %v2393
  %v3181 = vsel %vm3129, %v3116, %v2395
  %v3182 = vsel %vm3129, %v3117, %v2397
  %v3183 = vsel %vm3129, %v3118, %v2399
  %v3184 = vsel %vm3129, %v3119, %v2401
  %v3185 = vsel %vm3129, %v3120, %v2403
  %v3186 = vsel %vm3129, %v3121, %v2405
  %v3187 = vsel %vm3129, %v3122, %v2407
  %v3188 = vsel %vm3129, %v3123, %v2409
  %v3189 = vsel %vm3129, %v3124, %v2411
  %v3190 = vsel %vm3129, %v3125, %v2413
  %v3191 = vsel %vm3129, %v3126, %v2415
  %v3192 = vsel %vm3129, %v3127, %v2417
  %v3193 = vsel %vm3129, %v3128, %v2419
  %vm3194 = vcmask 261120
  %v3195 = vsel %vm3194, %v3130, %v2549
  %v3196 = vsel %vm3194, %v3131, %v2551
  %v3197 = vsel %vm3194, %v3132, %v2553
  %v3198 = vsel %vm3194, %v3133, %v2555
  %v3199 = vsel %vm3194, %v3134, %v2557
  %v3200 = vsel %vm3194, %v3135, %v2559
  %v3201 = vsel %vm3194, %v3136, %v2561
  %v3202 = vsel %vm3194, %v3137, %v2563
  %v3203 = vsel %vm3194, %v3138, %v2565
  %v3204 = vsel %vm3194, %v3139, %v2567
  %v3205 = vsel %vm3194, %v3140, %v2569
  %v3206 = vsel %vm3194, %v3141, %v2571
  %v3207 = vsel %vm3194, %v3142, %v2573
  %v3208 = vsel %vm3194, %v3143, %v2575
  %v3209 = vsel %vm3194, %v3144, %v2577
  %v3210 = vsel %vm3194, %v3145, %v2579
  %v3211 = vsel %vm3194, %v3146, %v2581
  %v3212 = vsel %vm3194, %v3147, %v2583
  %v3213 = vsel %vm3194, %v3148, %v2585
  %v3214 = vsel %vm3194, %v3149, %v2587
  %v3215 = vsel %vm3194, %v3150, %v2589
  %v3216 = vsel %vm3194, %v3151, %v2591
  %v3217 = vsel %vm3194, %v3152, %v2593
  %v3218 = vsel %vm3194, %v3153, %v2595
  %v3219 = vsel %vm3194, %v3154, %v2597
  %v3220 = vsel %vm3194, %v3155, %v2599
  %v3221 = vsel %vm3194, %v3156, %v2601
  %v3222 = vsel %vm3194, %v3157, %v2603
  %v3223 = vsel %vm3194, %v3158, %v2605
  %v3224 = vsel %vm3194, %v3159, %v2607
  %v3225 = vsel %vm3194, %v3160, %v2609
  %v3226 = vsel %vm3194, %v3161, %v2611
  %v3227 = vsel %vm3194, %v3162, %v2613
  %v3228 = vsel %vm3194, %v3163, %v2615
  %v3229 = vsel %vm3194, %v3164, %v2617
  %v3230 = vsel %vm3194, %v3165, %v2619
  %v3231 = vsel %vm3194, %v3166, %v2621
  %v3232 = vsel %vm3194, %v3167, %v2623
  %v3233 = vsel %vm3194, %v3168, %v2625
  %v3234 = vsel %vm3194, %v3169, %v2627
  %v3235 = vsel %vm3194, %v3170, %v2629
  %v3236 = vsel %vm3194, %v3171, %v2631
  %v3237 = vsel %vm3194, %v3172, %v2633
  %v3238 = vsel %vm3194, %v3173, %v2635
  %v3239 = vsel %vm3194, %v3174, %v2637
  %v3240 = vsel %vm3194, %v3175, %v2639
  %v3241 = vsel %vm3194, %v3176, %v2641
  %v3242 = vsel %vm3194, %v3177, %v2643
  %v3243 = vsel %vm3194, %v3178, %v2645
  %v3244 = vsel %vm3194, %v3179, %v2647
  %v3245 = vsel %vm3194, %v3180, %v2649
  %v3246 = vsel %vm3194, %v3181, %v2651
  %v3247 = vsel %vm3194, %v3182, %v2653
  %v3248 = vsel %vm3194, %v3183, %v2655
  %v3249 = vsel %vm3194, %v3184, %v2657
  %v3250 = vsel %vm3194, %v3185, %v2659
  %v3251 = vsel %vm3194, %v3186, %v2661
  %v3252 = vsel %vm3194, %v3187, %v2663
  %v3253 = vsel %vm3194, %v3188, %v2665
  %v3254 = vsel %vm3194, %v3189, %v2667
  %v3255 = vsel %vm3194, %v3190, %v2669
  %v3256 = vsel %vm3194, %v3191, %v2671
  %v3257 = vsel %vm3194, %v3192, %v2673
  %v3258 = vsel %vm3194, %v3193, %v2675
  %v3259 = vld [vmem:[%s1] sm:$0xff]
  %v3260 = vld [vmem:[%s1 + $0x8] sm:$0xff]
  %v3261 = vld [vmem:[%s1 + $0x10] sm:$0xff]
  %v3262 = vld [vmem:[%s1 + $0x18] sm:$0xff]
  %v3263 = vld [vmem:[%s1 + $0x20] sm:$0xf]
  %vm3264 = vcmask 293888
  %v3266 = vsel %vm3264, %v3195, 0
  %v3269 = vsel %vm3264, %v3196, 0
  %v3272 = vsel %vm3264, %v3197, 0
  %v3275 = vsel %vm3264, %v3198, 0
  %v3278 = vsel %vm3264, %v3199, 0
  %v3281 = vsel %vm3264, %v3200, 0
  %v3284 = vsel %vm3264, %v3201, 0
  %v3287 = vsel %vm3264, %v3202, 0
  %v3290 = vsel %vm3264, %v3203, 0
  %v3293 = vsel %vm3264, %v3204, 0
  %v3296 = vsel %vm3264, %v3205, 0
  %v3299 = vsel %vm3264, %v3206, 0
  %v3302 = vsel %vm3264, %v3207, 0
  %v3305 = vsel %vm3264, %v3208, 0
  %v3308 = vsel %vm3264, %v3209, 0
  %v3311 = vsel %vm3264, %v3210, 0
  %v3314 = vsel %vm3264, %v3211, 0
  %v3317 = vsel %vm3264, %v3212, 0
  %v3320 = vsel %vm3264, %v3213, 0
  %v3323 = vsel %vm3264, %v3214, 0
  %v3326 = vsel %vm3264, %v3215, 0
  %v3329 = vsel %vm3264, %v3216, 0
  %v3332 = vsel %vm3264, %v3217, 0
  %v3335 = vsel %vm3264, %v3218, 0
  %v3338 = vsel %vm3264, %v3219, 0
  %v3341 = vsel %vm3264, %v3220, 0
  %v3344 = vsel %vm3264, %v3221, 0
  %v3347 = vsel %vm3264, %v3222, 0
  %v3350 = vsel %vm3264, %v3223, 0
  %v3353 = vsel %vm3264, %v3224, 0
  %v3356 = vsel %vm3264, %v3225, 0
  %v3359 = vsel %vm3264, %v3226, 0
  %v3362 = vsel %vm3264, %v3227, 0
  %v3365 = vsel %vm3264, %v3228, 0
  %v3368 = vsel %vm3264, %v3229, 0
  %v3371 = vsel %vm3264, %v3230, 0
  %v3374 = vsel %vm3264, %v3231, 0
  %v3377 = vsel %vm3264, %v3232, 0
  %v3380 = vsel %vm3264, %v3233, 0
  %v3383 = vsel %vm3264, %v3234, 0
  %v3386 = vsel %vm3264, %v3235, 0
  %v3389 = vsel %vm3264, %v3236, 0
  %v3392 = vsel %vm3264, %v3237, 0
  %v3395 = vsel %vm3264, %v3238, 0
  %v3398 = vsel %vm3264, %v3239, 0
  %v3401 = vsel %vm3264, %v3240, 0
  %v3404 = vsel %vm3264, %v3241, 0
  %v3407 = vsel %vm3264, %v3242, 0
  %v3410 = vsel %vm3264, %v3243, 0
  %v3413 = vsel %vm3264, %v3244, 0
  %v3416 = vsel %vm3264, %v3245, 0
  %v3419 = vsel %vm3264, %v3246, 0
  %v3422 = vsel %vm3264, %v3247, 0
  %v3425 = vsel %vm3264, %v3248, 0
  %v3428 = vsel %vm3264, %v3249, 0
  %v3431 = vsel %vm3264, %v3250, 0
  %v3434 = vsel %vm3264, %v3251, 0
  %v3437 = vsel %vm3264, %v3252, 0
  %v3440 = vsel %vm3264, %v3253, 0
  %v3443 = vsel %vm3264, %v3254, 0
  %v3446 = vsel %vm3264, %v3255, 0
  %v3449 = vsel %vm3264, %v3256, 0
  %v3452 = vsel %vm3264, %v3257, 0
  %v3455 = vsel %vm3264, %v3258, 0
  %vm3457 = vcmask 1043456
  %v3459 = vsel %vm3457, %v3263, 0
  %3461 = vmatpush.msra.mxu0 0.0
  %3462 = vmatpush.msra.mxu0 0.0
  %3463 = vmatpush.msra.mxu0 0.0
  %3464 = vmatpush.msra.mxu0 0.0
  %3465 = vmatpush.msra.mxu0 0.0
  %3466 = vmatpush.msra.mxu0 0.0
  %3467 = vmatpush.msra.mxu0 0.0
  %3468 = vmatpush.msra.mxu0 0.0
  %3469 = vmatpush.msra.mxu0 0.0
  %3470 = vmatpush.msra.mxu0 0.0
  %3471 = vmatpush.msra.mxu0 0.0
  %3472 = vmatpush.msra.mxu0 %v3459
  %3473 = vmatpush.msra.mxu0 %v3262
  %3474 = vmatpush.msra.mxu0 %v3261
  %3475 = vmatpush.msra.mxu0 %v3260
  %3476 = vmatpush.msra.mxu0 %v3259
  %3477 = vmatmul.f32.gmra.mxu0 %v3266
  %v3478 = vpop.f32.mrf.mxu0
  %v3479 = vadd.f32 0.0, %v3478
  %3480 = vmatmul.f32.gmra.mxu0 %v3269
  %v3481 = vpop.f32.mrf.mxu0
  %v3482 = vadd.f32 0.0, %v3481
  %3483 = vmatmul.f32.gmra.mxu0 %v3272
  %v3484 = vpop.f32.mrf.mxu0
  %v3485 = vadd.f32 0.0, %v3484
  %3486 = vmatmul.f32.gmra.mxu0 %v3275
  %v3487 = vpop.f32.mrf.mxu0
  %v3488 = vadd.f32 0.0, %v3487
  %3489 = vmatmul.f32.gmra.mxu0 %v3278
  %v3490 = vpop.f32.mrf.mxu0
  %v3491 = vadd.f32 0.0, %v3490
  %3492 = vmatmul.f32.gmra.mxu0 %v3281
  %v3493 = vpop.f32.mrf.mxu0
  %v3494 = vadd.f32 0.0, %v3493
  %3495 = vmatmul.f32.gmra.mxu0 %v3284
  %v3496 = vpop.f32.mrf.mxu0
  %v3497 = vadd.f32 0.0, %v3496
  %3498 = vmatmul.f32.gmra.mxu0 %v3287
  %v3499 = vpop.f32.mrf.mxu0
  %v3500 = vadd.f32 0.0, %v3499
  %3501 = vmatmul.f32.gmra.mxu0 %v3290
  %v3502 = vpop.f32.mrf.mxu0
  %v3503 = vadd.f32 0.0, %v3502
  %3504 = vmatmul.f32.gmra.mxu0 %v3293
  %v3505 = vpop.f32.mrf.mxu0
  %v3506 = vadd.f32 0.0, %v3505
  %3507 = vmatmul.f32.gmra.mxu0 %v3296
  %v3508 = vpop.f32.mrf.mxu0
  %v3509 = vadd.f32 0.0, %v3508
  %3510 = vmatmul.f32.gmra.mxu0 %v3299
  %v3511 = vpop.f32.mrf.mxu0
  %v3512 = vadd.f32 0.0, %v3511
  %3513 = vmatmul.f32.gmra.mxu0 %v3302
  %v3514 = vpop.f32.mrf.mxu0
  %v3515 = vadd.f32 0.0, %v3514
  %3516 = vmatmul.f32.gmra.mxu0 %v3305
  %v3517 = vpop.f32.mrf.mxu0
  %v3518 = vadd.f32 0.0, %v3517
  %3519 = vmatmul.f32.gmra.mxu0 %v3308
  %v3520 = vpop.f32.mrf.mxu0
  %v3521 = vadd.f32 0.0, %v3520
  %3522 = vmatmul.f32.gmra.mxu0 %v3311
  %v3523 = vpop.f32.mrf.mxu0
  %v3524 = vadd.f32 0.0, %v3523
  %3525 = vmatmul.f32.gmra.mxu0 %v3314
  %v3526 = vpop.f32.mrf.mxu0
  %v3527 = vadd.f32 0.0, %v3526
  %3528 = vmatmul.f32.gmra.mxu0 %v3317
  %v3529 = vpop.f32.mrf.mxu0
  %v3530 = vadd.f32 0.0, %v3529
  %3531 = vmatmul.f32.gmra.mxu0 %v3320
  %v3532 = vpop.f32.mrf.mxu0
  %v3533 = vadd.f32 0.0, %v3532
  %3534 = vmatmul.f32.gmra.mxu0 %v3323
  %v3535 = vpop.f32.mrf.mxu0
  %v3536 = vadd.f32 0.0, %v3535
  %3537 = vmatmul.f32.gmra.mxu0 %v3326
  %v3538 = vpop.f32.mrf.mxu0
  %v3539 = vadd.f32 0.0, %v3538
  %3540 = vmatmul.f32.gmra.mxu0 %v3329
  %v3541 = vpop.f32.mrf.mxu0
  %v3542 = vadd.f32 0.0, %v3541
  %3543 = vmatmul.f32.gmra.mxu0 %v3332
  %v3544 = vpop.f32.mrf.mxu0
  %v3545 = vadd.f32 0.0, %v3544
  %3546 = vmatmul.f32.gmra.mxu0 %v3335
  %v3547 = vpop.f32.mrf.mxu0
  %v3548 = vadd.f32 0.0, %v3547
  %3549 = vmatmul.f32.gmra.mxu0 %v3338
  %v3550 = vpop.f32.mrf.mxu0
  %v3551 = vadd.f32 0.0, %v3550
  %3552 = vmatmul.f32.gmra.mxu0 %v3341
  %v3553 = vpop.f32.mrf.mxu0
  %v3554 = vadd.f32 0.0, %v3553
  %3555 = vmatmul.f32.gmra.mxu0 %v3344
  %v3556 = vpop.f32.mrf.mxu0
  %v3557 = vadd.f32 0.0, %v3556
  %3558 = vmatmul.f32.gmra.mxu0 %v3347
  %v3559 = vpop.f32.mrf.mxu0
  %v3560 = vadd.f32 0.0, %v3559
  %3561 = vmatmul.f32.gmra.mxu0 %v3350
  %v3562 = vpop.f32.mrf.mxu0
  %v3563 = vadd.f32 0.0, %v3562
  %3564 = vmatmul.f32.gmra.mxu0 %v3353
  %v3565 = vpop.f32.mrf.mxu0
  %v3566 = vadd.f32 0.0, %v3565
  %3567 = vmatmul.f32.gmra.mxu0 %v3356
  %v3568 = vpop.f32.mrf.mxu0
  %v3569 = vadd.f32 0.0, %v3568
  %3570 = vmatmul.f32.gmra.mxu0 %v3359
  %v3571 = vpop.f32.mrf.mxu0
  %v3572 = vadd.f32 0.0, %v3571
  %3573 = vmatmul.f32.gmra.mxu0 %v3362
  %v3574 = vpop.f32.mrf.mxu0
  %v3575 = vadd.f32 0.0, %v3574
  %3576 = vmatmul.f32.gmra.mxu0 %v3365
  %v3577 = vpop.f32.mrf.mxu0
  %v3578 = vadd.f32 0.0, %v3577
  %3579 = vmatmul.f32.gmra.mxu0 %v3368
  %v3580 = vpop.f32.mrf.mxu0
  %v3581 = vadd.f32 0.0, %v3580
  %3582 = vmatmul.f32.gmra.mxu0 %v3371
  %v3583 = vpop.f32.mrf.mxu0
  %v3584 = vadd.f32 0.0, %v3583
  %3585 = vmatmul.f32.gmra.mxu0 %v3374
  %v3586 = vpop.f32.mrf.mxu0
  %v3587 = vadd.f32 0.0, %v3586
  %3588 = vmatmul.f32.gmra.mxu0 %v3377
  %v3589 = vpop.f32.mrf.mxu0
  %v3590 = vadd.f32 0.0, %v3589
  %3591 = vmatmul.f32.gmra.mxu0 %v3380
  %v3592 = vpop.f32.mrf.mxu0
  %v3593 = vadd.f32 0.0, %v3592
  %3594 = vmatmul.f32.gmra.mxu0 %v3383
  %v3595 = vpop.f32.mrf.mxu0
  %v3596 = vadd.f32 0.0, %v3595
  %3597 = vmatmul.f32.gmra.mxu0 %v3386
  %v3598 = vpop.f32.mrf.mxu0
  %v3599 = vadd.f32 0.0, %v3598
  %3600 = vmatmul.f32.gmra.mxu0 %v3389
  %v3601 = vpop.f32.mrf.mxu0
  %v3602 = vadd.f32 0.0, %v3601
  %3603 = vmatmul.f32.gmra.mxu0 %v3392
  %v3604 = vpop.f32.mrf.mxu0
  %v3605 = vadd.f32 0.0, %v3604
  %3606 = vmatmul.f32.gmra.mxu0 %v3395
  %v3607 = vpop.f32.mrf.mxu0
  %v3608 = vadd.f32 0.0, %v3607
  %3609 = vmatmul.f32.gmra.mxu0 %v3398
  %v3610 = vpop.f32.mrf.mxu0
  %v3611 = vadd.f32 0.0, %v3610
  %3612 = vmatmul.f32.gmra.mxu0 %v3401
  %v3613 = vpop.f32.mrf.mxu0
  %v3614 = vadd.f32 0.0, %v3613
  %3615 = vmatmul.f32.gmra.mxu0 %v3404
  %v3616 = vpop.f32.mrf.mxu0
  %v3617 = vadd.f32 0.0, %v3616
  %3618 = vmatmul.f32.gmra.mxu0 %v3407
  %v3619 = vpop.f32.mrf.mxu0
  %v3620 = vadd.f32 0.0, %v3619
  %3621 = vmatmul.f32.gmra.mxu0 %v3410
  %v3622 = vpop.f32.mrf.mxu0
  %v3623 = vadd.f32 0.0, %v3622
  %3624 = vmatmul.f32.gmra.mxu0 %v3413
  %v3625 = vpop.f32.mrf.mxu0
  %v3626 = vadd.f32 0.0, %v3625
  %3627 = vmatmul.f32.gmra.mxu0 %v3416
  %v3628 = vpop.f32.mrf.mxu0
  %v3629 = vadd.f32 0.0, %v3628
  %3630 = vmatmul.f32.gmra.mxu0 %v3419
  %v3631 = vpop.f32.mrf.mxu0
  %v3632 = vadd.f32 0.0, %v3631
  %3633 = vmatmul.f32.gmra.mxu0 %v3422
  %v3634 = vpop.f32.mrf.mxu0
  %v3635 = vadd.f32 0.0, %v3634
  %3636 = vmatmul.f32.gmra.mxu0 %v3425
  %v3637 = vpop.f32.mrf.mxu0
  %v3638 = vadd.f32 0.0, %v3637
  %3639 = vmatmul.f32.gmra.mxu0 %v3428
  %v3640 = vpop.f32.mrf.mxu0
  %v3641 = vadd.f32 0.0, %v3640
  %3642 = vmatmul.f32.gmra.mxu0 %v3431
  %v3643 = vpop.f32.mrf.mxu0
  %v3644 = vadd.f32 0.0, %v3643
  %3645 = vmatmul.f32.gmra.mxu0 %v3434
  %v3646 = vpop.f32.mrf.mxu0
  %v3647 = vadd.f32 0.0, %v3646
  %3648 = vmatmul.f32.gmra.mxu0 %v3437
  %v3649 = vpop.f32.mrf.mxu0
  %v3650 = vadd.f32 0.0, %v3649
  %3651 = vmatmul.f32.gmra.mxu0 %v3440
  %v3652 = vpop.f32.mrf.mxu0
  %v3653 = vadd.f32 0.0, %v3652
  %3654 = vmatmul.f32.gmra.mxu0 %v3443
  %v3655 = vpop.f32.mrf.mxu0
  %v3656 = vadd.f32 0.0, %v3655
  %3657 = vmatmul.f32.gmra.mxu0 %v3446
  %v3658 = vpop.f32.mrf.mxu0
  %v3659 = vadd.f32 0.0, %v3658
  %3660 = vmatmul.f32.gmra.mxu0 %v3449
  %v3661 = vpop.f32.mrf.mxu0
  %v3662 = vadd.f32 0.0, %v3661
  %3663 = vmatmul.f32.gmra.mxu0 %v3452
  %v3664 = vpop.f32.mrf.mxu0
  %v3665 = vadd.f32 0.0, %v3664
  %3666 = vmatmul.f32.gmra.mxu0 %v3455
  %v3667 = vpop.f32.mrf.mxu0
  %v3668 = vadd.f32 0.0, %v3667
  %3669 = vdwg.mxu0
  %v3670 = vld [vmem:[%s2] sm:$0x1]
  %v3672 = vperm.slane %v3670, 0
  %v3674 = vmul.f32 %v3479, %v3672
  %v3675 = vmul.f32 %v3482, %v3672
  %v3676 = vmul.f32 %v3485, %v3672
  %v3677 = vmul.f32 %v3488, %v3672
  %v3678 = vmul.f32 %v3491, %v3672
  %v3679 = vmul.f32 %v3494, %v3672
  %v3680 = vmul.f32 %v3497, %v3672
  %v3681 = vmul.f32 %v3500, %v3672
  %v3682 = vmul.f32 %v3503, %v3672
  %v3683 = vmul.f32 %v3506, %v3672
  %v3684 = vmul.f32 %v3509, %v3672
  %v3685 = vmul.f32 %v3512, %v3672
  %v3686 = vmul.f32 %v3515, %v3672
  %v3687 = vmul.f32 %v3518, %v3672
  %v3688 = vmul.f32 %v3521, %v3672
  %v3689 = vmul.f32 %v3524, %v3672
  %v3690 = vmul.f32 %v3527, %v3672
  %v3691 = vmul.f32 %v3530, %v3672
  %v3692 = vmul.f32 %v3533, %v3672
  %v3693 = vmul.f32 %v3536, %v3672
  %v3694 = vmul.f32 %v3539, %v3672
  %v3695 = vmul.f32 %v3542, %v3672
  %v3696 = vmul.f32 %v3545, %v3672
  %v3697 = vmul.f32 %v3548, %v3672
  %v3698 = vmul.f32 %v3551, %v3672
  %v3699 = vmul.f32 %v3554, %v3672
  %v3700 = vmul.f32 %v3557, %v3672
  %v3701 = vmul.f32 %v3560, %v3672
  %v3702 = vmul.f32 %v3563, %v3672
  %v3703 = vmul.f32 %v3566, %v3672
  %v3704 = vmul.f32 %v3569, %v3672
  %v3705 = vmul.f32 %v3572, %v3672
  %v3706 = vmul.f32 %v3575, %v3672
  %v3707 = vmul.f32 %v3578, %v3672
  %v3708 = vmul.f32 %v3581, %v3672
  %v3709 = vmul.f32 %v3584, %v3672
  %v3710 = vmul.f32 %v3587, %v3672
  %v3711 = vmul.f32 %v3590, %v3672
  %v3712 = vmul.f32 %v3593, %v3672
  %v3713 = vmul.f32 %v3596, %v3672
  %v3714 = vmul.f32 %v3599, %v3672
  %v3715 = vmul.f32 %v3602, %v3672
  %v3716 = vmul.f32 %v3605, %v3672
  %v3717 = vmul.f32 %v3608, %v3672
  %v3718 = vmul.f32 %v3611, %v3672
  %v3719 = vmul.f32 %v3614, %v3672
  %v3720 = vmul.f32 %v3617, %v3672
  %v3721 = vmul.f32 %v3620, %v3672
  %v3722 = vmul.f32 %v3623, %v3672
  %v3723 = vmul.f32 %v3626, %v3672
  %v3724 = vmul.f32 %v3629, %v3672
  %v3725 = vmul.f32 %v3632, %v3672
  %v3726 = vmul.f32 %v3635, %v3672
  %v3727 = vmul.f32 %v3638, %v3672
  %v3728 = vmul.f32 %v3641, %v3672
  %v3729 = vmul.f32 %v3644, %v3672
  %v3730 = vmul.f32 %v3647, %v3672
  %v3731 = vmul.f32 %v3650, %v3672
  %v3732 = vmul.f32 %v3653, %v3672
  %v3733 = vmul.f32 %v3656, %v3672
  %v3734 = vmul.f32 %v3659, %v3672
  %v3735 = vmul.f32 %v3662, %v3672
  %v3736 = vmul.f32 %v3665, %v3672
  %v3737 = vmul.f32 %v3668, %v3672
  %v3738 = vld [vmem:[%s3] sm:$0x1]
  %v3740 = vperm.slane %v3738, 0
  %v3742 = vadd.f32 %v3674, %v3740
  %v3743 = vadd.f32 %v3675, %v3740
  %v3744 = vadd.f32 %v3676, %v3740
  %v3745 = vadd.f32 %v3677, %v3740
  %v3746 = vadd.f32 %v3678, %v3740
  %v3747 = vadd.f32 %v3679, %v3740
  %v3748 = vadd.f32 %v3680, %v3740
  %v3749 = vadd.f32 %v3681, %v3740
  %v3750 = vadd.f32 %v3682, %v3740
  %v3751 = vadd.f32 %v3683, %v3740
  %v3752 = vadd.f32 %v3684, %v3740
  %v3753 = vadd.f32 %v3685, %v3740
  %v3754 = vadd.f32 %v3686, %v3740
  %v3755 = vadd.f32 %v3687, %v3740
  %v3756 = vadd.f32 %v3688, %v3740
  %v3757 = vadd.f32 %v3689, %v3740
  %v3758 = vadd.f32 %v3690, %v3740
  %v3759 = vadd.f32 %v3691, %v3740
  %v3760 = vadd.f32 %v3692, %v3740
  %v3761 = vadd.f32 %v3693, %v3740
  %v3762 = vadd.f32 %v3694, %v3740
  %v3763 = vadd.f32 %v3695, %v3740
  %v3764 = vadd.f32 %v3696, %v3740
  %v3765 = vadd.f32 %v3697, %v3740
  %v3766 = vadd.f32 %v3698, %v3740
  %v3767 = vadd.f32 %v3699, %v3740
  %v3768 = vadd.f32 %v3700, %v3740
  %v3769 = vadd.f32 %v3701, %v3740
  %v3770 = vadd.f32 %v3702, %v3740
  %v3771 = vadd.f32 %v3703, %v3740
  %v3772 = vadd.f32 %v3704, %v3740
  %v3773 = vadd.f32 %v3705, %v3740
  %v3774 = vadd.f32 %v3706, %v3740
  %v3775 = vadd.f32 %v3707, %v3740
  %v3776 = vadd.f32 %v3708, %v3740
  %v3777 = vadd.f32 %v3709, %v3740
  %v3778 = vadd.f32 %v3710, %v3740
  %v3779 = vadd.f32 %v3711, %v3740
  %v3780 = vadd.f32 %v3712, %v3740
  %v3781 = vadd.f32 %v3713, %v3740
  %v3782 = vadd.f32 %v3714, %v3740
  %v3783 = vadd.f32 %v3715, %v3740
  %v3784 = vadd.f32 %v3716, %v3740
  %v3785 = vadd.f32 %v3717, %v3740
  %v3786 = vadd.f32 %v3718, %v3740
  %v3787 = vadd.f32 %v3719, %v3740
  %v3788 = vadd.f32 %v3720, %v3740
  %v3789 = vadd.f32 %v3721, %v3740
  %v3790 = vadd.f32 %v3722, %v3740
  %v3791 = vadd.f32 %v3723, %v3740
  %v3792 = vadd.f32 %v3724, %v3740
  %v3793 = vadd.f32 %v3725, %v3740
  %v3794 = vadd.f32 %v3726, %v3740
  %v3795 = vadd.f32 %v3727, %v3740
  %v3796 = vadd.f32 %v3728, %v3740
  %v3797 = vadd.f32 %v3729, %v3740
  %v3798 = vadd.f32 %v3730, %v3740
  %v3799 = vadd.f32 %v3731, %v3740
  %v3800 = vadd.f32 %v3732, %v3740
  %v3801 = vadd.f32 %v3733, %v3740
  %v3802 = vadd.f32 %v3734, %v3740
  %v3803 = vadd.f32 %v3735, %v3740
  %v3804 = vadd.f32 %v3736, %v3740
  %v3805 = vadd.f32 %v3737, %v3740
  %v3806 = vmul.f32 %v3742, 0.5
  %v3807 = vmul.f32 %v3743, 0.5
  %v3808 = vmul.f32 %v3744, 0.5
  %v3809 = vmul.f32 %v3745, 0.5
  %v3810 = vmul.f32 %v3746, 0.5
  %v3811 = vmul.f32 %v3747, 0.5
  %v3812 = vmul.f32 %v3748, 0.5
  %v3813 = vmul.f32 %v3749, 0.5
  %v3814 = vmul.f32 %v3750, 0.5
  %v3815 = vmul.f32 %v3751, 0.5
  %v3816 = vmul.f32 %v3752, 0.5
  %v3817 = vmul.f32 %v3753, 0.5
  %v3818 = vmul.f32 %v3754, 0.5
  %v3819 = vmul.f32 %v3755, 0.5
  %v3820 = vmul.f32 %v3756, 0.5
  %v3821 = vmul.f32 %v3757, 0.5
  %v3822 = vmul.f32 %v3758, 0.5
  %v3823 = vmul.f32 %v3759, 0.5
  %v3824 = vmul.f32 %v3760, 0.5
  %v3825 = vmul.f32 %v3761, 0.5
  %v3826 = vmul.f32 %v3762, 0.5
  %v3827 = vmul.f32 %v3763, 0.5
  %v3828 = vmul.f32 %v3764, 0.5
  %v3829 = vmul.f32 %v3765, 0.5
  %v3830 = vmul.f32 %v3766, 0.5
  %v3831 = vmul.f32 %v3767, 0.5
  %v3832 = vmul.f32 %v3768, 0.5
  %v3833 = vmul.f32 %v3769, 0.5
  %v3834 = vmul.f32 %v3770, 0.5
  %v3835 = vmul.f32 %v3771, 0.5
  %v3836 = vmul.f32 %v3772, 0.5
  %v3837 = vmul.f32 %v3773, 0.5
  %v3838 = vmul.f32 %v3774, 0.5
  %v3839 = vmul.f32 %v3775, 0.5
  %v3840 = vmul.f32 %v3776, 0.5
  %v3841 = vmul.f32 %v3777, 0.5
  %v3842 = vmul.f32 %v3778, 0.5
  %v3843 = vmul.f32 %v3779, 0.5
  %v3844 = vmul.f32 %v3780, 0.5
  %v3845 = vmul.f32 %v3781, 0.5
  %v3846 = vmul.f32 %v3782, 0.5
  %v3847 = vmul.f32 %v3783, 0.5
  %v3848 = vmul.f32 %v3784, 0.5
  %v3849 = vmul.f32 %v3785, 0.5
  %v3850 = vmul.f32 %v3786, 0.5
  %v3851 = vmul.f32 %v3787, 0.5
  %v3852 = vmul.f32 %v3788, 0.5
  %v3853 = vmul.f32 %v3789, 0.5
  %v3854 = vmul.f32 %v3790, 0.5
  %v3855 = vmul.f32 %v3791, 0.5
  %v3856 = vmul.f32 %v3792, 0.5
  %v3857 = vmul.f32 %v3793, 0.5
  %v3858 = vmul.f32 %v3794, 0.5
  %v3859 = vmul.f32 %v3795, 0.5
  %v3860 = vmul.f32 %v3796, 0.5
  %v3861 = vmul.f32 %v3797, 0.5
  %v3862 = vmul.f32 %v3798, 0.5
  %v3863 = vmul.f32 %v3799, 0.5
  %v3864 = vmul.f32 %v3800, 0.5
  %v3865 = vmul.f32 %v3801, 0.5
  %v3866 = vmul.f32 %v3802, 0.5
  %v3867 = vmul.f32 %v3803, 0.5
  %v3868 = vmul.f32 %v3804, 0.5
  %v3869 = vmul.f32 %v3805, 0.5
  %v3870 = vmul.f32 %v3742, 0.70710677
  %v3871 = vmul.f32 %v3743, 0.70710677
  %v3872 = vmul.f32 %v3744, 0.70710677
  %v3873 = vmul.f32 %v3745, 0.70710677
  %v3874 = vmul.f32 %v3746, 0.70710677
  %v3875 = vmul.f32 %v3747, 0.70710677
  %v3876 = vmul.f32 %v3748, 0.70710677
  %v3877 = vmul.f32 %v3749, 0.70710677
  %v3878 = vmul.f32 %v3750, 0.70710677
  %v3879 = vmul.f32 %v3751, 0.70710677
  %v3880 = vmul.f32 %v3752, 0.70710677
  %v3881 = vmul.f32 %v3753, 0.70710677
  %v3882 = vmul.f32 %v3754, 0.70710677
  %v3883 = vmul.f32 %v3755, 0.70710677
  %v3884 = vmul.f32 %v3756, 0.70710677
  %v3885 = vmul.f32 %v3757, 0.70710677
  %v3886 = vmul.f32 %v3758, 0.70710677
  %v3887 = vmul.f32 %v3759, 0.70710677
  %v3888 = vmul.f32 %v3760, 0.70710677
  %v3889 = vmul.f32 %v3761, 0.70710677
  %v3890 = vmul.f32 %v3762, 0.70710677
  %v3891 = vmul.f32 %v3763, 0.70710677
  %v3892 = vmul.f32 %v3764, 0.70710677
  %v3893 = vmul.f32 %v3765, 0.70710677
  %v3894 = vmul.f32 %v3766, 0.70710677
  %v3895 = vmul.f32 %v3767, 0.70710677
  %v3896 = vmul.f32 %v3768, 0.70710677
  %v3897 = vmul.f32 %v3769, 0.70710677
  %v3898 = vmul.f32 %v3770, 0.70710677
  %v3899 = vmul.f32 %v3771, 0.70710677
  %v3900 = vmul.f32 %v3772, 0.70710677
  %v3901 = vmul.f32 %v3773, 0.70710677
  %v3902 = vmul.f32 %v3774, 0.70710677
  %v3903 = vmul.f32 %v3775, 0.70710677
  %v3904 = vmul.f32 %v3776, 0.70710677
  %v3905 = vmul.f32 %v3777, 0.70710677
  %v3906 = vmul.f32 %v3778, 0.70710677
  %v3907 = vmul.f32 %v3779, 0.70710677
  %v3908 = vmul.f32 %v3780, 0.70710677
  %v3909 = vmul.f32 %v3781, 0.70710677
  %v3910 = vmul.f32 %v3782, 0.70710677
  %v3911 = vmul.f32 %v3783, 0.70710677
  %v3912 = vmul.f32 %v3784, 0.70710677
  %v3913 = vmul.f32 %v3785, 0.70710677
  %v3914 = vmul.f32 %v3786, 0.70710677
  %v3915 = vmul.f32 %v3787, 0.70710677
  %v3916 = vmul.f32 %v3788, 0.70710677
  %v3917 = vmul.f32 %v3789, 0.70710677
  %v3918 = vmul.f32 %v3790, 0.70710677
  %v3919 = vmul.f32 %v3791, 0.70710677
  %v3920 = vmul.f32 %v3792, 0.70710677
  %v3921 = vmul.f32 %v3793, 0.70710677
  %v3922 = vmul.f32 %v3794, 0.70710677
  %v3923 = vmul.f32 %v3795, 0.70710677
  %v3924 = vmul.f32 %v3796, 0.70710677
  %v3925 = vmul.f32 %v3797, 0.70710677
  %v3926 = vmul.f32 %v3798, 0.70710677
  %v3927 = vmul.f32 %v3799, 0.70710677
  %v3928 = vmul.f32 %v3800, 0.70710677
  %v3929 = vmul.f32 %v3801, 0.70710677
  %v3930 = vmul.f32 %v3802, 0.70710677
  %v3931 = vmul.f32 %v3803, 0.70710677
  %v3932 = vmul.f32 %v3804, 0.70710677
  %v3933 = vmul.f32 %v3805, 0.70710677
  %v3934 = vmul.f32 %v3870, %v3870
  %v3935 = vmin.f32 16.0, %v3934
  %v3936 = vmul.f32 %v3935, 2.1237322e-06
  %v3937 = vadd.f32 %v3936, 0.00028619796
  %v3938 = vmul.f32 %v3935, %v3937
  %v3939 = vadd.f32 %v3938, 0.0036580483
  %v3940 = vmul.f32 %v3935, %v3939
  %v3941 = vadd.f32 %v3940, 0.05243302
  %v3942 = vmul.f32 %v3935, %v3941
  %v3943 = vadd.f32 %v3942, 0.18741608
  %v3944 = vmul.f32 %v3935, %v3943
  %v3945 = vadd.f32 %v3944, 1.1283791
  %v3946 = vmul.f32 %v3870, %v3945
  %v3947 = vmul.f32 %v3935, 3.8918573e-05
  %v3948 = vadd.f32 %v3947, 0.001143296
  %v3949 = vmul.f32 %v3935, %v3948
  %v3950 = vadd.f32 %v3949, 0.014752088
  %v3951 = vmul.f32 %v3935, %v3950
  %v3952 = vadd.f32 %v3951, 0.112945676
  %v3953 = vmul.f32 %v3935, %v3952
  %v3954 = vadd.f32 %v3953, 0.4994258
  %v3955 = vmul.f32 %v3935, %v3954
  %v3956 = vadd.f32 %v3955, 1.0
  %v3957 = vrcp.pop %v3956
  %v3958 = vmul.f32 %v3956, %v3957
  %v3959 = vsub.f32 1.0, %v3958
  %v3960 = vmul.f32 %v3957, %v3959
  %v3961 = vadd.f32 %v3957, %v3960
  %vm3962 = vweird.f32 %v3956
  %vm3963 = vweird.f32 %v3957
  %vm3964 = vmor %vm3962, %vm3963
  %v3965 = vsel %vm3964, %v3957, %v3961
  %v3966 = vand.u32 2147483647, %v3956
  %vm3967 = vcmp.eq.f32.partialorder %v3966, 8.507059e+37
  %v3968 = vand.u32 %v3956, 2147483648
  %v3969 = vor.u32 1.1754944e-38, %v3968
  %v3970 = vsel %vm3967, %v3969, %v3965
  %v3971 = vmul.f32 %v3946, %v3970
  %v3972 = vmin.f32 %v3971, 1.0
  %v3973 = vmax.f32 %v3972, -1.0
  %v3974 = vmul.f32 %v3871, %v3871
  %v3975 = vmin.f32 16.0, %v3974
  %v3976 = vmul.f32 %v3975, 2.1237322e-06
  %v3977 = vadd.f32 %v3976, 0.00028619796
  %v3978 = vmul.f32 %v3975, %v3977
  %v3979 = vadd.f32 %v3978, 0.0036580483
  %v3980 = vmul.f32 %v3975, %v3979
  %v3981 = vadd.f32 %v3980, 0.05243302
  %v3982 = vmul.f32 %v3975, %v3981
  %v3983 = vadd.f32 %v3982, 0.18741608
  %v3984 = vmul.f32 %v3975, %v3983
  %v3985 = vadd.f32 %v3984, 1.1283791
  %v3986 = vmul.f32 %v3871, %v3985
  %v3987 = vmul.f32 %v3975, 3.8918573e-05
  %v3988 = vadd.f32 %v3987, 0.001143296
  %v3989 = vmul.f32 %v3975, %v3988
  %v3990 = vadd.f32 %v3989, 0.014752088
  %v3991 = vmul.f32 %v3975, %v3990
  %v3992 = vadd.f32 %v3991, 0.112945676
  %v3993 = vmul.f32 %v3975, %v3992
  %v3994 = vadd.f32 %v3993, 0.4994258
  %v3995 = vmul.f32 %v3975, %v3994
  %v3996 = vadd.f32 %v3995, 1.0
  %v3997 = vrcp.pop %v3996
  %v3998 = vmul.f32 %v3996, %v3997
  %v3999 = vsub.f32 1.0, %v3998
  %v4000 = vmul.f32 %v3997, %v3999
  %v4001 = vadd.f32 %v3997, %v4000
  %vm4002 = vweird.f32 %v3996
  %vm4003 = vweird.f32 %v3997
  %vm4004 = vmor %vm4002, %vm4003
  %v4005 = vsel %vm4004, %v3997, %v4001
  %v4006 = vand.u32 2147483647, %v3996
  %vm4007 = vcmp.eq.f32.partialorder %v4006, 8.507059e+37
  %v4008 = vand.u32 %v3996, 2147483648
  %v4009 = vor.u32 1.1754944e-38, %v4008
  %v4010 = vsel %vm4007, %v4009, %v4005
  %v4011 = vmul.f32 %v3986, %v4010
  %v4012 = vmin.f32 %v4011, 1.0
  %v4013 = vmax.f32 %v4012, -1.0
  %v4014 = vmul.f32 %v3872, %v3872
  %v4015 = vmin.f32 16.0, %v4014
  %v4016 = vmul.f32 %v4015, 2.1237322e-06
  %v4017 = vadd.f32 %v4016, 0.00028619796
  %v4018 = vmul.f32 %v4015, %v4017
  %v4019 = vadd.f32 %v4018, 0.0036580483
  %v4020 = vmul.f32 %v4015, %v4019
  %v4021 = vadd.f32 %v4020, 0.05243302
  %v4022 = vmul.f32 %v4015, %v4021
  %v4023 = vadd.f32 %v4022, 0.18741608
  %v4024 = vmul.f32 %v4015, %v4023
  %v4025 = vadd.f32 %v4024, 1.1283791
  %v4026 = vmul.f32 %v3872, %v4025
  %v4027 = vmul.f32 %v4015, 3.8918573e-05
  %v4028 = vadd.f32 %v4027, 0.001143296
  %v4029 = vmul.f32 %v4015, %v4028
  %v4030 = vadd.f32 %v4029, 0.014752088
  %v4031 = vmul.f32 %v4015, %v4030
  %v4032 = vadd.f32 %v4031, 0.112945676
  %v4033 = vmul.f32 %v4015, %v4032
  %v4034 = vadd.f32 %v4033, 0.4994258
  %v4035 = vmul.f32 %v4015, %v4034
  %v4036 = vadd.f32 %v4035, 1.0
  %v4037 = vrcp.pop %v4036
  %v4038 = vmul.f32 %v4036, %v4037
  %v4039 = vsub.f32 1.0, %v4038
  %v4040 = vmul.f32 %v4037, %v4039
  %v4041 = vadd.f32 %v4037, %v4040
  %vm4042 = vweird.f32 %v4036
  %vm4043 = vweird.f32 %v4037
  %vm4044 = vmor %vm4042, %vm4043
  %v4045 = vsel %vm4044, %v4037, %v4041
  %v4046 = vand.u32 2147483647, %v4036
  %vm4047 = vcmp.eq.f32.partialorder %v4046, 8.507059e+37
  %v4048 = vand.u32 %v4036, 2147483648
  %v4049 = vor.u32 1.1754944e-38, %v4048
  %v4050 = vsel %vm4047, %v4049, %v4045
  %v4051 = vmul.f32 %v4026, %v4050
  %v4052 = vmin.f32 %v4051, 1.0
  %v4053 = vmax.f32 %v4052, -1.0
  %v4054 = vmul.f32 %v3873, %v3873
  %v4055 = vmin.f32 16.0, %v4054
  %v4056 = vmul.f32 %v4055, 2.1237322e-06
  %v4057 = vadd.f32 %v4056, 0.00028619796
  %v4058 = vmul.f32 %v4055, %v4057
  %v4059 = vadd.f32 %v4058, 0.0036580483
  %v4060 = vmul.f32 %v4055, %v4059
  %v4061 = vadd.f32 %v4060, 0.05243302
  %v4062 = vmul.f32 %v4055, %v4061
  %v4063 = vadd.f32 %v4062, 0.18741608
  %v4064 = vmul.f32 %v4055, %v4063
  %v4065 = vadd.f32 %v4064, 1.1283791
  %v4066 = vmul.f32 %v3873, %v4065
  %v4067 = vmul.f32 %v4055, 3.8918573e-05
  %v4068 = vadd.f32 %v4067, 0.001143296
  %v4069 = vmul.f32 %v4055, %v4068
  %v4070 = vadd.f32 %v4069, 0.014752088
  %v4071 = vmul.f32 %v4055, %v4070
  %v4072 = vadd.f32 %v4071, 0.112945676
  %v4073 = vmul.f32 %v4055, %v4072
  %v4074 = vadd.f32 %v4073, 0.4994258
  %v4075 = vmul.f32 %v4055, %v4074
  %v4076 = vadd.f32 %v4075, 1.0
  %v4077 = vrcp.pop %v4076
  %v4078 = vmul.f32 %v4076, %v4077
  %v4079 = vsub.f32 1.0, %v4078
  %v4080 = vmul.f32 %v4077, %v4079
  %v4081 = vadd.f32 %v4077, %v4080
  %vm4082 = vweird.f32 %v4076
  %vm4083 = vweird.f32 %v4077
  %vm4084 = vmor %vm4082, %vm4083
  %v4085 = vsel %vm4084, %v4077, %v4081
  %v4086 = vand.u32 2147483647, %v4076
  %vm4087 = vcmp.eq.f32.partialorder %v4086, 8.507059e+37
  %v4088 = vand.u32 %v4076, 2147483648
  %v4089 = vor.u32 1.1754944e-38, %v4088
  %v4090 = vsel %vm4087, %v4089, %v4085
  %v4091 = vmul.f32 %v4066, %v4090
  %v4092 = vmin.f32 %v4091, 1.0
  %v4093 = vmax.f32 %v4092, -1.0
  %v4094 = vmul.f32 %v3874, %v3874
  %v4095 = vmin.f32 16.0, %v4094
  %v4096 = vmul.f32 %v4095, 2.1237322e-06
  %v4097 = vadd.f32 %v4096, 0.00028619796
  %v4098 = vmul.f32 %v4095, %v4097
  %v4099 = vadd.f32 %v4098, 0.0036580483
  %v4100 = vmul.f32 %v4095, %v4099
  %v4101 = vadd.f32 %v4100, 0.05243302
  %v4102 = vmul.f32 %v4095, %v4101
  %v4103 = vadd.f32 %v4102, 0.18741608
  %v4104 = vmul.f32 %v4095, %v4103
  %v4105 = vadd.f32 %v4104, 1.1283791
  %v4106 = vmul.f32 %v3874, %v4105
  %v4107 = vmul.f32 %v4095, 3.8918573e-05
  %v4108 = vadd.f32 %v4107, 0.001143296
  %v4109 = vmul.f32 %v4095, %v4108
  %v4110 = vadd.f32 %v4109, 0.014752088
  %v4111 = vmul.f32 %v4095, %v4110
  %v4112 = vadd.f32 %v4111, 0.112945676
  %v4113 = vmul.f32 %v4095, %v4112
  %v4114 = vadd.f32 %v4113, 0.4994258
  %v4115 = vmul.f32 %v4095, %v4114
  %v4116 = vadd.f32 %v4115, 1.0
  %v4117 = vrcp.pop %v4116
  %v4118 = vmul.f32 %v4116, %v4117
  %v4119 = vsub.f32 1.0, %v4118
  %v4120 = vmul.f32 %v4117, %v4119
  %v4121 = vadd.f32 %v4117, %v4120
  %vm4122 = vweird.f32 %v4116
  %vm4123 = vweird.f32 %v4117
  %vm4124 = vmor %vm4122, %vm4123
  %v4125 = vsel %vm4124, %v4117, %v4121
  %v4126 = vand.u32 2147483647, %v4116
  %vm4127 = vcmp.eq.f32.partialorder %v4126, 8.507059e+37
  %v4128 = vand.u32 %v4116, 2147483648
  %v4129 = vor.u32 1.1754944e-38, %v4128
  %v4130 = vsel %vm4127, %v4129, %v4125
  %v4131 = vmul.f32 %v4106, %v4130
  %v4132 = vmin.f32 %v4131, 1.0
  %v4133 = vmax.f32 %v4132, -1.0
  %v4134 = vmul.f32 %v3875, %v3875
  %v4135 = vmin.f32 16.0, %v4134
  %v4136 = vmul.f32 %v4135, 2.1237322e-06
  %v4137 = vadd.f32 %v4136, 0.00028619796
  %v4138 = vmul.f32 %v4135, %v4137
  %v4139 = vadd.f32 %v4138, 0.0036580483
  %v4140 = vmul.f32 %v4135, %v4139
  %v4141 = vadd.f32 %v4140, 0.05243302
  %v4142 = vmul.f32 %v4135, %v4141
  %v4143 = vadd.f32 %v4142, 0.18741608
  %v4144 = vmul.f32 %v4135, %v4143
  %v4145 = vadd.f32 %v4144, 1.1283791
  %v4146 = vmul.f32 %v3875, %v4145
  %v4147 = vmul.f32 %v4135, 3.8918573e-05
  %v4148 = vadd.f32 %v4147, 0.001143296
  %v4149 = vmul.f32 %v4135, %v4148
  %v4150 = vadd.f32 %v4149, 0.014752088
  %v4151 = vmul.f32 %v4135, %v4150
  %v4152 = vadd.f32 %v4151, 0.112945676
  %v4153 = vmul.f32 %v4135, %v4152
  %v4154 = vadd.f32 %v4153, 0.4994258
  %v4155 = vmul.f32 %v4135, %v4154
  %v4156 = vadd.f32 %v4155, 1.0
  %v4157 = vrcp.pop %v4156
  %v4158 = vmul.f32 %v4156, %v4157
  %v4159 = vsub.f32 1.0, %v4158
  %v4160 = vmul.f32 %v4157, %v4159
  %v4161 = vadd.f32 %v4157, %v4160
  %vm4162 = vweird.f32 %v4156
  %vm4163 = vweird.f32 %v4157
  %vm4164 = vmor %vm4162, %vm4163
  %v4165 = vsel %vm4164, %v4157, %v4161
  %v4166 = vand.u32 2147483647, %v4156
  %vm4167 = vcmp.eq.f32.partialorder %v4166, 8.507059e+37
  %v4168 = vand.u32 %v4156, 2147483648
  %v4169 = vor.u32 1.1754944e-38, %v4168
  %v4170 = vsel %vm4167, %v4169, %v4165
  %v4171 = vmul.f32 %v4146, %v4170
  %v4172 = vmin.f32 %v4171, 1.0
  %v4173 = vmax.f32 %v4172, -1.0
  %v4174 = vmul.f32 %v3876, %v3876
  %v4175 = vmin.f32 16.0, %v4174
  %v4176 = vmul.f32 %v4175, 2.1237322e-06
  %v4177 = vadd.f32 %v4176, 0.00028619796
  %v4178 = vmul.f32 %v4175, %v4177
  %v4179 = vadd.f32 %v4178, 0.0036580483
  %v4180 = vmul.f32 %v4175, %v4179
  %v4181 = vadd.f32 %v4180, 0.05243302
  %v4182 = vmul.f32 %v4175, %v4181
  %v4183 = vadd.f32 %v4182, 0.18741608
  %v4184 = vmul.f32 %v4175, %v4183
  %v4185 = vadd.f32 %v4184, 1.1283791
  %v4186 = vmul.f32 %v3876, %v4185
  %v4187 = vmul.f32 %v4175, 3.8918573e-05
  %v4188 = vadd.f32 %v4187, 0.001143296
  %v4189 = vmul.f32 %v4175, %v4188
  %v4190 = vadd.f32 %v4189, 0.014752088
  %v4191 = vmul.f32 %v4175, %v4190
  %v4192 = vadd.f32 %v4191, 0.112945676
  %v4193 = vmul.f32 %v4175, %v4192
  %v4194 = vadd.f32 %v4193, 0.4994258
  %v4195 = vmul.f32 %v4175, %v4194
  %v4196 = vadd.f32 %v4195, 1.0
  %v4197 = vrcp.pop %v4196
  %v4198 = vmul.f32 %v4196, %v4197
  %v4199 = vsub.f32 1.0, %v4198
  %v4200 = vmul.f32 %v4197, %v4199
  %v4201 = vadd.f32 %v4197, %v4200
  %vm4202 = vweird.f32 %v4196
  %vm4203 = vweird.f32 %v4197
  %vm4204 = vmor %vm4202, %vm4203
  %v4205 = vsel %vm4204, %v4197, %v4201
  %v4206 = vand.u32 2147483647, %v4196
  %vm4207 = vcmp.eq.f32.partialorder %v4206, 8.507059e+37
  %v4208 = vand.u32 %v4196, 2147483648
  %v4209 = vor.u32 1.1754944e-38, %v4208
  %v4210 = vsel %vm4207, %v4209, %v4205
  %v4211 = vmul.f32 %v4186, %v4210
  %v4212 = vmin.f32 %v4211, 1.0
  %v4213 = vmax.f32 %v4212, -1.0
  %v4214 = vmul.f32 %v3877, %v3877
  %v4215 = vmin.f32 16.0, %v4214
  %v4216 = vmul.f32 %v4215, 2.1237322e-06
  %v4217 = vadd.f32 %v4216, 0.00028619796
  %v4218 = vmul.f32 %v4215, %v4217
  %v4219 = vadd.f32 %v4218, 0.0036580483
  %v4220 = vmul.f32 %v4215, %v4219
  %v4221 = vadd.f32 %v4220, 0.05243302
  %v4222 = vmul.f32 %v4215, %v4221
  %v4223 = vadd.f32 %v4222, 0.18741608
  %v4224 = vmul.f32 %v4215, %v4223
  %v4225 = vadd.f32 %v4224, 1.1283791
  %v4226 = vmul.f32 %v3877, %v4225
  %v4227 = vmul.f32 %v4215, 3.8918573e-05
  %v4228 = vadd.f32 %v4227, 0.001143296
  %v4229 = vmul.f32 %v4215, %v4228
  %v4230 = vadd.f32 %v4229, 0.014752088
  %v4231 = vmul.f32 %v4215, %v4230
  %v4232 = vadd.f32 %v4231, 0.112945676
  %v4233 = vmul.f32 %v4215, %v4232
  %v4234 = vadd.f32 %v4233, 0.4994258
  %v4235 = vmul.f32 %v4215, %v4234
  %v4236 = vadd.f32 %v4235, 1.0
  %v4237 = vrcp.pop %v4236
  %v4238 = vmul.f32 %v4236, %v4237
  %v4239 = vsub.f32 1.0, %v4238
  %v4240 = vmul.f32 %v4237, %v4239
  %v4241 = vadd.f32 %v4237, %v4240
  %vm4242 = vweird.f32 %v4236
  %vm4243 = vweird.f32 %v4237
  %vm4244 = vmor %vm4242, %vm4243
  %v4245 = vsel %vm4244, %v4237, %v4241
  %v4246 = vand.u32 2147483647, %v4236
  %vm4247 = vcmp.eq.f32.partialorder %v4246, 8.507059e+37
  %v4248 = vand.u32 %v4236, 2147483648
  %v4249 = vor.u32 1.1754944e-38, %v4248
  %v4250 = vsel %vm4247, %v4249, %v4245
  %v4251 = vmul.f32 %v4226, %v4250
  %v4252 = vmin.f32 %v4251, 1.0
  %v4253 = vmax.f32 %v4252, -1.0
  %v4254 = vmul.f32 %v3878, %v3878
  %v4255 = vmin.f32 16.0, %v4254
  %v4256 = vmul.f32 %v4255, 2.1237322e-06
  %v4257 = vadd.f32 %v4256, 0.00028619796
  %v4258 = vmul.f32 %v4255, %v4257
  %v4259 = vadd.f32 %v4258, 0.0036580483
  %v4260 = vmul.f32 %v4255, %v4259
  %v4261 = vadd.f32 %v4260, 0.05243302
  %v4262 = vmul.f32 %v4255, %v4261
  %v4263 = vadd.f32 %v4262, 0.18741608
  %v4264 = vmul.f32 %v4255, %v4263
  %v4265 = vadd.f32 %v4264, 1.1283791
  %v4266 = vmul.f32 %v3878, %v4265
  %v4267 = vmul.f32 %v4255, 3.8918573e-05
  %v4268 = vadd.f32 %v4267, 0.001143296
  %v4269 = vmul.f32 %v4255, %v4268
  %v4270 = vadd.f32 %v4269, 0.014752088
  %v4271 = vmul.f32 %v4255, %v4270
  %v4272 = vadd.f32 %v4271, 0.112945676
  %v4273 = vmul.f32 %v4255, %v4272
  %v4274 = vadd.f32 %v4273, 0.4994258
  %v4275 = vmul.f32 %v4255, %v4274
  %v4276 = vadd.f32 %v4275, 1.0
  %v4277 = vrcp.pop %v4276
  %v4278 = vmul.f32 %v4276, %v4277
  %v4279 = vsub.f32 1.0, %v4278
  %v4280 = vmul.f32 %v4277, %v4279
  %v4281 = vadd.f32 %v4277, %v4280
  %vm4282 = vweird.f32 %v4276
  %vm4283 = vweird.f32 %v4277
  %vm4284 = vmor %vm4282, %vm4283
  %v4285 = vsel %vm4284, %v4277, %v4281
  %v4286 = vand.u32 2147483647, %v4276
  %vm4287 = vcmp.eq.f32.partialorder %v4286, 8.507059e+37
  %v4288 = vand.u32 %v4276, 2147483648
  %v4289 = vor.u32 1.1754944e-38, %v4288
  %v4290 = vsel %vm4287, %v4289, %v4285
  %v4291 = vmul.f32 %v4266, %v4290
  %v4292 = vmin.f32 %v4291, 1.0
  %v4293 = vmax.f32 %v4292, -1.0
  %v4294 = vmul.f32 %v3879, %v3879
  %v4295 = vmin.f32 16.0, %v4294
  %v4296 = vmul.f32 %v4295, 2.1237322e-06
  %v4297 = vadd.f32 %v4296, 0.00028619796
  %v4298 = vmul.f32 %v4295, %v4297
  %v4299 = vadd.f32 %v4298, 0.0036580483
  %v4300 = vmul.f32 %v4295, %v4299
  %v4301 = vadd.f32 %v4300, 0.05243302
  %v4302 = vmul.f32 %v4295, %v4301
  %v4303 = vadd.f32 %v4302, 0.18741608
  %v4304 = vmul.f32 %v4295, %v4303
  %v4305 = vadd.f32 %v4304, 1.1283791
  %v4306 = vmul.f32 %v3879, %v4305
  %v4307 = vmul.f32 %v4295, 3.8918573e-05
  %v4308 = vadd.f32 %v4307, 0.001143296
  %v4309 = vmul.f32 %v4295, %v4308
  %v4310 = vadd.f32 %v4309, 0.014752088
  %v4311 = vmul.f32 %v4295, %v4310
  %v4312 = vadd.f32 %v4311, 0.112945676
  %v4313 = vmul.f32 %v4295, %v4312
  %v4314 = vadd.f32 %v4313, 0.4994258
  %v4315 = vmul.f32 %v4295, %v4314
  %v4316 = vadd.f32 %v4315, 1.0
  %v4317 = vrcp.pop %v4316
  %v4318 = vmul.f32 %v4316, %v4317
  %v4319 = vsub.f32 1.0, %v4318
  %v4320 = vmul.f32 %v4317, %v4319
  %v4321 = vadd.f32 %v4317, %v4320
  %vm4322 = vweird.f32 %v4316
  %vm4323 = vweird.f32 %v4317
  %vm4324 = vmor %vm4322, %vm4323
  %v4325 = vsel %vm4324, %v4317, %v4321
  %v4326 = vand.u32 2147483647, %v4316
  %vm4327 = vcmp.eq.f32.partialorder %v4326, 8.507059e+37
  %v4328 = vand.u32 %v4316, 2147483648
  %v4329 = vor.u32 1.1754944e-38, %v4328
  %v4330 = vsel %vm4327, %v4329, %v4325
  %v4331 = vmul.f32 %v4306, %v4330
  %v4332 = vmin.f32 %v4331, 1.0
  %v4333 = vmax.f32 %v4332, -1.0
  %v4334 = vmul.f32 %v3880, %v3880
  %v4335 = vmin.f32 16.0, %v4334
  %v4336 = vmul.f32 %v4335, 2.1237322e-06
  %v4337 = vadd.f32 %v4336, 0.00028619796
  %v4338 = vmul.f32 %v4335, %v4337
  %v4339 = vadd.f32 %v4338, 0.0036580483
  %v4340 = vmul.f32 %v4335, %v4339
  %v4341 = vadd.f32 %v4340, 0.05243302
  %v4342 = vmul.f32 %v4335, %v4341
  %v4343 = vadd.f32 %v4342, 0.18741608
  %v4344 = vmul.f32 %v4335, %v4343
  %v4345 = vadd.f32 %v4344, 1.1283791
  %v4346 = vmul.f32 %v3880, %v4345
  %v4347 = vmul.f32 %v4335, 3.8918573e-05
  %v4348 = vadd.f32 %v4347, 0.001143296
  %v4349 = vmul.f32 %v4335, %v4348
  %v4350 = vadd.f32 %v4349, 0.014752088
  %v4351 = vmul.f32 %v4335, %v4350
  %v4352 = vadd.f32 %v4351, 0.112945676
  %v4353 = vmul.f32 %v4335, %v4352
  %v4354 = vadd.f32 %v4353, 0.4994258
  %v4355 = vmul.f32 %v4335, %v4354
  %v4356 = vadd.f32 %v4355, 1.0
  %v4357 = vrcp.pop %v4356
  %v4358 = vmul.f32 %v4356, %v4357
  %v4359 = vsub.f32 1.0, %v4358
  %v4360 = vmul.f32 %v4357, %v4359
  %v4361 = vadd.f32 %v4357, %v4360
  %vm4362 = vweird.f32 %v4356
  %vm4363 = vweird.f32 %v4357
  %vm4364 = vmor %vm4362, %vm4363
  %v4365 = vsel %vm4364, %v4357, %v4361
  %v4366 = vand.u32 2147483647, %v4356
  %vm4367 = vcmp.eq.f32.partialorder %v4366, 8.507059e+37
  %v4368 = vand.u32 %v4356, 2147483648
  %v4369 = vor.u32 1.1754944e-38, %v4368
  %v4370 = vsel %vm4367, %v4369, %v4365
  %v4371 = vmul.f32 %v4346, %v4370
  %v4372 = vmin.f32 %v4371, 1.0
  %v4373 = vmax.f32 %v4372, -1.0
  %v4374 = vmul.f32 %v3881, %v3881
  %v4375 = vmin.f32 16.0, %v4374
  %v4376 = vmul.f32 %v4375, 2.1237322e-06
  %v4377 = vadd.f32 %v4376, 0.00028619796
  %v4378 = vmul.f32 %v4375, %v4377
  %v4379 = vadd.f32 %v4378, 0.0036580483
  %v4380 = vmul.f32 %v4375, %v4379
  %v4381 = vadd.f32 %v4380, 0.05243302
  %v4382 = vmul.f32 %v4375, %v4381
  %v4383 = vadd.f32 %v4382, 0.18741608
  %v4384 = vmul.f32 %v4375, %v4383
  %v4385 = vadd.f32 %v4384, 1.1283791
  %v4386 = vmul.f32 %v3881, %v4385
  %v4387 = vmul.f32 %v4375, 3.8918573e-05
  %v4388 = vadd.f32 %v4387, 0.001143296
  %v4389 = vmul.f32 %v4375, %v4388
  %v4390 = vadd.f32 %v4389, 0.014752088
  %v4391 = vmul.f32 %v4375, %v4390
  %v4392 = vadd.f32 %v4391, 0.112945676
  %v4393 = vmul.f32 %v4375, %v4392
  %v4394 = vadd.f32 %v4393, 0.4994258
  %v4395 = vmul.f32 %v4375, %v4394
  %v4396 = vadd.f32 %v4395, 1.0
  %v4397 = vrcp.pop %v4396
  %v4398 = vmul.f32 %v4396, %v4397
  %v4399 = vsub.f32 1.0, %v4398
  %v4400 = vmul.f32 %v4397, %v4399
  %v4401 = vadd.f32 %v4397, %v4400
  %vm4402 = vweird.f32 %v4396
  %vm4403 = vweird.f32 %v4397
  %vm4404 = vmor %vm4402, %vm4403
  %v4405 = vsel %vm4404, %v4397, %v4401
  %v4406 = vand.u32 2147483647, %v4396
  %vm4407 = vcmp.eq.f32.partialorder %v4406, 8.507059e+37
  %v4408 = vand.u32 %v4396, 2147483648
  %v4409 = vor.u32 1.1754944e-38, %v4408
  %v4410 = vsel %vm4407, %v4409, %v4405
  %v4411 = vmul.f32 %v4386, %v4410
  %v4412 = vmin.f32 %v4411, 1.0
  %v4413 = vmax.f32 %v4412, -1.0
  %v4414 = vmul.f32 %v3882, %v3882
  %v4415 = vmin.f32 16.0, %v4414
  %v4416 = vmul.f32 %v4415, 2.1237322e-06
  %v4417 = vadd.f32 %v4416, 0.00028619796
  %v4418 = vmul.f32 %v4415, %v4417
  %v4419 = vadd.f32 %v4418, 0.0036580483
  %v4420 = vmul.f32 %v4415, %v4419
  %v4421 = vadd.f32 %v4420, 0.05243302
  %v4422 = vmul.f32 %v4415, %v4421
  %v4423 = vadd.f32 %v4422, 0.18741608
  %v4424 = vmul.f32 %v4415, %v4423
  %v4425 = vadd.f32 %v4424, 1.1283791
  %v4426 = vmul.f32 %v3882, %v4425
  %v4427 = vmul.f32 %v4415, 3.8918573e-05
  %v4428 = vadd.f32 %v4427, 0.001143296
  %v4429 = vmul.f32 %v4415, %v4428
  %v4430 = vadd.f32 %v4429, 0.014752088
  %v4431 = vmul.f32 %v4415, %v4430
  %v4432 = vadd.f32 %v4431, 0.112945676
  %v4433 = vmul.f32 %v4415, %v4432
  %v4434 = vadd.f32 %v4433, 0.4994258
  %v4435 = vmul.f32 %v4415, %v4434
  %v4436 = vadd.f32 %v4435, 1.0
  %v4437 = vrcp.pop %v4436
  %v4438 = vmul.f32 %v4436, %v4437
  %v4439 = vsub.f32 1.0, %v4438
  %v4440 = vmul.f32 %v4437, %v4439
  %v4441 = vadd.f32 %v4437, %v4440
  %vm4442 = vweird.f32 %v4436
  %vm4443 = vweird.f32 %v4437
  %vm4444 = vmor %vm4442, %vm4443
  %v4445 = vsel %vm4444, %v4437, %v4441
  %v4446 = vand.u32 2147483647, %v4436
  %vm4447 = vcmp.eq.f32.partialorder %v4446, 8.507059e+37
  %v4448 = vand.u32 %v4436, 2147483648
  %v4449 = vor.u32 1.1754944e-38, %v4448
  %v4450 = vsel %vm4447, %v4449, %v4445
  %v4451 = vmul.f32 %v4426, %v4450
  %v4452 = vmin.f32 %v4451, 1.0
  %v4453 = vmax.f32 %v4452, -1.0
  %v4454 = vmul.f32 %v3883, %v3883
  %v4455 = vmin.f32 16.0, %v4454
  %v4456 = vmul.f32 %v4455, 2.1237322e-06
  %v4457 = vadd.f32 %v4456, 0.00028619796
  %v4458 = vmul.f32 %v4455, %v4457
  %v4459 = vadd.f32 %v4458, 0.0036580483
  %v4460 = vmul.f32 %v4455, %v4459
  %v4461 = vadd.f32 %v4460, 0.05243302
  %v4462 = vmul.f32 %v4455, %v4461
  %v4463 = vadd.f32 %v4462, 0.18741608
  %v4464 = vmul.f32 %v4455, %v4463
  %v4465 = vadd.f32 %v4464, 1.1283791
  %v4466 = vmul.f32 %v3883, %v4465
  %v4467 = vmul.f32 %v4455, 3.8918573e-05
  %v4468 = vadd.f32 %v4467, 0.001143296
  %v4469 = vmul.f32 %v4455, %v4468
  %v4470 = vadd.f32 %v4469, 0.014752088
  %v4471 = vmul.f32 %v4455, %v4470
  %v4472 = vadd.f32 %v4471, 0.112945676
  %v4473 = vmul.f32 %v4455, %v4472
  %v4474 = vadd.f32 %v4473, 0.4994258
  %v4475 = vmul.f32 %v4455, %v4474
  %v4476 = vadd.f32 %v4475, 1.0
  %v4477 = vrcp.pop %v4476
  %v4478 = vmul.f32 %v4476, %v4477
  %v4479 = vsub.f32 1.0, %v4478
  %v4480 = vmul.f32 %v4477, %v4479
  %v4481 = vadd.f32 %v4477, %v4480
  %vm4482 = vweird.f32 %v4476
  %vm4483 = vweird.f32 %v4477
  %vm4484 = vmor %vm4482, %vm4483
  %v4485 = vsel %vm4484, %v4477, %v4481
  %v4486 = vand.u32 2147483647, %v4476
  %vm4487 = vcmp.eq.f32.partialorder %v4486, 8.507059e+37
  %v4488 = vand.u32 %v4476, 2147483648
  %v4489 = vor.u32 1.1754944e-38, %v4488
  %v4490 = vsel %vm4487, %v4489, %v4485
  %v4491 = vmul.f32 %v4466, %v4490
  %v4492 = vmin.f32 %v4491, 1.0
  %v4493 = vmax.f32 %v4492, -1.0
  %v4494 = vmul.f32 %v3884, %v3884
  %v4495 = vmin.f32 16.0, %v4494
  %v4496 = vmul.f32 %v4495, 2.1237322e-06
  %v4497 = vadd.f32 %v4496, 0.00028619796
  %v4498 = vmul.f32 %v4495, %v4497
  %v4499 = vadd.f32 %v4498, 0.0036580483
  %v4500 = vmul.f32 %v4495, %v4499
  %v4501 = vadd.f32 %v4500, 0.05243302
  %v4502 = vmul.f32 %v4495, %v4501
  %v4503 = vadd.f32 %v4502, 0.18741608
  %v4504 = vmul.f32 %v4495, %v4503
  %v4505 = vadd.f32 %v4504, 1.1283791
  %v4506 = vmul.f32 %v3884, %v4505
  %v4507 = vmul.f32 %v4495, 3.8918573e-05
  %v4508 = vadd.f32 %v4507, 0.001143296
  %v4509 = vmul.f32 %v4495, %v4508
  %v4510 = vadd.f32 %v4509, 0.014752088
  %v4511 = vmul.f32 %v4495, %v4510
  %v4512 = vadd.f32 %v4511, 0.112945676
  %v4513 = vmul.f32 %v4495, %v4512
  %v4514 = vadd.f32 %v4513, 0.4994258
  %v4515 = vmul.f32 %v4495, %v4514
  %v4516 = vadd.f32 %v4515, 1.0
  %v4517 = vrcp.pop %v4516
  %v4518 = vmul.f32 %v4516, %v4517
  %v4519 = vsub.f32 1.0, %v4518
  %v4520 = vmul.f32 %v4517, %v4519
  %v4521 = vadd.f32 %v4517, %v4520
  %vm4522 = vweird.f32 %v4516
  %vm4523 = vweird.f32 %v4517
  %vm4524 = vmor %vm4522, %vm4523
  %v4525 = vsel %vm4524, %v4517, %v4521
  %v4526 = vand.u32 2147483647, %v4516
  %vm4527 = vcmp.eq.f32.partialorder %v4526, 8.507059e+37
  %v4528 = vand.u32 %v4516, 2147483648
  %v4529 = vor.u32 1.1754944e-38, %v4528
  %v4530 = vsel %vm4527, %v4529, %v4525
  %v4531 = vmul.f32 %v4506, %v4530
  %v4532 = vmin.f32 %v4531, 1.0
  %v4533 = vmax.f32 %v4532, -1.0
  %v4534 = vmul.f32 %v3885, %v3885
  %v4535 = vmin.f32 16.0, %v4534
  %v4536 = vmul.f32 %v4535, 2.1237322e-06
  %v4537 = vadd.f32 %v4536, 0.00028619796
  %v4538 = vmul.f32 %v4535, %v4537
  %v4539 = vadd.f32 %v4538, 0.0036580483
  %v4540 = vmul.f32 %v4535, %v4539
  %v4541 = vadd.f32 %v4540, 0.05243302
  %v4542 = vmul.f32 %v4535, %v4541
  %v4543 = vadd.f32 %v4542, 0.18741608
  %v4544 = vmul.f32 %v4535, %v4543
  %v4545 = vadd.f32 %v4544, 1.1283791
  %v4546 = vmul.f32 %v3885, %v4545
  %v4547 = vmul.f32 %v4535, 3.8918573e-05
  %v4548 = vadd.f32 %v4547, 0.001143296
  %v4549 = vmul.f32 %v4535, %v4548
  %v4550 = vadd.f32 %v4549, 0.014752088
  %v4551 = vmul.f32 %v4535, %v4550
  %v4552 = vadd.f32 %v4551, 0.112945676
  %v4553 = vmul.f32 %v4535, %v4552
  %v4554 = vadd.f32 %v4553, 0.4994258
  %v4555 = vmul.f32 %v4535, %v4554
  %v4556 = vadd.f32 %v4555, 1.0
  %v4557 = vrcp.pop %v4556
  %v4558 = vmul.f32 %v4556, %v4557
  %v4559 = vsub.f32 1.0, %v4558
  %v4560 = vmul.f32 %v4557, %v4559
  %v4561 = vadd.f32 %v4557, %v4560
  %vm4562 = vweird.f32 %v4556
  %vm4563 = vweird.f32 %v4557
  %vm4564 = vmor %vm4562, %vm4563
  %v4565 = vsel %vm4564, %v4557, %v4561
  %v4566 = vand.u32 2147483647, %v4556
  %vm4567 = vcmp.eq.f32.partialorder %v4566, 8.507059e+37
  %v4568 = vand.u32 %v4556, 2147483648
  %v4569 = vor.u32 1.1754944e-38, %v4568
  %v4570 = vsel %vm4567, %v4569, %v4565
  %v4571 = vmul.f32 %v4546, %v4570
  %v4572 = vmin.f32 %v4571, 1.0
  %v4573 = vmax.f32 %v4572, -1.0
  %v4574 = vmul.f32 %v3886, %v3886
  %v4575 = vmin.f32 16.0, %v4574
  %v4576 = vmul.f32 %v4575, 2.1237322e-06
  %v4577 = vadd.f32 %v4576, 0.00028619796
  %v4578 = vmul.f32 %v4575, %v4577
  %v4579 = vadd.f32 %v4578, 0.0036580483
  %v4580 = vmul.f32 %v4575, %v4579
  %v4581 = vadd.f32 %v4580, 0.05243302
  %v4582 = vmul.f32 %v4575, %v4581
  %v4583 = vadd.f32 %v4582, 0.18741608
  %v4584 = vmul.f32 %v4575, %v4583
  %v4585 = vadd.f32 %v4584, 1.1283791
  %v4586 = vmul.f32 %v3886, %v4585
  %v4587 = vmul.f32 %v4575, 3.8918573e-05
  %v4588 = vadd.f32 %v4587, 0.001143296
  %v4589 = vmul.f32 %v4575, %v4588
  %v4590 = vadd.f32 %v4589, 0.014752088
  %v4591 = vmul.f32 %v4575, %v4590
  %v4592 = vadd.f32 %v4591, 0.112945676
  %v4593 = vmul.f32 %v4575, %v4592
  %v4594 = vadd.f32 %v4593, 0.4994258
  %v4595 = vmul.f32 %v4575, %v4594
  %v4596 = vadd.f32 %v4595, 1.0
  %v4597 = vrcp.pop %v4596
  %v4598 = vmul.f32 %v4596, %v4597
  %v4599 = vsub.f32 1.0, %v4598
  %v4600 = vmul.f32 %v4597, %v4599
  %v4601 = vadd.f32 %v4597, %v4600
  %vm4602 = vweird.f32 %v4596
  %vm4603 = vweird.f32 %v4597
  %vm4604 = vmor %vm4602, %vm4603
  %v4605 = vsel %vm4604, %v4597, %v4601
  %v4606 = vand.u32 2147483647, %v4596
  %vm4607 = vcmp.eq.f32.partialorder %v4606, 8.507059e+37
  %v4608 = vand.u32 %v4596, 2147483648
  %v4609 = vor.u32 1.1754944e-38, %v4608
  %v4610 = vsel %vm4607, %v4609, %v4605
  %v4611 = vmul.f32 %v4586, %v4610
  %v4612 = vmin.f32 %v4611, 1.0
  %v4613 = vmax.f32 %v4612, -1.0
  %v4614 = vmul.f32 %v3887, %v3887
  %v4615 = vmin.f32 16.0, %v4614
  %v4616 = vmul.f32 %v4615, 2.1237322e-06
  %v4617 = vadd.f32 %v4616, 0.00028619796
  %v4618 = vmul.f32 %v4615, %v4617
  %v4619 = vadd.f32 %v4618, 0.0036580483
  %v4620 = vmul.f32 %v4615, %v4619
  %v4621 = vadd.f32 %v4620, 0.05243302
  %v4622 = vmul.f32 %v4615, %v4621
  %v4623 = vadd.f32 %v4622, 0.18741608
  %v4624 = vmul.f32 %v4615, %v4623
  %v4625 = vadd.f32 %v4624, 1.1283791
  %v4626 = vmul.f32 %v3887, %v4625
  %v4627 = vmul.f32 %v4615, 3.8918573e-05
  %v4628 = vadd.f32 %v4627, 0.001143296
  %v4629 = vmul.f32 %v4615, %v4628
  %v4630 = vadd.f32 %v4629, 0.014752088
  %v4631 = vmul.f32 %v4615, %v4630
  %v4632 = vadd.f32 %v4631, 0.112945676
  %v4633 = vmul.f32 %v4615, %v4632
  %v4634 = vadd.f32 %v4633, 0.4994258
  %v4635 = vmul.f32 %v4615, %v4634
  %v4636 = vadd.f32 %v4635, 1.0
  %v4637 = vrcp.pop %v4636
  %v4638 = vmul.f32 %v4636, %v4637
  %v4639 = vsub.f32 1.0, %v4638
  %v4640 = vmul.f32 %v4637, %v4639
  %v4641 = vadd.f32 %v4637, %v4640
  %vm4642 = vweird.f32 %v4636
  %vm4643 = vweird.f32 %v4637
  %vm4644 = vmor %vm4642, %vm4643
  %v4645 = vsel %vm4644, %v4637, %v4641
  %v4646 = vand.u32 2147483647, %v4636
  %vm4647 = vcmp.eq.f32.partialorder %v4646, 8.507059e+37
  %v4648 = vand.u32 %v4636, 2147483648
  %v4649 = vor.u32 1.1754944e-38, %v4648
  %v4650 = vsel %vm4647, %v4649, %v4645
  %v4651 = vmul.f32 %v4626, %v4650
  %v4652 = vmin.f32 %v4651, 1.0
  %v4653 = vmax.f32 %v4652, -1.0
  %v4654 = vmul.f32 %v3888, %v3888
  %v4655 = vmin.f32 16.0, %v4654
  %v4656 = vmul.f32 %v4655, 2.1237322e-06
  %v4657 = vadd.f32 %v4656, 0.00028619796
  %v4658 = vmul.f32 %v4655, %v4657
  %v4659 = vadd.f32 %v4658, 0.0036580483
  %v4660 = vmul.f32 %v4655, %v4659
  %v4661 = vadd.f32 %v4660, 0.05243302
  %v4662 = vmul.f32 %v4655, %v4661
  %v4663 = vadd.f32 %v4662, 0.18741608
  %v4664 = vmul.f32 %v4655, %v4663
  %v4665 = vadd.f32 %v4664, 1.1283791
  %v4666 = vmul.f32 %v3888, %v4665
  %v4667 = vmul.f32 %v4655, 3.8918573e-05
  %v4668 = vadd.f32 %v4667, 0.001143296
  %v4669 = vmul.f32 %v4655, %v4668
  %v4670 = vadd.f32 %v4669, 0.014752088
  %v4671 = vmul.f32 %v4655, %v4670
  %v4672 = vadd.f32 %v4671, 0.112945676
  %v4673 = vmul.f32 %v4655, %v4672
  %v4674 = vadd.f32 %v4673, 0.4994258
  %v4675 = vmul.f32 %v4655, %v4674
  %v4676 = vadd.f32 %v4675, 1.0
  %v4677 = vrcp.pop %v4676
  %v4678 = vmul.f32 %v4676, %v4677
  %v4679 = vsub.f32 1.0, %v4678
  %v4680 = vmul.f32 %v4677, %v4679
  %v4681 = vadd.f32 %v4677, %v4680
  %vm4682 = vweird.f32 %v4676
  %vm4683 = vweird.f32 %v4677
  %vm4684 = vmor %vm4682, %vm4683
  %v4685 = vsel %vm4684, %v4677, %v4681
  %v4686 = vand.u32 2147483647, %v4676
  %vm4687 = vcmp.eq.f32.partialorder %v4686, 8.507059e+37
  %v4688 = vand.u32 %v4676, 2147483648
  %v4689 = vor.u32 1.1754944e-38, %v4688
  %v4690 = vsel %vm4687, %v4689, %v4685
  %v4691 = vmul.f32 %v4666, %v4690
  %v4692 = vmin.f32 %v4691, 1.0
  %v4693 = vmax.f32 %v4692, -1.0
  %v4694 = vmul.f32 %v3889, %v3889
  %v4695 = vmin.f32 16.0, %v4694
  %v4696 = vmul.f32 %v4695, 2.1237322e-06
  %v4697 = vadd.f32 %v4696, 0.00028619796
  %v4698 = vmul.f32 %v4695, %v4697
  %v4699 = vadd.f32 %v4698, 0.0036580483
  %v4700 = vmul.f32 %v4695, %v4699
  %v4701 = vadd.f32 %v4700, 0.05243302
  %v4702 = vmul.f32 %v4695, %v4701
  %v4703 = vadd.f32 %v4702, 0.18741608
  %v4704 = vmul.f32 %v4695, %v4703
  %v4705 = vadd.f32 %v4704, 1.1283791
  %v4706 = vmul.f32 %v3889, %v4705
  %v4707 = vmul.f32 %v4695, 3.8918573e-05
  %v4708 = vadd.f32 %v4707, 0.001143296
  %v4709 = vmul.f32 %v4695, %v4708
  %v4710 = vadd.f32 %v4709, 0.014752088
  %v4711 = vmul.f32 %v4695, %v4710
  %v4712 = vadd.f32 %v4711, 0.112945676
  %v4713 = vmul.f32 %v4695, %v4712
  %v4714 = vadd.f32 %v4713, 0.4994258
  %v4715 = vmul.f32 %v4695, %v4714
  %v4716 = vadd.f32 %v4715, 1.0
  %v4717 = vrcp.pop %v4716
  %v4718 = vmul.f32 %v4716, %v4717
  %v4719 = vsub.f32 1.0, %v4718
  %v4720 = vmul.f32 %v4717, %v4719
  %v4721 = vadd.f32 %v4717, %v4720
  %vm4722 = vweird.f32 %v4716
  %vm4723 = vweird.f32 %v4717
  %vm4724 = vmor %vm4722, %vm4723
  %v4725 = vsel %vm4724, %v4717, %v4721
  %v4726 = vand.u32 2147483647, %v4716
  %vm4727 = vcmp.eq.f32.partialorder %v4726, 8.507059e+37
  %v4728 = vand.u32 %v4716, 2147483648
  %v4729 = vor.u32 1.1754944e-38, %v4728
  %v4730 = vsel %vm4727, %v4729, %v4725
  %v4731 = vmul.f32 %v4706, %v4730
  %v4732 = vmin.f32 %v4731, 1.0
  %v4733 = vmax.f32 %v4732, -1.0
  %v4734 = vmul.f32 %v3890, %v3890
  %v4735 = vmin.f32 16.0, %v4734
  %v4736 = vmul.f32 %v4735, 2.1237322e-06
  %v4737 = vadd.f32 %v4736, 0.00028619796
  %v4738 = vmul.f32 %v4735, %v4737
  %v4739 = vadd.f32 %v4738, 0.0036580483
  %v4740 = vmul.f32 %v4735, %v4739
  %v4741 = vadd.f32 %v4740, 0.05243302
  %v4742 = vmul.f32 %v4735, %v4741
  %v4743 = vadd.f32 %v4742, 0.18741608
  %v4744 = vmul.f32 %v4735, %v4743
  %v4745 = vadd.f32 %v4744, 1.1283791
  %v4746 = vmul.f32 %v3890, %v4745
  %v4747 = vmul.f32 %v4735, 3.8918573e-05
  %v4748 = vadd.f32 %v4747, 0.001143296
  %v4749 = vmul.f32 %v4735, %v4748
  %v4750 = vadd.f32 %v4749, 0.014752088
  %v4751 = vmul.f32 %v4735, %v4750
  %v4752 = vadd.f32 %v4751, 0.112945676
  %v4753 = vmul.f32 %v4735, %v4752
  %v4754 = vadd.f32 %v4753, 0.4994258
  %v4755 = vmul.f32 %v4735, %v4754
  %v4756 = vadd.f32 %v4755, 1.0
  %v4757 = vrcp.pop %v4756
  %v4758 = vmul.f32 %v4756, %v4757
  %v4759 = vsub.f32 1.0, %v4758
  %v4760 = vmul.f32 %v4757, %v4759
  %v4761 = vadd.f32 %v4757, %v4760
  %vm4762 = vweird.f32 %v4756
  %vm4763 = vweird.f32 %v4757
  %vm4764 = vmor %vm4762, %vm4763
  %v4765 = vsel %vm4764, %v4757, %v4761
  %v4766 = vand.u32 2147483647, %v4756
  %vm4767 = vcmp.eq.f32.partialorder %v4766, 8.507059e+37
  %v4768 = vand.u32 %v4756, 2147483648
  %v4769 = vor.u32 1.1754944e-38, %v4768
  %v4770 = vsel %vm4767, %v4769, %v4765
  %v4771 = vmul.f32 %v4746, %v4770
  %v4772 = vmin.f32 %v4771, 1.0
  %v4773 = vmax.f32 %v4772, -1.0
  %v4774 = vmul.f32 %v3891, %v3891
  %v4775 = vmin.f32 16.0, %v4774
  %v4776 = vmul.f32 %v4775, 2.1237322e-06
  %v4777 = vadd.f32 %v4776, 0.00028619796
  %v4778 = vmul.f32 %v4775, %v4777
  %v4779 = vadd.f32 %v4778, 0.0036580483
  %v4780 = vmul.f32 %v4775, %v4779
  %v4781 = vadd.f32 %v4780, 0.05243302
  %v4782 = vmul.f32 %v4775, %v4781
  %v4783 = vadd.f32 %v4782, 0.18741608
  %v4784 = vmul.f32 %v4775, %v4783
  %v4785 = vadd.f32 %v4784, 1.1283791
  %v4786 = vmul.f32 %v3891, %v4785
  %v4787 = vmul.f32 %v4775, 3.8918573e-05
  %v4788 = vadd.f32 %v4787, 0.001143296
  %v4789 = vmul.f32 %v4775, %v4788
  %v4790 = vadd.f32 %v4789, 0.014752088
  %v4791 = vmul.f32 %v4775, %v4790
  %v4792 = vadd.f32 %v4791, 0.112945676
  %v4793 = vmul.f32 %v4775, %v4792
  %v4794 = vadd.f32 %v4793, 0.4994258
  %v4795 = vmul.f32 %v4775, %v4794
  %v4796 = vadd.f32 %v4795, 1.0
  %v4797 = vrcp.pop %v4796
  %v4798 = vmul.f32 %v4796, %v4797
  %v4799 = vsub.f32 1.0, %v4798
  %v4800 = vmul.f32 %v4797, %v4799
  %v4801 = vadd.f32 %v4797, %v4800
  %vm4802 = vweird.f32 %v4796
  %vm4803 = vweird.f32 %v4797
  %vm4804 = vmor %vm4802, %vm4803
  %v4805 = vsel %vm4804, %v4797, %v4801
  %v4806 = vand.u32 2147483647, %v4796
  %vm4807 = vcmp.eq.f32.partialorder %v4806, 8.507059e+37
  %v4808 = vand.u32 %v4796, 2147483648
  %v4809 = vor.u32 1.1754944e-38, %v4808
  %v4810 = vsel %vm4807, %v4809, %v4805
  %v4811 = vmul.f32 %v4786, %v4810
  %v4812 = vmin.f32 %v4811, 1.0
  %v4813 = vmax.f32 %v4812, -1.0
  %v4814 = vmul.f32 %v3892, %v3892
  %v4815 = vmin.f32 16.0, %v4814
  %v4816 = vmul.f32 %v4815, 2.1237322e-06
  %v4817 = vadd.f32 %v4816, 0.00028619796
  %v4818 = vmul.f32 %v4815, %v4817
  %v4819 = vadd.f32 %v4818, 0.0036580483
  %v4820 = vmul.f32 %v4815, %v4819
  %v4821 = vadd.f32 %v4820, 0.05243302
  %v4822 = vmul.f32 %v4815, %v4821
  %v4823 = vadd.f32 %v4822, 0.18741608
  %v4824 = vmul.f32 %v4815, %v4823
  %v4825 = vadd.f32 %v4824, 1.1283791
  %v4826 = vmul.f32 %v3892, %v4825
  %v4827 = vmul.f32 %v4815, 3.8918573e-05
  %v4828 = vadd.f32 %v4827, 0.001143296
  %v4829 = vmul.f32 %v4815, %v4828
  %v4830 = vadd.f32 %v4829, 0.014752088
  %v4831 = vmul.f32 %v4815, %v4830
  %v4832 = vadd.f32 %v4831, 0.112945676
  %v4833 = vmul.f32 %v4815, %v4832
  %v4834 = vadd.f32 %v4833, 0.4994258
  %v4835 = vmul.f32 %v4815, %v4834
  %v4836 = vadd.f32 %v4835, 1.0
  %v4837 = vrcp.pop %v4836
  %v4838 = vmul.f32 %v4836, %v4837
  %v4839 = vsub.f32 1.0, %v4838
  %v4840 = vmul.f32 %v4837, %v4839
  %v4841 = vadd.f32 %v4837, %v4840
  %vm4842 = vweird.f32 %v4836
  %vm4843 = vweird.f32 %v4837
  %vm4844 = vmor %vm4842, %vm4843
  %v4845 = vsel %vm4844, %v4837, %v4841
  %v4846 = vand.u32 2147483647, %v4836
  %vm4847 = vcmp.eq.f32.partialorder %v4846, 8.507059e+37
  %v4848 = vand.u32 %v4836, 2147483648
  %v4849 = vor.u32 1.1754944e-38, %v4848
  %v4850 = vsel %vm4847, %v4849, %v4845
  %v4851 = vmul.f32 %v4826, %v4850
  %v4852 = vmin.f32 %v4851, 1.0
  %v4853 = vmax.f32 %v4852, -1.0
  %v4854 = vmul.f32 %v3893, %v3893
  %v4855 = vmin.f32 16.0, %v4854
  %v4856 = vmul.f32 %v4855, 2.1237322e-06
  %v4857 = vadd.f32 %v4856, 0.00028619796
  %v4858 = vmul.f32 %v4855, %v4857
  %v4859 = vadd.f32 %v4858, 0.0036580483
  %v4860 = vmul.f32 %v4855, %v4859
  %v4861 = vadd.f32 %v4860, 0.05243302
  %v4862 = vmul.f32 %v4855, %v4861
  %v4863 = vadd.f32 %v4862, 0.18741608
  %v4864 = vmul.f32 %v4855, %v4863
  %v4865 = vadd.f32 %v4864, 1.1283791
  %v4866 = vmul.f32 %v3893, %v4865
  %v4867 = vmul.f32 %v4855, 3.8918573e-05
  %v4868 = vadd.f32 %v4867, 0.001143296
  %v4869 = vmul.f32 %v4855, %v4868
  %v4870 = vadd.f32 %v4869, 0.014752088
  %v4871 = vmul.f32 %v4855, %v4870
  %v4872 = vadd.f32 %v4871, 0.112945676
  %v4873 = vmul.f32 %v4855, %v4872
  %v4874 = vadd.f32 %v4873, 0.4994258
  %v4875 = vmul.f32 %v4855, %v4874
  %v4876 = vadd.f32 %v4875, 1.0
  %v4877 = vrcp.pop %v4876
  %v4878 = vmul.f32 %v4876, %v4877
  %v4879 = vsub.f32 1.0, %v4878
  %v4880 = vmul.f32 %v4877, %v4879
  %v4881 = vadd.f32 %v4877, %v4880
  %vm4882 = vweird.f32 %v4876
  %vm4883 = vweird.f32 %v4877
  %vm4884 = vmor %vm4882, %vm4883
  %v4885 = vsel %vm4884, %v4877, %v4881
  %v4886 = vand.u32 2147483647, %v4876
  %vm4887 = vcmp.eq.f32.partialorder %v4886, 8.507059e+37
  %v4888 = vand.u32 %v4876, 2147483648
  %v4889 = vor.u32 1.1754944e-38, %v4888
  %v4890 = vsel %vm4887, %v4889, %v4885
  %v4891 = vmul.f32 %v4866, %v4890
  %v4892 = vmin.f32 %v4891, 1.0
  %v4893 = vmax.f32 %v4892, -1.0
  %v4894 = vmul.f32 %v3894, %v3894
  %v4895 = vmin.f32 16.0, %v4894
  %v4896 = vmul.f32 %v4895, 2.1237322e-06
  %v4897 = vadd.f32 %v4896, 0.00028619796
  %v4898 = vmul.f32 %v4895, %v4897
  %v4899 = vadd.f32 %v4898, 0.0036580483
  %v4900 = vmul.f32 %v4895, %v4899
  %v4901 = vadd.f32 %v4900, 0.05243302
  %v4902 = vmul.f32 %v4895, %v4901
  %v4903 = vadd.f32 %v4902, 0.18741608
  %v4904 = vmul.f32 %v4895, %v4903
  %v4905 = vadd.f32 %v4904, 1.1283791
  %v4906 = vmul.f32 %v3894, %v4905
  %v4907 = vmul.f32 %v4895, 3.8918573e-05
  %v4908 = vadd.f32 %v4907, 0.001143296
  %v4909 = vmul.f32 %v4895, %v4908
  %v4910 = vadd.f32 %v4909, 0.014752088
  %v4911 = vmul.f32 %v4895, %v4910
  %v4912 = vadd.f32 %v4911, 0.112945676
  %v4913 = vmul.f32 %v4895, %v4912
  %v4914 = vadd.f32 %v4913, 0.4994258
  %v4915 = vmul.f32 %v4895, %v4914
  %v4916 = vadd.f32 %v4915, 1.0
  %v4917 = vrcp.pop %v4916
  %v4918 = vmul.f32 %v4916, %v4917
  %v4919 = vsub.f32 1.0, %v4918
  %v4920 = vmul.f32 %v4917, %v4919
  %v4921 = vadd.f32 %v4917, %v4920
  %vm4922 = vweird.f32 %v4916
  %vm4923 = vweird.f32 %v4917
  %vm4924 = vmor %vm4922, %vm4923
  %v4925 = vsel %vm4924, %v4917, %v4921
  %v4926 = vand.u32 2147483647, %v4916
  %vm4927 = vcmp.eq.f32.partialorder %v4926, 8.507059e+37
  %v4928 = vand.u32 %v4916, 2147483648
  %v4929 = vor.u32 1.1754944e-38, %v4928
  %v4930 = vsel %vm4927, %v4929, %v4925
  %v4931 = vmul.f32 %v4906, %v4930
  %v4932 = vmin.f32 %v4931, 1.0
  %v4933 = vmax.f32 %v4932, -1.0
  %v4934 = vmul.f32 %v3895, %v3895
  %v4935 = vmin.f32 16.0, %v4934
  %v4936 = vmul.f32 %v4935, 2.1237322e-06
  %v4937 = vadd.f32 %v4936, 0.00028619796
  %v4938 = vmul.f32 %v4935, %v4937
  %v4939 = vadd.f32 %v4938, 0.0036580483
  %v4940 = vmul.f32 %v4935, %v4939
  %v4941 = vadd.f32 %v4940, 0.05243302
  %v4942 = vmul.f32 %v4935, %v4941
  %v4943 = vadd.f32 %v4942, 0.18741608
  %v4944 = vmul.f32 %v4935, %v4943
  %v4945 = vadd.f32 %v4944, 1.1283791
  %v4946 = vmul.f32 %v3895, %v4945
  %v4947 = vmul.f32 %v4935, 3.8918573e-05
  %v4948 = vadd.f32 %v4947, 0.001143296
  %v4949 = vmul.f32 %v4935, %v4948
  %v4950 = vadd.f32 %v4949, 0.014752088
  %v4951 = vmul.f32 %v4935, %v4950
  %v4952 = vadd.f32 %v4951, 0.112945676
  %v4953 = vmul.f32 %v4935, %v4952
  %v4954 = vadd.f32 %v4953, 0.4994258
  %v4955 = vmul.f32 %v4935, %v4954
  %v4956 = vadd.f32 %v4955, 1.0
  %v4957 = vrcp.pop %v4956
  %v4958 = vmul.f32 %v4956, %v4957
  %v4959 = vsub.f32 1.0, %v4958
  %v4960 = vmul.f32 %v4957, %v4959
  %v4961 = vadd.f32 %v4957, %v4960
  %vm4962 = vweird.f32 %v4956
  %vm4963 = vweird.f32 %v4957
  %vm4964 = vmor %vm4962, %vm4963
  %v4965 = vsel %vm4964, %v4957, %v4961
  %v4966 = vand.u32 2147483647, %v4956
  %vm4967 = vcmp.eq.f32.partialorder %v4966, 8.507059e+37
  %v4968 = vand.u32 %v4956, 2147483648
  %v4969 = vor.u32 1.1754944e-38, %v4968
  %v4970 = vsel %vm4967, %v4969, %v4965
  %v4971 = vmul.f32 %v4946, %v4970
  %v4972 = vmin.f32 %v4971, 1.0
  %v4973 = vmax.f32 %v4972, -1.0
  %v4974 = vmul.f32 %v3896, %v3896
  %v4975 = vmin.f32 16.0, %v4974
  %v4976 = vmul.f32 %v4975, 2.1237322e-06
  %v4977 = vadd.f32 %v4976, 0.00028619796
  %v4978 = vmul.f32 %v4975, %v4977
  %v4979 = vadd.f32 %v4978, 0.0036580483
  %v4980 = vmul.f32 %v4975, %v4979
  %v4981 = vadd.f32 %v4980, 0.05243302
  %v4982 = vmul.f32 %v4975, %v4981
  %v4983 = vadd.f32 %v4982, 0.18741608
  %v4984 = vmul.f32 %v4975, %v4983
  %v4985 = vadd.f32 %v4984, 1.1283791
  %v4986 = vmul.f32 %v3896, %v4985
  %v4987 = vmul.f32 %v4975, 3.8918573e-05
  %v4988 = vadd.f32 %v4987, 0.001143296
  %v4989 = vmul.f32 %v4975, %v4988
  %v4990 = vadd.f32 %v4989, 0.014752088
  %v4991 = vmul.f32 %v4975, %v4990
  %v4992 = vadd.f32 %v4991, 0.112945676
  %v4993 = vmul.f32 %v4975, %v4992
  %v4994 = vadd.f32 %v4993, 0.4994258
  %v4995 = vmul.f32 %v4975, %v4994
  %v4996 = vadd.f32 %v4995, 1.0
  %v4997 = vrcp.pop %v4996
  %v4998 = vmul.f32 %v4996, %v4997
  %v4999 = vsub.f32 1.0, %v4998
  %v5000 = vmul.f32 %v4997, %v4999
  %v5001 = vadd.f32 %v4997, %v5000
  %vm5002 = vweird.f32 %v4996
  %vm5003 = vweird.f32 %v4997
  %vm5004 = vmor %vm5002, %vm5003
  %v5005 = vsel %vm5004, %v4997, %v5001
  %v5006 = vand.u32 2147483647, %v4996
  %vm5007 = vcmp.eq.f32.partialorder %v5006, 8.507059e+37
  %v5008 = vand.u32 %v4996, 2147483648
  %v5009 = vor.u32 1.1754944e-38, %v5008
  %v5010 = vsel %vm5007, %v5009, %v5005
  %v5011 = vmul.f32 %v4986, %v5010
  %v5012 = vmin.f32 %v5011, 1.0
  %v5013 = vmax.f32 %v5012, -1.0
  %v5014 = vmul.f32 %v3897, %v3897
  %v5015 = vmin.f32 16.0, %v5014
  %v5016 = vmul.f32 %v5015, 2.1237322e-06
  %v5017 = vadd.f32 %v5016, 0.00028619796
  %v5018 = vmul.f32 %v5015, %v5017
  %v5019 = vadd.f32 %v5018, 0.0036580483
  %v5020 = vmul.f32 %v5015, %v5019
  %v5021 = vadd.f32 %v5020, 0.05243302
  %v5022 = vmul.f32 %v5015, %v5021
  %v5023 = vadd.f32 %v5022, 0.18741608
  %v5024 = vmul.f32 %v5015, %v5023
  %v5025 = vadd.f32 %v5024, 1.1283791
  %v5026 = vmul.f32 %v3897, %v5025
  %v5027 = vmul.f32 %v5015, 3.8918573e-05
  %v5028 = vadd.f32 %v5027, 0.001143296
  %v5029 = vmul.f32 %v5015, %v5028
  %v5030 = vadd.f32 %v5029, 0.014752088
  %v5031 = vmul.f32 %v5015, %v5030
  %v5032 = vadd.f32 %v5031, 0.112945676
  %v5033 = vmul.f32 %v5015, %v5032
  %v5034 = vadd.f32 %v5033, 0.4994258
  %v5035 = vmul.f32 %v5015, %v5034
  %v5036 = vadd.f32 %v5035, 1.0
  %v5037 = vrcp.pop %v5036
  %v5038 = vmul.f32 %v5036, %v5037
  %v5039 = vsub.f32 1.0, %v5038
  %v5040 = vmul.f32 %v5037, %v5039
  %v5041 = vadd.f32 %v5037, %v5040
  %vm5042 = vweird.f32 %v5036
  %vm5043 = vweird.f32 %v5037
  %vm5044 = vmor %vm5042, %vm5043
  %v5045 = vsel %vm5044, %v5037, %v5041
  %v5046 = vand.u32 2147483647, %v5036
  %vm5047 = vcmp.eq.f32.partialorder %v5046, 8.507059e+37
  %v5048 = vand.u32 %v5036, 2147483648
  %v5049 = vor.u32 1.1754944e-38, %v5048
  %v5050 = vsel %vm5047, %v5049, %v5045
  %v5051 = vmul.f32 %v5026, %v5050
  %v5052 = vmin.f32 %v5051, 1.0
  %v5053 = vmax.f32 %v5052, -1.0
  %v5054 = vmul.f32 %v3898, %v3898
  %v5055 = vmin.f32 16.0, %v5054
  %v5056 = vmul.f32 %v5055, 2.1237322e-06
  %v5057 = vadd.f32 %v5056, 0.00028619796
  %v5058 = vmul.f32 %v5055, %v5057
  %v5059 = vadd.f32 %v5058, 0.0036580483
  %v5060 = vmul.f32 %v5055, %v5059
  %v5061 = vadd.f32 %v5060, 0.05243302
  %v5062 = vmul.f32 %v5055, %v5061
  %v5063 = vadd.f32 %v5062, 0.18741608
  %v5064 = vmul.f32 %v5055, %v5063
  %v5065 = vadd.f32 %v5064, 1.1283791
  %v5066 = vmul.f32 %v3898, %v5065
  %v5067 = vmul.f32 %v5055, 3.8918573e-05
  %v5068 = vadd.f32 %v5067, 0.001143296
  %v5069 = vmul.f32 %v5055, %v5068
  %v5070 = vadd.f32 %v5069, 0.014752088
  %v5071 = vmul.f32 %v5055, %v5070
  %v5072 = vadd.f32 %v5071, 0.112945676
  %v5073 = vmul.f32 %v5055, %v5072
  %v5074 = vadd.f32 %v5073, 0.4994258
  %v5075 = vmul.f32 %v5055, %v5074
  %v5076 = vadd.f32 %v5075, 1.0
  %v5077 = vrcp.pop %v5076
  %v5078 = vmul.f32 %v5076, %v5077
  %v5079 = vsub.f32 1.0, %v5078
  %v5080 = vmul.f32 %v5077, %v5079
  %v5081 = vadd.f32 %v5077, %v5080
  %vm5082 = vweird.f32 %v5076
  %vm5083 = vweird.f32 %v5077
  %vm5084 = vmor %vm5082, %vm5083
  %v5085 = vsel %vm5084, %v5077, %v5081
  %v5086 = vand.u32 2147483647, %v5076
  %vm5087 = vcmp.eq.f32.partialorder %v5086, 8.507059e+37
  %v5088 = vand.u32 %v5076, 2147483648
  %v5089 = vor.u32 1.1754944e-38, %v5088
  %v5090 = vsel %vm5087, %v5089, %v5085
  %v5091 = vmul.f32 %v5066, %v5090
  %v5092 = vmin.f32 %v5091, 1.0
  %v5093 = vmax.f32 %v5092, -1.0
  %v5094 = vmul.f32 %v3899, %v3899
  %v5095 = vmin.f32 16.0, %v5094
  %v5096 = vmul.f32 %v5095, 2.1237322e-06
  %v5097 = vadd.f32 %v5096, 0.00028619796
  %v5098 = vmul.f32 %v5095, %v5097
  %v5099 = vadd.f32 %v5098, 0.0036580483
  %v5100 = vmul.f32 %v5095, %v5099
  %v5101 = vadd.f32 %v5100, 0.05243302
  %v5102 = vmul.f32 %v5095, %v5101
  %v5103 = vadd.f32 %v5102, 0.18741608
  %v5104 = vmul.f32 %v5095, %v5103
  %v5105 = vadd.f32 %v5104, 1.1283791
  %v5106 = vmul.f32 %v3899, %v5105
  %v5107 = vmul.f32 %v5095, 3.8918573e-05
  %v5108 = vadd.f32 %v5107, 0.001143296
  %v5109 = vmul.f32 %v5095, %v5108
  %v5110 = vadd.f32 %v5109, 0.014752088
  %v5111 = vmul.f32 %v5095, %v5110
  %v5112 = vadd.f32 %v5111, 0.112945676
  %v5113 = vmul.f32 %v5095, %v5112
  %v5114 = vadd.f32 %v5113, 0.4994258
  %v5115 = vmul.f32 %v5095, %v5114
  %v5116 = vadd.f32 %v5115, 1.0
  %v5117 = vrcp.pop %v5116
  %v5118 = vmul.f32 %v5116, %v5117
  %v5119 = vsub.f32 1.0, %v5118
  %v5120 = vmul.f32 %v5117, %v5119
  %v5121 = vadd.f32 %v5117, %v5120
  %vm5122 = vweird.f32 %v5116
  %vm5123 = vweird.f32 %v5117
  %vm5124 = vmor %vm5122, %vm5123
  %v5125 = vsel %vm5124, %v5117, %v5121
  %v5126 = vand.u32 2147483647, %v5116
  %vm5127 = vcmp.eq.f32.partialorder %v5126, 8.507059e+37
  %v5128 = vand.u32 %v5116, 2147483648
  %v5129 = vor.u32 1.1754944e-38, %v5128
  %v5130 = vsel %vm5127, %v5129, %v5125
  %v5131 = vmul.f32 %v5106, %v5130
  %v5132 = vmin.f32 %v5131, 1.0
  %v5133 = vmax.f32 %v5132, -1.0
  %v5134 = vmul.f32 %v3900, %v3900
  %v5135 = vmin.f32 16.0, %v5134
  %v5136 = vmul.f32 %v5135, 2.1237322e-06
  %v5137 = vadd.f32 %v5136, 0.00028619796
  %v5138 = vmul.f32 %v5135, %v5137
  %v5139 = vadd.f32 %v5138, 0.0036580483
  %v5140 = vmul.f32 %v5135, %v5139
  %v5141 = vadd.f32 %v5140, 0.05243302
  %v5142 = vmul.f32 %v5135, %v5141
  %v5143 = vadd.f32 %v5142, 0.18741608
  %v5144 = vmul.f32 %v5135, %v5143
  %v5145 = vadd.f32 %v5144, 1.1283791
  %v5146 = vmul.f32 %v3900, %v5145
  %v5147 = vmul.f32 %v5135, 3.8918573e-05
  %v5148 = vadd.f32 %v5147, 0.001143296
  %v5149 = vmul.f32 %v5135, %v5148
  %v5150 = vadd.f32 %v5149, 0.014752088
  %v5151 = vmul.f32 %v5135, %v5150
  %v5152 = vadd.f32 %v5151, 0.112945676
  %v5153 = vmul.f32 %v5135, %v5152
  %v5154 = vadd.f32 %v5153, 0.4994258
  %v5155 = vmul.f32 %v5135, %v5154
  %v5156 = vadd.f32 %v5155, 1.0
  %v5157 = vrcp.pop %v5156
  %v5158 = vmul.f32 %v5156, %v5157
  %v5159 = vsub.f32 1.0, %v5158
  %v5160 = vmul.f32 %v5157, %v5159
  %v5161 = vadd.f32 %v5157, %v5160
  %vm5162 = vweird.f32 %v5156
  %vm5163 = vweird.f32 %v5157
  %vm5164 = vmor %vm5162, %vm5163
  %v5165 = vsel %vm5164, %v5157, %v5161
  %v5166 = vand.u32 2147483647, %v5156
  %vm5167 = vcmp.eq.f32.partialorder %v5166, 8.507059e+37
  %v5168 = vand.u32 %v5156, 2147483648
  %v5169 = vor.u32 1.1754944e-38, %v5168
  %v5170 = vsel %vm5167, %v5169, %v5165
  %v5171 = vmul.f32 %v5146, %v5170
  %v5172 = vmin.f32 %v5171, 1.0
  %v5173 = vmax.f32 %v5172, -1.0
  %v5174 = vmul.f32 %v3901, %v3901
  %v5175 = vmin.f32 16.0, %v5174
  %v5176 = vmul.f32 %v5175, 2.1237322e-06
  %v5177 = vadd.f32 %v5176, 0.00028619796
  %v5178 = vmul.f32 %v5175, %v5177
  %v5179 = vadd.f32 %v5178, 0.0036580483
  %v5180 = vmul.f32 %v5175, %v5179
  %v5181 = vadd.f32 %v5180, 0.05243302
  %v5182 = vmul.f32 %v5175, %v5181
  %v5183 = vadd.f32 %v5182, 0.18741608
  %v5184 = vmul.f32 %v5175, %v5183
  %v5185 = vadd.f32 %v5184, 1.1283791
  %v5186 = vmul.f32 %v3901, %v5185
  %v5187 = vmul.f32 %v5175, 3.8918573e-05
  %v5188 = vadd.f32 %v5187, 0.001143296
  %v5189 = vmul.f32 %v5175, %v5188
  %v5190 = vadd.f32 %v5189, 0.014752088
  %v5191 = vmul.f32 %v5175, %v5190
  %v5192 = vadd.f32 %v5191, 0.112945676
  %v5193 = vmul.f32 %v5175, %v5192
  %v5194 = vadd.f32 %v5193, 0.4994258
  %v5195 = vmul.f32 %v5175, %v5194
  %v5196 = vadd.f32 %v5195, 1.0
  %v5197 = vrcp.pop %v5196
  %v5198 = vmul.f32 %v5196, %v5197
  %v5199 = vsub.f32 1.0, %v5198
  %v5200 = vmul.f32 %v5197, %v5199
  %v5201 = vadd.f32 %v5197, %v5200
  %vm5202 = vweird.f32 %v5196
  %vm5203 = vweird.f32 %v5197
  %vm5204 = vmor %vm5202, %vm5203
  %v5205 = vsel %vm5204, %v5197, %v5201
  %v5206 = vand.u32 2147483647, %v5196
  %vm5207 = vcmp.eq.f32.partialorder %v5206, 8.507059e+37
  %v5208 = vand.u32 %v5196, 2147483648
  %v5209 = vor.u32 1.1754944e-38, %v5208
  %v5210 = vsel %vm5207, %v5209, %v5205
  %v5211 = vmul.f32 %v5186, %v5210
  %v5212 = vmin.f32 %v5211, 1.0
  %v5213 = vmax.f32 %v5212, -1.0
  %v5214 = vmul.f32 %v3902, %v3902
  %v5215 = vmin.f32 16.0, %v5214
  %v5216 = vmul.f32 %v5215, 2.1237322e-06
  %v5217 = vadd.f32 %v5216, 0.00028619796
  %v5218 = vmul.f32 %v5215, %v5217
  %v5219 = vadd.f32 %v5218, 0.0036580483
  %v5220 = vmul.f32 %v5215, %v5219
  %v5221 = vadd.f32 %v5220, 0.05243302
  %v5222 = vmul.f32 %v5215, %v5221
  %v5223 = vadd.f32 %v5222, 0.18741608
  %v5224 = vmul.f32 %v5215, %v5223
  %v5225 = vadd.f32 %v5224, 1.1283791
  %v5226 = vmul.f32 %v3902, %v5225
  %v5227 = vmul.f32 %v5215, 3.8918573e-05
  %v5228 = vadd.f32 %v5227, 0.001143296
  %v5229 = vmul.f32 %v5215, %v5228
  %v5230 = vadd.f32 %v5229, 0.014752088
  %v5231 = vmul.f32 %v5215, %v5230
  %v5232 = vadd.f32 %v5231, 0.112945676
  %v5233 = vmul.f32 %v5215, %v5232
  %v5234 = vadd.f32 %v5233, 0.4994258
  %v5235 = vmul.f32 %v5215, %v5234
  %v5236 = vadd.f32 %v5235, 1.0
  %v5237 = vrcp.pop %v5236
  %v5238 = vmul.f32 %v5236, %v5237
  %v5239 = vsub.f32 1.0, %v5238
  %v5240 = vmul.f32 %v5237, %v5239
  %v5241 = vadd.f32 %v5237, %v5240
  %vm5242 = vweird.f32 %v5236
  %vm5243 = vweird.f32 %v5237
  %vm5244 = vmor %vm5242, %vm5243
  %v5245 = vsel %vm5244, %v5237, %v5241
  %v5246 = vand.u32 2147483647, %v5236
  %vm5247 = vcmp.eq.f32.partialorder %v5246, 8.507059e+37
  %v5248 = vand.u32 %v5236, 2147483648
  %v5249 = vor.u32 1.1754944e-38, %v5248
  %v5250 = vsel %vm5247, %v5249, %v5245
  %v5251 = vmul.f32 %v5226, %v5250
  %v5252 = vmin.f32 %v5251, 1.0
  %v5253 = vmax.f32 %v5252, -1.0
  %v5254 = vmul.f32 %v3903, %v3903
  %v5255 = vmin.f32 16.0, %v5254
  %v5256 = vmul.f32 %v5255, 2.1237322e-06
  %v5257 = vadd.f32 %v5256, 0.00028619796
  %v5258 = vmul.f32 %v5255, %v5257
  %v5259 = vadd.f32 %v5258, 0.0036580483
  %v5260 = vmul.f32 %v5255, %v5259
  %v5261 = vadd.f32 %v5260, 0.05243302
  %v5262 = vmul.f32 %v5255, %v5261
  %v5263 = vadd.f32 %v5262, 0.18741608
  %v5264 = vmul.f32 %v5255, %v5263
  %v5265 = vadd.f32 %v5264, 1.1283791
  %v5266 = vmul.f32 %v3903, %v5265
  %v5267 = vmul.f32 %v5255, 3.8918573e-05
  %v5268 = vadd.f32 %v5267, 0.001143296
  %v5269 = vmul.f32 %v5255, %v5268
  %v5270 = vadd.f32 %v5269, 0.014752088
  %v5271 = vmul.f32 %v5255, %v5270
  %v5272 = vadd.f32 %v5271, 0.112945676
  %v5273 = vmul.f32 %v5255, %v5272
  %v5274 = vadd.f32 %v5273, 0.4994258
  %v5275 = vmul.f32 %v5255, %v5274
  %v5276 = vadd.f32 %v5275, 1.0
  %v5277 = vrcp.pop %v5276
  %v5278 = vmul.f32 %v5276, %v5277
  %v5279 = vsub.f32 1.0, %v5278
  %v5280 = vmul.f32 %v5277, %v5279
  %v5281 = vadd.f32 %v5277, %v5280
  %vm5282 = vweird.f32 %v5276
  %vm5283 = vweird.f32 %v5277
  %vm5284 = vmor %vm5282, %vm5283
  %v5285 = vsel %vm5284, %v5277, %v5281
  %v5286 = vand.u32 2147483647, %v5276
  %vm5287 = vcmp.eq.f32.partialorder %v5286, 8.507059e+37
  %v5288 = vand.u32 %v5276, 2147483648
  %v5289 = vor.u32 1.1754944e-38, %v5288
  %v5290 = vsel %vm5287, %v5289, %v5285
  %v5291 = vmul.f32 %v5266, %v5290
  %v5292 = vmin.f32 %v5291, 1.0
  %v5293 = vmax.f32 %v5292, -1.0
  %v5294 = vmul.f32 %v3904, %v3904
  %v5295 = vmin.f32 16.0, %v5294
  %v5296 = vmul.f32 %v5295, 2.1237322e-06
  %v5297 = vadd.f32 %v5296, 0.00028619796
  %v5298 = vmul.f32 %v5295, %v5297
  %v5299 = vadd.f32 %v5298, 0.0036580483
  %v5300 = vmul.f32 %v5295, %v5299
  %v5301 = vadd.f32 %v5300, 0.05243302
  %v5302 = vmul.f32 %v5295, %v5301
  %v5303 = vadd.f32 %v5302, 0.18741608
  %v5304 = vmul.f32 %v5295, %v5303
  %v5305 = vadd.f32 %v5304, 1.1283791
  %v5306 = vmul.f32 %v3904, %v5305
  %v5307 = vmul.f32 %v5295, 3.8918573e-05
  %v5308 = vadd.f32 %v5307, 0.001143296
  %v5309 = vmul.f32 %v5295, %v5308
  %v5310 = vadd.f32 %v5309, 0.014752088
  %v5311 = vmul.f32 %v5295, %v5310
  %v5312 = vadd.f32 %v5311, 0.112945676
  %v5313 = vmul.f32 %v5295, %v5312
  %v5314 = vadd.f32 %v5313, 0.4994258
  %v5315 = vmul.f32 %v5295, %v5314
  %v5316 = vadd.f32 %v5315, 1.0
  %v5317 = vrcp.pop %v5316
  %v5318 = vmul.f32 %v5316, %v5317
  %v5319 = vsub.f32 1.0, %v5318
  %v5320 = vmul.f32 %v5317, %v5319
  %v5321 = vadd.f32 %v5317, %v5320
  %vm5322 = vweird.f32 %v5316
  %vm5323 = vweird.f32 %v5317
  %vm5324 = vmor %vm5322, %vm5323
  %v5325 = vsel %vm5324, %v5317, %v5321
  %v5326 = vand.u32 2147483647, %v5316
  %vm5327 = vcmp.eq.f32.partialorder %v5326, 8.507059e+37
  %v5328 = vand.u32 %v5316, 2147483648
  %v5329 = vor.u32 1.1754944e-38, %v5328
  %v5330 = vsel %vm5327, %v5329, %v5325
  %v5331 = vmul.f32 %v5306, %v5330
  %v5332 = vmin.f32 %v5331, 1.0
  %v5333 = vmax.f32 %v5332, -1.0
  %v5334 = vmul.f32 %v3905, %v3905
  %v5335 = vmin.f32 16.0, %v5334
  %v5336 = vmul.f32 %v5335, 2.1237322e-06
  %v5337 = vadd.f32 %v5336, 0.00028619796
  %v5338 = vmul.f32 %v5335, %v5337
  %v5339 = vadd.f32 %v5338, 0.0036580483
  %v5340 = vmul.f32 %v5335, %v5339
  %v5341 = vadd.f32 %v5340, 0.05243302
  %v5342 = vmul.f32 %v5335, %v5341
  %v5343 = vadd.f32 %v5342, 0.18741608
  %v5344 = vmul.f32 %v5335, %v5343
  %v5345 = vadd.f32 %v5344, 1.1283791
  %v5346 = vmul.f32 %v3905, %v5345
  %v5347 = vmul.f32 %v5335, 3.8918573e-05
  %v5348 = vadd.f32 %v5347, 0.001143296
  %v5349 = vmul.f32 %v5335, %v5348
  %v5350 = vadd.f32 %v5349, 0.014752088
  %v5351 = vmul.f32 %v5335, %v5350
  %v5352 = vadd.f32 %v5351, 0.112945676
  %v5353 = vmul.f32 %v5335, %v5352
  %v5354 = vadd.f32 %v5353, 0.4994258
  %v5355 = vmul.f32 %v5335, %v5354
  %v5356 = vadd.f32 %v5355, 1.0
  %v5357 = vrcp.pop %v5356
  %v5358 = vmul.f32 %v5356, %v5357
  %v5359 = vsub.f32 1.0, %v5358
  %v5360 = vmul.f32 %v5357, %v5359
  %v5361 = vadd.f32 %v5357, %v5360
  %vm5362 = vweird.f32 %v5356
  %vm5363 = vweird.f32 %v5357
  %vm5364 = vmor %vm5362, %vm5363
  %v5365 = vsel %vm5364, %v5357, %v5361
  %v5366 = vand.u32 2147483647, %v5356
  %vm5367 = vcmp.eq.f32.partialorder %v5366, 8.507059e+37
  %v5368 = vand.u32 %v5356, 2147483648
  %v5369 = vor.u32 1.1754944e-38, %v5368
  %v5370 = vsel %vm5367, %v5369, %v5365
  %v5371 = vmul.f32 %v5346, %v5370
  %v5372 = vmin.f32 %v5371, 1.0
  %v5373 = vmax.f32 %v5372, -1.0
  %v5374 = vmul.f32 %v3906, %v3906
  %v5375 = vmin.f32 16.0, %v5374
  %v5376 = vmul.f32 %v5375, 2.1237322e-06
  %v5377 = vadd.f32 %v5376, 0.00028619796
  %v5378 = vmul.f32 %v5375, %v5377
  %v5379 = vadd.f32 %v5378, 0.0036580483
  %v5380 = vmul.f32 %v5375, %v5379
  %v5381 = vadd.f32 %v5380, 0.05243302
  %v5382 = vmul.f32 %v5375, %v5381
  %v5383 = vadd.f32 %v5382, 0.18741608
  %v5384 = vmul.f32 %v5375, %v5383
  %v5385 = vadd.f32 %v5384, 1.1283791
  %v5386 = vmul.f32 %v3906, %v5385
  %v5387 = vmul.f32 %v5375, 3.8918573e-05
  %v5388 = vadd.f32 %v5387, 0.001143296
  %v5389 = vmul.f32 %v5375, %v5388
  %v5390 = vadd.f32 %v5389, 0.014752088
  %v5391 = vmul.f32 %v5375, %v5390
  %v5392 = vadd.f32 %v5391, 0.112945676
  %v5393 = vmul.f32 %v5375, %v5392
  %v5394 = vadd.f32 %v5393, 0.4994258
  %v5395 = vmul.f32 %v5375, %v5394
  %v5396 = vadd.f32 %v5395, 1.0
  %v5397 = vrcp.pop %v5396
  %v5398 = vmul.f32 %v5396, %v5397
  %v5399 = vsub.f32 1.0, %v5398
  %v5400 = vmul.f32 %v5397, %v5399
  %v5401 = vadd.f32 %v5397, %v5400
  %vm5402 = vweird.f32 %v5396
  %vm5403 = vweird.f32 %v5397
  %vm5404 = vmor %vm5402, %vm5403
  %v5405 = vsel %vm5404, %v5397, %v5401
  %v5406 = vand.u32 2147483647, %v5396
  %vm5407 = vcmp.eq.f32.partialorder %v5406, 8.507059e+37
  %v5408 = vand.u32 %v5396, 2147483648
  %v5409 = vor.u32 1.1754944e-38, %v5408
  %v5410 = vsel %vm5407, %v5409, %v5405
  %v5411 = vmul.f32 %v5386, %v5410
  %v5412 = vmin.f32 %v5411, 1.0
  %v5413 = vmax.f32 %v5412, -1.0
  %v5414 = vmul.f32 %v3907, %v3907
  %v5415 = vmin.f32 16.0, %v5414
  %v5416 = vmul.f32 %v5415, 2.1237322e-06
  %v5417 = vadd.f32 %v5416, 0.00028619796
  %v5418 = vmul.f32 %v5415, %v5417
  %v5419 = vadd.f32 %v5418, 0.0036580483
  %v5420 = vmul.f32 %v5415, %v5419
  %v5421 = vadd.f32 %v5420, 0.05243302
  %v5422 = vmul.f32 %v5415, %v5421
  %v5423 = vadd.f32 %v5422, 0.18741608
  %v5424 = vmul.f32 %v5415, %v5423
  %v5425 = vadd.f32 %v5424, 1.1283791
  %v5426 = vmul.f32 %v3907, %v5425
  %v5427 = vmul.f32 %v5415, 3.8918573e-05
  %v5428 = vadd.f32 %v5427, 0.001143296
  %v5429 = vmul.f32 %v5415, %v5428
  %v5430 = vadd.f32 %v5429, 0.014752088
  %v5431 = vmul.f32 %v5415, %v5430
  %v5432 = vadd.f32 %v5431, 0.112945676
  %v5433 = vmul.f32 %v5415, %v5432
  %v5434 = vadd.f32 %v5433, 0.4994258
  %v5435 = vmul.f32 %v5415, %v5434
  %v5436 = vadd.f32 %v5435, 1.0
  %v5437 = vrcp.pop %v5436
  %v5438 = vmul.f32 %v5436, %v5437
  %v5439 = vsub.f32 1.0, %v5438
  %v5440 = vmul.f32 %v5437, %v5439
  %v5441 = vadd.f32 %v5437, %v5440
  %vm5442 = vweird.f32 %v5436
  %vm5443 = vweird.f32 %v5437
  %vm5444 = vmor %vm5442, %vm5443
  %v5445 = vsel %vm5444, %v5437, %v5441
  %v5446 = vand.u32 2147483647, %v5436
  %vm5447 = vcmp.eq.f32.partialorder %v5446, 8.507059e+37
  %v5448 = vand.u32 %v5436, 2147483648
  %v5449 = vor.u32 1.1754944e-38, %v5448
  %v5450 = vsel %vm5447, %v5449, %v5445
  %v5451 = vmul.f32 %v5426, %v5450
  %v5452 = vmin.f32 %v5451, 1.0
  %v5453 = vmax.f32 %v5452, -1.0
  %v5454 = vmul.f32 %v3908, %v3908
  %v5455 = vmin.f32 16.0, %v5454
  %v5456 = vmul.f32 %v5455, 2.1237322e-06
  %v5457 = vadd.f32 %v5456, 0.00028619796
  %v5458 = vmul.f32 %v5455, %v5457
  %v5459 = vadd.f32 %v5458, 0.0036580483
  %v5460 = vmul.f32 %v5455, %v5459
  %v5461 = vadd.f32 %v5460, 0.05243302
  %v5462 = vmul.f32 %v5455, %v5461
  %v5463 = vadd.f32 %v5462, 0.18741608
  %v5464 = vmul.f32 %v5455, %v5463
  %v5465 = vadd.f32 %v5464, 1.1283791
  %v5466 = vmul.f32 %v3908, %v5465
  %v5467 = vmul.f32 %v5455, 3.8918573e-05
  %v5468 = vadd.f32 %v5467, 0.001143296
  %v5469 = vmul.f32 %v5455, %v5468
  %v5470 = vadd.f32 %v5469, 0.014752088
  %v5471 = vmul.f32 %v5455, %v5470
  %v5472 = vadd.f32 %v5471, 0.112945676
  %v5473 = vmul.f32 %v5455, %v5472
  %v5474 = vadd.f32 %v5473, 0.4994258
  %v5475 = vmul.f32 %v5455, %v5474
  %v5476 = vadd.f32 %v5475, 1.0
  %v5477 = vrcp.pop %v5476
  %v5478 = vmul.f32 %v5476, %v5477
  %v5479 = vsub.f32 1.0, %v5478
  %v5480 = vmul.f32 %v5477, %v5479
  %v5481 = vadd.f32 %v5477, %v5480
  %vm5482 = vweird.f32 %v5476
  %vm5483 = vweird.f32 %v5477
  %vm5484 = vmor %vm5482, %vm5483
  %v5485 = vsel %vm5484, %v5477, %v5481
  %v5486 = vand.u32 2147483647, %v5476
  %vm5487 = vcmp.eq.f32.partialorder %v5486, 8.507059e+37
  %v5488 = vand.u32 %v5476, 2147483648
  %v5489 = vor.u32 1.1754944e-38, %v5488
  %v5490 = vsel %vm5487, %v5489, %v5485
  %v5491 = vmul.f32 %v5466, %v5490
  %v5492 = vmin.f32 %v5491, 1.0
  %v5493 = vmax.f32 %v5492, -1.0
  %v5494 = vmul.f32 %v3909, %v3909
  %v5495 = vmin.f32 16.0, %v5494
  %v5496 = vmul.f32 %v5495, 2.1237322e-06
  %v5497 = vadd.f32 %v5496, 0.00028619796
  %v5498 = vmul.f32 %v5495, %v5497
  %v5499 = vadd.f32 %v5498, 0.0036580483
  %v5500 = vmul.f32 %v5495, %v5499
  %v5501 = vadd.f32 %v5500, 0.05243302
  %v5502 = vmul.f32 %v5495, %v5501
  %v5503 = vadd.f32 %v5502, 0.18741608
  %v5504 = vmul.f32 %v5495, %v5503
  %v5505 = vadd.f32 %v5504, 1.1283791
  %v5506 = vmul.f32 %v3909, %v5505
  %v5507 = vmul.f32 %v5495, 3.8918573e-05
  %v5508 = vadd.f32 %v5507, 0.001143296
  %v5509 = vmul.f32 %v5495, %v5508
  %v5510 = vadd.f32 %v5509, 0.014752088
  %v5511 = vmul.f32 %v5495, %v5510
  %v5512 = vadd.f32 %v5511, 0.112945676
  %v5513 = vmul.f32 %v5495, %v5512
  %v5514 = vadd.f32 %v5513, 0.4994258
  %v5515 = vmul.f32 %v5495, %v5514
  %v5516 = vadd.f32 %v5515, 1.0
  %v5517 = vrcp.pop %v5516
  %v5518 = vmul.f32 %v5516, %v5517
  %v5519 = vsub.f32 1.0, %v5518
  %v5520 = vmul.f32 %v5517, %v5519
  %v5521 = vadd.f32 %v5517, %v5520
  %vm5522 = vweird.f32 %v5516
  %vm5523 = vweird.f32 %v5517
  %vm5524 = vmor %vm5522, %vm5523
  %v5525 = vsel %vm5524, %v5517, %v5521
  %v5526 = vand.u32 2147483647, %v5516
  %vm5527 = vcmp.eq.f32.partialorder %v5526, 8.507059e+37
  %v5528 = vand.u32 %v5516, 2147483648
  %v5529 = vor.u32 1.1754944e-38, %v5528
  %v5530 = vsel %vm5527, %v5529, %v5525
  %v5531 = vmul.f32 %v5506, %v5530
  %v5532 = vmin.f32 %v5531, 1.0
  %v5533 = vmax.f32 %v5532, -1.0
  %v5534 = vmul.f32 %v3910, %v3910
  %v5535 = vmin.f32 16.0, %v5534
  %v5536 = vmul.f32 %v5535, 2.1237322e-06
  %v5537 = vadd.f32 %v5536, 0.00028619796
  %v5538 = vmul.f32 %v5535, %v5537
  %v5539 = vadd.f32 %v5538, 0.0036580483
  %v5540 = vmul.f32 %v5535, %v5539
  %v5541 = vadd.f32 %v5540, 0.05243302
  %v5542 = vmul.f32 %v5535, %v5541
  %v5543 = vadd.f32 %v5542, 0.18741608
  %v5544 = vmul.f32 %v5535, %v5543
  %v5545 = vadd.f32 %v5544, 1.1283791
  %v5546 = vmul.f32 %v3910, %v5545
  %v5547 = vmul.f32 %v5535, 3.8918573e-05
  %v5548 = vadd.f32 %v5547, 0.001143296
  %v5549 = vmul.f32 %v5535, %v5548
  %v5550 = vadd.f32 %v5549, 0.014752088
  %v5551 = vmul.f32 %v5535, %v5550
  %v5552 = vadd.f32 %v5551, 0.112945676
  %v5553 = vmul.f32 %v5535, %v5552
  %v5554 = vadd.f32 %v5553, 0.4994258
  %v5555 = vmul.f32 %v5535, %v5554
  %v5556 = vadd.f32 %v5555, 1.0
  %v5557 = vrcp.pop %v5556
  %v5558 = vmul.f32 %v5556, %v5557
  %v5559 = vsub.f32 1.0, %v5558
  %v5560 = vmul.f32 %v5557, %v5559
  %v5561 = vadd.f32 %v5557, %v5560
  %vm5562 = vweird.f32 %v5556
  %vm5563 = vweird.f32 %v5557
  %vm5564 = vmor %vm5562, %vm5563
  %v5565 = vsel %vm5564, %v5557, %v5561
  %v5566 = vand.u32 2147483647, %v5556
  %vm5567 = vcmp.eq.f32.partialorder %v5566, 8.507059e+37
  %v5568 = vand.u32 %v5556, 2147483648
  %v5569 = vor.u32 1.1754944e-38, %v5568
  %v5570 = vsel %vm5567, %v5569, %v5565
  %v5571 = vmul.f32 %v5546, %v5570
  %v5572 = vmin.f32 %v5571, 1.0
  %v5573 = vmax.f32 %v5572, -1.0
  %v5574 = vmul.f32 %v3911, %v3911
  %v5575 = vmin.f32 16.0, %v5574
  %v5576 = vmul.f32 %v5575, 2.1237322e-06
  %v5577 = vadd.f32 %v5576, 0.00028619796
  %v5578 = vmul.f32 %v5575, %v5577
  %v5579 = vadd.f32 %v5578, 0.0036580483
  %v5580 = vmul.f32 %v5575, %v5579
  %v5581 = vadd.f32 %v5580, 0.05243302
  %v5582 = vmul.f32 %v5575, %v5581
  %v5583 = vadd.f32 %v5582, 0.18741608
  %v5584 = vmul.f32 %v5575, %v5583
  %v5585 = vadd.f32 %v5584, 1.1283791
  %v5586 = vmul.f32 %v3911, %v5585
  %v5587 = vmul.f32 %v5575, 3.8918573e-05
  %v5588 = vadd.f32 %v5587, 0.001143296
  %v5589 = vmul.f32 %v5575, %v5588
  %v5590 = vadd.f32 %v5589, 0.014752088
  %v5591 = vmul.f32 %v5575, %v5590
  %v5592 = vadd.f32 %v5591, 0.112945676
  %v5593 = vmul.f32 %v5575, %v5592
  %v5594 = vadd.f32 %v5593, 0.4994258
  %v5595 = vmul.f32 %v5575, %v5594
  %v5596 = vadd.f32 %v5595, 1.0
  %v5597 = vrcp.pop %v5596
  %v5598 = vmul.f32 %v5596, %v5597
  %v5599 = vsub.f32 1.0, %v5598
  %v5600 = vmul.f32 %v5597, %v5599
  %v5601 = vadd.f32 %v5597, %v5600
  %vm5602 = vweird.f32 %v5596
  %vm5603 = vweird.f32 %v5597
  %vm5604 = vmor %vm5602, %vm5603
  %v5605 = vsel %vm5604, %v5597, %v5601
  %v5606 = vand.u32 2147483647, %v5596
  %vm5607 = vcmp.eq.f32.partialorder %v5606, 8.507059e+37
  %v5608 = vand.u32 %v5596, 2147483648
  %v5609 = vor.u32 1.1754944e-38, %v5608
  %v5610 = vsel %vm5607, %v5609, %v5605
  %v5611 = vmul.f32 %v5586, %v5610
  %v5612 = vmin.f32 %v5611, 1.0
  %v5613 = vmax.f32 %v5612, -1.0
  %v5614 = vmul.f32 %v3912, %v3912
  %v5615 = vmin.f32 16.0, %v5614
  %v5616 = vmul.f32 %v5615, 2.1237322e-06
  %v5617 = vadd.f32 %v5616, 0.00028619796
  %v5618 = vmul.f32 %v5615, %v5617
  %v5619 = vadd.f32 %v5618, 0.0036580483
  %v5620 = vmul.f32 %v5615, %v5619
  %v5621 = vadd.f32 %v5620, 0.05243302
  %v5622 = vmul.f32 %v5615, %v5621
  %v5623 = vadd.f32 %v5622, 0.18741608
  %v5624 = vmul.f32 %v5615, %v5623
  %v5625 = vadd.f32 %v5624, 1.1283791
  %v5626 = vmul.f32 %v3912, %v5625
  %v5627 = vmul.f32 %v5615, 3.8918573e-05
  %v5628 = vadd.f32 %v5627, 0.001143296
  %v5629 = vmul.f32 %v5615, %v5628
  %v5630 = vadd.f32 %v5629, 0.014752088
  %v5631 = vmul.f32 %v5615, %v5630
  %v5632 = vadd.f32 %v5631, 0.112945676
  %v5633 = vmul.f32 %v5615, %v5632
  %v5634 = vadd.f32 %v5633, 0.4994258
  %v5635 = vmul.f32 %v5615, %v5634
  %v5636 = vadd.f32 %v5635, 1.0
  %v5637 = vrcp.pop %v5636
  %v5638 = vmul.f32 %v5636, %v5637
  %v5639 = vsub.f32 1.0, %v5638
  %v5640 = vmul.f32 %v5637, %v5639
  %v5641 = vadd.f32 %v5637, %v5640
  %vm5642 = vweird.f32 %v5636
  %vm5643 = vweird.f32 %v5637
  %vm5644 = vmor %vm5642, %vm5643
  %v5645 = vsel %vm5644, %v5637, %v5641
  %v5646 = vand.u32 2147483647, %v5636
  %vm5647 = vcmp.eq.f32.partialorder %v5646, 8.507059e+37
  %v5648 = vand.u32 %v5636, 2147483648
  %v5649 = vor.u32 1.1754944e-38, %v5648
  %v5650 = vsel %vm5647, %v5649, %v5645
  %v5651 = vmul.f32 %v5626, %v5650
  %v5652 = vmin.f32 %v5651, 1.0
  %v5653 = vmax.f32 %v5652, -1.0
  %v5654 = vmul.f32 %v3913, %v3913
  %v5655 = vmin.f32 16.0, %v5654
  %v5656 = vmul.f32 %v5655, 2.1237322e-06
  %v5657 = vadd.f32 %v5656, 0.00028619796
  %v5658 = vmul.f32 %v5655, %v5657
  %v5659 = vadd.f32 %v5658, 0.0036580483
  %v5660 = vmul.f32 %v5655, %v5659
  %v5661 = vadd.f32 %v5660, 0.05243302
  %v5662 = vmul.f32 %v5655, %v5661
  %v5663 = vadd.f32 %v5662, 0.18741608
  %v5664 = vmul.f32 %v5655, %v5663
  %v5665 = vadd.f32 %v5664, 1.1283791
  %v5666 = vmul.f32 %v3913, %v5665
  %v5667 = vmul.f32 %v5655, 3.8918573e-05
  %v5668 = vadd.f32 %v5667, 0.001143296
  %v5669 = vmul.f32 %v5655, %v5668
  %v5670 = vadd.f32 %v5669, 0.014752088
  %v5671 = vmul.f32 %v5655, %v5670
  %v5672 = vadd.f32 %v5671, 0.112945676
  %v5673 = vmul.f32 %v5655, %v5672
  %v5674 = vadd.f32 %v5673, 0.4994258
  %v5675 = vmul.f32 %v5655, %v5674
  %v5676 = vadd.f32 %v5675, 1.0
  %v5677 = vrcp.pop %v5676
  %v5678 = vmul.f32 %v5676, %v5677
  %v5679 = vsub.f32 1.0, %v5678
  %v5680 = vmul.f32 %v5677, %v5679
  %v5681 = vadd.f32 %v5677, %v5680
  %vm5682 = vweird.f32 %v5676
  %vm5683 = vweird.f32 %v5677
  %vm5684 = vmor %vm5682, %vm5683
  %v5685 = vsel %vm5684, %v5677, %v5681
  %v5686 = vand.u32 2147483647, %v5676
  %vm5687 = vcmp.eq.f32.partialorder %v5686, 8.507059e+37
  %v5688 = vand.u32 %v5676, 2147483648
  %v5689 = vor.u32 1.1754944e-38, %v5688
  %v5690 = vsel %vm5687, %v5689, %v5685
  %v5691 = vmul.f32 %v5666, %v5690
  %v5692 = vmin.f32 %v5691, 1.0
  %v5693 = vmax.f32 %v5692, -1.0
  %v5694 = vmul.f32 %v3914, %v3914
  %v5695 = vmin.f32 16.0, %v5694
  %v5696 = vmul.f32 %v5695, 2.1237322e-06
  %v5697 = vadd.f32 %v5696, 0.00028619796
  %v5698 = vmul.f32 %v5695, %v5697
  %v5699 = vadd.f32 %v5698, 0.0036580483
  %v5700 = vmul.f32 %v5695, %v5699
  %v5701 = vadd.f32 %v5700, 0.05243302
  %v5702 = vmul.f32 %v5695, %v5701
  %v5703 = vadd.f32 %v5702, 0.18741608
  %v5704 = vmul.f32 %v5695, %v5703
  %v5705 = vadd.f32 %v5704, 1.1283791
  %v5706 = vmul.f32 %v3914, %v5705
  %v5707 = vmul.f32 %v5695, 3.8918573e-05
  %v5708 = vadd.f32 %v5707, 0.001143296
  %v5709 = vmul.f32 %v5695, %v5708
  %v5710 = vadd.f32 %v5709, 0.014752088
  %v5711 = vmul.f32 %v5695, %v5710
  %v5712 = vadd.f32 %v5711, 0.112945676
  %v5713 = vmul.f32 %v5695, %v5712
  %v5714 = vadd.f32 %v5713, 0.4994258
  %v5715 = vmul.f32 %v5695, %v5714
  %v5716 = vadd.f32 %v5715, 1.0
  %v5717 = vrcp.pop %v5716
  %v5718 = vmul.f32 %v5716, %v5717
  %v5719 = vsub.f32 1.0, %v5718
  %v5720 = vmul.f32 %v5717, %v5719
  %v5721 = vadd.f32 %v5717, %v5720
  %vm5722 = vweird.f32 %v5716
  %vm5723 = vweird.f32 %v5717
  %vm5724 = vmor %vm5722, %vm5723
  %v5725 = vsel %vm5724, %v5717, %v5721
  %v5726 = vand.u32 2147483647, %v5716
  %vm5727 = vcmp.eq.f32.partialorder %v5726, 8.507059e+37
  %v5728 = vand.u32 %v5716, 2147483648
  %v5729 = vor.u32 1.1754944e-38, %v5728
  %v5730 = vsel %vm5727, %v5729, %v5725
  %v5731 = vmul.f32 %v5706, %v5730
  %v5732 = vmin.f32 %v5731, 1.0
  %v5733 = vmax.f32 %v5732, -1.0
  %v5734 = vmul.f32 %v3915, %v3915
  %v5735 = vmin.f32 16.0, %v5734
  %v5736 = vmul.f32 %v5735, 2.1237322e-06
  %v5737 = vadd.f32 %v5736, 0.00028619796
  %v5738 = vmul.f32 %v5735, %v5737
  %v5739 = vadd.f32 %v5738, 0.0036580483
  %v5740 = vmul.f32 %v5735, %v5739
  %v5741 = vadd.f32 %v5740, 0.05243302
  %v5742 = vmul.f32 %v5735, %v5741
  %v5743 = vadd.f32 %v5742, 0.18741608
  %v5744 = vmul.f32 %v5735, %v5743
  %v5745 = vadd.f32 %v5744, 1.1283791
  %v5746 = vmul.f32 %v3915, %v5745
  %v5747 = vmul.f32 %v5735, 3.8918573e-05
  %v5748 = vadd.f32 %v5747, 0.001143296
  %v5749 = vmul.f32 %v5735, %v5748
  %v5750 = vadd.f32 %v5749, 0.014752088
  %v5751 = vmul.f32 %v5735, %v5750
  %v5752 = vadd.f32 %v5751, 0.112945676
  %v5753 = vmul.f32 %v5735, %v5752
  %v5754 = vadd.f32 %v5753, 0.4994258
  %v5755 = vmul.f32 %v5735, %v5754
  %v5756 = vadd.f32 %v5755, 1.0
  %v5757 = vrcp.pop %v5756
  %v5758 = vmul.f32 %v5756, %v5757
  %v5759 = vsub.f32 1.0, %v5758
  %v5760 = vmul.f32 %v5757, %v5759
  %v5761 = vadd.f32 %v5757, %v5760
  %vm5762 = vweird.f32 %v5756
  %vm5763 = vweird.f32 %v5757
  %vm5764 = vmor %vm5762, %vm5763
  %v5765 = vsel %vm5764, %v5757, %v5761
  %v5766 = vand.u32 2147483647, %v5756
  %vm5767 = vcmp.eq.f32.partialorder %v5766, 8.507059e+37
  %v5768 = vand.u32 %v5756, 2147483648
  %v5769 = vor.u32 1.1754944e-38, %v5768
  %v5770 = vsel %vm5767, %v5769, %v5765
  %v5771 = vmul.f32 %v5746, %v5770
  %v5772 = vmin.f32 %v5771, 1.0
  %v5773 = vmax.f32 %v5772, -1.0
  %v5774 = vmul.f32 %v3916, %v3916
  %v5775 = vmin.f32 16.0, %v5774
  %v5776 = vmul.f32 %v5775, 2.1237322e-06
  %v5777 = vadd.f32 %v5776, 0.00028619796
  %v5778 = vmul.f32 %v5775, %v5777
  %v5779 = vadd.f32 %v5778, 0.0036580483
  %v5780 = vmul.f32 %v5775, %v5779
  %v5781 = vadd.f32 %v5780, 0.05243302
  %v5782 = vmul.f32 %v5775, %v5781
  %v5783 = vadd.f32 %v5782, 0.18741608
  %v5784 = vmul.f32 %v5775, %v5783
  %v5785 = vadd.f32 %v5784, 1.1283791
  %v5786 = vmul.f32 %v3916, %v5785
  %v5787 = vmul.f32 %v5775, 3.8918573e-05
  %v5788 = vadd.f32 %v5787, 0.001143296
  %v5789 = vmul.f32 %v5775, %v5788
  %v5790 = vadd.f32 %v5789, 0.014752088
  %v5791 = vmul.f32 %v5775, %v5790
  %v5792 = vadd.f32 %v5791, 0.112945676
  %v5793 = vmul.f32 %v5775, %v5792
  %v5794 = vadd.f32 %v5793, 0.4994258
  %v5795 = vmul.f32 %v5775, %v5794
  %v5796 = vadd.f32 %v5795, 1.0
  %v5797 = vrcp.pop %v5796
  %v5798 = vmul.f32 %v5796, %v5797
  %v5799 = vsub.f32 1.0, %v5798
  %v5800 = vmul.f32 %v5797, %v5799
  %v5801 = vadd.f32 %v5797, %v5800
  %vm5802 = vweird.f32 %v5796
  %vm5803 = vweird.f32 %v5797
  %vm5804 = vmor %vm5802, %vm5803
  %v5805 = vsel %vm5804, %v5797, %v5801
  %v5806 = vand.u32 2147483647, %v5796
  %vm5807 = vcmp.eq.f32.partialorder %v5806, 8.507059e+37
  %v5808 = vand.u32 %v5796, 2147483648
  %v5809 = vor.u32 1.1754944e-38, %v5808
  %v5810 = vsel %vm5807, %v5809, %v5805
  %v5811 = vmul.f32 %v5786, %v5810
  %v5812 = vmin.f32 %v5811, 1.0
  %v5813 = vmax.f32 %v5812, -1.0
  %v5814 = vmul.f32 %v3917, %v3917
  %v5815 = vmin.f32 16.0, %v5814
  %v5816 = vmul.f32 %v5815, 2.1237322e-06
  %v5817 = vadd.f32 %v5816, 0.00028619796
  %v5818 = vmul.f32 %v5815, %v5817
  %v5819 = vadd.f32 %v5818, 0.0036580483
  %v5820 = vmul.f32 %v5815, %v5819
  %v5821 = vadd.f32 %v5820, 0.05243302
  %v5822 = vmul.f32 %v5815, %v5821
  %v5823 = vadd.f32 %v5822, 0.18741608
  %v5824 = vmul.f32 %v5815, %v5823
  %v5825 = vadd.f32 %v5824, 1.1283791
  %v5826 = vmul.f32 %v3917, %v5825
  %v5827 = vmul.f32 %v5815, 3.8918573e-05
  %v5828 = vadd.f32 %v5827, 0.001143296
  %v5829 = vmul.f32 %v5815, %v5828
  %v5830 = vadd.f32 %v5829, 0.014752088
  %v5831 = vmul.f32 %v5815, %v5830
  %v5832 = vadd.f32 %v5831, 0.112945676
  %v5833 = vmul.f32 %v5815, %v5832
  %v5834 = vadd.f32 %v5833, 0.4994258
  %v5835 = vmul.f32 %v5815, %v5834
  %v5836 = vadd.f32 %v5835, 1.0
  %v5837 = vrcp.pop %v5836
  %v5838 = vmul.f32 %v5836, %v5837
  %v5839 = vsub.f32 1.0, %v5838
  %v5840 = vmul.f32 %v5837, %v5839
  %v5841 = vadd.f32 %v5837, %v5840
  %vm5842 = vweird.f32 %v5836
  %vm5843 = vweird.f32 %v5837
  %vm5844 = vmor %vm5842, %vm5843
  %v5845 = vsel %vm5844, %v5837, %v5841
  %v5846 = vand.u32 2147483647, %v5836
  %vm5847 = vcmp.eq.f32.partialorder %v5846, 8.507059e+37
  %v5848 = vand.u32 %v5836, 2147483648
  %v5849 = vor.u32 1.1754944e-38, %v5848
  %v5850 = vsel %vm5847, %v5849, %v5845
  %v5851 = vmul.f32 %v5826, %v5850
  %v5852 = vmin.f32 %v5851, 1.0
  %v5853 = vmax.f32 %v5852, -1.0
  %v5854 = vmul.f32 %v3918, %v3918
  %v5855 = vmin.f32 16.0, %v5854
  %v5856 = vmul.f32 %v5855, 2.1237322e-06
  %v5857 = vadd.f32 %v5856, 0.00028619796
  %v5858 = vmul.f32 %v5855, %v5857
  %v5859 = vadd.f32 %v5858, 0.0036580483
  %v5860 = vmul.f32 %v5855, %v5859
  %v5861 = vadd.f32 %v5860, 0.05243302
  %v5862 = vmul.f32 %v5855, %v5861
  %v5863 = vadd.f32 %v5862, 0.18741608
  %v5864 = vmul.f32 %v5855, %v5863
  %v5865 = vadd.f32 %v5864, 1.1283791
  %v5866 = vmul.f32 %v3918, %v5865
  %v5867 = vmul.f32 %v5855, 3.8918573e-05
  %v5868 = vadd.f32 %v5867, 0.001143296
  %v5869 = vmul.f32 %v5855, %v5868
  %v5870 = vadd.f32 %v5869, 0.014752088
  %v5871 = vmul.f32 %v5855, %v5870
  %v5872 = vadd.f32 %v5871, 0.112945676
  %v5873 = vmul.f32 %v5855, %v5872
  %v5874 = vadd.f32 %v5873, 0.4994258
  %v5875 = vmul.f32 %v5855, %v5874
  %v5876 = vadd.f32 %v5875, 1.0
  %v5877 = vrcp.pop %v5876
  %v5878 = vmul.f32 %v5876, %v5877
  %v5879 = vsub.f32 1.0, %v5878
  %v5880 = vmul.f32 %v5877, %v5879
  %v5881 = vadd.f32 %v5877, %v5880
  %vm5882 = vweird.f32 %v5876
  %vm5883 = vweird.f32 %v5877
  %vm5884 = vmor %vm5882, %vm5883
  %v5885 = vsel %vm5884, %v5877, %v5881
  %v5886 = vand.u32 2147483647, %v5876
  %vm5887 = vcmp.eq.f32.partialorder %v5886, 8.507059e+37
  %v5888 = vand.u32 %v5876, 2147483648
  %v5889 = vor.u32 1.1754944e-38, %v5888
  %v5890 = vsel %vm5887, %v5889, %v5885
  %v5891 = vmul.f32 %v5866, %v5890
  %v5892 = vmin.f32 %v5891, 1.0
  %v5893 = vmax.f32 %v5892, -1.0
  %v5894 = vmul.f32 %v3919, %v3919
  %v5895 = vmin.f32 16.0, %v5894
  %v5896 = vmul.f32 %v5895, 2.1237322e-06
  %v5897 = vadd.f32 %v5896, 0.00028619796
  %v5898 = vmul.f32 %v5895, %v5897
  %v5899 = vadd.f32 %v5898, 0.0036580483
  %v5900 = vmul.f32 %v5895, %v5899
  %v5901 = vadd.f32 %v5900, 0.05243302
  %v5902 = vmul.f32 %v5895, %v5901
  %v5903 = vadd.f32 %v5902, 0.18741608
  %v5904 = vmul.f32 %v5895, %v5903
  %v5905 = vadd.f32 %v5904, 1.1283791
  %v5906 = vmul.f32 %v3919, %v5905
  %v5907 = vmul.f32 %v5895, 3.8918573e-05
  %v5908 = vadd.f32 %v5907, 0.001143296
  %v5909 = vmul.f32 %v5895, %v5908
  %v5910 = vadd.f32 %v5909, 0.014752088
  %v5911 = vmul.f32 %v5895, %v5910
  %v5912 = vadd.f32 %v5911, 0.112945676
  %v5913 = vmul.f32 %v5895, %v5912
  %v5914 = vadd.f32 %v5913, 0.4994258
  %v5915 = vmul.f32 %v5895, %v5914
  %v5916 = vadd.f32 %v5915, 1.0
  %v5917 = vrcp.pop %v5916
  %v5918 = vmul.f32 %v5916, %v5917
  %v5919 = vsub.f32 1.0, %v5918
  %v5920 = vmul.f32 %v5917, %v5919
  %v5921 = vadd.f32 %v5917, %v5920
  %vm5922 = vweird.f32 %v5916
  %vm5923 = vweird.f32 %v5917
  %vm5924 = vmor %vm5922, %vm5923
  %v5925 = vsel %vm5924, %v5917, %v5921
  %v5926 = vand.u32 2147483647, %v5916
  %vm5927 = vcmp.eq.f32.partialorder %v5926, 8.507059e+37
  %v5928 = vand.u32 %v5916, 2147483648
  %v5929 = vor.u32 1.1754944e-38, %v5928
  %v5930 = vsel %vm5927, %v5929, %v5925
  %v5931 = vmul.f32 %v5906, %v5930
  %v5932 = vmin.f32 %v5931, 1.0
  %v5933 = vmax.f32 %v5932, -1.0
  %v5934 = vmul.f32 %v3920, %v3920
  %v5935 = vmin.f32 16.0, %v5934
  %v5936 = vmul.f32 %v5935, 2.1237322e-06
  %v5937 = vadd.f32 %v5936, 0.00028619796
  %v5938 = vmul.f32 %v5935, %v5937
  %v5939 = vadd.f32 %v5938, 0.0036580483
  %v5940 = vmul.f32 %v5935, %v5939
  %v5941 = vadd.f32 %v5940, 0.05243302
  %v5942 = vmul.f32 %v5935, %v5941
  %v5943 = vadd.f32 %v5942, 0.18741608
  %v5944 = vmul.f32 %v5935, %v5943
  %v5945 = vadd.f32 %v5944, 1.1283791
  %v5946 = vmul.f32 %v3920, %v5945
  %v5947 = vmul.f32 %v5935, 3.8918573e-05
  %v5948 = vadd.f32 %v5947, 0.001143296
  %v5949 = vmul.f32 %v5935, %v5948
  %v5950 = vadd.f32 %v5949, 0.014752088
  %v5951 = vmul.f32 %v5935, %v5950
  %v5952 = vadd.f32 %v5951, 0.112945676
  %v5953 = vmul.f32 %v5935, %v5952
  %v5954 = vadd.f32 %v5953, 0.4994258
  %v5955 = vmul.f32 %v5935, %v5954
  %v5956 = vadd.f32 %v5955, 1.0
  %v5957 = vrcp.pop %v5956
  %v5958 = vmul.f32 %v5956, %v5957
  %v5959 = vsub.f32 1.0, %v5958
  %v5960 = vmul.f32 %v5957, %v5959
  %v5961 = vadd.f32 %v5957, %v5960
  %vm5962 = vweird.f32 %v5956
  %vm5963 = vweird.f32 %v5957
  %vm5964 = vmor %vm5962, %vm5963
  %v5965 = vsel %vm5964, %v5957, %v5961
  %v5966 = vand.u32 2147483647, %v5956
  %vm5967 = vcmp.eq.f32.partialorder %v5966, 8.507059e+37
  %v5968 = vand.u32 %v5956, 2147483648
  %v5969 = vor.u32 1.1754944e-38, %v5968
  %v5970 = vsel %vm5967, %v5969, %v5965
  %v5971 = vmul.f32 %v5946, %v5970
  %v5972 = vmin.f32 %v5971, 1.0
  %v5973 = vmax.f32 %v5972, -1.0
  %v5974 = vmul.f32 %v3921, %v3921
  %v5975 = vmin.f32 16.0, %v5974
  %v5976 = vmul.f32 %v5975, 2.1237322e-06
  %v5977 = vadd.f32 %v5976, 0.00028619796
  %v5978 = vmul.f32 %v5975, %v5977
  %v5979 = vadd.f32 %v5978, 0.0036580483
  %v5980 = vmul.f32 %v5975, %v5979
  %v5981 = vadd.f32 %v5980, 0.05243302
  %v5982 = vmul.f32 %v5975, %v5981
  %v5983 = vadd.f32 %v5982, 0.18741608
  %v5984 = vmul.f32 %v5975, %v5983
  %v5985 = vadd.f32 %v5984, 1.1283791
  %v5986 = vmul.f32 %v3921, %v5985
  %v5987 = vmul.f32 %v5975, 3.8918573e-05
  %v5988 = vadd.f32 %v5987, 0.001143296
  %v5989 = vmul.f32 %v5975, %v5988
  %v5990 = vadd.f32 %v5989, 0.014752088
  %v5991 = vmul.f32 %v5975, %v5990
  %v5992 = vadd.f32 %v5991, 0.112945676
  %v5993 = vmul.f32 %v5975, %v5992
  %v5994 = vadd.f32 %v5993, 0.4994258
  %v5995 = vmul.f32 %v5975, %v5994
  %v5996 = vadd.f32 %v5995, 1.0
  %v5997 = vrcp.pop %v5996
  %v5998 = vmul.f32 %v5996, %v5997
  %v5999 = vsub.f32 1.0, %v5998
  %v6000 = vmul.f32 %v5997, %v5999
  %v6001 = vadd.f32 %v5997, %v6000
  %vm6002 = vweird.f32 %v5996
  %vm6003 = vweird.f32 %v5997
  %vm6004 = vmor %vm6002, %vm6003
  %v6005 = vsel %vm6004, %v5997, %v6001
  %v6006 = vand.u32 2147483647, %v5996
  %vm6007 = vcmp.eq.f32.partialorder %v6006, 8.507059e+37
  %v6008 = vand.u32 %v5996, 2147483648
  %v6009 = vor.u32 1.1754944e-38, %v6008
  %v6010 = vsel %vm6007, %v6009, %v6005
  %v6011 = vmul.f32 %v5986, %v6010
  %v6012 = vmin.f32 %v6011, 1.0
  %v6013 = vmax.f32 %v6012, -1.0
  %v6014 = vmul.f32 %v3922, %v3922
  %v6015 = vmin.f32 16.0, %v6014
  %v6016 = vmul.f32 %v6015, 2.1237322e-06
  %v6017 = vadd.f32 %v6016, 0.00028619796
  %v6018 = vmul.f32 %v6015, %v6017
  %v6019 = vadd.f32 %v6018, 0.0036580483
  %v6020 = vmul.f32 %v6015, %v6019
  %v6021 = vadd.f32 %v6020, 0.05243302
  %v6022 = vmul.f32 %v6015, %v6021
  %v6023 = vadd.f32 %v6022, 0.18741608
  %v6024 = vmul.f32 %v6015, %v6023
  %v6025 = vadd.f32 %v6024, 1.1283791
  %v6026 = vmul.f32 %v3922, %v6025
  %v6027 = vmul.f32 %v6015, 3.8918573e-05
  %v6028 = vadd.f32 %v6027, 0.001143296
  %v6029 = vmul.f32 %v6015, %v6028
  %v6030 = vadd.f32 %v6029, 0.014752088
  %v6031 = vmul.f32 %v6015, %v6030
  %v6032 = vadd.f32 %v6031, 0.112945676
  %v6033 = vmul.f32 %v6015, %v6032
  %v6034 = vadd.f32 %v6033, 0.4994258
  %v6035 = vmul.f32 %v6015, %v6034
  %v6036 = vadd.f32 %v6035, 1.0
  %v6037 = vrcp.pop %v6036
  %v6038 = vmul.f32 %v6036, %v6037
  %v6039 = vsub.f32 1.0, %v6038
  %v6040 = vmul.f32 %v6037, %v6039
  %v6041 = vadd.f32 %v6037, %v6040
  %vm6042 = vweird.f32 %v6036
  %vm6043 = vweird.f32 %v6037
  %vm6044 = vmor %vm6042, %vm6043
  %v6045 = vsel %vm6044, %v6037, %v6041
  %v6046 = vand.u32 2147483647, %v6036
  %vm6047 = vcmp.eq.f32.partialorder %v6046, 8.507059e+37
  %v6048 = vand.u32 %v6036, 2147483648
  %v6049 = vor.u32 1.1754944e-38, %v6048
  %v6050 = vsel %vm6047, %v6049, %v6045
  %v6051 = vmul.f32 %v6026, %v6050
  %v6052 = vmin.f32 %v6051, 1.0
  %v6053 = vmax.f32 %v6052, -1.0
  %v6054 = vmul.f32 %v3923, %v3923
  %v6055 = vmin.f32 16.0, %v6054
  %v6056 = vmul.f32 %v6055, 2.1237322e-06
  %v6057 = vadd.f32 %v6056, 0.00028619796
  %v6058 = vmul.f32 %v6055, %v6057
  %v6059 = vadd.f32 %v6058, 0.0036580483
  %v6060 = vmul.f32 %v6055, %v6059
  %v6061 = vadd.f32 %v6060, 0.05243302
  %v6062 = vmul.f32 %v6055, %v6061
  %v6063 = vadd.f32 %v6062, 0.18741608
  %v6064 = vmul.f32 %v6055, %v6063
  %v6065 = vadd.f32 %v6064, 1.1283791
  %v6066 = vmul.f32 %v3923, %v6065
  %v6067 = vmul.f32 %v6055, 3.8918573e-05
  %v6068 = vadd.f32 %v6067, 0.001143296
  %v6069 = vmul.f32 %v6055, %v6068
  %v6070 = vadd.f32 %v6069, 0.014752088
  %v6071 = vmul.f32 %v6055, %v6070
  %v6072 = vadd.f32 %v6071, 0.112945676
  %v6073 = vmul.f32 %v6055, %v6072
  %v6074 = vadd.f32 %v6073, 0.4994258
  %v6075 = vmul.f32 %v6055, %v6074
  %v6076 = vadd.f32 %v6075, 1.0
  %v6077 = vrcp.pop %v6076
  %v6078 = vmul.f32 %v6076, %v6077
  %v6079 = vsub.f32 1.0, %v6078
  %v6080 = vmul.f32 %v6077, %v6079
  %v6081 = vadd.f32 %v6077, %v6080
  %vm6082 = vweird.f32 %v6076
  %vm6083 = vweird.f32 %v6077
  %vm6084 = vmor %vm6082, %vm6083
  %v6085 = vsel %vm6084, %v6077, %v6081
  %v6086 = vand.u32 2147483647, %v6076
  %vm6087 = vcmp.eq.f32.partialorder %v6086, 8.507059e+37
  %v6088 = vand.u32 %v6076, 2147483648
  %v6089 = vor.u32 1.1754944e-38, %v6088
  %v6090 = vsel %vm6087, %v6089, %v6085
  %v6091 = vmul.f32 %v6066, %v6090
  %v6092 = vmin.f32 %v6091, 1.0
  %v6093 = vmax.f32 %v6092, -1.0
  %v6094 = vmul.f32 %v3924, %v3924
  %v6095 = vmin.f32 16.0, %v6094
  %v6096 = vmul.f32 %v6095, 2.1237322e-06
  %v6097 = vadd.f32 %v6096, 0.00028619796
  %v6098 = vmul.f32 %v6095, %v6097
  %v6099 = vadd.f32 %v6098, 0.0036580483
  %v6100 = vmul.f32 %v6095, %v6099
  %v6101 = vadd.f32 %v6100, 0.05243302
  %v6102 = vmul.f32 %v6095, %v6101
  %v6103 = vadd.f32 %v6102, 0.18741608
  %v6104 = vmul.f32 %v6095, %v6103
  %v6105 = vadd.f32 %v6104, 1.1283791
  %v6106 = vmul.f32 %v3924, %v6105
  %v6107 = vmul.f32 %v6095, 3.8918573e-05
  %v6108 = vadd.f32 %v6107, 0.001143296
  %v6109 = vmul.f32 %v6095, %v6108
  %v6110 = vadd.f32 %v6109, 0.014752088
  %v6111 = vmul.f32 %v6095, %v6110
  %v6112 = vadd.f32 %v6111, 0.112945676
  %v6113 = vmul.f32 %v6095, %v6112
  %v6114 = vadd.f32 %v6113, 0.4994258
  %v6115 = vmul.f32 %v6095, %v6114
  %v6116 = vadd.f32 %v6115, 1.0
  %v6117 = vrcp.pop %v6116
  %v6118 = vmul.f32 %v6116, %v6117
  %v6119 = vsub.f32 1.0, %v6118
  %v6120 = vmul.f32 %v6117, %v6119
  %v6121 = vadd.f32 %v6117, %v6120
  %vm6122 = vweird.f32 %v6116
  %vm6123 = vweird.f32 %v6117
  %vm6124 = vmor %vm6122, %vm6123
  %v6125 = vsel %vm6124, %v6117, %v6121
  %v6126 = vand.u32 2147483647, %v6116
  %vm6127 = vcmp.eq.f32.partialorder %v6126, 8.507059e+37
  %v6128 = vand.u32 %v6116, 2147483648
  %v6129 = vor.u32 1.1754944e-38, %v6128
  %v6130 = vsel %vm6127, %v6129, %v6125
  %v6131 = vmul.f32 %v6106, %v6130
  %v6132 = vmin.f32 %v6131, 1.0
  %v6133 = vmax.f32 %v6132, -1.0
  %v6134 = vmul.f32 %v3925, %v3925
  %v6135 = vmin.f32 16.0, %v6134
  %v6136 = vmul.f32 %v6135, 2.1237322e-06
  %v6137 = vadd.f32 %v6136, 0.00028619796
  %v6138 = vmul.f32 %v6135, %v6137
  %v6139 = vadd.f32 %v6138, 0.0036580483
  %v6140 = vmul.f32 %v6135, %v6139
  %v6141 = vadd.f32 %v6140, 0.05243302
  %v6142 = vmul.f32 %v6135, %v6141
  %v6143 = vadd.f32 %v6142, 0.18741608
  %v6144 = vmul.f32 %v6135, %v6143
  %v6145 = vadd.f32 %v6144, 1.1283791
  %v6146 = vmul.f32 %v3925, %v6145
  %v6147 = vmul.f32 %v6135, 3.8918573e-05
  %v6148 = vadd.f32 %v6147, 0.001143296
  %v6149 = vmul.f32 %v6135, %v6148
  %v6150 = vadd.f32 %v6149, 0.014752088
  %v6151 = vmul.f32 %v6135, %v6150
  %v6152 = vadd.f32 %v6151, 0.112945676
  %v6153 = vmul.f32 %v6135, %v6152
  %v6154 = vadd.f32 %v6153, 0.4994258
  %v6155 = vmul.f32 %v6135, %v6154
  %v6156 = vadd.f32 %v6155, 1.0
  %v6157 = vrcp.pop %v6156
  %v6158 = vmul.f32 %v6156, %v6157
  %v6159 = vsub.f32 1.0, %v6158
  %v6160 = vmul.f32 %v6157, %v6159
  %v6161 = vadd.f32 %v6157, %v6160
  %vm6162 = vweird.f32 %v6156
  %vm6163 = vweird.f32 %v6157
  %vm6164 = vmor %vm6162, %vm6163
  %v6165 = vsel %vm6164, %v6157, %v6161
  %v6166 = vand.u32 2147483647, %v6156
  %vm6167 = vcmp.eq.f32.partialorder %v6166, 8.507059e+37
  %v6168 = vand.u32 %v6156, 2147483648
  %v6169 = vor.u32 1.1754944e-38, %v6168
  %v6170 = vsel %vm6167, %v6169, %v6165
  %v6171 = vmul.f32 %v6146, %v6170
  %v6172 = vmin.f32 %v6171, 1.0
  %v6173 = vmax.f32 %v6172, -1.0
  %v6174 = vmul.f32 %v3926, %v3926
  %v6175 = vmin.f32 16.0, %v6174
  %v6176 = vmul.f32 %v6175, 2.1237322e-06
  %v6177 = vadd.f32 %v6176, 0.00028619796
  %v6178 = vmul.f32 %v6175, %v6177
  %v6179 = vadd.f32 %v6178, 0.0036580483
  %v6180 = vmul.f32 %v6175, %v6179
  %v6181 = vadd.f32 %v6180, 0.05243302
  %v6182 = vmul.f32 %v6175, %v6181
  %v6183 = vadd.f32 %v6182, 0.18741608
  %v6184 = vmul.f32 %v6175, %v6183
  %v6185 = vadd.f32 %v6184, 1.1283791
  %v6186 = vmul.f32 %v3926, %v6185
  %v6187 = vmul.f32 %v6175, 3.8918573e-05
  %v6188 = vadd.f32 %v6187, 0.001143296
  %v6189 = vmul.f32 %v6175, %v6188
  %v6190 = vadd.f32 %v6189, 0.014752088
  %v6191 = vmul.f32 %v6175, %v6190
  %v6192 = vadd.f32 %v6191, 0.112945676
  %v6193 = vmul.f32 %v6175, %v6192
  %v6194 = vadd.f32 %v6193, 0.4994258
  %v6195 = vmul.f32 %v6175, %v6194
  %v6196 = vadd.f32 %v6195, 1.0
  %v6197 = vrcp.pop %v6196
  %v6198 = vmul.f32 %v6196, %v6197
  %v6199 = vsub.f32 1.0, %v6198
  %v6200 = vmul.f32 %v6197, %v6199
  %v6201 = vadd.f32 %v6197, %v6200
  %vm6202 = vweird.f32 %v6196
  %vm6203 = vweird.f32 %v6197
  %vm6204 = vmor %vm6202, %vm6203
  %v6205 = vsel %vm6204, %v6197, %v6201
  %v6206 = vand.u32 2147483647, %v6196
  %vm6207 = vcmp.eq.f32.partialorder %v6206, 8.507059e+37
  %v6208 = vand.u32 %v6196, 2147483648
  %v6209 = vor.u32 1.1754944e-38, %v6208
  %v6210 = vsel %vm6207, %v6209, %v6205
  %v6211 = vmul.f32 %v6186, %v6210
  %v6212 = vmin.f32 %v6211, 1.0
  %v6213 = vmax.f32 %v6212, -1.0
  %v6214 = vmul.f32 %v3927, %v3927
  %v6215 = vmin.f32 16.0, %v6214
  %v6216 = vmul.f32 %v6215, 2.1237322e-06
  %v6217 = vadd.f32 %v6216, 0.00028619796
  %v6218 = vmul.f32 %v6215, %v6217
  %v6219 = vadd.f32 %v6218, 0.0036580483
  %v6220 = vmul.f32 %v6215, %v6219
  %v6221 = vadd.f32 %v6220, 0.05243302
  %v6222 = vmul.f32 %v6215, %v6221
  %v6223 = vadd.f32 %v6222, 0.18741608
  %v6224 = vmul.f32 %v6215, %v6223
  %v6225 = vadd.f32 %v6224, 1.1283791
  %v6226 = vmul.f32 %v3927, %v6225
  %v6227 = vmul.f32 %v6215, 3.8918573e-05
  %v6228 = vadd.f32 %v6227, 0.001143296
  %v6229 = vmul.f32 %v6215, %v6228
  %v6230 = vadd.f32 %v6229, 0.014752088
  %v6231 = vmul.f32 %v6215, %v6230
  %v6232 = vadd.f32 %v6231, 0.112945676
  %v6233 = vmul.f32 %v6215, %v6232
  %v6234 = vadd.f32 %v6233, 0.4994258
  %v6235 = vmul.f32 %v6215, %v6234
  %v6236 = vadd.f32 %v6235, 1.0
  %v6237 = vrcp.pop %v6236
  %v6238 = vmul.f32 %v6236, %v6237
  %v6239 = vsub.f32 1.0, %v6238
  %v6240 = vmul.f32 %v6237, %v6239
  %v6241 = vadd.f32 %v6237, %v6240
  %vm6242 = vweird.f32 %v6236
  %vm6243 = vweird.f32 %v6237
  %vm6244 = vmor %vm6242, %vm6243
  %v6245 = vsel %vm6244, %v6237, %v6241
  %v6246 = vand.u32 2147483647, %v6236
  %vm6247 = vcmp.eq.f32.partialorder %v6246, 8.507059e+37
  %v6248 = vand.u32 %v6236, 2147483648
  %v6249 = vor.u32 1.1754944e-38, %v6248
  %v6250 = vsel %vm6247, %v6249, %v6245
  %v6251 = vmul.f32 %v6226, %v6250
  %v6252 = vmin.f32 %v6251, 1.0
  %v6253 = vmax.f32 %v6252, -1.0
  %v6254 = vmul.f32 %v3928, %v3928
  %v6255 = vmin.f32 16.0, %v6254
  %v6256 = vmul.f32 %v6255, 2.1237322e-06
  %v6257 = vadd.f32 %v6256, 0.00028619796
  %v6258 = vmul.f32 %v6255, %v6257
  %v6259 = vadd.f32 %v6258, 0.0036580483
  %v6260 = vmul.f32 %v6255, %v6259
  %v6261 = vadd.f32 %v6260, 0.05243302
  %v6262 = vmul.f32 %v6255, %v6261
  %v6263 = vadd.f32 %v6262, 0.18741608
  %v6264 = vmul.f32 %v6255, %v6263
  %v6265 = vadd.f32 %v6264, 1.1283791
  %v6266 = vmul.f32 %v3928, %v6265
  %v6267 = vmul.f32 %v6255, 3.8918573e-05
  %v6268 = vadd.f32 %v6267, 0.001143296
  %v6269 = vmul.f32 %v6255, %v6268
  %v6270 = vadd.f32 %v6269, 0.014752088
  %v6271 = vmul.f32 %v6255, %v6270
  %v6272 = vadd.f32 %v6271, 0.112945676
  %v6273 = vmul.f32 %v6255, %v6272
  %v6274 = vadd.f32 %v6273, 0.4994258
  %v6275 = vmul.f32 %v6255, %v6274
  %v6276 = vadd.f32 %v6275, 1.0
  %v6277 = vrcp.pop %v6276
  %v6278 = vmul.f32 %v6276, %v6277
  %v6279 = vsub.f32 1.0, %v6278
  %v6280 = vmul.f32 %v6277, %v6279
  %v6281 = vadd.f32 %v6277, %v6280
  %vm6282 = vweird.f32 %v6276
  %vm6283 = vweird.f32 %v6277
  %vm6284 = vmor %vm6282, %vm6283
  %v6285 = vsel %vm6284, %v6277, %v6281
  %v6286 = vand.u32 2147483647, %v6276
  %vm6287 = vcmp.eq.f32.partialorder %v6286, 8.507059e+37
  %v6288 = vand.u32 %v6276, 2147483648
  %v6289 = vor.u32 1.1754944e-38, %v6288
  %v6290 = vsel %vm6287, %v6289, %v6285
  %v6291 = vmul.f32 %v6266, %v6290
  %v6292 = vmin.f32 %v6291, 1.0
  %v6293 = vmax.f32 %v6292, -1.0
  %v6294 = vmul.f32 %v3929, %v3929
  %v6295 = vmin.f32 16.0, %v6294
  %v6296 = vmul.f32 %v6295, 2.1237322e-06
  %v6297 = vadd.f32 %v6296, 0.00028619796
  %v6298 = vmul.f32 %v6295, %v6297
  %v6299 = vadd.f32 %v6298, 0.0036580483
  %v6300 = vmul.f32 %v6295, %v6299
  %v6301 = vadd.f32 %v6300, 0.05243302
  %v6302 = vmul.f32 %v6295, %v6301
  %v6303 = vadd.f32 %v6302, 0.18741608
  %v6304 = vmul.f32 %v6295, %v6303
  %v6305 = vadd.f32 %v6304, 1.1283791
  %v6306 = vmul.f32 %v3929, %v6305
  %v6307 = vmul.f32 %v6295, 3.8918573e-05
  %v6308 = vadd.f32 %v6307, 0.001143296
  %v6309 = vmul.f32 %v6295, %v6308
  %v6310 = vadd.f32 %v6309, 0.014752088
  %v6311 = vmul.f32 %v6295, %v6310
  %v6312 = vadd.f32 %v6311, 0.112945676
  %v6313 = vmul.f32 %v6295, %v6312
  %v6314 = vadd.f32 %v6313, 0.4994258
  %v6315 = vmul.f32 %v6295, %v6314
  %v6316 = vadd.f32 %v6315, 1.0
  %v6317 = vrcp.pop %v6316
  %v6318 = vmul.f32 %v6316, %v6317
  %v6319 = vsub.f32 1.0, %v6318
  %v6320 = vmul.f32 %v6317, %v6319
  %v6321 = vadd.f32 %v6317, %v6320
  %vm6322 = vweird.f32 %v6316
  %vm6323 = vweird.f32 %v6317
  %vm6324 = vmor %vm6322, %vm6323
  %v6325 = vsel %vm6324, %v6317, %v6321
  %v6326 = vand.u32 2147483647, %v6316
  %vm6327 = vcmp.eq.f32.partialorder %v6326, 8.507059e+37
  %v6328 = vand.u32 %v6316, 2147483648
  %v6329 = vor.u32 1.1754944e-38, %v6328
  %v6330 = vsel %vm6327, %v6329, %v6325
  %v6331 = vmul.f32 %v6306, %v6330
  %v6332 = vmin.f32 %v6331, 1.0
  %v6333 = vmax.f32 %v6332, -1.0
  %v6334 = vmul.f32 %v3930, %v3930
  %v6335 = vmin.f32 16.0, %v6334
  %v6336 = vmul.f32 %v6335, 2.1237322e-06
  %v6337 = vadd.f32 %v6336, 0.00028619796
  %v6338 = vmul.f32 %v6335, %v6337
  %v6339 = vadd.f32 %v6338, 0.0036580483
  %v6340 = vmul.f32 %v6335, %v6339
  %v6341 = vadd.f32 %v6340, 0.05243302
  %v6342 = vmul.f32 %v6335, %v6341
  %v6343 = vadd.f32 %v6342, 0.18741608
  %v6344 = vmul.f32 %v6335, %v6343
  %v6345 = vadd.f32 %v6344, 1.1283791
  %v6346 = vmul.f32 %v3930, %v6345
  %v6347 = vmul.f32 %v6335, 3.8918573e-05
  %v6348 = vadd.f32 %v6347, 0.001143296
  %v6349 = vmul.f32 %v6335, %v6348
  %v6350 = vadd.f32 %v6349, 0.014752088
  %v6351 = vmul.f32 %v6335, %v6350
  %v6352 = vadd.f32 %v6351, 0.112945676
  %v6353 = vmul.f32 %v6335, %v6352
  %v6354 = vadd.f32 %v6353, 0.4994258
  %v6355 = vmul.f32 %v6335, %v6354
  %v6356 = vadd.f32 %v6355, 1.0
  %v6357 = vrcp.pop %v6356
  %v6358 = vmul.f32 %v6356, %v6357
  %v6359 = vsub.f32 1.0, %v6358
  %v6360 = vmul.f32 %v6357, %v6359
  %v6361 = vadd.f32 %v6357, %v6360
  %vm6362 = vweird.f32 %v6356
  %vm6363 = vweird.f32 %v6357
  %vm6364 = vmor %vm6362, %vm6363
  %v6365 = vsel %vm6364, %v6357, %v6361
  %v6366 = vand.u32 2147483647, %v6356
  %vm6367 = vcmp.eq.f32.partialorder %v6366, 8.507059e+37
  %v6368 = vand.u32 %v6356, 2147483648
  %v6369 = vor.u32 1.1754944e-38, %v6368
  %v6370 = vsel %vm6367, %v6369, %v6365
  %v6371 = vmul.f32 %v6346, %v6370
  %v6372 = vmin.f32 %v6371, 1.0
  %v6373 = vmax.f32 %v6372, -1.0
  %v6374 = vmul.f32 %v3931, %v3931
  %v6375 = vmin.f32 16.0, %v6374
  %v6376 = vmul.f32 %v6375, 2.1237322e-06
  %v6377 = vadd.f32 %v6376, 0.00028619796
  %v6378 = vmul.f32 %v6375, %v6377
  %v6379 = vadd.f32 %v6378, 0.0036580483
  %v6380 = vmul.f32 %v6375, %v6379
  %v6381 = vadd.f32 %v6380, 0.05243302
  %v6382 = vmul.f32 %v6375, %v6381
  %v6383 = vadd.f32 %v6382, 0.18741608
  %v6384 = vmul.f32 %v6375, %v6383
  %v6385 = vadd.f32 %v6384, 1.1283791
  %v6386 = vmul.f32 %v3931, %v6385
  %v6387 = vmul.f32 %v6375, 3.8918573e-05
  %v6388 = vadd.f32 %v6387, 0.001143296
  %v6389 = vmul.f32 %v6375, %v6388
  %v6390 = vadd.f32 %v6389, 0.014752088
  %v6391 = vmul.f32 %v6375, %v6390
  %v6392 = vadd.f32 %v6391, 0.112945676
  %v6393 = vmul.f32 %v6375, %v6392
  %v6394 = vadd.f32 %v6393, 0.4994258
  %v6395 = vmul.f32 %v6375, %v6394
  %v6396 = vadd.f32 %v6395, 1.0
  %v6397 = vrcp.pop %v6396
  %v6398 = vmul.f32 %v6396, %v6397
  %v6399 = vsub.f32 1.0, %v6398
  %v6400 = vmul.f32 %v6397, %v6399
  %v6401 = vadd.f32 %v6397, %v6400
  %vm6402 = vweird.f32 %v6396
  %vm6403 = vweird.f32 %v6397
  %vm6404 = vmor %vm6402, %vm6403
  %v6405 = vsel %vm6404, %v6397, %v6401
  %v6406 = vand.u32 2147483647, %v6396
  %vm6407 = vcmp.eq.f32.partialorder %v6406, 8.507059e+37
  %v6408 = vand.u32 %v6396, 2147483648
  %v6409 = vor.u32 1.1754944e-38, %v6408
  %v6410 = vsel %vm6407, %v6409, %v6405
  %v6411 = vmul.f32 %v6386, %v6410
  %v6412 = vmin.f32 %v6411, 1.0
  %v6413 = vmax.f32 %v6412, -1.0
  %v6414 = vmul.f32 %v3932, %v3932
  %v6415 = vmin.f32 16.0, %v6414
  %v6416 = vmul.f32 %v6415, 2.1237322e-06
  %v6417 = vadd.f32 %v6416, 0.00028619796
  %v6418 = vmul.f32 %v6415, %v6417
  %v6419 = vadd.f32 %v6418, 0.0036580483
  %v6420 = vmul.f32 %v6415, %v6419
  %v6421 = vadd.f32 %v6420, 0.05243302
  %v6422 = vmul.f32 %v6415, %v6421
  %v6423 = vadd.f32 %v6422, 0.18741608
  %v6424 = vmul.f32 %v6415, %v6423
  %v6425 = vadd.f32 %v6424, 1.1283791
  %v6426 = vmul.f32 %v3932, %v6425
  %v6427 = vmul.f32 %v6415, 3.8918573e-05
  %v6428 = vadd.f32 %v6427, 0.001143296
  %v6429 = vmul.f32 %v6415, %v6428
  %v6430 = vadd.f32 %v6429, 0.014752088
  %v6431 = vmul.f32 %v6415, %v6430
  %v6432 = vadd.f32 %v6431, 0.112945676
  %v6433 = vmul.f32 %v6415, %v6432
  %v6434 = vadd.f32 %v6433, 0.4994258
  %v6435 = vmul.f32 %v6415, %v6434
  %v6436 = vadd.f32 %v6435, 1.0
  %v6437 = vrcp.pop %v6436
  %v6438 = vmul.f32 %v6436, %v6437
  %v6439 = vsub.f32 1.0, %v6438
  %v6440 = vmul.f32 %v6437, %v6439
  %v6441 = vadd.f32 %v6437, %v6440
  %vm6442 = vweird.f32 %v6436
  %vm6443 = vweird.f32 %v6437
  %vm6444 = vmor %vm6442, %vm6443
  %v6445 = vsel %vm6444, %v6437, %v6441
  %v6446 = vand.u32 2147483647, %v6436
  %vm6447 = vcmp.eq.f32.partialorder %v6446, 8.507059e+37
  %v6448 = vand.u32 %v6436, 2147483648
  %v6449 = vor.u32 1.1754944e-38, %v6448
  %v6450 = vsel %vm6447, %v6449, %v6445
  %v6451 = vmul.f32 %v6426, %v6450
  %v6452 = vmin.f32 %v6451, 1.0
  %v6453 = vmax.f32 %v6452, -1.0
  %v6454 = vmul.f32 %v3933, %v3933
  %v6455 = vmin.f32 16.0, %v6454
  %v6456 = vmul.f32 %v6455, 2.1237322e-06
  %v6457 = vadd.f32 %v6456, 0.00028619796
  %v6458 = vmul.f32 %v6455, %v6457
  %v6459 = vadd.f32 %v6458, 0.0036580483
  %v6460 = vmul.f32 %v6455, %v6459
  %v6461 = vadd.f32 %v6460, 0.05243302
  %v6462 = vmul.f32 %v6455, %v6461
  %v6463 = vadd.f32 %v6462, 0.18741608
  %v6464 = vmul.f32 %v6455, %v6463
  %v6465 = vadd.f32 %v6464, 1.1283791
  %v6466 = vmul.f32 %v3933, %v6465
  %v6467 = vmul.f32 %v6455, 3.8918573e-05
  %v6468 = vadd.f32 %v6467, 0.001143296
  %v6469 = vmul.f32 %v6455, %v6468
  %v6470 = vadd.f32 %v6469, 0.014752088
  %v6471 = vmul.f32 %v6455, %v6470
  %v6472 = vadd.f32 %v6471, 0.112945676
  %v6473 = vmul.f32 %v6455, %v6472
  %v6474 = vadd.f32 %v6473, 0.4994258
  %v6475 = vmul.f32 %v6455, %v6474
  %v6476 = vadd.f32 %v6475, 1.0
  %v6477 = vrcp.pop %v6476
  %v6478 = vmul.f32 %v6476, %v6477
  %v6479 = vsub.f32 1.0, %v6478
  %v6480 = vmul.f32 %v6477, %v6479
  %v6481 = vadd.f32 %v6477, %v6480
  %vm6482 = vweird.f32 %v6476
  %vm6483 = vweird.f32 %v6477
  %vm6484 = vmor %vm6482, %vm6483
  %v6485 = vsel %vm6484, %v6477, %v6481
  %v6486 = vand.u32 2147483647, %v6476
  %vm6487 = vcmp.eq.f32.partialorder %v6486, 8.507059e+37
  %v6488 = vand.u32 %v6476, 2147483648
  %v6489 = vor.u32 1.1754944e-38, %v6488
  %v6490 = vsel %vm6487, %v6489, %v6485
  %v6491 = vmul.f32 %v6466, %v6490
  %v6492 = vmin.f32 %v6491, 1.0
  %v6493 = vmax.f32 %v6492, -1.0
  %v6494 = vadd.f32 %v3973, 1.0
  %v6495 = vadd.f32 %v4013, 1.0
  %v6496 = vadd.f32 %v4053, 1.0
  %v6497 = vadd.f32 %v4093, 1.0
  %v6498 = vadd.f32 %v4133, 1.0
  %v6499 = vadd.f32 %v4173, 1.0
  %v6500 = vadd.f32 %v4213, 1.0
  %v6501 = vadd.f32 %v4253, 1.0
  %v6502 = vadd.f32 %v4293, 1.0
  %v6503 = vadd.f32 %v4333, 1.0
  %v6504 = vadd.f32 %v4373, 1.0
  %v6505 = vadd.f32 %v4413, 1.0
  %v6506 = vadd.f32 %v4453, 1.0
  %v6507 = vadd.f32 %v4493, 1.0
  %v6508 = vadd.f32 %v4533, 1.0
  %v6509 = vadd.f32 %v4573, 1.0
  %v6510 = vadd.f32 %v4613, 1.0
  %v6511 = vadd.f32 %v4653, 1.0
  %v6512 = vadd.f32 %v4693, 1.0
  %v6513 = vadd.f32 %v4733, 1.0
  %v6514 = vadd.f32 %v4773, 1.0
  %v6515 = vadd.f32 %v4813, 1.0
  %v6516 = vadd.f32 %v4853, 1.0
  %v6517 = vadd.f32 %v4893, 1.0
  %v6518 = vadd.f32 %v4933, 1.0
  %v6519 = vadd.f32 %v4973, 1.0
  %v6520 = vadd.f32 %v5013, 1.0
  %v6521 = vadd.f32 %v5053, 1.0
  %v6522 = vadd.f32 %v5093, 1.0
  %v6523 = vadd.f32 %v5133, 1.0
  %v6524 = vadd.f32 %v5173, 1.0
  %v6525 = vadd.f32 %v5213, 1.0
  %v6526 = vadd.f32 %v5253, 1.0
  %v6527 = vadd.f32 %v5293, 1.0
  %v6528 = vadd.f32 %v5333, 1.0
  %v6529 = vadd.f32 %v5373, 1.0
  %v6530 = vadd.f32 %v5413, 1.0
  %v6531 = vadd.f32 %v5453, 1.0
  %v6532 = vadd.f32 %v5493, 1.0
  %v6533 = vadd.f32 %v5533, 1.0
  %v6534 = vadd.f32 %v5573, 1.0
  %v6535 = vadd.f32 %v5613, 1.0
  %v6536 = vadd.f32 %v5653, 1.0
  %v6537 = vadd.f32 %v5693, 1.0
  %v6538 = vadd.f32 %v5733, 1.0
  %v6539 = vadd.f32 %v5773, 1.0
  %v6540 = vadd.f32 %v5813, 1.0
  %v6541 = vadd.f32 %v5853, 1.0
  %v6542 = vadd.f32 %v5893, 1.0
  %v6543 = vadd.f32 %v5933, 1.0
  %v6544 = vadd.f32 %v5973, 1.0
  %v6545 = vadd.f32 %v6013, 1.0
  %v6546 = vadd.f32 %v6053, 1.0
  %v6547 = vadd.f32 %v6093, 1.0
  %v6548 = vadd.f32 %v6133, 1.0
  %v6549 = vadd.f32 %v6173, 1.0
  %v6550 = vadd.f32 %v6213, 1.0
  %v6551 = vadd.f32 %v6253, 1.0
  %v6552 = vadd.f32 %v6293, 1.0
  %v6553 = vadd.f32 %v6333, 1.0
  %v6554 = vadd.f32 %v6373, 1.0
  %v6555 = vadd.f32 %v6413, 1.0
  %v6556 = vadd.f32 %v6453, 1.0
  %v6557 = vadd.f32 %v6493, 1.0
  %v6558 = vmul.f32 %v3806, %v6494
  %v6559 = vmul.f32 %v3807, %v6495
  %v6560 = vmul.f32 %v3808, %v6496
  %v6561 = vmul.f32 %v3809, %v6497
  %v6562 = vmul.f32 %v3810, %v6498
  %v6563 = vmul.f32 %v3811, %v6499
  %v6564 = vmul.f32 %v3812, %v6500
  %v6565 = vmul.f32 %v3813, %v6501
  %v6566 = vmul.f32 %v3814, %v6502
  %v6567 = vmul.f32 %v3815, %v6503
  %v6568 = vmul.f32 %v3816, %v6504
  %v6569 = vmul.f32 %v3817, %v6505
  %v6570 = vmul.f32 %v3818, %v6506
  %v6571 = vmul.f32 %v3819, %v6507
  %v6572 = vmul.f32 %v3820, %v6508
  %v6573 = vmul.f32 %v3821, %v6509
  %v6574 = vmul.f32 %v3822, %v6510
  %v6575 = vmul.f32 %v3823, %v6511
  %v6576 = vmul.f32 %v3824, %v6512
  %v6577 = vmul.f32 %v3825, %v6513
  %v6578 = vmul.f32 %v3826, %v6514
  %v6579 = vmul.f32 %v3827, %v6515
  %v6580 = vmul.f32 %v3828, %v6516
  %v6581 = vmul.f32 %v3829, %v6517
  %v6582 = vmul.f32 %v3830, %v6518
  %v6583 = vmul.f32 %v3831, %v6519
  %v6584 = vmul.f32 %v3832, %v6520
  %v6585 = vmul.f32 %v3833, %v6521
  %v6586 = vmul.f32 %v3834, %v6522
  %v6587 = vmul.f32 %v3835, %v6523
  %v6588 = vmul.f32 %v3836, %v6524
  %v6589 = vmul.f32 %v3837, %v6525
  %v6590 = vmul.f32 %v3838, %v6526
  %v6591 = vmul.f32 %v3839, %v6527
  %v6592 = vmul.f32 %v3840, %v6528
  %v6593 = vmul.f32 %v3841, %v6529
  %v6594 = vmul.f32 %v3842, %v6530
  %v6595 = vmul.f32 %v3843, %v6531
  %v6596 = vmul.f32 %v3844, %v6532
  %v6597 = vmul.f32 %v3845, %v6533
  %v6598 = vmul.f32 %v3846, %v6534
  %v6599 = vmul.f32 %v3847, %v6535
  %v6600 = vmul.f32 %v3848, %v6536
  %v6601 = vmul.f32 %v3849, %v6537
  %v6602 = vmul.f32 %v3850, %v6538
  %v6603 = vmul.f32 %v3851, %v6539
  %v6604 = vmul.f32 %v3852, %v6540
  %v6605 = vmul.f32 %v3853, %v6541
  %v6606 = vmul.f32 %v3854, %v6542
  %v6607 = vmul.f32 %v3855, %v6543
  %v6608 = vmul.f32 %v3856, %v6544
  %v6609 = vmul.f32 %v3857, %v6545
  %v6610 = vmul.f32 %v3858, %v6546
  %v6611 = vmul.f32 %v3859, %v6547
  %v6612 = vmul.f32 %v3860, %v6548
  %v6613 = vmul.f32 %v3861, %v6549
  %v6614 = vmul.f32 %v3862, %v6550
  %v6615 = vmul.f32 %v3863, %v6551
  %v6616 = vmul.f32 %v3864, %v6552
  %v6617 = vmul.f32 %v3865, %v6553
  %v6618 = vmul.f32 %v3866, %v6554
  %v6619 = vmul.f32 %v3867, %v6555
  %v6620 = vmul.f32 %v3868, %v6556
  %v6621 = vmul.f32 %v3869, %v6557
  %s6622 = scalar_lea.vmem [#allocation2], 24
  %6623 = vst.msk [vmem:[%s6622 + $0x1] sm:$0xff] %vm26, %v6558
  %6624 = vst.msk [vmem:[%s6622 + $0x9] sm:$0xff] %vm26, %v6559
  %6625 = vst.msk [vmem:[%s6622 + $0x19] sm:$0xff] %vm26, %v6560
  %6626 = vst.msk [vmem:[%s6622 + $0x21] sm:$0xff] %vm26, %v6561
  %6627 = vst.msk [vmem:[%s6622 + $0x31] sm:$0xff] %vm26, %v6562
  %6628 = vst.msk [vmem:[%s6622 + $0x39] sm:$0xff] %vm26, %v6563
  %6629 = vst.msk [vmem:[%s6622 + $0x49] sm:$0xff] %vm26, %v6564
  %6630 = vst.msk [vmem:[%s6622 + $0x51] sm:$0xff] %vm26, %v6565
  %6631 = vst.msk [vmem:[%s6622 + $0x61] sm:$0xff] %vm26, %v6566
  %6632 = vst.msk [vmem:[%s6622 + $0x69] sm:$0xff] %vm26, %v6567
  %6633 = vst.msk [vmem:[%s6622 + $0x79] sm:$0xff] %vm26, %v6568
  %6634 = vst.msk [vmem:[%s6622 + $0x81] sm:$0xff] %vm26, %v6569
  %6635 = vst.msk [vmem:[%s6622 + $0x91] sm:$0xff] %vm26, %v6570
  %6636 = vst.msk [vmem:[%s6622 + $0x99] sm:$0xff] %vm26, %v6571
  %6637 = vst.msk [vmem:[%s6622 + $0xa9] sm:$0xff] %vm26, %v6572
  %6638 = vst.msk [vmem:[%s6622 + $0xb1] sm:$0xff] %vm26, %v6573
  %6639 = vst.msk [vmem:[%s6622 + $0xc1] sm:$0xff] %vm26, %v6574
  %6640 = vst.msk [vmem:[%s6622 + $0xc9] sm:$0xff] %vm26, %v6575
  %6641 = vst.msk [vmem:[%s6622 + $0xd9] sm:$0xff] %vm26, %v6576
  %6642 = vst.msk [vmem:[%s6622 + $0xe1] sm:$0xff] %vm26, %v6577
  %6643 = vst.msk [vmem:[%s6622 + $0xf1] sm:$0xff] %vm26, %v6578
  %6644 = vst.msk [vmem:[%s6622 + $0xf9] sm:$0xff] %vm26, %v6579
  %6645 = vst.msk [vmem:[%s6622 + $0x109] sm:$0xff] %vm26, %v6580
  %6646 = vst.msk [vmem:[%s6622 + $0x111] sm:$0xff] %vm26, %v6581
  %6647 = vst.msk [vmem:[%s6622 + $0x121] sm:$0xff] %vm26, %v6582
  %6648 = vst.msk [vmem:[%s6622 + $0x129] sm:$0xff] %vm26, %v6583
  %6649 = vst.msk [vmem:[%s6622 + $0x139] sm:$0xff] %vm26, %v6584
  %6650 = vst.msk [vmem:[%s6622 + $0x141] sm:$0xff] %vm26, %v6585
  %6651 = vst.msk [vmem:[%s6622 + $0x151] sm:$0xff] %vm26, %v6586
  %6652 = vst.msk [vmem:[%s6622 + $0x159] sm:$0xff] %vm26, %v6587
  %6653 = vst.msk [vmem:[%s6622 + $0x169] sm:$0xff] %vm26, %v6588
  %6654 = vst.msk [vmem:[%s6622 + $0x171] sm:$0xff] %vm26, %v6589
  %6655 = vst.msk [vmem:[%s6622 + $0x1b1] sm:$0xff] %vm26, %v6590
  %6656 = vst.msk [vmem:[%s6622 + $0x1b9] sm:$0xff] %vm26, %v6591
  %6657 = vst.msk [vmem:[%s6622 + $0x1c9] sm:$0xff] %vm26, %v6592
  %6658 = vst.msk [vmem:[%s6622 + $0x1d1] sm:$0xff] %vm26, %v6593
  %6659 = vst.msk [vmem:[%s6622 + $0x1e1] sm:$0xff] %vm26, %v6594
  %6660 = vst.msk [vmem:[%s6622 + $0x1e9] sm:$0xff] %vm26, %v6595
  %6661 = vst.msk [vmem:[%s6622 + $0x1f9] sm:$0xff] %vm26, %v6596
  %6662 = vst.msk [vmem:[%s6622 + $0x201] sm:$0xff] %vm26, %v6597
  %6663 = vst.msk [vmem:[%s6622 + $0x211] sm:$0xff] %vm26, %v6598
  %6664 = vst.msk [vmem:[%s6622 + $0x219] sm:$0xff] %vm26, %v6599
  %6665 = vst.msk [vmem:[%s6622 + $0x229] sm:$0xff] %vm26, %v6600
  %6666 = vst.msk [vmem:[%s6622 + $0x231] sm:$0xff] %vm26, %v6601
  %6667 = vst.msk [vmem:[%s6622 + $0x241] sm:$0xff] %vm26, %v6602
  %6668 = vst.msk [vmem:[%s6622 + $0x249] sm:$0xff] %vm26, %v6603
  %6669 = vst.msk [vmem:[%s6622 + $0x259] sm:$0xff] %vm26, %v6604
  %6670 = vst.msk [vmem:[%s6622 + $0x261] sm:$0xff] %vm26, %v6605
  %6671 = vst.msk [vmem:[%s6622 + $0x271] sm:$0xff] %vm26, %v6606
  %6672 = vst.msk [vmem:[%s6622 + $0x279] sm:$0xff] %vm26, %v6607
  %6673 = vst.msk [vmem:[%s6622 + $0x289] sm:$0xff] %vm26, %v6608
  %6674 = vst.msk [vmem:[%s6622 + $0x291] sm:$0xff] %vm26, %v6609
  %6675 = vst.msk [vmem:[%s6622 + $0x2a1] sm:$0xff] %vm26, %v6610
  %6676 = vst.msk [vmem:[%s6622 + $0x2a9] sm:$0xff] %vm26, %v6611
  %6677 = vst.msk [vmem:[%s6622 + $0x2b9] sm:$0xff] %vm26, %v6612
  %6678 = vst.msk [vmem:[%s6622 + $0x2c1] sm:$0xff] %vm26, %v6613
  %6679 = vst.msk [vmem:[%s6622 + $0x2d1] sm:$0xff] %vm26, %v6614
  %6680 = vst.msk [vmem:[%s6622 + $0x2d9] sm:$0xff] %vm26, %v6615
  %6681 = vst.msk [vmem:[%s6622 + $0x2e9] sm:$0xff] %vm26, %v6616
  %6682 = vst.msk [vmem:[%s6622 + $0x2f1] sm:$0xff] %vm26, %v6617
  %6683 = vst.msk [vmem:[%s6622 + $0x301] sm:$0xff] %vm26, %v6618
  %6684 = vst.msk [vmem:[%s6622 + $0x309] sm:$0xff] %vm26, %v6619
  %6685 = vst.msk [vmem:[%s6622 + $0x319] sm:$0xff] %vm26, %v6620
  %6686 = vst.msk [vmem:[%s6622 + $0x321] sm:$0xff] %vm26, %v6621
  %v6687 = vld [vmem:[#allocation2] sm:$0xff]
  %v6688 = vld [vmem:[#allocation2 + $0x8] sm:$0xff]
  %v6689 = vld [vmem:[#allocation2 + $0x18] sm:$0xff]
  %v6690 = vld [vmem:[#allocation2 + $0x20] sm:$0xff]
  %v6691 = vld [vmem:[#allocation2 + $0x30] sm:$0xff]
  %v6692 = vld [vmem:[#allocation2 + $0x38] sm:$0xff]
  %v6693 = vld [vmem:[#allocation2 + $0x48] sm:$0xff]
  %v6694 = vld [vmem:[#allocation2 + $0x50] sm:$0xff]
  %v6695 = vld [vmem:[#allocation2 + $0x60] sm:$0xff]
  %v6696 = vld [vmem:[#allocation2 + $0x68] sm:$0xff]
  %v6697 = vld [vmem:[#allocation2 + $0x78] sm:$0xff]
  %v6698 = vld [vmem:[#allocation2 + $0x80] sm:$0xff]
  %v6699 = vld [vmem:[#allocation2 + $0x90] sm:$0xff]
  %v6700 = vld [vmem:[#allocation2 + $0x98] sm:$0xff]
  %v6701 = vld [vmem:[#allocation2 + $0xa8] sm:$0xff]
  %v6702 = vld [vmem:[#allocation2 + $0xb0] sm:$0xff]
  %v6703 = vld [vmem:[#allocation2 + $0xc0] sm:$0xff]
  %v6704 = vld [vmem:[#allocation2 + $0xc8] sm:$0xff]
  %v6705 = vld [vmem:[#allocation2 + $0xd8] sm:$0xff]
  %v6706 = vld [vmem:[#allocation2 + $0xe0] sm:$0xff]
  %v6707 = vld [vmem:[#allocation2 + $0xf0] sm:$0xff]
  %v6708 = vld [vmem:[#allocation2 + $0xf8] sm:$0xff]
  %v6709 = vld [vmem:[#allocation2 + $0x108] sm:$0xff]
  %v6710 = vld [vmem:[#allocation2 + $0x110] sm:$0xff]
  %v6711 = vld [vmem:[#allocation2 + $0x120] sm:$0xff]
  %v6712 = vld [vmem:[#allocation2 + $0x128] sm:$0xff]
  %v6713 = vld [vmem:[#allocation2 + $0x138] sm:$0xff]
  %v6714 = vld [vmem:[#allocation2 + $0x140] sm:$0xff]
  %v6715 = vld [vmem:[#allocation2 + $0x150] sm:$0xff]
  %v6716 = vld [vmem:[#allocation2 + $0x158] sm:$0xff]
  %v6717 = vld [vmem:[#allocation2 + $0x168] sm:$0xff]
  %v6718 = vld [vmem:[#allocation2 + $0x170] sm:$0xff]
  %v6719 = vld [vmem:[#allocation2 + $0x1b0] sm:$0xff]
  %v6720 = vld [vmem:[#allocation2 + $0x1b8] sm:$0xff]
  %v6721 = vld [vmem:[#allocation2 + $0x1c8] sm:$0xff]
  %v6722 = vld [vmem:[#allocation2 + $0x1d0] sm:$0xff]
  %v6723 = vld [vmem:[#allocation2 + $0x1e0] sm:$0xff]
  %v6724 = vld [vmem:[#allocation2 + $0x1e8] sm:$0xff]
  %v6725 = vld [vmem:[#allocation2 + $0x1f8] sm:$0xff]
  %v6726 = vld [vmem:[#allocation2 + $0x200] sm:$0xff]
  %v6727 = vld [vmem:[#allocation2 + $0x210] sm:$0xff]
  %v6728 = vld [vmem:[#allocation2 + $0x218] sm:$0xff]
  %v6729 = vld [vmem:[#allocation2 + $0x228] sm:$0xff]
  %v6730 = vld [vmem:[#allocation2 + $0x230] sm:$0xff]
  %v6731 = vld [vmem:[#allocation2 + $0x240] sm:$0xff]
  %v6732 = vld [vmem:[#allocation2 + $0x248] sm:$0xff]
  %v6733 = vld [vmem:[#allocation2 + $0x258] sm:$0xff]
  %v6734 = vld [vmem:[#allocation2 + $0x260] sm:$0xff]
  %v6735 = vld [vmem:[#allocation2 + $0x270] sm:$0xff]
  %v6736 = vld [vmem:[#allocation2 + $0x278] sm:$0xff]
  %v6737 = vld [vmem:[#allocation2 + $0x288] sm:$0xff]
  %v6738 = vld [vmem:[#allocation2 + $0x290] sm:$0xff]
  %v6739 = vld [vmem:[#allocation2 + $0x2a0] sm:$0xff]
  %v6740 = vld [vmem:[#allocation2 + $0x2a8] sm:$0xff]
  %v6741 = vld [vmem:[#allocation2 + $0x2b8] sm:$0xff]
  %v6742 = vld [vmem:[#allocation2 + $0x2c0] sm:$0xff]
  %v6743 = vld [vmem:[#allocation2 + $0x2d0] sm:$0xff]
  %v6744 = vld [vmem:[#allocation2 + $0x2d8] sm:$0xff]
  %v6745 = vld [vmem:[#allocation2 + $0x2e8] sm:$0xff]
  %v6746 = vld [vmem:[#allocation2 + $0x2f0] sm:$0xff]
  %v6747 = vld [vmem:[#allocation2 + $0x300] sm:$0xff]
  %v6748 = vld [vmem:[#allocation2 + $0x308] sm:$0xff]
  %v6749 = vld [vmem:[#allocation2 + $0x318] sm:$0xff]
  %v6750 = vld [vmem:[#allocation2 + $0x320] sm:$0xff]
  %v6751 = vld [vmem:[#allocation2 + $0x1] sm:$0xff]
  %v6752 = vld [vmem:[#allocation2 + $0x9] sm:$0xff]
  %v6753 = vld [vmem:[#allocation2 + $0x19] sm:$0xff]
  %v6754 = vld [vmem:[#allocation2 + $0x21] sm:$0xff]
  %v6755 = vld [vmem:[#allocation2 + $0x31] sm:$0xff]
  %v6756 = vld [vmem:[#allocation2 + $0x39] sm:$0xff]
  %v6757 = vld [vmem:[#allocation2 + $0x49] sm:$0xff]
  %v6758 = vld [vmem:[#allocation2 + $0x51] sm:$0xff]
  %v6759 = vld [vmem:[#allocation2 + $0x61] sm:$0xff]
  %v6760 = vld [vmem:[#allocation2 + $0x69] sm:$0xff]
  %v6761 = vld [vmem:[#allocation2 + $0x79] sm:$0xff]
  %v6762 = vld [vmem:[#allocation2 + $0x81] sm:$0xff]
  %v6763 = vld [vmem:[#allocation2 + $0x91] sm:$0xff]
  %v6764 = vld [vmem:[#allocation2 + $0x99] sm:$0xff]
  %v6765 = vld [vmem:[#allocation2 + $0xa9] sm:$0xff]
  %v6766 = vld [vmem:[#allocation2 + $0xb1] sm:$0xff]
  %v6767 = vld [vmem:[#allocation2 + $0xc1] sm:$0xff]
  %v6768 = vld [vmem:[#allocation2 + $0xc9] sm:$0xff]
  %v6769 = vld [vmem:[#allocation2 + $0xd9] sm:$0xff]
  %v6770 = vld [vmem:[#allocation2 + $0xe1] sm:$0xff]
  %v6771 = vld [vmem:[#allocation2 + $0xf1] sm:$0xff]
  %v6772 = vld [vmem:[#allocation2 + $0xf9] sm:$0xff]
  %v6773 = vld [vmem:[#allocation2 + $0x109] sm:$0xff]
  %v6774 = vld [vmem:[#allocation2 + $0x111] sm:$0xff]
  %v6775 = vld [vmem:[#allocation2 + $0x121] sm:$0xff]
  %v6776 = vld [vmem:[#allocation2 + $0x129] sm:$0xff]
  %v6777 = vld [vmem:[#allocation2 + $0x139] sm:$0xff]
  %v6778 = vld [vmem:[#allocation2 + $0x141] sm:$0xff]
  %v6779 = vld [vmem:[#allocation2 + $0x151] sm:$0xff]
  %v6780 = vld [vmem:[#allocation2 + $0x159] sm:$0xff]
  %v6781 = vld [vmem:[#allocation2 + $0x169] sm:$0xff]
  %v6782 = vld [vmem:[#allocation2 + $0x171] sm:$0xff]
  %v6783 = vld [vmem:[#allocation2 + $0x1b1] sm:$0xff]
  %v6784 = vld [vmem:[#allocation2 + $0x1b9] sm:$0xff]
  %v6785 = vld [vmem:[#allocation2 + $0x1c9] sm:$0xff]
  %v6786 = vld [vmem:[#allocation2 + $0x1d1] sm:$0xff]
  %v6787 = vld [vmem:[#allocation2 + $0x1e1] sm:$0xff]
  %v6788 = vld [vmem:[#allocation2 + $0x1e9] sm:$0xff]
  %v6789 = vld [vmem:[#allocation2 + $0x1f9] sm:$0xff]
  %v6790 = vld [vmem:[#allocation2 + $0x201] sm:$0xff]
  %v6791 = vld [vmem:[#allocation2 + $0x211] sm:$0xff]
  %v6792 = vld [vmem:[#allocation2 + $0x219] sm:$0xff]
  %v6793 = vld [vmem:[#allocation2 + $0x229] sm:$0xff]
  %v6794 = vld [vmem:[#allocation2 + $0x231] sm:$0xff]
  %v6795 = vld [vmem:[#allocation2 + $0x241] sm:$0xff]
  %v6796 = vld [vmem:[#allocation2 + $0x249] sm:$0xff]
  %v6797 = vld [vmem:[#allocation2 + $0x259] sm:$0xff]
  %v6798 = vld [vmem:[#allocation2 + $0x261] sm:$0xff]
  %v6799 = vld [vmem:[#allocation2 + $0x271] sm:$0xff]
  %v6800 = vld [vmem:[#allocation2 + $0x279] sm:$0xff]
  %v6801 = vld [vmem:[#allocation2 + $0x289] sm:$0xff]
  %v6802 = vld [vmem:[#allocation2 + $0x291] sm:$0xff]
  %v6803 = vld [vmem:[#allocation2 + $0x2a1] sm:$0xff]
  %v6804 = vld [vmem:[#allocation2 + $0x2a9] sm:$0xff]
  %v6805 = vld [vmem:[#allocation2 + $0x2b9] sm:$0xff]
  %v6806 = vld [vmem:[#allocation2 + $0x2c1] sm:$0xff]
  %v6807 = vld [vmem:[#allocation2 + $0x2d1] sm:$0xff]
  %v6808 = vld [vmem:[#allocation2 + $0x2d9] sm:$0xff]
  %v6809 = vld [vmem:[#allocation2 + $0x2e9] sm:$0xff]
  %v6810 = vld [vmem:[#allocation2 + $0x2f1] sm:$0xff]
  %v6811 = vld [vmem:[#allocation2 + $0x301] sm:$0xff]
  %v6812 = vld [vmem:[#allocation2 + $0x309] sm:$0xff]
  %v6813 = vld [vmem:[#allocation2 + $0x319] sm:$0xff]
  %v6814 = vld [vmem:[#allocation2 + $0x321] sm:$0xff]
  %v6815 = vld [vmem:[#allocation2 + $0x2] sm:$0xff]
  %v6816 = vld [vmem:[#allocation2 + $0xa] sm:$0xff]
  %v6817 = vld [vmem:[#allocation2 + $0x1a] sm:$0xff]
  %v6818 = vld [vmem:[#allocation2 + $0x22] sm:$0xff]
  %v6819 = vld [vmem:[#allocation2 + $0x32] sm:$0xff]
  %v6820 = vld [vmem:[#allocation2 + $0x3a] sm:$0xff]
  %v6821 = vld [vmem:[#allocation2 + $0x4a] sm:$0xff]
  %v6822 = vld [vmem:[#allocation2 + $0x52] sm:$0xff]
  %v6823 = vld [vmem:[#allocation2 + $0x62] sm:$0xff]
  %v6824 = vld [vmem:[#allocation2 + $0x6a] sm:$0xff]
  %v6825 = vld [vmem:[#allocation2 + $0x7a] sm:$0xff]
  %v6826 = vld [vmem:[#allocation2 + $0x82] sm:$0xff]
  %v6827 = vld [vmem:[#allocation2 + $0x92] sm:$0xff]
  %v6828 = vld [vmem:[#allocation2 + $0x9a] sm:$0xff]
  %v6829 = vld [vmem:[#allocation2 + $0xaa] sm:$0xff]
  %v6830 = vld [vmem:[#allocation2 + $0xb2] sm:$0xff]
  %v6831 = vld [vmem:[#allocation2 + $0xc2] sm:$0xff]
  %v6832 = vld [vmem:[#allocation2 + $0xca] sm:$0xff]
  %v6833 = vld [vmem:[#allocation2 + $0xda] sm:$0xff]
  %v6834 = vld [vmem:[#allocation2 + $0xe2] sm:$0xff]
  %v6835 = vld [vmem:[#allocation2 + $0xf2] sm:$0xff]
  %v6836 = vld [vmem:[#allocation2 + $0xfa] sm:$0xff]
  %v6837 = vld [vmem:[#allocation2 + $0x10a] sm:$0xff]
  %v6838 = vld [vmem:[#allocation2 + $0x112] sm:$0xff]
  %v6839 = vld [vmem:[#allocation2 + $0x122] sm:$0xff]
  %v6840 = vld [vmem:[#allocation2 + $0x12a] sm:$0xff]
  %v6841 = vld [vmem:[#allocation2 + $0x13a] sm:$0xff]
  %v6842 = vld [vmem:[#allocation2 + $0x142] sm:$0xff]
  %v6843 = vld [vmem:[#allocation2 + $0x152] sm:$0xff]
  %v6844 = vld [vmem:[#allocation2 + $0x15a] sm:$0xff]
  %v6845 = vld [vmem:[#allocation2 + $0x16a] sm:$0xff]
  %v6846 = vld [vmem:[#allocation2 + $0x172] sm:$0xff]
  %v6847 = vld [vmem:[#allocation2 + $0x1b2] sm:$0xff]
  %v6848 = vld [vmem:[#allocation2 + $0x1ba] sm:$0xff]
  %v6849 = vld [vmem:[#allocation2 + $0x1ca] sm:$0xff]
  %v6850 = vld [vmem:[#allocation2 + $0x1d2] sm:$0xff]
  %v6851 = vld [vmem:[#allocation2 + $0x1e2] sm:$0xff]
  %v6852 = vld [vmem:[#allocation2 + $0x1ea] sm:$0xff]
  %v6853 = vld [vmem:[#allocation2 + $0x1fa] sm:$0xff]
  %v6854 = vld [vmem:[#allocation2 + $0x202] sm:$0xff]
  %v6855 = vld [vmem:[#allocation2 + $0x212] sm:$0xff]
  %v6856 = vld [vmem:[#allocation2 + $0x21a] sm:$0xff]
  %v6857 = vld [vmem:[#allocation2 + $0x22a] sm:$0xff]
  %v6858 = vld [vmem:[#allocation2 + $0x232] sm:$0xff]
  %v6859 = vld [vmem:[#allocation2 + $0x242] sm:$0xff]
  %v6860 = vld [vmem:[#allocation2 + $0x24a] sm:$0xff]
  %v6861 = vld [vmem:[#allocation2 + $0x25a] sm:$0xff]
  %v6862 = vld [vmem:[#allocation2 + $0x262] sm:$0xff]
  %v6863 = vld [vmem:[#allocation2 + $0x272] sm:$0xff]
  %v6864 = vld [vmem:[#allocation2 + $0x27a] sm:$0xff]
  %v6865 = vld [vmem:[#allocation2 + $0x28a] sm:$0xff]
  %v6866 = vld [vmem:[#allocation2 + $0x292] sm:$0xff]
  %v6867 = vld [vmem:[#allocation2 + $0x2a2] sm:$0xff]
  %v6868 = vld [vmem:[#allocation2 + $0x2aa] sm:$0xff]
  %v6869 = vld [vmem:[#allocation2 + $0x2ba] sm:$0xff]
  %v6870 = vld [vmem:[#allocation2 + $0x2c2] sm:$0xff]
  %v6871 = vld [vmem:[#allocation2 + $0x2d2] sm:$0xff]
  %v6872 = vld [vmem:[#allocation2 + $0x2da] sm:$0xff]
  %v6873 = vld [vmem:[#allocation2 + $0x2ea] sm:$0xff]
  %v6874 = vld [vmem:[#allocation2 + $0x2f2] sm:$0xff]
  %v6875 = vld [vmem:[#allocation2 + $0x302] sm:$0xff]
  %v6876 = vld [vmem:[#allocation2 + $0x30a] sm:$0xff]
  %v6877 = vld [vmem:[#allocation2 + $0x31a] sm:$0xff]
  %v6878 = vld [vmem:[#allocation2 + $0x322] sm:$0xff]
  %v6879 = vld [vmem:[%s6622] sm:$0xff]
  %v6880 = vld [vmem:[%s6622 + $0x8] sm:$0xff]
  %v6881 = vld [vmem:[%s6622 + $0x18] sm:$0xff]
  %v6882 = vld [vmem:[%s6622 + $0x20] sm:$0xff]
  %v6883 = vld [vmem:[%s6622 + $0x30] sm:$0xff]
  %v6884 = vld [vmem:[%s6622 + $0x38] sm:$0xff]
  %v6885 = vld [vmem:[%s6622 + $0x48] sm:$0xff]
  %v6886 = vld [vmem:[%s6622 + $0x50] sm:$0xff]
  %v6887 = vld [vmem:[%s6622 + $0x60] sm:$0xff]
  %v6888 = vld [vmem:[%s6622 + $0x68] sm:$0xff]
  %v6889 = vld [vmem:[%s6622 + $0x78] sm:$0xff]
  %v6890 = vld [vmem:[%s6622 + $0x80] sm:$0xff]
  %v6891 = vld [vmem:[%s6622 + $0x90] sm:$0xff]
  %v6892 = vld [vmem:[%s6622 + $0x98] sm:$0xff]
  %v6893 = vld [vmem:[%s6622 + $0xa8] sm:$0xff]
  %v6894 = vld [vmem:[%s6622 + $0xb0] sm:$0xff]
  %v6895 = vld [vmem:[%s6622 + $0xc0] sm:$0xff]
  %v6896 = vld [vmem:[%s6622 + $0xc8] sm:$0xff]
  %v6897 = vld [vmem:[%s6622 + $0xd8] sm:$0xff]
  %v6898 = vld [vmem:[%s6622 + $0xe0] sm:$0xff]
  %v6899 = vld [vmem:[%s6622 + $0xf0] sm:$0xff]
  %v6900 = vld [vmem:[%s6622 + $0xf8] sm:$0xff]
  %v6901 = vld [vmem:[%s6622 + $0x108] sm:$0xff]
  %v6902 = vld [vmem:[%s6622 + $0x110] sm:$0xff]
  %v6903 = vld [vmem:[%s6622 + $0x120] sm:$0xff]
  %v6904 = vld [vmem:[%s6622 + $0x128] sm:$0xff]
  %v6905 = vld [vmem:[%s6622 + $0x138] sm:$0xff]
  %v6906 = vld [vmem:[%s6622 + $0x140] sm:$0xff]
  %v6907 = vld [vmem:[%s6622 + $0x150] sm:$0xff]
  %v6908 = vld [vmem:[%s6622 + $0x158] sm:$0xff]
  %v6909 = vld [vmem:[%s6622 + $0x168] sm:$0xff]
  %v6910 = vld [vmem:[%s6622 + $0x170] sm:$0xff]
  %v6911 = vld [vmem:[%s6622 + $0x1b0] sm:$0xff]
  %v6912 = vld [vmem:[%s6622 + $0x1b8] sm:$0xff]
  %v6913 = vld [vmem:[%s6622 + $0x1c8] sm:$0xff]
  %v6914 = vld [vmem:[%s6622 + $0x1d0] sm:$0xff]
  %v6915 = vld [vmem:[%s6622 + $0x1e0] sm:$0xff]
  %v6916 = vld [vmem:[%s6622 + $0x1e8] sm:$0xff]
  %v6917 = vld [vmem:[%s6622 + $0x1f8] sm:$0xff]
  %v6918 = vld [vmem:[%s6622 + $0x200] sm:$0xff]
  %v6919 = vld [vmem:[%s6622 + $0x210] sm:$0xff]
  %v6920 = vld [vmem:[%s6622 + $0x218] sm:$0xff]
  %v6921 = vld [vmem:[%s6622 + $0x228] sm:$0xff]
  %v6922 = vld [vmem:[%s6622 + $0x230] sm:$0xff]
  %v6923 = vld [vmem:[%s6622 + $0x240] sm:$0xff]
  %v6924 = vld [vmem:[%s6622 + $0x248] sm:$0xff]
  %v6925 = vld [vmem:[%s6622 + $0x258] sm:$0xff]
  %v6926 = vld [vmem:[%s6622 + $0x260] sm:$0xff]
  %v6927 = vld [vmem:[%s6622 + $0x270] sm:$0xff]
  %v6928 = vld [vmem:[%s6622 + $0x278] sm:$0xff]
  %v6929 = vld [vmem:[%s6622 + $0x288] sm:$0xff]
  %v6930 = vld [vmem:[%s6622 + $0x290] sm:$0xff]
  %v6931 = vld [vmem:[%s6622 + $0x2a0] sm:$0xff]
  %v6932 = vld [vmem:[%s6622 + $0x2a8] sm:$0xff]
  %v6933 = vld [vmem:[%s6622 + $0x2b8] sm:$0xff]
  %v6934 = vld [vmem:[%s6622 + $0x2c0] sm:$0xff]
  %v6935 = vld [vmem:[%s6622 + $0x2d0] sm:$0xff]
  %v6936 = vld [vmem:[%s6622 + $0x2d8] sm:$0xff]
  %v6937 = vld [vmem:[%s6622 + $0x2e8] sm:$0xff]
  %v6938 = vld [vmem:[%s6622 + $0x2f0] sm:$0xff]
  %v6939 = vld [vmem:[%s6622 + $0x300] sm:$0xff]
  %v6940 = vld [vmem:[%s6622 + $0x308] sm:$0xff]
  %v6941 = vld [vmem:[%s6622 + $0x318] sm:$0xff]
  %v6942 = vld [vmem:[%s6622 + $0x320] sm:$0xff]
  %v6943 = vld [vmem:[%s6622 + $0x1] sm:$0xff]
  %v6944 = vld [vmem:[%s6622 + $0x9] sm:$0xff]
  %v6945 = vld [vmem:[%s6622 + $0x19] sm:$0xff]
  %v6946 = vld [vmem:[%s6622 + $0x21] sm:$0xff]
  %v6947 = vld [vmem:[%s6622 + $0x31] sm:$0xff]
  %v6948 = vld [vmem:[%s6622 + $0x39] sm:$0xff]
  %v6949 = vld [vmem:[%s6622 + $0x49] sm:$0xff]
  %v6950 = vld [vmem:[%s6622 + $0x51] sm:$0xff]
  %v6951 = vld [vmem:[%s6622 + $0x61] sm:$0xff]
  %v6952 = vld [vmem:[%s6622 + $0x69] sm:$0xff]
  %v6953 = vld [vmem:[%s6622 + $0x79] sm:$0xff]
  %v6954 = vld [vmem:[%s6622 + $0x81] sm:$0xff]
  %v6955 = vld [vmem:[%s6622 + $0x91] sm:$0xff]
  %v6956 = vld [vmem:[%s6622 + $0x99] sm:$0xff]
  %v6957 = vld [vmem:[%s6622 + $0xa9] sm:$0xff]
  %v6958 = vld [vmem:[%s6622 + $0xb1] sm:$0xff]
  %v6959 = vld [vmem:[%s6622 + $0xc1] sm:$0xff]
  %v6960 = vld [vmem:[%s6622 + $0xc9] sm:$0xff]
  %v6961 = vld [vmem:[%s6622 + $0xd9] sm:$0xff]
  %v6962 = vld [vmem:[%s6622 + $0xe1] sm:$0xff]
  %v6963 = vld [vmem:[%s6622 + $0xf1] sm:$0xff]
  %v6964 = vld [vmem:[%s6622 + $0xf9] sm:$0xff]
  %v6965 = vld [vmem:[%s6622 + $0x109] sm:$0xff]
  %v6966 = vld [vmem:[%s6622 + $0x111] sm:$0xff]
  %v6967 = vld [vmem:[%s6622 + $0x121] sm:$0xff]
  %v6968 = vld [vmem:[%s6622 + $0x129] sm:$0xff]
  %v6969 = vld [vmem:[%s6622 + $0x139] sm:$0xff]
  %v6970 = vld [vmem:[%s6622 + $0x141] sm:$0xff]
  %v6971 = vld [vmem:[%s6622 + $0x151] sm:$0xff]
  %v6972 = vld [vmem:[%s6622 + $0x159] sm:$0xff]
  %v6973 = vld [vmem:[%s6622 + $0x169] sm:$0xff]
  %v6974 = vld [vmem:[%s6622 + $0x171] sm:$0xff]
  %v6975 = vld [vmem:[%s6622 + $0x1b1] sm:$0xff]
  %v6976 = vld [vmem:[%s6622 + $0x1b9] sm:$0xff]
  %v6977 = vld [vmem:[%s6622 + $0x1c9] sm:$0xff]
  %v6978 = vld [vmem:[%s6622 + $0x1d1] sm:$0xff]
  %v6979 = vld [vmem:[%s6622 + $0x1e1] sm:$0xff]
  %v6980 = vld [vmem:[%s6622 + $0x1e9] sm:$0xff]
  %v6981 = vld [vmem:[%s6622 + $0x1f9] sm:$0xff]
  %v6982 = vld [vmem:[%s6622 + $0x201] sm:$0xff]
  %v6983 = vld [vmem:[%s6622 + $0x211] sm:$0xff]
  %v6984 = vld [vmem:[%s6622 + $0x219] sm:$0xff]
  %v6985 = vld [vmem:[%s6622 + $0x229] sm:$0xff]
  %v6986 = vld [vmem:[%s6622 + $0x231] sm:$0xff]
  %v6987 = vld [vmem:[%s6622 + $0x241] sm:$0xff]
  %v6988 = vld [vmem:[%s6622 + $0x249] sm:$0xff]
  %v6989 = vld [vmem:[%s6622 + $0x259] sm:$0xff]
  %v6990 = vld [vmem:[%s6622 + $0x261] sm:$0xff]
  %v6991 = vld [vmem:[%s6622 + $0x271] sm:$0xff]
  %v6992 = vld [vmem:[%s6622 + $0x279] sm:$0xff]
  %v6993 = vld [vmem:[%s6622 + $0x289] sm:$0xff]
  %v6994 = vld [vmem:[%s6622 + $0x291] sm:$0xff]
  %v6995 = vld [vmem:[%s6622 + $0x2a1] sm:$0xff]
  %v6996 = vld [vmem:[%s6622 + $0x2a9] sm:$0xff]
  %v6997 = vld [vmem:[%s6622 + $0x2b9] sm:$0xff]
  %v6998 = vld [vmem:[%s6622 + $0x2c1] sm:$0xff]
  %v6999 = vld [vmem:[%s6622 + $0x2d1] sm:$0xff]
  %v7000 = vld [vmem:[%s6622 + $0x2d9] sm:$0xff]
  %v7001 = vld [vmem:[%s6622 + $0x2e9] sm:$0xff]
  %v7002 = vld [vmem:[%s6622 + $0x2f1] sm:$0xff]
  %v7003 = vld [vmem:[%s6622 + $0x301] sm:$0xff]
  %v7004 = vld [vmem:[%s6622 + $0x309] sm:$0xff]
  %v7005 = vld [vmem:[%s6622 + $0x319] sm:$0xff]
  %v7006 = vld [vmem:[%s6622 + $0x321] sm:$0xff]
  %v7007 = vld [vmem:[%s6622 + $0x2] sm:$0xff]
  %v7008 = vld [vmem:[%s6622 + $0xa] sm:$0xff]
  %v7009 = vld [vmem:[%s6622 + $0x1a] sm:$0xff]
  %v7010 = vld [vmem:[%s6622 + $0x22] sm:$0xff]
  %v7011 = vld [vmem:[%s6622 + $0x32] sm:$0xff]
  %v7012 = vld [vmem:[%s6622 + $0x3a] sm:$0xff]
  %v7013 = vld [vmem:[%s6622 + $0x4a] sm:$0xff]
  %v7014 = vld [vmem:[%s6622 + $0x52] sm:$0xff]
  %v7015 = vld [vmem:[%s6622 + $0x62] sm:$0xff]
  %v7016 = vld [vmem:[%s6622 + $0x6a] sm:$0xff]
  %v7017 = vld [vmem:[%s6622 + $0x7a] sm:$0xff]
  %v7018 = vld [vmem:[%s6622 + $0x82] sm:$0xff]
  %v7019 = vld [vmem:[%s6622 + $0x92] sm:$0xff]
  %v7020 = vld [vmem:[%s6622 + $0x9a] sm:$0xff]
  %v7021 = vld [vmem:[%s6622 + $0xaa] sm:$0xff]
  %v7022 = vld [vmem:[%s6622 + $0xb2] sm:$0xff]
  %v7023 = vld [vmem:[%s6622 + $0xc2] sm:$0xff]
  %v7024 = vld [vmem:[%s6622 + $0xca] sm:$0xff]
  %v7025 = vld [vmem:[%s6622 + $0xda] sm:$0xff]
  %v7026 = vld [vmem:[%s6622 + $0xe2] sm:$0xff]
  %v7027 = vld [vmem:[%s6622 + $0xf2] sm:$0xff]
  %v7028 = vld [vmem:[%s6622 + $0xfa] sm:$0xff]
  %v7029 = vld [vmem:[%s6622 + $0x10a] sm:$0xff]
  %v7030 = vld [vmem:[%s6622 + $0x112] sm:$0xff]
  %v7031 = vld [vmem:[%s6622 + $0x122] sm:$0xff]
  %v7032 = vld [vmem:[%s6622 + $0x12a] sm:$0xff]
  %v7033 = vld [vmem:[%s6622 + $0x13a] sm:$0xff]
  %v7034 = vld [vmem:[%s6622 + $0x142] sm:$0xff]
  %v7035 = vld [vmem:[%s6622 + $0x152] sm:$0xff]
  %v7036 = vld [vmem:[%s6622 + $0x15a] sm:$0xff]
  %v7037 = vld [vmem:[%s6622 + $0x16a] sm:$0xff]
  %v7038 = vld [vmem:[%s6622 + $0x172] sm:$0xff]
  %v7039 = vld [vmem:[%s6622 + $0x1b2] sm:$0xff]
  %v7040 = vld [vmem:[%s6622 + $0x1ba] sm:$0xff]
  %v7041 = vld [vmem:[%s6622 + $0x1ca] sm:$0xff]
  %v7042 = vld [vmem:[%s6622 + $0x1d2] sm:$0xff]
  %v7043 = vld [vmem:[%s6622 + $0x1e2] sm:$0xff]
  %v7044 = vld [vmem:[%s6622 + $0x1ea] sm:$0xff]
  %v7045 = vld [vmem:[%s6622 + $0x1fa] sm:$0xff]
  %v7046 = vld [vmem:[%s6622 + $0x202] sm:$0xff]
  %v7047 = vld [vmem:[%s6622 + $0x212] sm:$0xff]
  %v7048 = vld [vmem:[%s6622 + $0x21a] sm:$0xff]
  %v7049 = vld [vmem:[%s6622 + $0x22a] sm:$0xff]
  %v7050 = vld [vmem:[%s6622 + $0x232] sm:$0xff]
  %v7051 = vld [vmem:[%s6622 + $0x242] sm:$0xff]
  %v7052 = vld [vmem:[%s6622 + $0x24a] sm:$0xff]
  %v7053 = vld [vmem:[%s6622 + $0x25a] sm:$0xff]
  %v7054 = vld [vmem:[%s6622 + $0x262] sm:$0xff]
  %v7055 = vld [vmem:[%s6622 + $0x272] sm:$0xff]
  %v7056 = vld [vmem:[%s6622 + $0x27a] sm:$0xff]
  %v7057 = vld [vmem:[%s6622 + $0x28a] sm:$0xff]
  %v7058 = vld [vmem:[%s6622 + $0x292] sm:$0xff]
  %v7059 = vld [vmem:[%s6622 + $0x2a2] sm:$0xff]
  %v7060 = vld [vmem:[%s6622 + $0x2aa] sm:$0xff]
  %v7061 = vld [vmem:[%s6622 + $0x2ba] sm:$0xff]
  %v7062 = vld [vmem:[%s6622 + $0x2c2] sm:$0xff]
  %v7063 = vld [vmem:[%s6622 + $0x2d2] sm:$0xff]
  %v7064 = vld [vmem:[%s6622 + $0x2da] sm:$0xff]
  %v7065 = vld [vmem:[%s6622 + $0x2ea] sm:$0xff]
  %v7066 = vld [vmem:[%s6622 + $0x2f2] sm:$0xff]
  %v7067 = vld [vmem:[%s6622 + $0x302] sm:$0xff]
  %v7068 = vld [vmem:[%s6622 + $0x30a] sm:$0xff]
  %v7069 = vld [vmem:[%s6622 + $0x31a] sm:$0xff]
  %v7070 = vld [vmem:[%s6622 + $0x322] sm:$0xff]
  %s7071 = scalar_lea.vmem [#allocation2], 48
  %v7072 = vld [vmem:[%s7071] sm:$0xff]
  %v7073 = vld [vmem:[%s7071 + $0x8] sm:$0xff]
  %v7074 = vld [vmem:[%s7071 + $0x18] sm:$0xff]
  %v7075 = vld [vmem:[%s7071 + $0x20] sm:$0xff]
  %v7076 = vld [vmem:[%s7071 + $0x30] sm:$0xff]
  %v7077 = vld [vmem:[%s7071 + $0x38] sm:$0xff]
  %v7078 = vld [vmem:[%s7071 + $0x48] sm:$0xff]
  %v7079 = vld [vmem:[%s7071 + $0x50] sm:$0xff]
  %v7080 = vld [vmem:[%s7071 + $0x60] sm:$0xff]
  %v7081 = vld [vmem:[%s7071 + $0x68] sm:$0xff]
  %v7082 = vld [vmem:[%s7071 + $0x78] sm:$0xff]
  %v7083 = vld [vmem:[%s7071 + $0x80] sm:$0xff]
  %v7084 = vld [vmem:[%s7071 + $0x90] sm:$0xff]
  %v7085 = vld [vmem:[%s7071 + $0x98] sm:$0xff]
  %v7086 = vld [vmem:[%s7071 + $0xa8] sm:$0xff]
  %v7087 = vld [vmem:[%s7071 + $0xb0] sm:$0xff]
  %v7088 = vld [vmem:[%s7071 + $0xc0] sm:$0xff]
  %v7089 = vld [vmem:[%s7071 + $0xc8] sm:$0xff]
  %v7090 = vld [vmem:[%s7071 + $0xd8] sm:$0xff]
  %v7091 = vld [vmem:[%s7071 + $0xe0] sm:$0xff]
  %v7092 = vld [vmem:[%s7071 + $0xf0] sm:$0xff]
  %v7093 = vld [vmem:[%s7071 + $0xf8] sm:$0xff]
  %v7094 = vld [vmem:[%s7071 + $0x108] sm:$0xff]
  %v7095 = vld [vmem:[%s7071 + $0x110] sm:$0xff]
  %v7096 = vld [vmem:[%s7071 + $0x120] sm:$0xff]
  %v7097 = vld [vmem:[%s7071 + $0x128] sm:$0xff]
  %v7098 = vld [vmem:[%s7071 + $0x138] sm:$0xff]
  %v7099 = vld [vmem:[%s7071 + $0x140] sm:$0xff]
  %v7100 = vld [vmem:[%s7071 + $0x150] sm:$0xff]
  %v7101 = vld [vmem:[%s7071 + $0x158] sm:$0xff]
  %v7102 = vld [vmem:[%s7071 + $0x168] sm:$0xff]
  %v7103 = vld [vmem:[%s7071 + $0x170] sm:$0xff]
  %v7104 = vld [vmem:[%s7071 + $0x1b0] sm:$0xff]
  %v7105 = vld [vmem:[%s7071 + $0x1b8] sm:$0xff]
  %v7106 = vld [vmem:[%s7071 + $0x1c8] sm:$0xff]
  %v7107 = vld [vmem:[%s7071 + $0x1d0] sm:$0xff]
  %v7108 = vld [vmem:[%s7071 + $0x1e0] sm:$0xff]
  %v7109 = vld [vmem:[%s7071 + $0x1e8] sm:$0xff]
  %v7110 = vld [vmem:[%s7071 + $0x1f8] sm:$0xff]
  %v7111 = vld [vmem:[%s7071 + $0x200] sm:$0xff]
  %v7112 = vld [vmem:[%s7071 + $0x210] sm:$0xff]
  %v7113 = vld [vmem:[%s7071 + $0x218] sm:$0xff]
  %v7114 = vld [vmem:[%s7071 + $0x228] sm:$0xff]
  %v7115 = vld [vmem:[%s7071 + $0x230] sm:$0xff]
  %v7116 = vld [vmem:[%s7071 + $0x240] sm:$0xff]
  %v7117 = vld [vmem:[%s7071 + $0x248] sm:$0xff]
  %v7118 = vld [vmem:[%s7071 + $0x258] sm:$0xff]
  %v7119 = vld [vmem:[%s7071 + $0x260] sm:$0xff]
  %v7120 = vld [vmem:[%s7071 + $0x270] sm:$0xff]
  %v7121 = vld [vmem:[%s7071 + $0x278] sm:$0xff]
  %v7122 = vld [vmem:[%s7071 + $0x288] sm:$0xff]
  %v7123 = vld [vmem:[%s7071 + $0x290] sm:$0xff]
  %v7124 = vld [vmem:[%s7071 + $0x2a0] sm:$0xff]
  %v7125 = vld [vmem:[%s7071 + $0x2a8] sm:$0xff]
  %v7126 = vld [vmem:[%s7071 + $0x2b8] sm:$0xff]
  %v7127 = vld [vmem:[%s7071 + $0x2c0] sm:$0xff]
  %v7128 = vld [vmem:[%s7071 + $0x2d0] sm:$0xff]
  %v7129 = vld [vmem:[%s7071 + $0x2d8] sm:$0xff]
  %v7130 = vld [vmem:[%s7071 + $0x2e8] sm:$0xff]
  %v7131 = vld [vmem:[%s7071 + $0x2f0] sm:$0xff]
  %v7132 = vld [vmem:[%s7071 + $0x300] sm:$0xff]
  %v7133 = vld [vmem:[%s7071 + $0x308] sm:$0xff]
  %v7134 = vld [vmem:[%s7071 + $0x318] sm:$0xff]
  %v7135 = vld [vmem:[%s7071 + $0x320] sm:$0xff]
  %v7136 = vld [vmem:[%s7071 + $0x1] sm:$0xff]
  %v7137 = vld [vmem:[%s7071 + $0x9] sm:$0xff]
  %v7138 = vld [vmem:[%s7071 + $0x19] sm:$0xff]
  %v7139 = vld [vmem:[%s7071 + $0x21] sm:$0xff]
  %v7140 = vld [vmem:[%s7071 + $0x31] sm:$0xff]
  %v7141 = vld [vmem:[%s7071 + $0x39] sm:$0xff]
  %v7142 = vld [vmem:[%s7071 + $0x49] sm:$0xff]
  %v7143 = vld [vmem:[%s7071 + $0x51] sm:$0xff]
  %v7144 = vld [vmem:[%s7071 + $0x61] sm:$0xff]
  %v7145 = vld [vmem:[%s7071 + $0x69] sm:$0xff]
  %v7146 = vld [vmem:[%s7071 + $0x79] sm:$0xff]
  %v7147 = vld [vmem:[%s7071 + $0x81] sm:$0xff]
  %v7148 = vld [vmem:[%s7071 + $0x91] sm:$0xff]
  %v7149 = vld [vmem:[%s7071 + $0x99] sm:$0xff]
  %v7150 = vld [vmem:[%s7071 + $0xa9] sm:$0xff]
  %v7151 = vld [vmem:[%s7071 + $0xb1] sm:$0xff]
  %v7152 = vld [vmem:[%s7071 + $0xc1] sm:$0xff]
  %v7153 = vld [vmem:[%s7071 + $0xc9] sm:$0xff]
  %v7154 = vld [vmem:[%s7071 + $0xd9] sm:$0xff]
  %v7155 = vld [vmem:[%s7071 + $0xe1] sm:$0xff]
  %v7156 = vld [vmem:[%s7071 + $0xf1] sm:$0xff]
  %v7157 = vld [vmem:[%s7071 + $0xf9] sm:$0xff]
  %v7158 = vld [vmem:[%s7071 + $0x109] sm:$0xff]
  %v7159 = vld [vmem:[%s7071 + $0x111] sm:$0xff]
  %v7160 = vld [vmem:[%s7071 + $0x121] sm:$0xff]
  %v7161 = vld [vmem:[%s7071 + $0x129] sm:$0xff]
  %v7162 = vld [vmem:[%s7071 + $0x139] sm:$0xff]
  %v7163 = vld [vmem:[%s7071 + $0x141] sm:$0xff]
  %v7164 = vld [vmem:[%s7071 + $0x151] sm:$0xff]
  %v7165 = vld [vmem:[%s7071 + $0x159] sm:$0xff]
  %v7166 = vld [vmem:[%s7071 + $0x169] sm:$0xff]
  %v7167 = vld [vmem:[%s7071 + $0x171] sm:$0xff]
  %v7168 = vld [vmem:[%s7071 + $0x1b1] sm:$0xff]
  %v7169 = vld [vmem:[%s7071 + $0x1b9] sm:$0xff]
  %v7170 = vld [vmem:[%s7071 + $0x1c9] sm:$0xff]
  %v7171 = vld [vmem:[%s7071 + $0x1d1] sm:$0xff]
  %v7172 = vld [vmem:[%s7071 + $0x1e1] sm:$0xff]
  %v7173 = vld [vmem:[%s7071 + $0x1e9] sm:$0xff]
  %v7174 = vld [vmem:[%s7071 + $0x1f9] sm:$0xff]
  %v7175 = vld [vmem:[%s7071 + $0x201] sm:$0xff]
  %v7176 = vld [vmem:[%s7071 + $0x211] sm:$0xff]
  %v7177 = vld [vmem:[%s7071 + $0x219] sm:$0xff]
  %v7178 = vld [vmem:[%s7071 + $0x229] sm:$0xff]
  %v7179 = vld [vmem:[%s7071 + $0x231] sm:$0xff]
  %v7180 = vld [vmem:[%s7071 + $0x241] sm:$0xff]
  %v7181 = vld [vmem:[%s7071 + $0x249] sm:$0xff]
  %v7182 = vld [vmem:[%s7071 + $0x259] sm:$0xff]
  %v7183 = vld [vmem:[%s7071 + $0x261] sm:$0xff]
  %v7184 = vld [vmem:[%s7071 + $0x271] sm:$0xff]
  %v7185 = vld [vmem:[%s7071 + $0x279] sm:$0xff]
  %v7186 = vld [vmem:[%s7071 + $0x289] sm:$0xff]
  %v7187 = vld [vmem:[%s7071 + $0x291] sm:$0xff]
  %v7188 = vld [vmem:[%s7071 + $0x2a1] sm:$0xff]
  %v7189 = vld [vmem:[%s7071 + $0x2a9] sm:$0xff]
  %v7190 = vld [vmem:[%s7071 + $0x2b9] sm:$0xff]
  %v7191 = vld [vmem:[%s7071 + $0x2c1] sm:$0xff]
  %v7192 = vld [vmem:[%s7071 + $0x2d1] sm:$0xff]
  %v7193 = vld [vmem:[%s7071 + $0x2d9] sm:$0xff]
  %v7194 = vld [vmem:[%s7071 + $0x2e9] sm:$0xff]
  %v7195 = vld [vmem:[%s7071 + $0x2f1] sm:$0xff]
  %v7196 = vld [vmem:[%s7071 + $0x301] sm:$0xff]
  %v7197 = vld [vmem:[%s7071 + $0x309] sm:$0xff]
  %v7198 = vld [vmem:[%s7071 + $0x319] sm:$0xff]
  %v7199 = vld [vmem:[%s7071 + $0x321] sm:$0xff]
  %v7200 = vld [vmem:[%s7071 + $0x2] sm:$0xff]
  %v7201 = vld [vmem:[%s7071 + $0xa] sm:$0xff]
  %v7202 = vld [vmem:[%s7071 + $0x1a] sm:$0xff]
  %v7203 = vld [vmem:[%s7071 + $0x22] sm:$0xff]
  %v7204 = vld [vmem:[%s7071 + $0x32] sm:$0xff]
  %v7205 = vld [vmem:[%s7071 + $0x3a] sm:$0xff]
  %v7206 = vld [vmem:[%s7071 + $0x4a] sm:$0xff]
  %v7207 = vld [vmem:[%s7071 + $0x52] sm:$0xff]
  %v7208 = vld [vmem:[%s7071 + $0x62] sm:$0xff]
  %v7209 = vld [vmem:[%s7071 + $0x6a] sm:$0xff]
  %v7210 = vld [vmem:[%s7071 + $0x7a] sm:$0xff]
  %v7211 = vld [vmem:[%s7071 + $0x82] sm:$0xff]
  %v7212 = vld [vmem:[%s7071 + $0x92] sm:$0xff]
  %v7213 = vld [vmem:[%s7071 + $0x9a] sm:$0xff]
  %v7214 = vld [vmem:[%s7071 + $0xaa] sm:$0xff]
  %v7215 = vld [vmem:[%s7071 + $0xb2] sm:$0xff]
  %v7216 = vld [vmem:[%s7071 + $0xc2] sm:$0xff]
  %v7217 = vld [vmem:[%s7071 + $0xca] sm:$0xff]
  %v7218 = vld [vmem:[%s7071 + $0xda] sm:$0xff]
  %v7219 = vld [vmem:[%s7071 + $0xe2] sm:$0xff]
  %v7220 = vld [vmem:[%s7071 + $0xf2] sm:$0xff]
  %v7221 = vld [vmem:[%s7071 + $0xfa] sm:$0xff]
  %v7222 = vld [vmem:[%s7071 + $0x10a] sm:$0xff]
  %v7223 = vld [vmem:[%s7071 + $0x112] sm:$0xff]
  %v7224 = vld [vmem:[%s7071 + $0x122] sm:$0xff]
  %v7225 = vld [vmem:[%s7071 + $0x12a] sm:$0xff]
  %v7226 = vld [vmem:[%s7071 + $0x13a] sm:$0xff]
  %v7227 = vld [vmem:[%s7071 + $0x142] sm:$0xff]
  %v7228 = vld [vmem:[%s7071 + $0x152] sm:$0xff]
  %v7229 = vld [vmem:[%s7071 + $0x15a] sm:$0xff]
  %v7230 = vld [vmem:[%s7071 + $0x16a] sm:$0xff]
  %v7231 = vld [vmem:[%s7071 + $0x172] sm:$0xff]
  %v7232 = vld [vmem:[%s7071 + $0x1b2] sm:$0xff]
  %v7233 = vld [vmem:[%s7071 + $0x1ba] sm:$0xff]
  %v7234 = vld [vmem:[%s7071 + $0x1ca] sm:$0xff]
  %v7235 = vld [vmem:[%s7071 + $0x1d2] sm:$0xff]
  %v7236 = vld [vmem:[%s7071 + $0x1e2] sm:$0xff]
  %v7237 = vld [vmem:[%s7071 + $0x1ea] sm:$0xff]
  %v7238 = vld [vmem:[%s7071 + $0x1fa] sm:$0xff]
  %v7239 = vld [vmem:[%s7071 + $0x202] sm:$0xff]
  %v7240 = vld [vmem:[%s7071 + $0x212] sm:$0xff]
  %v7241 = vld [vmem:[%s7071 + $0x21a] sm:$0xff]
  %v7242 = vld [vmem:[%s7071 + $0x22a] sm:$0xff]
  %v7243 = vld [vmem:[%s7071 + $0x232] sm:$0xff]
  %v7244 = vld [vmem:[%s7071 + $0x242] sm:$0xff]
  %v7245 = vld [vmem:[%s7071 + $0x24a] sm:$0xff]
  %v7246 = vld [vmem:[%s7071 + $0x25a] sm:$0xff]
  %v7247 = vld [vmem:[%s7071 + $0x262] sm:$0xff]
  %v7248 = vld [vmem:[%s7071 + $0x272] sm:$0xff]
  %v7249 = vld [vmem:[%s7071 + $0x27a] sm:$0xff]
  %v7250 = vld [vmem:[%s7071 + $0x28a] sm:$0xff]
  %v7251 = vld [vmem:[%s7071 + $0x292] sm:$0xff]
  %v7252 = vld [vmem:[%s7071 + $0x2a2] sm:$0xff]
  %v7253 = vld [vmem:[%s7071 + $0x2aa] sm:$0xff]
  %v7254 = vld [vmem:[%s7071 + $0x2ba] sm:$0xff]
  %v7255 = vld [vmem:[%s7071 + $0x2c2] sm:$0xff]
  %v7256 = vld [vmem:[%s7071 + $0x2d2] sm:$0xff]
  %v7257 = vld [vmem:[%s7071 + $0x2da] sm:$0xff]
  %v7258 = vld [vmem:[%s7071 + $0x2ea] sm:$0xff]
  %v7259 = vld [vmem:[%s7071 + $0x2f2] sm:$0xff]
  %v7260 = vld [vmem:[%s7071 + $0x302] sm:$0xff]
  %v7261 = vld [vmem:[%s7071 + $0x30a] sm:$0xff]
  %v7262 = vld [vmem:[%s7071 + $0x31a] sm:$0xff]
  %v7263 = vld [vmem:[%s7071 + $0x322] sm:$0xff]
  %7328 = vrot.lane.b32.xlu0 %v6751, 4
  %v7329 = vpop.permute.xlu0 %7328
  %7330 = vrot.lane.b32.xlu0 %v6752, 4
  %v7331 = vpop.permute.xlu0 %7330
  %7332 = vrot.lane.b32.xlu0 %v6753, 4
  %v7333 = vpop.permute.xlu0 %7332
  %7334 = vrot.lane.b32.xlu0 %v6754, 4
  %v7335 = vpop.permute.xlu0 %7334
  %7336 = vrot.lane.b32.xlu0 %v6755, 4
  %v7337 = vpop.permute.xlu0 %7336
  %7338 = vrot.lane.b32.xlu0 %v6756, 4
  %v7339 = vpop.permute.xlu0 %7338
  %7340 = vrot.lane.b32.xlu0 %v6757, 4
  %v7341 = vpop.permute.xlu0 %7340
  %7342 = vrot.lane.b32.xlu0 %v6758, 4
  %v7343 = vpop.permute.xlu0 %7342
  %7344 = vrot.lane.b32.xlu0 %v6759, 4
  %v7345 = vpop.permute.xlu0 %7344
  %7346 = vrot.lane.b32.xlu0 %v6760, 4
  %v7347 = vpop.permute.xlu0 %7346
  %7348 = vrot.lane.b32.xlu0 %v6761, 4
  %v7349 = vpop.permute.xlu0 %7348
  %7350 = vrot.lane.b32.xlu0 %v6762, 4
  %v7351 = vpop.permute.xlu0 %7350
  %7352 = vrot.lane.b32.xlu0 %v6763, 4
  %v7353 = vpop.permute.xlu0 %7352
  %7354 = vrot.lane.b32.xlu0 %v6764, 4
  %v7355 = vpop.permute.xlu0 %7354
  %7356 = vrot.lane.b32.xlu0 %v6765, 4
  %v7357 = vpop.permute.xlu0 %7356
  %7358 = vrot.lane.b32.xlu0 %v6766, 4
  %v7359 = vpop.permute.xlu0 %7358
  %7360 = vrot.lane.b32.xlu0 %v6767, 4
  %v7361 = vpop.permute.xlu0 %7360
  %7362 = vrot.lane.b32.xlu0 %v6768, 4
  %v7363 = vpop.permute.xlu0 %7362
  %7364 = vrot.lane.b32.xlu0 %v6769, 4
  %v7365 = vpop.permute.xlu0 %7364
  %7366 = vrot.lane.b32.xlu0 %v6770, 4
  %v7367 = vpop.permute.xlu0 %7366
  %7368 = vrot.lane.b32.xlu0 %v6771, 4
  %v7369 = vpop.permute.xlu0 %7368
  %7370 = vrot.lane.b32.xlu0 %v6772, 4
  %v7371 = vpop.permute.xlu0 %7370
  %7372 = vrot.lane.b32.xlu0 %v6773, 4
  %v7373 = vpop.permute.xlu0 %7372
  %7374 = vrot.lane.b32.xlu0 %v6774, 4
  %v7375 = vpop.permute.xlu0 %7374
  %7376 = vrot.lane.b32.xlu0 %v6775, 4
  %v7377 = vpop.permute.xlu0 %7376
  %7378 = vrot.lane.b32.xlu0 %v6776, 4
  %v7379 = vpop.permute.xlu0 %7378
  %7380 = vrot.lane.b32.xlu0 %v6777, 4
  %v7381 = vpop.permute.xlu0 %7380
  %7382 = vrot.lane.b32.xlu0 %v6778, 4
  %v7383 = vpop.permute.xlu0 %7382
  %7384 = vrot.lane.b32.xlu0 %v6779, 4
  %v7385 = vpop.permute.xlu0 %7384
  %7386 = vrot.lane.b32.xlu0 %v6780, 4
  %v7387 = vpop.permute.xlu0 %7386
  %7388 = vrot.lane.b32.xlu0 %v6781, 4
  %v7389 = vpop.permute.xlu0 %7388
  %7390 = vrot.lane.b32.xlu0 %v6782, 4
  %v7391 = vpop.permute.xlu0 %7390
  %7392 = vrot.lane.b32.xlu0 %v6783, 4
  %v7393 = vpop.permute.xlu0 %7392
  %7394 = vrot.lane.b32.xlu0 %v6784, 4
  %v7395 = vpop.permute.xlu0 %7394
  %7396 = vrot.lane.b32.xlu0 %v6785, 4
  %v7397 = vpop.permute.xlu0 %7396
  %7398 = vrot.lane.b32.xlu0 %v6786, 4
  %v7399 = vpop.permute.xlu0 %7398
  %7400 = vrot.lane.b32.xlu0 %v6787, 4
  %v7401 = vpop.permute.xlu0 %7400
  %7402 = vrot.lane.b32.xlu0 %v6788, 4
  %v7403 = vpop.permute.xlu0 %7402
  %7404 = vrot.lane.b32.xlu0 %v6789, 4
  %v7405 = vpop.permute.xlu0 %7404
  %7406 = vrot.lane.b32.xlu0 %v6790, 4
  %v7407 = vpop.permute.xlu0 %7406
  %7408 = vrot.lane.b32.xlu0 %v6791, 4
  %v7409 = vpop.permute.xlu0 %7408
  %7410 = vrot.lane.b32.xlu0 %v6792, 4
  %v7411 = vpop.permute.xlu0 %7410
  %7412 = vrot.lane.b32.xlu0 %v6793, 4
  %v7413 = vpop.permute.xlu0 %7412
  %7414 = vrot.lane.b32.xlu0 %v6794, 4
  %v7415 = vpop.permute.xlu0 %7414
  %7416 = vrot.lane.b32.xlu0 %v6795, 4
  %v7417 = vpop.permute.xlu0 %7416
  %7418 = vrot.lane.b32.xlu0 %v6796, 4
  %v7419 = vpop.permute.xlu0 %7418
  %7420 = vrot.lane.b32.xlu0 %v6797, 4
  %v7421 = vpop.permute.xlu0 %7420
  %7422 = vrot.lane.b32.xlu0 %v6798, 4
  %v7423 = vpop.permute.xlu0 %7422
  %7424 = vrot.lane.b32.xlu0 %v6799, 4
  %v7425 = vpop.permute.xlu0 %7424
  %7426 = vrot.lane.b32.xlu0 %v6800, 4
  %v7427 = vpop.permute.xlu0 %7426
  %7428 = vrot.lane.b32.xlu0 %v6801, 4
  %v7429 = vpop.permute.xlu0 %7428
  %7430 = vrot.lane.b32.xlu0 %v6802, 4
  %v7431 = vpop.permute.xlu0 %7430
  %7432 = vrot.lane.b32.xlu0 %v6803, 4
  %v7433 = vpop.permute.xlu0 %7432
  %7434 = vrot.lane.b32.xlu0 %v6804, 4
  %v7435 = vpop.permute.xlu0 %7434
  %7436 = vrot.lane.b32.xlu0 %v6805, 4
  %v7437 = vpop.permute.xlu0 %7436
  %7438 = vrot.lane.b32.xlu0 %v6806, 4
  %v7439 = vpop.permute.xlu0 %7438
  %7440 = vrot.lane.b32.xlu0 %v6807, 4
  %v7441 = vpop.permute.xlu0 %7440
  %7442 = vrot.lane.b32.xlu0 %v6808, 4
  %v7443 = vpop.permute.xlu0 %7442
  %7444 = vrot.lane.b32.xlu0 %v6809, 4
  %v7445 = vpop.permute.xlu0 %7444
  %7446 = vrot.lane.b32.xlu0 %v6810, 4
  %v7447 = vpop.permute.xlu0 %7446
  %7448 = vrot.lane.b32.xlu0 %v6811, 4
  %v7449 = vpop.permute.xlu0 %7448
  %7450 = vrot.lane.b32.xlu0 %v6812, 4
  %v7451 = vpop.permute.xlu0 %7450
  %7452 = vrot.lane.b32.xlu0 %v6813, 4
  %v7453 = vpop.permute.xlu0 %7452
  %7454 = vrot.lane.b32.xlu0 %v6814, 4
  %v7455 = vpop.permute.xlu0 %7454
  %7584 = vrot.lane.b32.xlu0 %v6815, 8
  %v7585 = vpop.permute.xlu0 %7584
  %7586 = vrot.lane.b32.xlu0 %v6816, 8
  %v7587 = vpop.permute.xlu0 %7586
  %7588 = vrot.lane.b32.xlu0 %v6817, 8
  %v7589 = vpop.permute.xlu0 %7588
  %7590 = vrot.lane.b32.xlu0 %v6818, 8
  %v7591 = vpop.permute.xlu0 %7590
  %7592 = vrot.lane.b32.xlu0 %v6819, 8
  %v7593 = vpop.permute.xlu0 %7592
  %7594 = vrot.lane.b32.xlu0 %v6820, 8
  %v7595 = vpop.permute.xlu0 %7594
  %7596 = vrot.lane.b32.xlu0 %v6821, 8
  %v7597 = vpop.permute.xlu0 %7596
  %7598 = vrot.lane.b32.xlu0 %v6822, 8
  %v7599 = vpop.permute.xlu0 %7598
  %7600 = vrot.lane.b32.xlu0 %v6823, 8
  %v7601 = vpop.permute.xlu0 %7600
  %7602 = vrot.lane.b32.xlu0 %v6824, 8
  %v7603 = vpop.permute.xlu0 %7602
  %7604 = vrot.lane.b32.xlu0 %v6825, 8
  %v7605 = vpop.permute.xlu0 %7604
  %7606 = vrot.lane.b32.xlu0 %v6826, 8
  %v7607 = vpop.permute.xlu0 %7606
  %7608 = vrot.lane.b32.xlu0 %v6827, 8
  %v7609 = vpop.permute.xlu0 %7608
  %7610 = vrot.lane.b32.xlu0 %v6828, 8
  %v7611 = vpop.permute.xlu0 %7610
  %7612 = vrot.lane.b32.xlu0 %v6829, 8
  %v7613 = vpop.permute.xlu0 %7612
  %7614 = vrot.lane.b32.xlu0 %v6830, 8
  %v7615 = vpop.permute.xlu0 %7614
  %7616 = vrot.lane.b32.xlu0 %v6831, 8
  %v7617 = vpop.permute.xlu0 %7616
  %7618 = vrot.lane.b32.xlu0 %v6832, 8
  %v7619 = vpop.permute.xlu0 %7618
  %7620 = vrot.lane.b32.xlu0 %v6833, 8
  %v7621 = vpop.permute.xlu0 %7620
  %7622 = vrot.lane.b32.xlu0 %v6834, 8
  %v7623 = vpop.permute.xlu0 %7622
  %7624 = vrot.lane.b32.xlu0 %v6835, 8
  %v7625 = vpop.permute.xlu0 %7624
  %7626 = vrot.lane.b32.xlu0 %v6836, 8
  %v7627 = vpop.permute.xlu0 %7626
  %7628 = vrot.lane.b32.xlu0 %v6837, 8
  %v7629 = vpop.permute.xlu0 %7628
  %7630 = vrot.lane.b32.xlu0 %v6838, 8
  %v7631 = vpop.permute.xlu0 %7630
  %7632 = vrot.lane.b32.xlu0 %v6839, 8
  %v7633 = vpop.permute.xlu0 %7632
  %7634 = vrot.lane.b32.xlu0 %v6840, 8
  %v7635 = vpop.permute.xlu0 %7634
  %7636 = vrot.lane.b32.xlu0 %v6841, 8
  %v7637 = vpop.permute.xlu0 %7636
  %7638 = vrot.lane.b32.xlu0 %v6842, 8
  %v7639 = vpop.permute.xlu0 %7638
  %7640 = vrot.lane.b32.xlu0 %v6843, 8
  %v7641 = vpop.permute.xlu0 %7640
  %7642 = vrot.lane.b32.xlu0 %v6844, 8
  %v7643 = vpop.permute.xlu0 %7642
  %7644 = vrot.lane.b32.xlu0 %v6845, 8
  %v7645 = vpop.permute.xlu0 %7644
  %7646 = vrot.lane.b32.xlu0 %v6846, 8
  %v7647 = vpop.permute.xlu0 %7646
  %7648 = vrot.lane.b32.xlu0 %v6847, 8
  %v7649 = vpop.permute.xlu0 %7648
  %7650 = vrot.lane.b32.xlu0 %v6848, 8
  %v7651 = vpop.permute.xlu0 %7650
  %7652 = vrot.lane.b32.xlu0 %v6849, 8
  %v7653 = vpop.permute.xlu0 %7652
  %7654 = vrot.lane.b32.xlu0 %v6850, 8
  %v7655 = vpop.permute.xlu0 %7654
  %7656 = vrot.lane.b32.xlu0 %v6851, 8
  %v7657 = vpop.permute.xlu0 %7656
  %7658 = vrot.lane.b32.xlu0 %v6852, 8
  %v7659 = vpop.permute.xlu0 %7658
  %7660 = vrot.lane.b32.xlu0 %v6853, 8
  %v7661 = vpop.permute.xlu0 %7660
  %7662 = vrot.lane.b32.xlu0 %v6854, 8
  %v7663 = vpop.permute.xlu0 %7662
  %7664 = vrot.lane.b32.xlu0 %v6855, 8
  %v7665 = vpop.permute.xlu0 %7664
  %7666 = vrot.lane.b32.xlu0 %v6856, 8
  %v7667 = vpop.permute.xlu0 %7666
  %7668 = vrot.lane.b32.xlu0 %v6857, 8
  %v7669 = vpop.permute.xlu0 %7668
  %7670 = vrot.lane.b32.xlu0 %v6858, 8
  %v7671 = vpop.permute.xlu0 %7670
  %7672 = vrot.lane.b32.xlu0 %v6859, 8
  %v7673 = vpop.permute.xlu0 %7672
  %7674 = vrot.lane.b32.xlu0 %v6860, 8
  %v7675 = vpop.permute.xlu0 %7674
  %7676 = vrot.lane.b32.xlu0 %v6861, 8
  %v7677 = vpop.permute.xlu0 %7676
  %7678 = vrot.lane.b32.xlu0 %v6862, 8
  %v7679 = vpop.permute.xlu0 %7678
  %7680 = vrot.lane.b32.xlu0 %v6863, 8
  %v7681 = vpop.permute.xlu0 %7680
  %7682 = vrot.lane.b32.xlu0 %v6864, 8
  %v7683 = vpop.permute.xlu0 %7682
  %7684 = vrot.lane.b32.xlu0 %v6865, 8
  %v7685 = vpop.permute.xlu0 %7684
  %7686 = vrot.lane.b32.xlu0 %v6866, 8
  %v7687 = vpop.permute.xlu0 %7686
  %7688 = vrot.lane.b32.xlu0 %v6867, 8
  %v7689 = vpop.permute.xlu0 %7688
  %7690 = vrot.lane.b32.xlu0 %v6868, 8
  %v7691 = vpop.permute.xlu0 %7690
  %7692 = vrot.lane.b32.xlu0 %v6869, 8
  %v7693 = vpop.permute.xlu0 %7692
  %7694 = vrot.lane.b32.xlu0 %v6870, 8
  %v7695 = vpop.permute.xlu0 %7694
  %7696 = vrot.lane.b32.xlu0 %v6871, 8
  %v7697 = vpop.permute.xlu0 %7696
  %7698 = vrot.lane.b32.xlu0 %v6872, 8
  %v7699 = vpop.permute.xlu0 %7698
  %7700 = vrot.lane.b32.xlu0 %v6873, 8
  %v7701 = vpop.permute.xlu0 %7700
  %7702 = vrot.lane.b32.xlu0 %v6874, 8
  %v7703 = vpop.permute.xlu0 %7702
  %7704 = vrot.lane.b32.xlu0 %v6875, 8
  %v7705 = vpop.permute.xlu0 %7704
  %7706 = vrot.lane.b32.xlu0 %v6876, 8
  %v7707 = vpop.permute.xlu0 %7706
  %7708 = vrot.lane.b32.xlu0 %v6877, 8
  %v7709 = vpop.permute.xlu0 %7708
  %7710 = vrot.lane.b32.xlu0 %v6878, 8
  %v7711 = vpop.permute.xlu0 %7710
  %7840 = vrot.lane.b32.xlu0 %v6879, 12
  %v7841 = vpop.permute.xlu0 %7840
  %7842 = vrot.lane.b32.xlu0 %v6880, 12
  %v7843 = vpop.permute.xlu0 %7842
  %7844 = vrot.lane.b32.xlu0 %v6881, 12
  %v7845 = vpop.permute.xlu0 %7844
  %7846 = vrot.lane.b32.xlu0 %v6882, 12
  %v7847 = vpop.permute.xlu0 %7846
  %7848 = vrot.lane.b32.xlu0 %v6883, 12
  %v7849 = vpop.permute.xlu0 %7848
  %7850 = vrot.lane.b32.xlu0 %v6884, 12
  %v7851 = vpop.permute.xlu0 %7850
  %7852 = vrot.lane.b32.xlu0 %v6885, 12
  %v7853 = vpop.permute.xlu0 %7852
  %7854 = vrot.lane.b32.xlu0 %v6886, 12
  %v7855 = vpop.permute.xlu0 %7854
  %7856 = vrot.lane.b32.xlu0 %v6887, 12
  %v7857 = vpop.permute.xlu0 %7856
  %7858 = vrot.lane.b32.xlu0 %v6888, 12
  %v7859 = vpop.permute.xlu0 %7858
  %7860 = vrot.lane.b32.xlu0 %v6889, 12
  %v7861 = vpop.permute.xlu0 %7860
  %7862 = vrot.lane.b32.xlu0 %v6890, 12
  %v7863 = vpop.permute.xlu0 %7862
  %7864 = vrot.lane.b32.xlu0 %v6891, 12
  %v7865 = vpop.permute.xlu0 %7864
  %7866 = vrot.lane.b32.xlu0 %v6892, 12
  %v7867 = vpop.permute.xlu0 %7866
  %7868 = vrot.lane.b32.xlu0 %v6893, 12
  %v7869 = vpop.permute.xlu0 %7868
  %7870 = vrot.lane.b32.xlu0 %v6894, 12
  %v7871 = vpop.permute.xlu0 %7870
  %7872 = vrot.lane.b32.xlu0 %v6895, 12
  %v7873 = vpop.permute.xlu0 %7872
  %7874 = vrot.lane.b32.xlu0 %v6896, 12
  %v7875 = vpop.permute.xlu0 %7874
  %7876 = vrot.lane.b32.xlu0 %v6897, 12
  %v7877 = vpop.permute.xlu0 %7876
  %7878 = vrot.lane.b32.xlu0 %v6898, 12
  %v7879 = vpop.permute.xlu0 %7878
  %7880 = vrot.lane.b32.xlu0 %v6899, 12
  %v7881 = vpop.permute.xlu0 %7880
  %7882 = vrot.lane.b32.xlu0 %v6900, 12
  %v7883 = vpop.permute.xlu0 %7882
  %7884 = vrot.lane.b32.xlu0 %v6901, 12
  %v7885 = vpop.permute.xlu0 %7884
  %7886 = vrot.lane.b32.xlu0 %v6902, 12
  %v7887 = vpop.permute.xlu0 %7886
  %7888 = vrot.lane.b32.xlu0 %v6903, 12
  %v7889 = vpop.permute.xlu0 %7888
  %7890 = vrot.lane.b32.xlu0 %v6904, 12
  %v7891 = vpop.permute.xlu0 %7890
  %7892 = vrot.lane.b32.xlu0 %v6905, 12
  %v7893 = vpop.permute.xlu0 %7892
  %7894 = vrot.lane.b32.xlu0 %v6906, 12
  %v7895 = vpop.permute.xlu0 %7894
  %7896 = vrot.lane.b32.xlu0 %v6907, 12
  %v7897 = vpop.permute.xlu0 %7896
  %7898 = vrot.lane.b32.xlu0 %v6908, 12
  %v7899 = vpop.permute.xlu0 %7898
  %7900 = vrot.lane.b32.xlu0 %v6909, 12
  %v7901 = vpop.permute.xlu0 %7900
  %7902 = vrot.lane.b32.xlu0 %v6910, 12
  %v7903 = vpop.permute.xlu0 %7902
  %7904 = vrot.lane.b32.xlu0 %v6911, 12
  %v7905 = vpop.permute.xlu0 %7904
  %7906 = vrot.lane.b32.xlu0 %v6912, 12
  %v7907 = vpop.permute.xlu0 %7906
  %7908 = vrot.lane.b32.xlu0 %v6913, 12
  %v7909 = vpop.permute.xlu0 %7908
  %7910 = vrot.lane.b32.xlu0 %v6914, 12
  %v7911 = vpop.permute.xlu0 %7910
  %7912 = vrot.lane.b32.xlu0 %v6915, 12
  %v7913 = vpop.permute.xlu0 %7912
  %7914 = vrot.lane.b32.xlu0 %v6916, 12
  %v7915 = vpop.permute.xlu0 %7914
  %7916 = vrot.lane.b32.xlu0 %v6917, 12
  %v7917 = vpop.permute.xlu0 %7916
  %7918 = vrot.lane.b32.xlu0 %v6918, 12
  %v7919 = vpop.permute.xlu0 %7918
  %7920 = vrot.lane.b32.xlu0 %v6919, 12
  %v7921 = vpop.permute.xlu0 %7920
  %7922 = vrot.lane.b32.xlu0 %v6920, 12
  %v7923 = vpop.permute.xlu0 %7922
  %7924 = vrot.lane.b32.xlu0 %v6921, 12
  %v7925 = vpop.permute.xlu0 %7924
  %7926 = vrot.lane.b32.xlu0 %v6922, 12
  %v7927 = vpop.permute.xlu0 %7926
  %7928 = vrot.lane.b32.xlu0 %v6923, 12
  %v7929 = vpop.permute.xlu0 %7928
  %7930 = vrot.lane.b32.xlu0 %v6924, 12
  %v7931 = vpop.permute.xlu0 %7930
  %7932 = vrot.lane.b32.xlu0 %v6925, 12
  %v7933 = vpop.permute.xlu0 %7932
  %7934 = vrot.lane.b32.xlu0 %v6926, 12
  %v7935 = vpop.permute.xlu0 %7934
  %7936 = vrot.lane.b32.xlu0 %v6927, 12
  %v7937 = vpop.permute.xlu0 %7936
  %7938 = vrot.lane.b32.xlu0 %v6928, 12
  %v7939 = vpop.permute.xlu0 %7938
  %7940 = vrot.lane.b32.xlu0 %v6929, 12
  %v7941 = vpop.permute.xlu0 %7940
  %7942 = vrot.lane.b32.xlu0 %v6930, 12
  %v7943 = vpop.permute.xlu0 %7942
  %7944 = vrot.lane.b32.xlu0 %v6931, 12
  %v7945 = vpop.permute.xlu0 %7944
  %7946 = vrot.lane.b32.xlu0 %v6932, 12
  %v7947 = vpop.permute.xlu0 %7946
  %7948 = vrot.lane.b32.xlu0 %v6933, 12
  %v7949 = vpop.permute.xlu0 %7948
  %7950 = vrot.lane.b32.xlu0 %v6934, 12
  %v7951 = vpop.permute.xlu0 %7950
  %7952 = vrot.lane.b32.xlu0 %v6935, 12
  %v7953 = vpop.permute.xlu0 %7952
  %7954 = vrot.lane.b32.xlu0 %v6936, 12
  %v7955 = vpop.permute.xlu0 %7954
  %7956 = vrot.lane.b32.xlu0 %v6937, 12
  %v7957 = vpop.permute.xlu0 %7956
  %7958 = vrot.lane.b32.xlu0 %v6938, 12
  %v7959 = vpop.permute.xlu0 %7958
  %7960 = vrot.lane.b32.xlu0 %v6939, 12
  %v7961 = vpop.permute.xlu0 %7960
  %7962 = vrot.lane.b32.xlu0 %v6940, 12
  %v7963 = vpop.permute.xlu0 %7962
  %7964 = vrot.lane.b32.xlu0 %v6941, 12
  %v7965 = vpop.permute.xlu0 %7964
  %7966 = vrot.lane.b32.xlu0 %v6942, 12
  %v7967 = vpop.permute.xlu0 %7966
  %8096 = vrot.lane.b32.xlu0 %v6943, 16
  %v8097 = vpop.permute.xlu0 %8096
  %8098 = vrot.lane.b32.xlu0 %v6944, 16
  %v8099 = vpop.permute.xlu0 %8098
  %8100 = vrot.lane.b32.xlu0 %v6945, 16
  %v8101 = vpop.permute.xlu0 %8100
  %8102 = vrot.lane.b32.xlu0 %v6946, 16
  %v8103 = vpop.permute.xlu0 %8102
  %8104 = vrot.lane.b32.xlu0 %v6947, 16
  %v8105 = vpop.permute.xlu0 %8104
  %8106 = vrot.lane.b32.xlu0 %v6948, 16
  %v8107 = vpop.permute.xlu0 %8106
  %8108 = vrot.lane.b32.xlu0 %v6949, 16
  %v8109 = vpop.permute.xlu0 %8108
  %8110 = vrot.lane.b32.xlu0 %v6950, 16
  %v8111 = vpop.permute.xlu0 %8110
  %8112 = vrot.lane.b32.xlu0 %v6951, 16
  %v8113 = vpop.permute.xlu0 %8112
  %8114 = vrot.lane.b32.xlu0 %v6952, 16
  %v8115 = vpop.permute.xlu0 %8114
  %8116 = vrot.lane.b32.xlu0 %v6953, 16
  %v8117 = vpop.permute.xlu0 %8116
  %8118 = vrot.lane.b32.xlu0 %v6954, 16
  %v8119 = vpop.permute.xlu0 %8118
  %8120 = vrot.lane.b32.xlu0 %v6955, 16
  %v8121 = vpop.permute.xlu0 %8120
  %8122 = vrot.lane.b32.xlu0 %v6956, 16
  %v8123 = vpop.permute.xlu0 %8122
  %8124 = vrot.lane.b32.xlu0 %v6957, 16
  %v8125 = vpop.permute.xlu0 %8124
  %8126 = vrot.lane.b32.xlu0 %v6958, 16
  %v8127 = vpop.permute.xlu0 %8126
  %8128 = vrot.lane.b32.xlu0 %v6959, 16
  %v8129 = vpop.permute.xlu0 %8128
  %8130 = vrot.lane.b32.xlu0 %v6960, 16
  %v8131 = vpop.permute.xlu0 %8130
  %8132 = vrot.lane.b32.xlu0 %v6961, 16
  %v8133 = vpop.permute.xlu0 %8132
  %8134 = vrot.lane.b32.xlu0 %v6962, 16
  %v8135 = vpop.permute.xlu0 %8134
  %8136 = vrot.lane.b32.xlu0 %v6963, 16
  %v8137 = vpop.permute.xlu0 %8136
  %8138 = vrot.lane.b32.xlu0 %v6964, 16
  %v8139 = vpop.permute.xlu0 %8138
  %8140 = vrot.lane.b32.xlu0 %v6965, 16
  %v8141 = vpop.permute.xlu0 %8140
  %8142 = vrot.lane.b32.xlu0 %v6966, 16
  %v8143 = vpop.permute.xlu0 %8142
  %8144 = vrot.lane.b32.xlu0 %v6967, 16
  %v8145 = vpop.permute.xlu0 %8144
  %8146 = vrot.lane.b32.xlu0 %v6968, 16
  %v8147 = vpop.permute.xlu0 %8146
  %8148 = vrot.lane.b32.xlu0 %v6969, 16
  %v8149 = vpop.permute.xlu0 %8148
  %8150 = vrot.lane.b32.xlu0 %v6970, 16
  %v8151 = vpop.permute.xlu0 %8150
  %8152 = vrot.lane.b32.xlu0 %v6971, 16
  %v8153 = vpop.permute.xlu0 %8152
  %8154 = vrot.lane.b32.xlu0 %v6972, 16
  %v8155 = vpop.permute.xlu0 %8154
  %8156 = vrot.lane.b32.xlu0 %v6973, 16
  %v8157 = vpop.permute.xlu0 %8156
  %8158 = vrot.lane.b32.xlu0 %v6974, 16
  %v8159 = vpop.permute.xlu0 %8158
  %8160 = vrot.lane.b32.xlu0 %v6975, 16
  %v8161 = vpop.permute.xlu0 %8160
  %8162 = vrot.lane.b32.xlu0 %v6976, 16
  %v8163 = vpop.permute.xlu0 %8162
  %8164 = vrot.lane.b32.xlu0 %v6977, 16
  %v8165 = vpop.permute.xlu0 %8164
  %8166 = vrot.lane.b32.xlu0 %v6978, 16
  %v8167 = vpop.permute.xlu0 %8166
  %8168 = vrot.lane.b32.xlu0 %v6979, 16
  %v8169 = vpop.permute.xlu0 %8168
  %8170 = vrot.lane.b32.xlu0 %v6980, 16
  %v8171 = vpop.permute.xlu0 %8170
  %8172 = vrot.lane.b32.xlu0 %v6981, 16
  %v8173 = vpop.permute.xlu0 %8172
  %8174 = vrot.lane.b32.xlu0 %v6982, 16
  %v8175 = vpop.permute.xlu0 %8174
  %8176 = vrot.lane.b32.xlu0 %v6983, 16
  %v8177 = vpop.permute.xlu0 %8176
  %8178 = vrot.lane.b32.xlu0 %v6984, 16
  %v8179 = vpop.permute.xlu0 %8178
  %8180 = vrot.lane.b32.xlu0 %v6985, 16
  %v8181 = vpop.permute.xlu0 %8180
  %8182 = vrot.lane.b32.xlu0 %v6986, 16
  %v8183 = vpop.permute.xlu0 %8182
  %8184 = vrot.lane.b32.xlu0 %v6987, 16
  %v8185 = vpop.permute.xlu0 %8184
  %8186 = vrot.lane.b32.xlu0 %v6988, 16
  %v8187 = vpop.permute.xlu0 %8186
  %8188 = vrot.lane.b32.xlu0 %v6989, 16
  %v8189 = vpop.permute.xlu0 %8188
  %8190 = vrot.lane.b32.xlu0 %v6990, 16
  %v8191 = vpop.permute.xlu0 %8190
  %8192 = vrot.lane.b32.xlu0 %v6991, 16
  %v8193 = vpop.permute.xlu0 %8192
  %8194 = vrot.lane.b32.xlu0 %v6992, 16
  %v8195 = vpop.permute.xlu0 %8194
  %8196 = vrot.lane.b32.xlu0 %v6993, 16
  %v8197 = vpop.permute.xlu0 %8196
  %8198 = vrot.lane.b32.xlu0 %v6994, 16
  %v8199 = vpop.permute.xlu0 %8198
  %8200 = vrot.lane.b32.xlu0 %v6995, 16
  %v8201 = vpop.permute.xlu0 %8200
  %8202 = vrot.lane.b32.xlu0 %v6996, 16
  %v8203 = vpop.permute.xlu0 %8202
  %8204 = vrot.lane.b32.xlu0 %v6997, 16
  %v8205 = vpop.permute.xlu0 %8204
  %8206 = vrot.lane.b32.xlu0 %v6998, 16
  %v8207 = vpop.permute.xlu0 %8206
  %8208 = vrot.lane.b32.xlu0 %v6999, 16
  %v8209 = vpop.permute.xlu0 %8208
  %8210 = vrot.lane.b32.xlu0 %v7000, 16
  %v8211 = vpop.permute.xlu0 %8210
  %8212 = vrot.lane.b32.xlu0 %v7001, 16
  %v8213 = vpop.permute.xlu0 %8212
  %8214 = vrot.lane.b32.xlu0 %v7002, 16
  %v8215 = vpop.permute.xlu0 %8214
  %8216 = vrot.lane.b32.xlu0 %v7003, 16
  %v8217 = vpop.permute.xlu0 %8216
  %8218 = vrot.lane.b32.xlu0 %v7004, 16
  %v8219 = vpop.permute.xlu0 %8218
  %8220 = vrot.lane.b32.xlu0 %v7005, 16
  %v8221 = vpop.permute.xlu0 %8220
  %8222 = vrot.lane.b32.xlu0 %v7006, 16
  %v8223 = vpop.permute.xlu0 %8222
  %8352 = vrot.lane.b32.xlu0 %v7007, 20
  %v8353 = vpop.permute.xlu0 %8352
  %8354 = vrot.lane.b32.xlu0 %v7008, 20
  %v8355 = vpop.permute.xlu0 %8354
  %8356 = vrot.lane.b32.xlu0 %v7009, 20
  %v8357 = vpop.permute.xlu0 %8356
  %8358 = vrot.lane.b32.xlu0 %v7010, 20
  %v8359 = vpop.permute.xlu0 %8358
  %8360 = vrot.lane.b32.xlu0 %v7011, 20
  %v8361 = vpop.permute.xlu0 %8360
  %8362 = vrot.lane.b32.xlu0 %v7012, 20
  %v8363 = vpop.permute.xlu0 %8362
  %8364 = vrot.lane.b32.xlu0 %v7013, 20
  %v8365 = vpop.permute.xlu0 %8364
  %8366 = vrot.lane.b32.xlu0 %v7014, 20
  %v8367 = vpop.permute.xlu0 %8366
  %8368 = vrot.lane.b32.xlu0 %v7015, 20
  %v8369 = vpop.permute.xlu0 %8368
  %8370 = vrot.lane.b32.xlu0 %v7016, 20
  %v8371 = vpop.permute.xlu0 %8370
  %8372 = vrot.lane.b32.xlu0 %v7017, 20
  %v8373 = vpop.permute.xlu0 %8372
  %8374 = vrot.lane.b32.xlu0 %v7018, 20
  %v8375 = vpop.permute.xlu0 %8374
  %8376 = vrot.lane.b32.xlu0 %v7019, 20
  %v8377 = vpop.permute.xlu0 %8376
  %8378 = vrot.lane.b32.xlu0 %v7020, 20
  %v8379 = vpop.permute.xlu0 %8378
  %8380 = vrot.lane.b32.xlu0 %v7021, 20
  %v8381 = vpop.permute.xlu0 %8380
  %8382 = vrot.lane.b32.xlu0 %v7022, 20
  %v8383 = vpop.permute.xlu0 %8382
  %8384 = vrot.lane.b32.xlu0 %v7023, 20
  %v8385 = vpop.permute.xlu0 %8384
  %8386 = vrot.lane.b32.xlu0 %v7024, 20
  %v8387 = vpop.permute.xlu0 %8386
  %8388 = vrot.lane.b32.xlu0 %v7025, 20
  %v8389 = vpop.permute.xlu0 %8388
  %8390 = vrot.lane.b32.xlu0 %v7026, 20
  %v8391 = vpop.permute.xlu0 %8390
  %8392 = vrot.lane.b32.xlu0 %v7027, 20
  %v8393 = vpop.permute.xlu0 %8392
  %8394 = vrot.lane.b32.xlu0 %v7028, 20
  %v8395 = vpop.permute.xlu0 %8394
  %8396 = vrot.lane.b32.xlu0 %v7029, 20
  %v8397 = vpop.permute.xlu0 %8396
  %8398 = vrot.lane.b32.xlu0 %v7030, 20
  %v8399 = vpop.permute.xlu0 %8398
  %8400 = vrot.lane.b32.xlu0 %v7031, 20
  %v8401 = vpop.permute.xlu0 %8400
  %8402 = vrot.lane.b32.xlu0 %v7032, 20
  %v8403 = vpop.permute.xlu0 %8402
  %8404 = vrot.lane.b32.xlu0 %v7033, 20
  %v8405 = vpop.permute.xlu0 %8404
  %8406 = vrot.lane.b32.xlu0 %v7034, 20
  %v8407 = vpop.permute.xlu0 %8406
  %8408 = vrot.lane.b32.xlu0 %v7035, 20
  %v8409 = vpop.permute.xlu0 %8408
  %8410 = vrot.lane.b32.xlu0 %v7036, 20
  %v8411 = vpop.permute.xlu0 %8410
  %8412 = vrot.lane.b32.xlu0 %v7037, 20
  %v8413 = vpop.permute.xlu0 %8412
  %8414 = vrot.lane.b32.xlu0 %v7038, 20
  %v8415 = vpop.permute.xlu0 %8414
  %8416 = vrot.lane.b32.xlu0 %v7039, 20
  %v8417 = vpop.permute.xlu0 %8416
  %8418 = vrot.lane.b32.xlu0 %v7040, 20
  %v8419 = vpop.permute.xlu0 %8418
  %8420 = vrot.lane.b32.xlu0 %v7041, 20
  %v8421 = vpop.permute.xlu0 %8420
  %8422 = vrot.lane.b32.xlu0 %v7042, 20
  %v8423 = vpop.permute.xlu0 %8422
  %8424 = vrot.lane.b32.xlu0 %v7043, 20
  %v8425 = vpop.permute.xlu0 %8424
  %8426 = vrot.lane.b32.xlu0 %v7044, 20
  %v8427 = vpop.permute.xlu0 %8426
  %8428 = vrot.lane.b32.xlu0 %v7045, 20
  %v8429 = vpop.permute.xlu0 %8428
  %8430 = vrot.lane.b32.xlu0 %v7046, 20
  %v8431 = vpop.permute.xlu0 %8430
  %8432 = vrot.lane.b32.xlu0 %v7047, 20
  %v8433 = vpop.permute.xlu0 %8432
  %8434 = vrot.lane.b32.xlu0 %v7048, 20
  %v8435 = vpop.permute.xlu0 %8434
  %8436 = vrot.lane.b32.xlu0 %v7049, 20
  %v8437 = vpop.permute.xlu0 %8436
  %8438 = vrot.lane.b32.xlu0 %v7050, 20
  %v8439 = vpop.permute.xlu0 %8438
  %8440 = vrot.lane.b32.xlu0 %v7051, 20
  %v8441 = vpop.permute.xlu0 %8440
  %8442 = vrot.lane.b32.xlu0 %v7052, 20
  %v8443 = vpop.permute.xlu0 %8442
  %8444 = vrot.lane.b32.xlu0 %v7053, 20
  %v8445 = vpop.permute.xlu0 %8444
  %8446 = vrot.lane.b32.xlu0 %v7054, 20
  %v8447 = vpop.permute.xlu0 %8446
  %8448 = vrot.lane.b32.xlu0 %v7055, 20
  %v8449 = vpop.permute.xlu0 %8448
  %8450 = vrot.lane.b32.xlu0 %v7056, 20
  %v8451 = vpop.permute.xlu0 %8450
  %8452 = vrot.lane.b32.xlu0 %v7057, 20
  %v8453 = vpop.permute.xlu0 %8452
  %8454 = vrot.lane.b32.xlu0 %v7058, 20
  %v8455 = vpop.permute.xlu0 %8454
  %8456 = vrot.lane.b32.xlu0 %v7059, 20
  %v8457 = vpop.permute.xlu0 %8456
  %8458 = vrot.lane.b32.xlu0 %v7060, 20
  %v8459 = vpop.permute.xlu0 %8458
  %8460 = vrot.lane.b32.xlu0 %v7061, 20
  %v8461 = vpop.permute.xlu0 %8460
  %8462 = vrot.lane.b32.xlu0 %v7062, 20
  %v8463 = vpop.permute.xlu0 %8462
  %8464 = vrot.lane.b32.xlu0 %v7063, 20
  %v8465 = vpop.permute.xlu0 %8464
  %8466 = vrot.lane.b32.xlu0 %v7064, 20
  %v8467 = vpop.permute.xlu0 %8466
  %8468 = vrot.lane.b32.xlu0 %v7065, 20
  %v8469 = vpop.permute.xlu0 %8468
  %8470 = vrot.lane.b32.xlu0 %v7066, 20
  %v8471 = vpop.permute.xlu0 %8470
  %8472 = vrot.lane.b32.xlu0 %v7067, 20
  %v8473 = vpop.permute.xlu0 %8472
  %8474 = vrot.lane.b32.xlu0 %v7068, 20
  %v8475 = vpop.permute.xlu0 %8474
  %8476 = vrot.lane.b32.xlu0 %v7069, 20
  %v8477 = vpop.permute.xlu0 %8476
  %8478 = vrot.lane.b32.xlu0 %v7070, 20
  %v8479 = vpop.permute.xlu0 %8478
  %8608 = vrot.lane.b32.xlu0 %v7072, 24
  %v8609 = vpop.permute.xlu0 %8608
  %8610 = vrot.lane.b32.xlu0 %v7073, 24
  %v8611 = vpop.permute.xlu0 %8610
  %8612 = vrot.lane.b32.xlu0 %v7074, 24
  %v8613 = vpop.permute.xlu0 %8612
  %8614 = vrot.lane.b32.xlu0 %v7075, 24
  %v8615 = vpop.permute.xlu0 %8614
  %8616 = vrot.lane.b32.xlu0 %v7076, 24
  %v8617 = vpop.permute.xlu0 %8616
  %8618 = vrot.lane.b32.xlu0 %v7077, 24
  %v8619 = vpop.permute.xlu0 %8618
  %8620 = vrot.lane.b32.xlu0 %v7078, 24
  %v8621 = vpop.permute.xlu0 %8620
  %8622 = vrot.lane.b32.xlu0 %v7079, 24
  %v8623 = vpop.permute.xlu0 %8622
  %8624 = vrot.lane.b32.xlu0 %v7080, 24
  %v8625 = vpop.permute.xlu0 %8624
  %8626 = vrot.lane.b32.xlu0 %v7081, 24
  %v8627 = vpop.permute.xlu0 %8626
  %8628 = vrot.lane.b32.xlu0 %v7082, 24
  %v8629 = vpop.permute.xlu0 %8628
  %8630 = vrot.lane.b32.xlu0 %v7083, 24
  %v8631 = vpop.permute.xlu0 %8630
  %8632 = vrot.lane.b32.xlu0 %v7084, 24
  %v8633 = vpop.permute.xlu0 %8632
  %8634 = vrot.lane.b32.xlu0 %v7085, 24
  %v8635 = vpop.permute.xlu0 %8634
  %8636 = vrot.lane.b32.xlu0 %v7086, 24
  %v8637 = vpop.permute.xlu0 %8636
  %8638 = vrot.lane.b32.xlu0 %v7087, 24
  %v8639 = vpop.permute.xlu0 %8638
  %8640 = vrot.lane.b32.xlu0 %v7088, 24
  %v8641 = vpop.permute.xlu0 %8640
  %8642 = vrot.lane.b32.xlu0 %v7089, 24
  %v8643 = vpop.permute.xlu0 %8642
  %8644 = vrot.lane.b32.xlu0 %v7090, 24
  %v8645 = vpop.permute.xlu0 %8644
  %8646 = vrot.lane.b32.xlu0 %v7091, 24
  %v8647 = vpop.permute.xlu0 %8646
  %8648 = vrot.lane.b32.xlu0 %v7092, 24
  %v8649 = vpop.permute.xlu0 %8648
  %8650 = vrot.lane.b32.xlu0 %v7093, 24
  %v8651 = vpop.permute.xlu0 %8650
  %8652 = vrot.lane.b32.xlu0 %v7094, 24
  %v8653 = vpop.permute.xlu0 %8652
  %8654 = vrot.lane.b32.xlu0 %v7095, 24
  %v8655 = vpop.permute.xlu0 %8654
  %8656 = vrot.lane.b32.xlu0 %v7096, 24
  %v8657 = vpop.permute.xlu0 %8656
  %8658 = vrot.lane.b32.xlu0 %v7097, 24
  %v8659 = vpop.permute.xlu0 %8658
  %8660 = vrot.lane.b32.xlu0 %v7098, 24
  %v8661 = vpop.permute.xlu0 %8660
  %8662 = vrot.lane.b32.xlu0 %v7099, 24
  %v8663 = vpop.permute.xlu0 %8662
  %8664 = vrot.lane.b32.xlu0 %v7100, 24
  %v8665 = vpop.permute.xlu0 %8664
  %8666 = vrot.lane.b32.xlu0 %v7101, 24
  %v8667 = vpop.permute.xlu0 %8666
  %8668 = vrot.lane.b32.xlu0 %v7102, 24
  %v8669 = vpop.permute.xlu0 %8668
  %8670 = vrot.lane.b32.xlu0 %v7103, 24
  %v8671 = vpop.permute.xlu0 %8670
  %8672 = vrot.lane.b32.xlu0 %v7104, 24
  %v8673 = vpop.permute.xlu0 %8672
  %8674 = vrot.lane.b32.xlu0 %v7105, 24
  %v8675 = vpop.permute.xlu0 %8674
  %8676 = vrot.lane.b32.xlu0 %v7106, 24
  %v8677 = vpop.permute.xlu0 %8676
  %8678 = vrot.lane.b32.xlu0 %v7107, 24
  %v8679 = vpop.permute.xlu0 %8678
  %8680 = vrot.lane.b32.xlu0 %v7108, 24
  %v8681 = vpop.permute.xlu0 %8680
  %8682 = vrot.lane.b32.xlu0 %v7109, 24
  %v8683 = vpop.permute.xlu0 %8682
  %8684 = vrot.lane.b32.xlu0 %v7110, 24
  %v8685 = vpop.permute.xlu0 %8684
  %8686 = vrot.lane.b32.xlu0 %v7111, 24
  %v8687 = vpop.permute.xlu0 %8686
  %8688 = vrot.lane.b32.xlu0 %v7112, 24
  %v8689 = vpop.permute.xlu0 %8688
  %8690 = vrot.lane.b32.xlu0 %v7113, 24
  %v8691 = vpop.permute.xlu0 %8690
  %8692 = vrot.lane.b32.xlu0 %v7114, 24
  %v8693 = vpop.permute.xlu0 %8692
  %8694 = vrot.lane.b32.xlu0 %v7115, 24
  %v8695 = vpop.permute.xlu0 %8694
  %8696 = vrot.lane.b32.xlu0 %v7116, 24
  %v8697 = vpop.permute.xlu0 %8696
  %8698 = vrot.lane.b32.xlu0 %v7117, 24
  %v8699 = vpop.permute.xlu0 %8698
  %8700 = vrot.lane.b32.xlu0 %v7118, 24
  %v8701 = vpop.permute.xlu0 %8700
  %8702 = vrot.lane.b32.xlu0 %v7119, 24
  %v8703 = vpop.permute.xlu0 %8702
  %8704 = vrot.lane.b32.xlu0 %v7120, 24
  %v8705 = vpop.permute.xlu0 %8704
  %8706 = vrot.lane.b32.xlu0 %v7121, 24
  %v8707 = vpop.permute.xlu0 %8706
  %8708 = vrot.lane.b32.xlu0 %v7122, 24
  %v8709 = vpop.permute.xlu0 %8708
  %8710 = vrot.lane.b32.xlu0 %v7123, 24
  %v8711 = vpop.permute.xlu0 %8710
  %8712 = vrot.lane.b32.xlu0 %v7124, 24
  %v8713 = vpop.permute.xlu0 %8712
  %8714 = vrot.lane.b32.xlu0 %v7125, 24
  %v8715 = vpop.permute.xlu0 %8714
  %8716 = vrot.lane.b32.xlu0 %v7126, 24
  %v8717 = vpop.permute.xlu0 %8716
  %8718 = vrot.lane.b32.xlu0 %v7127, 24
  %v8719 = vpop.permute.xlu0 %8718
  %8720 = vrot.lane.b32.xlu0 %v7128, 24
  %v8721 = vpop.permute.xlu0 %8720
  %8722 = vrot.lane.b32.xlu0 %v7129, 24
  %v8723 = vpop.permute.xlu0 %8722
  %8724 = vrot.lane.b32.xlu0 %v7130, 24
  %v8725 = vpop.permute.xlu0 %8724
  %8726 = vrot.lane.b32.xlu0 %v7131, 24
  %v8727 = vpop.permute.xlu0 %8726
  %8728 = vrot.lane.b32.xlu0 %v7132, 24
  %v8729 = vpop.permute.xlu0 %8728
  %8730 = vrot.lane.b32.xlu0 %v7133, 24
  %v8731 = vpop.permute.xlu0 %8730
  %8732 = vrot.lane.b32.xlu0 %v7134, 24
  %v8733 = vpop.permute.xlu0 %8732
  %8734 = vrot.lane.b32.xlu0 %v7135, 24
  %v8735 = vpop.permute.xlu0 %8734
  %8864 = vrot.lane.b32.xlu0 %v7136, 28
  %v8865 = vpop.permute.xlu0 %8864
  %8866 = vrot.lane.b32.xlu0 %v7137, 28
  %v8867 = vpop.permute.xlu0 %8866
  %8868 = vrot.lane.b32.xlu0 %v7138, 28
  %v8869 = vpop.permute.xlu0 %8868
  %8870 = vrot.lane.b32.xlu0 %v7139, 28
  %v8871 = vpop.permute.xlu0 %8870
  %8872 = vrot.lane.b32.xlu0 %v7140, 28
  %v8873 = vpop.permute.xlu0 %8872
  %8874 = vrot.lane.b32.xlu0 %v7141, 28
  %v8875 = vpop.permute.xlu0 %8874
  %8876 = vrot.lane.b32.xlu0 %v7142, 28
  %v8877 = vpop.permute.xlu0 %8876
  %8878 = vrot.lane.b32.xlu0 %v7143, 28
  %v8879 = vpop.permute.xlu0 %8878
  %8880 = vrot.lane.b32.xlu0 %v7144, 28
  %v8881 = vpop.permute.xlu0 %8880
  %8882 = vrot.lane.b32.xlu0 %v7145, 28
  %v8883 = vpop.permute.xlu0 %8882
  %8884 = vrot.lane.b32.xlu0 %v7146, 28
  %v8885 = vpop.permute.xlu0 %8884
  %8886 = vrot.lane.b32.xlu0 %v7147, 28
  %v8887 = vpop.permute.xlu0 %8886
  %8888 = vrot.lane.b32.xlu0 %v7148, 28
  %v8889 = vpop.permute.xlu0 %8888
  %8890 = vrot.lane.b32.xlu0 %v7149, 28
  %v8891 = vpop.permute.xlu0 %8890
  %8892 = vrot.lane.b32.xlu0 %v7150, 28
  %v8893 = vpop.permute.xlu0 %8892
  %8894 = vrot.lane.b32.xlu0 %v7151, 28
  %v8895 = vpop.permute.xlu0 %8894
  %8896 = vrot.lane.b32.xlu0 %v7152, 28
  %v8897 = vpop.permute.xlu0 %8896
  %8898 = vrot.lane.b32.xlu0 %v7153, 28
  %v8899 = vpop.permute.xlu0 %8898
  %8900 = vrot.lane.b32.xlu0 %v7154, 28
  %v8901 = vpop.permute.xlu0 %8900
  %8902 = vrot.lane.b32.xlu0 %v7155, 28
  %v8903 = vpop.permute.xlu0 %8902
  %8904 = vrot.lane.b32.xlu0 %v7156, 28
  %v8905 = vpop.permute.xlu0 %8904
  %8906 = vrot.lane.b32.xlu0 %v7157, 28
  %v8907 = vpop.permute.xlu0 %8906
  %8908 = vrot.lane.b32.xlu0 %v7158, 28
  %v8909 = vpop.permute.xlu0 %8908
  %8910 = vrot.lane.b32.xlu0 %v7159, 28
  %v8911 = vpop.permute.xlu0 %8910
  %8912 = vrot.lane.b32.xlu0 %v7160, 28
  %v8913 = vpop.permute.xlu0 %8912
  %8914 = vrot.lane.b32.xlu0 %v7161, 28
  %v8915 = vpop.permute.xlu0 %8914
  %8916 = vrot.lane.b32.xlu0 %v7162, 28
  %v8917 = vpop.permute.xlu0 %8916
  %8918 = vrot.lane.b32.xlu0 %v7163, 28
  %v8919 = vpop.permute.xlu0 %8918
  %8920 = vrot.lane.b32.xlu0 %v7164, 28
  %v8921 = vpop.permute.xlu0 %8920
  %8922 = vrot.lane.b32.xlu0 %v7165, 28
  %v8923 = vpop.permute.xlu0 %8922
  %8924 = vrot.lane.b32.xlu0 %v7166, 28
  %v8925 = vpop.permute.xlu0 %8924
  %8926 = vrot.lane.b32.xlu0 %v7167, 28
  %v8927 = vpop.permute.xlu0 %8926
  %8928 = vrot.lane.b32.xlu0 %v7168, 28
  %v8929 = vpop.permute.xlu0 %8928
  %8930 = vrot.lane.b32.xlu0 %v7169, 28
  %v8931 = vpop.permute.xlu0 %8930
  %8932 = vrot.lane.b32.xlu0 %v7170, 28
  %v8933 = vpop.permute.xlu0 %8932
  %8934 = vrot.lane.b32.xlu0 %v7171, 28
  %v8935 = vpop.permute.xlu0 %8934
  %8936 = vrot.lane.b32.xlu0 %v7172, 28
  %v8937 = vpop.permute.xlu0 %8936
  %8938 = vrot.lane.b32.xlu0 %v7173, 28
  %v8939 = vpop.permute.xlu0 %8938
  %8940 = vrot.lane.b32.xlu0 %v7174, 28
  %v8941 = vpop.permute.xlu0 %8940
  %8942 = vrot.lane.b32.xlu0 %v7175, 28
  %v8943 = vpop.permute.xlu0 %8942
  %8944 = vrot.lane.b32.xlu0 %v7176, 28
  %v8945 = vpop.permute.xlu0 %8944
  %8946 = vrot.lane.b32.xlu0 %v7177, 28
  %v8947 = vpop.permute.xlu0 %8946
  %8948 = vrot.lane.b32.xlu0 %v7178, 28
  %v8949 = vpop.permute.xlu0 %8948
  %8950 = vrot.lane.b32.xlu0 %v7179, 28
  %v8951 = vpop.permute.xlu0 %8950
  %8952 = vrot.lane.b32.xlu0 %v7180, 28
  %v8953 = vpop.permute.xlu0 %8952
  %8954 = vrot.lane.b32.xlu0 %v7181, 28
  %v8955 = vpop.permute.xlu0 %8954
  %8956 = vrot.lane.b32.xlu0 %v7182, 28
  %v8957 = vpop.permute.xlu0 %8956
  %8958 = vrot.lane.b32.xlu0 %v7183, 28
  %v8959 = vpop.permute.xlu0 %8958
  %8960 = vrot.lane.b32.xlu0 %v7184, 28
  %v8961 = vpop.permute.xlu0 %8960
  %8962 = vrot.lane.b32.xlu0 %v7185, 28
  %v8963 = vpop.permute.xlu0 %8962
  %8964 = vrot.lane.b32.xlu0 %v7186, 28
  %v8965 = vpop.permute.xlu0 %8964
  %8966 = vrot.lane.b32.xlu0 %v7187, 28
  %v8967 = vpop.permute.xlu0 %8966
  %8968 = vrot.lane.b32.xlu0 %v7188, 28
  %v8969 = vpop.permute.xlu0 %8968
  %8970 = vrot.lane.b32.xlu0 %v7189, 28
  %v8971 = vpop.permute.xlu0 %8970
  %8972 = vrot.lane.b32.xlu0 %v7190, 28
  %v8973 = vpop.permute.xlu0 %8972
  %8974 = vrot.lane.b32.xlu0 %v7191, 28
  %v8975 = vpop.permute.xlu0 %8974
  %8976 = vrot.lane.b32.xlu0 %v7192, 28
  %v8977 = vpop.permute.xlu0 %8976
  %8978 = vrot.lane.b32.xlu0 %v7193, 28
  %v8979 = vpop.permute.xlu0 %8978
  %8980 = vrot.lane.b32.xlu0 %v7194, 28
  %v8981 = vpop.permute.xlu0 %8980
  %8982 = vrot.lane.b32.xlu0 %v7195, 28
  %v8983 = vpop.permute.xlu0 %8982
  %8984 = vrot.lane.b32.xlu0 %v7196, 28
  %v8985 = vpop.permute.xlu0 %8984
  %8986 = vrot.lane.b32.xlu0 %v7197, 28
  %v8987 = vpop.permute.xlu0 %8986
  %8988 = vrot.lane.b32.xlu0 %v7198, 28
  %v8989 = vpop.permute.xlu0 %8988
  %8990 = vrot.lane.b32.xlu0 %v7199, 28
  %v8991 = vpop.permute.xlu0 %8990
  %9120 = vrot.lane.b32.xlu0 %v7200, 32
  %v9121 = vpop.permute.xlu0 %9120
  %9122 = vrot.lane.b32.xlu0 %v7201, 32
  %v9123 = vpop.permute.xlu0 %9122
  %9124 = vrot.lane.b32.xlu0 %v7202, 32
  %v9125 = vpop.permute.xlu0 %9124
  %9126 = vrot.lane.b32.xlu0 %v7203, 32
  %v9127 = vpop.permute.xlu0 %9126
  %9128 = vrot.lane.b32.xlu0 %v7204, 32
  %v9129 = vpop.permute.xlu0 %9128
  %9130 = vrot.lane.b32.xlu0 %v7205, 32
  %v9131 = vpop.permute.xlu0 %9130
  %9132 = vrot.lane.b32.xlu0 %v7206, 32
  %v9133 = vpop.permute.xlu0 %9132
  %9134 = vrot.lane.b32.xlu0 %v7207, 32
  %v9135 = vpop.permute.xlu0 %9134
  %9136 = vrot.lane.b32.xlu0 %v7208, 32
  %v9137 = vpop.permute.xlu0 %9136
  %9138 = vrot.lane.b32.xlu0 %v7209, 32
  %v9139 = vpop.permute.xlu0 %9138
  %9140 = vrot.lane.b32.xlu0 %v7210, 32
  %v9141 = vpop.permute.xlu0 %9140
  %9142 = vrot.lane.b32.xlu0 %v7211, 32
  %v9143 = vpop.permute.xlu0 %9142
  %9144 = vrot.lane.b32.xlu0 %v7212, 32
  %v9145 = vpop.permute.xlu0 %9144
  %9146 = vrot.lane.b32.xlu0 %v7213, 32
  %v9147 = vpop.permute.xlu0 %9146
  %9148 = vrot.lane.b32.xlu0 %v7214, 32
  %v9149 = vpop.permute.xlu0 %9148
  %9150 = vrot.lane.b32.xlu0 %v7215, 32
  %v9151 = vpop.permute.xlu0 %9150
  %9152 = vrot.lane.b32.xlu0 %v7216, 32
  %v9153 = vpop.permute.xlu0 %9152
  %9154 = vrot.lane.b32.xlu0 %v7217, 32
  %v9155 = vpop.permute.xlu0 %9154
  %9156 = vrot.lane.b32.xlu0 %v7218, 32
  %v9157 = vpop.permute.xlu0 %9156
  %9158 = vrot.lane.b32.xlu0 %v7219, 32
  %v9159 = vpop.permute.xlu0 %9158
  %9160 = vrot.lane.b32.xlu0 %v7220, 32
  %v9161 = vpop.permute.xlu0 %9160
  %9162 = vrot.lane.b32.xlu0 %v7221, 32
  %v9163 = vpop.permute.xlu0 %9162
  %9164 = vrot.lane.b32.xlu0 %v7222, 32
  %v9165 = vpop.permute.xlu0 %9164
  %9166 = vrot.lane.b32.xlu0 %v7223, 32
  %v9167 = vpop.permute.xlu0 %9166
  %9168 = vrot.lane.b32.xlu0 %v7224, 32
  %v9169 = vpop.permute.xlu0 %9168
  %9170 = vrot.lane.b32.xlu0 %v7225, 32
  %v9171 = vpop.permute.xlu0 %9170
  %9172 = vrot.lane.b32.xlu0 %v7226, 32
  %v9173 = vpop.permute.xlu0 %9172
  %9174 = vrot.lane.b32.xlu0 %v7227, 32
  %v9175 = vpop.permute.xlu0 %9174
  %9176 = vrot.lane.b32.xlu0 %v7228, 32
  %v9177 = vpop.permute.xlu0 %9176
  %9178 = vrot.lane.b32.xlu0 %v7229, 32
  %v9179 = vpop.permute.xlu0 %9178
  %9180 = vrot.lane.b32.xlu0 %v7230, 32
  %v9181 = vpop.permute.xlu0 %9180
  %9182 = vrot.lane.b32.xlu0 %v7231, 32
  %v9183 = vpop.permute.xlu0 %9182
  %9184 = vrot.lane.b32.xlu0 %v7232, 32
  %v9185 = vpop.permute.xlu0 %9184
  %9186 = vrot.lane.b32.xlu0 %v7233, 32
  %v9187 = vpop.permute.xlu0 %9186
  %9188 = vrot.lane.b32.xlu0 %v7234, 32
  %v9189 = vpop.permute.xlu0 %9188
  %9190 = vrot.lane.b32.xlu0 %v7235, 32
  %v9191 = vpop.permute.xlu0 %9190
  %9192 = vrot.lane.b32.xlu0 %v7236, 32
  %v9193 = vpop.permute.xlu0 %9192
  %9194 = vrot.lane.b32.xlu0 %v7237, 32
  %v9195 = vpop.permute.xlu0 %9194
  %9196 = vrot.lane.b32.xlu0 %v7238, 32
  %v9197 = vpop.permute.xlu0 %9196
  %9198 = vrot.lane.b32.xlu0 %v7239, 32
  %v9199 = vpop.permute.xlu0 %9198
  %9200 = vrot.lane.b32.xlu0 %v7240, 32
  %v9201 = vpop.permute.xlu0 %9200
  %9202 = vrot.lane.b32.xlu0 %v7241, 32
  %v9203 = vpop.permute.xlu0 %9202
  %9204 = vrot.lane.b32.xlu0 %v7242, 32
  %v9205 = vpop.permute.xlu0 %9204
  %9206 = vrot.lane.b32.xlu0 %v7243, 32
  %v9207 = vpop.permute.xlu0 %9206
  %9208 = vrot.lane.b32.xlu0 %v7244, 32
  %v9209 = vpop.permute.xlu0 %9208
  %9210 = vrot.lane.b32.xlu0 %v7245, 32
  %v9211 = vpop.permute.xlu0 %9210
  %9212 = vrot.lane.b32.xlu0 %v7246, 32
  %v9213 = vpop.permute.xlu0 %9212
  %9214 = vrot.lane.b32.xlu0 %v7247, 32
  %v9215 = vpop.permute.xlu0 %9214
  %9216 = vrot.lane.b32.xlu0 %v7248, 32
  %v9217 = vpop.permute.xlu0 %9216
  %9218 = vrot.lane.b32.xlu0 %v7249, 32
  %v9219 = vpop.permute.xlu0 %9218
  %9220 = vrot.lane.b32.xlu0 %v7250, 32
  %v9221 = vpop.permute.xlu0 %9220
  %9222 = vrot.lane.b32.xlu0 %v7251, 32
  %v9223 = vpop.permute.xlu0 %9222
  %9224 = vrot.lane.b32.xlu0 %v7252, 32
  %v9225 = vpop.permute.xlu0 %9224
  %9226 = vrot.lane.b32.xlu0 %v7253, 32
  %v9227 = vpop.permute.xlu0 %9226
  %9228 = vrot.lane.b32.xlu0 %v7254, 32
  %v9229 = vpop.permute.xlu0 %9228
  %9230 = vrot.lane.b32.xlu0 %v7255, 32
  %v9231 = vpop.permute.xlu0 %9230
  %9232 = vrot.lane.b32.xlu0 %v7256, 32
  %v9233 = vpop.permute.xlu0 %9232
  %9234 = vrot.lane.b32.xlu0 %v7257, 32
  %v9235 = vpop.permute.xlu0 %9234
  %9236 = vrot.lane.b32.xlu0 %v7258, 32
  %v9237 = vpop.permute.xlu0 %9236
  %9238 = vrot.lane.b32.xlu0 %v7259, 32
  %v9239 = vpop.permute.xlu0 %9238
  %9240 = vrot.lane.b32.xlu0 %v7260, 32
  %v9241 = vpop.permute.xlu0 %9240
  %9242 = vrot.lane.b32.xlu0 %v7261, 32
  %v9243 = vpop.permute.xlu0 %9242
  %9244 = vrot.lane.b32.xlu0 %v7262, 32
  %v9245 = vpop.permute.xlu0 %9244
  %9246 = vrot.lane.b32.xlu0 %v7263, 32
  %v9247 = vpop.permute.xlu0 %9246
  %v9312 = vsel %vm26, %v6687, %v7329
  %v9313 = vsel %vm26, %v6688, %v7331
  %v9314 = vsel %vm26, %v6689, %v7333
  %v9315 = vsel %vm26, %v6690, %v7335
  %v9316 = vsel %vm26, %v6691, %v7337
  %v9317 = vsel %vm26, %v6692, %v7339
  %v9318 = vsel %vm26, %v6693, %v7341
  %v9319 = vsel %vm26, %v6694, %v7343
  %v9320 = vsel %vm26, %v6695, %v7345
  %v9321 = vsel %vm26, %v6696, %v7347
  %v9322 = vsel %vm26, %v6697, %v7349
  %v9323 = vsel %vm26, %v6698, %v7351
  %v9324 = vsel %vm26, %v6699, %v7353
  %v9325 = vsel %vm26, %v6700, %v7355
  %v9326 = vsel %vm26, %v6701, %v7357
  %v9327 = vsel %vm26, %v6702, %v7359
  %v9328 = vsel %vm26, %v6703, %v7361
  %v9329 = vsel %vm26, %v6704, %v7363
  %v9330 = vsel %vm26, %v6705, %v7365
  %v9331 = vsel %vm26, %v6706, %v7367
  %v9332 = vsel %vm26, %v6707, %v7369
  %v9333 = vsel %vm26, %v6708, %v7371
  %v9334 = vsel %vm26, %v6709, %v7373
  %v9335 = vsel %vm26, %v6710, %v7375
  %v9336 = vsel %vm26, %v6711, %v7377
  %v9337 = vsel %vm26, %v6712, %v7379
  %v9338 = vsel %vm26, %v6713, %v7381
  %v9339 = vsel %vm26, %v6714, %v7383
  %v9340 = vsel %vm26, %v6715, %v7385
  %v9341 = vsel %vm26, %v6716, %v7387
  %v9342 = vsel %vm26, %v6717, %v7389
  %v9343 = vsel %vm26, %v6718, %v7391
  %v9344 = vsel %vm26, %v6719, %v7393
  %v9345 = vsel %vm26, %v6720, %v7395
  %v9346 = vsel %vm26, %v6721, %v7397
  %v9347 = vsel %vm26, %v6722, %v7399
  %v9348 = vsel %vm26, %v6723, %v7401
  %v9349 = vsel %vm26, %v6724, %v7403
  %v9350 = vsel %vm26, %v6725, %v7405
  %v9351 = vsel %vm26, %v6726, %v7407
  %v9352 = vsel %vm26, %v6727, %v7409
  %v9353 = vsel %vm26, %v6728, %v7411
  %v9354 = vsel %vm26, %v6729, %v7413
  %v9355 = vsel %vm26, %v6730, %v7415
  %v9356 = vsel %vm26, %v6731, %v7417
  %v9357 = vsel %vm26, %v6732, %v7419
  %v9358 = vsel %vm26, %v6733, %v7421
  %v9359 = vsel %vm26, %v6734, %v7423
  %v9360 = vsel %vm26, %v6735, %v7425
  %v9361 = vsel %vm26, %v6736, %v7427
  %v9362 = vsel %vm26, %v6737, %v7429
  %v9363 = vsel %vm26, %v6738, %v7431
  %v9364 = vsel %vm26, %v6739, %v7433
  %v9365 = vsel %vm26, %v6740, %v7435
  %v9366 = vsel %vm26, %v6741, %v7437
  %v9367 = vsel %vm26, %v6742, %v7439
  %v9368 = vsel %vm26, %v6743, %v7441
  %v9369 = vsel %vm26, %v6744, %v7443
  %v9370 = vsel %vm26, %v6745, %v7445
  %v9371 = vsel %vm26, %v6746, %v7447
  %v9372 = vsel %vm26, %v6747, %v7449
  %v9373 = vsel %vm26, %v6748, %v7451
  %v9374 = vsel %vm26, %v6749, %v7453
  %v9375 = vsel %vm26, %v6750, %v7455
  %v9376 = vsel %vm2804, %v9312, %v7585
  %v9377 = vsel %vm2804, %v9313, %v7587
  %v9378 = vsel %vm2804, %v9314, %v7589
  %v9379 = vsel %vm2804, %v9315, %v7591
  %v9380 = vsel %vm2804, %v9316, %v7593
  %v9381 = vsel %vm2804, %v9317, %v7595
  %v9382 = vsel %vm2804, %v9318, %v7597
  %v9383 = vsel %vm2804, %v9319, %v7599
  %v9384 = vsel %vm2804, %v9320, %v7601
  %v9385 = vsel %vm2804, %v9321, %v7603
  %v9386 = vsel %vm2804, %v9322, %v7605
  %v9387 = vsel %vm2804, %v9323, %v7607
  %v9388 = vsel %vm2804, %v9324, %v7609
  %v9389 = vsel %vm2804, %v9325, %v7611
  %v9390 = vsel %vm2804, %v9326, %v7613
  %v9391 = vsel %vm2804, %v9327, %v7615
  %v9392 = vsel %vm2804, %v9328, %v7617
  %v9393 = vsel %vm2804, %v9329, %v7619
  %v9394 = vsel %vm2804, %v9330, %v7621
  %v9395 = vsel %vm2804, %v9331, %v7623
  %v9396 = vsel %vm2804, %v9332, %v7625
  %v9397 = vsel %vm2804, %v9333, %v7627
  %v9398 = vsel %vm2804, %v9334, %v7629
  %v9399 = vsel %vm2804, %v9335, %v7631
  %v9400 = vsel %vm2804, %v9336, %v7633
  %v9401 = vsel %vm2804, %v9337, %v7635
  %v9402 = vsel %vm2804, %v9338, %v7637
  %v9403 = vsel %vm2804, %v9339, %v7639
  %v9404 = vsel %vm2804, %v9340, %v7641
  %v9405 = vsel %vm2804, %v9341, %v7643
  %v9406 = vsel %vm2804, %v9342, %v7645
  %v9407 = vsel %vm2804, %v9343, %v7647
  %v9408 = vsel %vm2804, %v9344, %v7649
  %v9409 = vsel %vm2804, %v9345, %v7651
  %v9410 = vsel %vm2804, %v9346, %v7653
  %v9411 = vsel %vm2804, %v9347, %v7655
  %v9412 = vsel %vm2804, %v9348, %v7657
  %v9413 = vsel %vm2804, %v9349, %v7659
  %v9414 = vsel %vm2804, %v9350, %v7661
  %v9415 = vsel %vm2804, %v9351, %v7663
  %v9416 = vsel %vm2804, %v9352, %v7665
  %v9417 = vsel %vm2804, %v9353, %v7667
  %v9418 = vsel %vm2804, %v9354, %v7669
  %v9419 = vsel %vm2804, %v9355, %v7671
  %v9420 = vsel %vm2804, %v9356, %v7673
  %v9421 = vsel %vm2804, %v9357, %v7675
  %v9422 = vsel %vm2804, %v9358, %v7677
  %v9423 = vsel %vm2804, %v9359, %v7679
  %v9424 = vsel %vm2804, %v9360, %v7681
  %v9425 = vsel %vm2804, %v9361, %v7683
  %v9426 = vsel %vm2804, %v9362, %v7685
  %v9427 = vsel %vm2804, %v9363, %v7687
  %v9428 = vsel %vm2804, %v9364, %v7689
  %v9429 = vsel %vm2804, %v9365, %v7691
  %v9430 = vsel %vm2804, %v9366, %v7693
  %v9431 = vsel %vm2804, %v9367, %v7695
  %v9432 = vsel %vm2804, %v9368, %v7697
  %v9433 = vsel %vm2804, %v9369, %v7699
  %v9434 = vsel %vm2804, %v9370, %v7701
  %v9435 = vsel %vm2804, %v9371, %v7703
  %v9436 = vsel %vm2804, %v9372, %v7705
  %v9437 = vsel %vm2804, %v9373, %v7707
  %v9438 = vsel %vm2804, %v9374, %v7709
  %v9439 = vsel %vm2804, %v9375, %v7711
  %v9440 = vsel %vm2869, %v9376, %v7841
  %v9441 = vsel %vm2869, %v9377, %v7843
  %v9442 = vsel %vm2869, %v9378, %v7845
  %v9443 = vsel %vm2869, %v9379, %v7847
  %v9444 = vsel %vm2869, %v9380, %v7849
  %v9445 = vsel %vm2869, %v9381, %v7851
  %v9446 = vsel %vm2869, %v9382, %v7853
  %v9447 = vsel %vm2869, %v9383, %v7855
  %v9448 = vsel %vm2869, %v9384, %v7857
  %v9449 = vsel %vm2869, %v9385, %v7859
  %v9450 = vsel %vm2869, %v9386, %v7861
  %v9451 = vsel %vm2869, %v9387, %v7863
  %v9452 = vsel %vm2869, %v9388, %v7865
  %v9453 = vsel %vm2869, %v9389, %v7867
  %v9454 = vsel %vm2869, %v9390, %v7869
  %v9455 = vsel %vm2869, %v9391, %v7871
  %v9456 = vsel %vm2869, %v9392, %v7873
  %v9457 = vsel %vm2869, %v9393, %v7875
  %v9458 = vsel %vm2869, %v9394, %v7877
  %v9459 = vsel %vm2869, %v9395, %v7879
  %v9460 = vsel %vm2869, %v9396, %v7881
  %v9461 = vsel %vm2869, %v9397, %v7883
  %v9462 = vsel %vm2869, %v9398, %v7885
  %v9463 = vsel %vm2869, %v9399, %v7887
  %v9464 = vsel %vm2869, %v9400, %v7889
  %v9465 = vsel %vm2869, %v9401, %v7891
  %v9466 = vsel %vm2869, %v9402, %v7893
  %v9467 = vsel %vm2869, %v9403, %v7895
  %v9468 = vsel %vm2869, %v9404, %v7897
  %v9469 = vsel %vm2869, %v9405, %v7899
  %v9470 = vsel %vm2869, %v9406, %v7901
  %v9471 = vsel %vm2869, %v9407, %v7903
  %v9472 = vsel %vm2869, %v9408, %v7905
  %v9473 = vsel %vm2869, %v9409, %v7907
  %v9474 = vsel %vm2869, %v9410, %v7909
  %v9475 = vsel %vm2869, %v9411, %v7911
  %v9476 = vsel %vm2869, %v9412, %v7913
  %v9477 = vsel %vm2869, %v9413, %v7915
  %v9478 = vsel %vm2869, %v9414, %v7917
  %v9479 = vsel %vm2869, %v9415, %v7919
  %v9480 = vsel %vm2869, %v9416, %v7921
  %v9481 = vsel %vm2869, %v9417, %v7923
  %v9482 = vsel %vm2869, %v9418, %v7925
  %v9483 = vsel %vm2869, %v9419, %v7927
  %v9484 = vsel %vm2869, %v9420, %v7929
  %v9485 = vsel %vm2869, %v9421, %v7931
  %v9486 = vsel %vm2869, %v9422, %v7933
  %v9487 = vsel %vm2869, %v9423, %v7935
  %v9488 = vsel %vm2869, %v9424, %v7937
  %v9489 = vsel %vm2869, %v9425, %v7939
  %v9490 = vsel %vm2869, %v9426, %v7941
  %v9491 = vsel %vm2869, %v9427, %v7943
  %v9492 = vsel %vm2869, %v9428, %v7945
  %v9493 = vsel %vm2869, %v9429, %v7947
  %v9494 = vsel %vm2869, %v9430, %v7949
  %v9495 = vsel %vm2869, %v9431, %v7951
  %v9496 = vsel %vm2869, %v9432, %v7953
  %v9497 = vsel %vm2869, %v9433, %v7955
  %v9498 = vsel %vm2869, %v9434, %v7957
  %v9499 = vsel %vm2869, %v9435, %v7959
  %v9500 = vsel %vm2869, %v9436, %v7961
  %v9501 = vsel %vm2869, %v9437, %v7963
  %v9502 = vsel %vm2869, %v9438, %v7965
  %v9503 = vsel %vm2869, %v9439, %v7967
  %v9504 = vsel %vm2934, %v9440, %v8097
  %v9505 = vsel %vm2934, %v9441, %v8099
  %v9506 = vsel %vm2934, %v9442, %v8101
  %v9507 = vsel %vm2934, %v9443, %v8103
  %v9508 = vsel %vm2934, %v9444, %v8105
  %v9509 = vsel %vm2934, %v9445, %v8107
  %v9510 = vsel %vm2934, %v9446, %v8109
  %v9511 = vsel %vm2934, %v9447, %v8111
  %v9512 = vsel %vm2934, %v9448, %v8113
  %v9513 = vsel %vm2934, %v9449, %v8115
  %v9514 = vsel %vm2934, %v9450, %v8117
  %v9515 = vsel %vm2934, %v9451, %v8119
  %v9516 = vsel %vm2934, %v9452, %v8121
  %v9517 = vsel %vm2934, %v9453, %v8123
  %v9518 = vsel %vm2934, %v9454, %v8125
  %v9519 = vsel %vm2934, %v9455, %v8127
  %v9520 = vsel %vm2934, %v9456, %v8129
  %v9521 = vsel %vm2934, %v9457, %v8131
  %v9522 = vsel %vm2934, %v9458, %v8133
  %v9523 = vsel %vm2934, %v9459, %v8135
  %v9524 = vsel %vm2934, %v9460, %v8137
  %v9525 = vsel %vm2934, %v9461, %v8139
  %v9526 = vsel %vm2934, %v9462, %v8141
  %v9527 = vsel %vm2934, %v9463, %v8143
  %v9528 = vsel %vm2934, %v9464, %v8145
  %v9529 = vsel %vm2934, %v9465, %v8147
  %v9530 = vsel %vm2934, %v9466, %v8149
  %v9531 = vsel %vm2934, %v9467, %v8151
  %v9532 = vsel %vm2934, %v9468, %v8153
  %v9533 = vsel %vm2934, %v9469, %v8155
  %v9534 = vsel %vm2934, %v9470, %v8157
  %v9535 = vsel %vm2934, %v9471, %v8159
  %v9536 = vsel %vm2934, %v9472, %v8161
  %v9537 = vsel %vm2934, %v9473, %v8163
  %v9538 = vsel %vm2934, %v9474, %v8165
  %v9539 = vsel %vm2934, %v9475, %v8167
  %v9540 = vsel %vm2934, %v9476, %v8169
  %v9541 = vsel %vm2934, %v9477, %v8171
  %v9542 = vsel %vm2934, %v9478, %v8173
  %v9543 = vsel %vm2934, %v9479, %v8175
  %v9544 = vsel %vm2934, %v9480, %v8177
  %v9545 = vsel %vm2934, %v9481, %v8179
  %v9546 = vsel %vm2934, %v9482, %v8181
  %v9547 = vsel %vm2934, %v9483, %v8183
  %v9548 = vsel %vm2934, %v9484, %v8185
  %v9549 = vsel %vm2934, %v9485, %v8187
  %v9550 = vsel %vm2934, %v9486, %v8189
  %v9551 = vsel %vm2934, %v9487, %v8191
  %v9552 = vsel %vm2934, %v9488, %v8193
  %v9553 = vsel %vm2934, %v9489, %v8195
  %v9554 = vsel %vm2934, %v9490, %v8197
  %v9555 = vsel %vm2934, %v9491, %v8199
  %v9556 = vsel %vm2934, %v9492, %v8201
  %v9557 = vsel %vm2934, %v9493, %v8203
  %v9558 = vsel %vm2934, %v9494, %v8205
  %v9559 = vsel %vm2934, %v9495, %v8207
  %v9560 = vsel %vm2934, %v9496, %v8209
  %v9561 = vsel %vm2934, %v9497, %v8211
  %v9562 = vsel %vm2934, %v9498, %v8213
  %v9563 = vsel %vm2934, %v9499, %v8215
  %v9564 = vsel %vm2934, %v9500, %v8217
  %v9565 = vsel %vm2934, %v9501, %v8219
  %v9566 = vsel %vm2934, %v9502, %v8221
  %v9567 = vsel %vm2934, %v9503, %v8223
  %v9568 = vsel %vm2999, %v9504, %v8353
  %v9569 = vsel %vm2999, %v9505, %v8355
  %v9570 = vsel %vm2999, %v9506, %v8357
  %v9571 = vsel %vm2999, %v9507, %v8359
  %v9572 = vsel %vm2999, %v9508, %v8361
  %v9573 = vsel %vm2999, %v9509, %v8363
  %v9574 = vsel %vm2999, %v9510, %v8365
  %v9575 = vsel %vm2999, %v9511, %v8367
  %v9576 = vsel %vm2999, %v9512, %v8369
  %v9577 = vsel %vm2999, %v9513, %v8371
  %v9578 = vsel %vm2999, %v9514, %v8373
  %v9579 = vsel %vm2999, %v9515, %v8375
  %v9580 = vsel %vm2999, %v9516, %v8377
  %v9581 = vsel %vm2999, %v9517, %v8379
  %v9582 = vsel %vm2999, %v9518, %v8381
  %v9583 = vsel %vm2999, %v9519, %v8383
  %v9584 = vsel %vm2999, %v9520, %v8385
  %v9585 = vsel %vm2999, %v9521, %v8387
  %v9586 = vsel %vm2999, %v9522, %v8389
  %v9587 = vsel %vm2999, %v9523, %v8391
  %v9588 = vsel %vm2999, %v9524, %v8393
  %v9589 = vsel %vm2999, %v9525, %v8395
  %v9590 = vsel %vm2999, %v9526, %v8397
  %v9591 = vsel %vm2999, %v9527, %v8399
  %v9592 = vsel %vm2999, %v9528, %v8401
  %v9593 = vsel %vm2999, %v9529, %v8403
  %v9594 = vsel %vm2999, %v9530, %v8405
  %v9595 = vsel %vm2999, %v9531, %v8407
  %v9596 = vsel %vm2999, %v9532, %v8409
  %v9597 = vsel %vm2999, %v9533, %v8411
  %v9598 = vsel %vm2999, %v9534, %v8413
  %v9599 = vsel %vm2999, %v9535, %v8415
  %v9600 = vsel %vm2999, %v9536, %v8417
  %v9601 = vsel %vm2999, %v9537, %v8419
  %v9602 = vsel %vm2999, %v9538, %v8421
  %v9603 = vsel %vm2999, %v9539, %v8423
  %v9604 = vsel %vm2999, %v9540, %v8425
  %v9605 = vsel %vm2999, %v9541, %v8427
  %v9606 = vsel %vm2999, %v9542, %v8429
  %v9607 = vsel %vm2999, %v9543, %v8431
  %v9608 = vsel %vm2999, %v9544, %v8433
  %v9609 = vsel %vm2999, %v9545, %v8435
  %v9610 = vsel %vm2999, %v9546, %v8437
  %v9611 = vsel %vm2999, %v9547, %v8439
  %v9612 = vsel %vm2999, %v9548, %v8441
  %v9613 = vsel %vm2999, %v9549, %v8443
  %v9614 = vsel %vm2999, %v9550, %v8445
  %v9615 = vsel %vm2999, %v9551, %v8447
  %v9616 = vsel %vm2999, %v9552, %v8449
  %v9617 = vsel %vm2999, %v9553, %v8451
  %v9618 = vsel %vm2999, %v9554, %v8453
  %v9619 = vsel %vm2999, %v9555, %v8455
  %v9620 = vsel %vm2999, %v9556, %v8457
  %v9621 = vsel %vm2999, %v9557, %v8459
  %v9622 = vsel %vm2999, %v9558, %v8461
  %v9623 = vsel %vm2999, %v9559, %v8463
  %v9624 = vsel %vm2999, %v9560, %v8465
  %v9625 = vsel %vm2999, %v9561, %v8467
  %v9626 = vsel %vm2999, %v9562, %v8469
  %v9627 = vsel %vm2999, %v9563, %v8471
  %v9628 = vsel %vm2999, %v9564, %v8473
  %v9629 = vsel %vm2999, %v9565, %v8475
  %v9630 = vsel %vm2999, %v9566, %v8477
  %v9631 = vsel %vm2999, %v9567, %v8479
  %v9632 = vsel %vm3064, %v9568, %v8609
  %v9633 = vsel %vm3064, %v9569, %v8611
  %v9634 = vsel %vm3064, %v9570, %v8613
  %v9635 = vsel %vm3064, %v9571, %v8615
  %v9636 = vsel %vm3064, %v9572, %v8617
  %v9637 = vsel %vm3064, %v9573, %v8619
  %v9638 = vsel %vm3064, %v9574, %v8621
  %v9639 = vsel %vm3064, %v9575, %v8623
  %v9640 = vsel %vm3064, %v9576, %v8625
  %v9641 = vsel %vm3064, %v9577, %v8627
  %v9642 = vsel %vm3064, %v9578, %v8629
  %v9643 = vsel %vm3064, %v9579, %v8631
  %v9644 = vsel %vm3064, %v9580, %v8633
  %v9645 = vsel %vm3064, %v9581, %v8635
  %v9646 = vsel %vm3064, %v9582, %v8637
  %v9647 = vsel %vm3064, %v9583, %v8639
  %v9648 = vsel %vm3064, %v9584, %v8641
  %v9649 = vsel %vm3064, %v9585, %v8643
  %v9650 = vsel %vm3064, %v9586, %v8645
  %v9651 = vsel %vm3064, %v9587, %v8647
  %v9652 = vsel %vm3064, %v9588, %v8649
  %v9653 = vsel %vm3064, %v9589, %v8651
  %v9654 = vsel %vm3064, %v9590, %v8653
  %v9655 = vsel %vm3064, %v9591, %v8655
  %v9656 = vsel %vm3064, %v9592, %v8657
  %v9657 = vsel %vm3064, %v9593, %v8659
  %v9658 = vsel %vm3064, %v9594, %v8661
  %v9659 = vsel %vm3064, %v9595, %v8663
  %v9660 = vsel %vm3064, %v9596, %v8665
  %v9661 = vsel %vm3064, %v9597, %v8667
  %v9662 = vsel %vm3064, %v9598, %v8669
  %v9663 = vsel %vm3064, %v9599, %v8671
  %v9664 = vsel %vm3064, %v9600, %v8673
  %v9665 = vsel %vm3064, %v9601, %v8675
  %v9666 = vsel %vm3064, %v9602, %v8677
  %v9667 = vsel %vm3064, %v9603, %v8679
  %v9668 = vsel %vm3064, %v9604, %v8681
  %v9669 = vsel %vm3064, %v9605, %v8683
  %v9670 = vsel %vm3064, %v9606, %v8685
  %v9671 = vsel %vm3064, %v9607, %v8687
  %v9672 = vsel %vm3064, %v9608, %v8689
  %v9673 = vsel %vm3064, %v9609, %v8691
  %v9674 = vsel %vm3064, %v9610, %v8693
  %v9675 = vsel %vm3064, %v9611, %v8695
  %v9676 = vsel %vm3064, %v9612, %v8697
  %v9677 = vsel %vm3064, %v9613, %v8699
  %v9678 = vsel %vm3064, %v9614, %v8701
  %v9679 = vsel %vm3064, %v9615, %v8703
  %v9680 = vsel %vm3064, %v9616, %v8705
  %v9681 = vsel %vm3064, %v9617, %v8707
  %v9682 = vsel %vm3064, %v9618, %v8709
  %v9683 = vsel %vm3064, %v9619, %v8711
  %v9684 = vsel %vm3064, %v9620, %v8713
  %v9685 = vsel %vm3064, %v9621, %v8715
  %v9686 = vsel %vm3064, %v9622, %v8717
  %v9687 = vsel %vm3064, %v9623, %v8719
  %v9688 = vsel %vm3064, %v9624, %v8721
  %v9689 = vsel %vm3064, %v9625, %v8723
  %v9690 = vsel %vm3064, %v9626, %v8725
  %v9691 = vsel %vm3064, %v9627, %v8727
  %v9692 = vsel %vm3064, %v9628, %v8729
  %v9693 = vsel %vm3064, %v9629, %v8731
  %v9694 = vsel %vm3064, %v9630, %v8733
  %v9695 = vsel %vm3064, %v9631, %v8735
  %v9696 = vsel %vm3129, %v9632, %v8865
  %v9697 = vsel %vm3129, %v9633, %v8867
  %v9698 = vsel %vm3129, %v9634, %v8869
  %v9699 = vsel %vm3129, %v9635, %v8871
  %v9700 = vsel %vm3129, %v9636, %v8873
  %v9701 = vsel %vm3129, %v9637, %v8875
  %v9702 = vsel %vm3129, %v9638, %v8877
  %v9703 = vsel %vm3129, %v9639, %v8879
  %v9704 = vsel %vm3129, %v9640, %v8881
  %v9705 = vsel %vm3129, %v9641, %v8883
  %v9706 = vsel %vm3129, %v9642, %v8885
  %v9707 = vsel %vm3129, %v9643, %v8887
  %v9708 = vsel %vm3129, %v9644, %v8889
  %v9709 = vsel %vm3129, %v9645, %v8891
  %v9710 = vsel %vm3129, %v9646, %v8893
  %v9711 = vsel %vm3129, %v9647, %v8895
  %v9712 = vsel %vm3129, %v9648, %v8897
  %v9713 = vsel %vm3129, %v9649, %v8899
  %v9714 = vsel %vm3129, %v9650, %v8901
  %v9715 = vsel %vm3129, %v9651, %v8903
  %v9716 = vsel %vm3129, %v9652, %v8905
  %v9717 = vsel %vm3129, %v9653, %v8907
  %v9718 = vsel %vm3129, %v9654, %v8909
  %v9719 = vsel %vm3129, %v9655, %v8911
  %v9720 = vsel %vm3129, %v9656, %v8913
  %v9721 = vsel %vm3129, %v9657, %v8915
  %v9722 = vsel %vm3129, %v9658, %v8917
  %v9723 = vsel %vm3129, %v9659, %v8919
  %v9724 = vsel %vm3129, %v9660, %v8921
  %v9725 = vsel %vm3129, %v9661, %v8923
  %v9726 = vsel %vm3129, %v9662, %v8925
  %v9727 = vsel %vm3129, %v9663, %v8927
  %v9728 = vsel %vm3129, %v9664, %v8929
  %v9729 = vsel %vm3129, %v9665, %v8931
  %v9730 = vsel %vm3129, %v9666, %v8933
  %v9731 = vsel %vm3129, %v9667, %v8935
  %v9732 = vsel %vm3129, %v9668, %v8937
  %v9733 = vsel %vm3129, %v9669, %v8939
  %v9734 = vsel %vm3129, %v9670, %v8941
  %v9735 = vsel %vm3129, %v9671, %v8943
  %v9736 = vsel %vm3129, %v9672, %v8945
  %v9737 = vsel %vm3129, %v9673, %v8947
  %v9738 = vsel %vm3129, %v9674, %v8949
  %v9739 = vsel %vm3129, %v9675, %v8951
  %v9740 = vsel %vm3129, %v9676, %v8953
  %v9741 = vsel %vm3129, %v9677, %v8955
  %v9742 = vsel %vm3129, %v9678, %v8957
  %v9743 = vsel %vm3129, %v9679, %v8959
  %v9744 = vsel %vm3129, %v9680, %v8961
  %v9745 = vsel %vm3129, %v9681, %v8963
  %v9746 = vsel %vm3129, %v9682, %v8965
  %v9747 = vsel %vm3129, %v9683, %v8967
  %v9748 = vsel %vm3129, %v9684, %v8969
  %v9749 = vsel %vm3129, %v9685, %v8971
  %v9750 = vsel %vm3129, %v9686, %v8973
  %v9751 = vsel %vm3129, %v9687, %v8975
  %v9752 = vsel %vm3129, %v9688, %v8977
  %v9753 = vsel %vm3129, %v9689, %v8979
  %v9754 = vsel %vm3129, %v9690, %v8981
  %v9755 = vsel %vm3129, %v9691, %v8983
  %v9756 = vsel %vm3129, %v9692, %v8985
  %v9757 = vsel %vm3129, %v9693, %v8987
  %v9758 = vsel %vm3129, %v9694, %v8989
  %v9759 = vsel %vm3129, %v9695, %v8991
  %v9760 = vsel %vm3194, %v9696, %v9121
  %v9761 = vsel %vm3194, %v9697, %v9123
  %v9762 = vsel %vm3194, %v9698, %v9125
  %v9763 = vsel %vm3194, %v9699, %v9127
  %v9764 = vsel %vm3194, %v9700, %v9129
  %v9765 = vsel %vm3194, %v9701, %v9131
  %v9766 = vsel %vm3194, %v9702, %v9133
  %v9767 = vsel %vm3194, %v9703, %v9135
  %v9768 = vsel %vm3194, %v9704, %v9137
  %v9769 = vsel %vm3194, %v9705, %v9139
  %v9770 = vsel %vm3194, %v9706, %v9141
  %v9771 = vsel %vm3194, %v9707, %v9143
  %v9772 = vsel %vm3194, %v9708, %v9145
  %v9773 = vsel %vm3194, %v9709, %v9147
  %v9774 = vsel %vm3194, %v9710, %v9149
  %v9775 = vsel %vm3194, %v9711, %v9151
  %v9776 = vsel %vm3194, %v9712, %v9153
  %v9777 = vsel %vm3194, %v9713, %v9155
  %v9778 = vsel %vm3194, %v9714, %v9157
  %v9779 = vsel %vm3194, %v9715, %v9159
  %v9780 = vsel %vm3194, %v9716, %v9161
  %v9781 = vsel %vm3194, %v9717, %v9163
  %v9782 = vsel %vm3194, %v9718, %v9165
  %v9783 = vsel %vm3194, %v9719, %v9167
  %v9784 = vsel %vm3194, %v9720, %v9169
  %v9785 = vsel %vm3194, %v9721, %v9171
  %v9786 = vsel %vm3194, %v9722, %v9173
  %v9787 = vsel %vm3194, %v9723, %v9175
  %v9788 = vsel %vm3194, %v9724, %v9177
  %v9789 = vsel %vm3194, %v9725, %v9179
  %v9790 = vsel %vm3194, %v9726, %v9181
  %v9791 = vsel %vm3194, %v9727, %v9183
  %v9792 = vsel %vm3194, %v9728, %v9185
  %v9793 = vsel %vm3194, %v9729, %v9187
  %v9794 = vsel %vm3194, %v9730, %v9189
  %v9795 = vsel %vm3194, %v9731, %v9191
  %v9796 = vsel %vm3194, %v9732, %v9193
  %v9797 = vsel %vm3194, %v9733, %v9195
  %v9798 = vsel %vm3194, %v9734, %v9197
  %v9799 = vsel %vm3194, %v9735, %v9199
  %v9800 = vsel %vm3194, %v9736, %v9201
  %v9801 = vsel %vm3194, %v9737, %v9203
  %v9802 = vsel %vm3194, %v9738, %v9205
  %v9803 = vsel %vm3194, %v9739, %v9207
  %v9804 = vsel %vm3194, %v9740, %v9209
  %v9805 = vsel %vm3194, %v9741, %v9211
  %v9806 = vsel %vm3194, %v9742, %v9213
  %v9807 = vsel %vm3194, %v9743, %v9215
  %v9808 = vsel %vm3194, %v9744, %v9217
  %v9809 = vsel %vm3194, %v9745, %v9219
  %v9810 = vsel %vm3194, %v9746, %v9221
  %v9811 = vsel %vm3194, %v9747, %v9223
  %v9812 = vsel %vm3194, %v9748, %v9225
  %v9813 = vsel %vm3194, %v9749, %v9227
  %v9814 = vsel %vm3194, %v9750, %v9229
  %v9815 = vsel %vm3194, %v9751, %v9231
  %v9816 = vsel %vm3194, %v9752, %v9233
  %v9817 = vsel %vm3194, %v9753, %v9235
  %v9818 = vsel %vm3194, %v9754, %v9237
  %v9819 = vsel %vm3194, %v9755, %v9239
  %v9820 = vsel %vm3194, %v9756, %v9241
  %v9821 = vsel %vm3194, %v9757, %v9243
  %v9822 = vsel %vm3194, %v9758, %v9245
  %v9823 = vsel %vm3194, %v9759, %v9247
  %v9824 = vld [vmem:[%s4] sm:$0xff]
  %v9825 = vld [vmem:[%s4 + $0x8] sm:$0xff]
  %v9826 = vld [vmem:[%s4 + $0x10] sm:$0xff]
  %v9827 = vld [vmem:[%s4 + $0x18] sm:$0xff]
  %v9828 = vld [vmem:[%s4 + $0x20] sm:$0xf]
  %v9830 = vsel %vm3264, %v9760, 0
  %v9833 = vsel %vm3264, %v9761, 0
  %v9836 = vsel %vm3264, %v9762, 0
  %v9839 = vsel %vm3264, %v9763, 0
  %v9842 = vsel %vm3264, %v9764, 0
  %v9845 = vsel %vm3264, %v9765, 0
  %v9848 = vsel %vm3264, %v9766, 0
  %v9851 = vsel %vm3264, %v9767, 0
  %v9854 = vsel %vm3264, %v9768, 0
  %v9857 = vsel %vm3264, %v9769, 0
  %v9860 = vsel %vm3264, %v9770, 0
  %v9863 = vsel %vm3264, %v9771, 0
  %v9866 = vsel %vm3264, %v9772, 0
  %v9869 = vsel %vm3264, %v9773, 0
  %v9872 = vsel %vm3264, %v9774, 0
  %v9875 = vsel %vm3264, %v9775, 0
  %v9878 = vsel %vm3264, %v9776, 0
  %v9881 = vsel %vm3264, %v9777, 0
  %v9884 = vsel %vm3264, %v9778, 0
  %v9887 = vsel %vm3264, %v9779, 0
  %v9890 = vsel %vm3264, %v9780, 0
  %v9893 = vsel %vm3264, %v9781, 0
  %v9896 = vsel %vm3264, %v9782, 0
  %v9899 = vsel %vm3264, %v9783, 0
  %v9902 = vsel %vm3264, %v9784, 0
  %v9905 = vsel %vm3264, %v9785, 0
  %v9908 = vsel %vm3264, %v9786, 0
  %v9911 = vsel %vm3264, %v9787, 0
  %v9914 = vsel %vm3264, %v9788, 0
  %v9917 = vsel %vm3264, %v9789, 0
  %v9920 = vsel %vm3264, %v9790, 0
  %v9923 = vsel %vm3264, %v9791, 0
  %v9926 = vsel %vm3264, %v9792, 0
  %v9929 = vsel %vm3264, %v9793, 0
  %v9932 = vsel %vm3264, %v9794, 0
  %v9935 = vsel %vm3264, %v9795, 0
  %v9938 = vsel %vm3264, %v9796, 0
  %v9941 = vsel %vm3264, %v9797, 0
  %v9944 = vsel %vm3264, %v9798, 0
  %v9947 = vsel %vm3264, %v9799, 0
  %v9950 = vsel %vm3264, %v9800, 0
  %v9953 = vsel %vm3264, %v9801, 0
  %v9956 = vsel %vm3264, %v9802, 0
  %v9959 = vsel %vm3264, %v9803, 0
  %v9962 = vsel %vm3264, %v9804, 0
  %v9965 = vsel %vm3264, %v9805, 0
  %v9968 = vsel %vm3264, %v9806, 0
  %v9971 = vsel %vm3264, %v9807, 0
  %v9974 = vsel %vm3264, %v9808, 0
  %v9977 = vsel %vm3264, %v9809, 0
  %v9980 = vsel %vm3264, %v9810, 0
  %v9983 = vsel %vm3264, %v9811, 0
  %v9986 = vsel %vm3264, %v9812, 0
  %v9989 = vsel %vm3264, %v9813, 0
  %v9992 = vsel %vm3264, %v9814, 0
  %v9995 = vsel %vm3264, %v9815, 0
  %v9998 = vsel %vm3264, %v9816, 0
  %v10001 = vsel %vm3264, %v9817, 0
  %v10004 = vsel %vm3264, %v9818, 0
  %v10007 = vsel %vm3264, %v9819, 0
  %v10010 = vsel %vm3264, %v9820, 0
  %v10013 = vsel %vm3264, %v9821, 0
  %v10016 = vsel %vm3264, %v9822, 0
  %v10019 = vsel %vm3264, %v9823, 0
  %v10022 = vsel %vm3457, %v9828, 0
  %10024 = vmatpush.msra.mxu0 0.0
  %10025 = vmatpush.msra.mxu0 0.0
  %10026 = vmatpush.msra.mxu0 0.0
  %10027 = vmatpush.msra.mxu0 0.0
  %10028 = vmatpush.msra.mxu0 0.0
  %10029 = vmatpush.msra.mxu0 0.0
  %10030 = vmatpush.msra.mxu0 0.0
  %10031 = vmatpush.msra.mxu0 0.0
  %10032 = vmatpush.msra.mxu0 0.0
  %10033 = vmatpush.msra.mxu0 0.0
  %10034 = vmatpush.msra.mxu0 0.0
  %10035 = vmatpush.msra.mxu0 %v10022
  %10036 = vmatpush.msra.mxu0 %v9827
  %10037 = vmatpush.msra.mxu0 %v9826
  %10038 = vmatpush.msra.mxu0 %v9825
  %10039 = vmatpush.msra.mxu0 %v9824
  %10040 = vmatmul.f32.gmra.mxu0 %v9830
  %v10041 = vpop.f32.mrf.mxu0
  %v10042 = vadd.f32 0.0, %v10041
  %10043 = vmatmul.f32.gmra.mxu0 %v9833
  %v10044 = vpop.f32.mrf.mxu0
  %v10045 = vadd.f32 0.0, %v10044
  %10046 = vmatmul.f32.gmra.mxu0 %v9836
  %v10047 = vpop.f32.mrf.mxu0
  %v10048 = vadd.f32 0.0, %v10047
  %10049 = vmatmul.f32.gmra.mxu0 %v9839
  %v10050 = vpop.f32.mrf.mxu0
  %v10051 = vadd.f32 0.0, %v10050
  %10052 = vmatmul.f32.gmra.mxu0 %v9842
  %v10053 = vpop.f32.mrf.mxu0
  %v10054 = vadd.f32 0.0, %v10053
  %10055 = vmatmul.f32.gmra.mxu0 %v9845
  %v10056 = vpop.f32.mrf.mxu0
  %v10057 = vadd.f32 0.0, %v10056
  %10058 = vmatmul.f32.gmra.mxu0 %v9848
  %v10059 = vpop.f32.mrf.mxu0
  %v10060 = vadd.f32 0.0, %v10059
  %10061 = vmatmul.f32.gmra.mxu0 %v9851
  %v10062 = vpop.f32.mrf.mxu0
  %v10063 = vadd.f32 0.0, %v10062
  %10064 = vmatmul.f32.gmra.mxu0 %v9854
  %v10065 = vpop.f32.mrf.mxu0
  %v10066 = vadd.f32 0.0, %v10065
  %10067 = vmatmul.f32.gmra.mxu0 %v9857
  %v10068 = vpop.f32.mrf.mxu0
  %v10069 = vadd.f32 0.0, %v10068
  %10070 = vmatmul.f32.gmra.mxu0 %v9860
  %v10071 = vpop.f32.mrf.mxu0
  %v10072 = vadd.f32 0.0, %v10071
  %10073 = vmatmul.f32.gmra.mxu0 %v9863
  %v10074 = vpop.f32.mrf.mxu0
  %v10075 = vadd.f32 0.0, %v10074
  %10076 = vmatmul.f32.gmra.mxu0 %v9866
  %v10077 = vpop.f32.mrf.mxu0
  %v10078 = vadd.f32 0.0, %v10077
  %10079 = vmatmul.f32.gmra.mxu0 %v9869
  %v10080 = vpop.f32.mrf.mxu0
  %v10081 = vadd.f32 0.0, %v10080
  %10082 = vmatmul.f32.gmra.mxu0 %v9872
  %v10083 = vpop.f32.mrf.mxu0
  %v10084 = vadd.f32 0.0, %v10083
  %10085 = vmatmul.f32.gmra.mxu0 %v9875
  %v10086 = vpop.f32.mrf.mxu0
  %v10087 = vadd.f32 0.0, %v10086
  %10088 = vmatmul.f32.gmra.mxu0 %v9878
  %v10089 = vpop.f32.mrf.mxu0
  %v10090 = vadd.f32 0.0, %v10089
  %10091 = vmatmul.f32.gmra.mxu0 %v9881
  %v10092 = vpop.f32.mrf.mxu0
  %v10093 = vadd.f32 0.0, %v10092
  %10094 = vmatmul.f32.gmra.mxu0 %v9884
  %v10095 = vpop.f32.mrf.mxu0
  %v10096 = vadd.f32 0.0, %v10095
  %10097 = vmatmul.f32.gmra.mxu0 %v9887
  %v10098 = vpop.f32.mrf.mxu0
  %v10099 = vadd.f32 0.0, %v10098
  %10100 = vmatmul.f32.gmra.mxu0 %v9890
  %v10101 = vpop.f32.mrf.mxu0
  %v10102 = vadd.f32 0.0, %v10101
  %10103 = vmatmul.f32.gmra.mxu0 %v9893
  %v10104 = vpop.f32.mrf.mxu0
  %v10105 = vadd.f32 0.0, %v10104
  %10106 = vmatmul.f32.gmra.mxu0 %v9896
  %v10107 = vpop.f32.mrf.mxu0
  %v10108 = vadd.f32 0.0, %v10107
  %10109 = vmatmul.f32.gmra.mxu0 %v9899
  %v10110 = vpop.f32.mrf.mxu0
  %v10111 = vadd.f32 0.0, %v10110
  %10112 = vmatmul.f32.gmra.mxu0 %v9902
  %v10113 = vpop.f32.mrf.mxu0
  %v10114 = vadd.f32 0.0, %v10113
  %10115 = vmatmul.f32.gmra.mxu0 %v9905
  %v10116 = vpop.f32.mrf.mxu0
  %v10117 = vadd.f32 0.0, %v10116
  %10118 = vmatmul.f32.gmra.mxu0 %v9908
  %v10119 = vpop.f32.mrf.mxu0
  %v10120 = vadd.f32 0.0, %v10119
  %10121 = vmatmul.f32.gmra.mxu0 %v9911
  %v10122 = vpop.f32.mrf.mxu0
  %v10123 = vadd.f32 0.0, %v10122
  %10124 = vmatmul.f32.gmra.mxu0 %v9914
  %v10125 = vpop.f32.mrf.mxu0
  %v10126 = vadd.f32 0.0, %v10125
  %10127 = vmatmul.f32.gmra.mxu0 %v9917
  %v10128 = vpop.f32.mrf.mxu0
  %v10129 = vadd.f32 0.0, %v10128
  %10130 = vmatmul.f32.gmra.mxu0 %v9920
  %v10131 = vpop.f32.mrf.mxu0
  %v10132 = vadd.f32 0.0, %v10131
  %10133 = vmatmul.f32.gmra.mxu0 %v9923
  %v10134 = vpop.f32.mrf.mxu0
  %v10135 = vadd.f32 0.0, %v10134
  %10136 = vmatmul.f32.gmra.mxu0 %v9926
  %v10137 = vpop.f32.mrf.mxu0
  %v10138 = vadd.f32 0.0, %v10137
  %10139 = vmatmul.f32.gmra.mxu0 %v9929
  %v10140 = vpop.f32.mrf.mxu0
  %v10141 = vadd.f32 0.0, %v10140
  %10142 = vmatmul.f32.gmra.mxu0 %v9932
  %v10143 = vpop.f32.mrf.mxu0
  %v10144 = vadd.f32 0.0, %v10143
  %10145 = vmatmul.f32.gmra.mxu0 %v9935
  %v10146 = vpop.f32.mrf.mxu0
  %v10147 = vadd.f32 0.0, %v10146
  %10148 = vmatmul.f32.gmra.mxu0 %v9938
  %v10149 = vpop.f32.mrf.mxu0
  %v10150 = vadd.f32 0.0, %v10149
  %10151 = vmatmul.f32.gmra.mxu0 %v9941
  %v10152 = vpop.f32.mrf.mxu0
  %v10153 = vadd.f32 0.0, %v10152
  %10154 = vmatmul.f32.gmra.mxu0 %v9944
  %v10155 = vpop.f32.mrf.mxu0
  %v10156 = vadd.f32 0.0, %v10155
  %10157 = vmatmul.f32.gmra.mxu0 %v9947
  %v10158 = vpop.f32.mrf.mxu0
  %v10159 = vadd.f32 0.0, %v10158
  %10160 = vmatmul.f32.gmra.mxu0 %v9950
  %v10161 = vpop.f32.mrf.mxu0
  %v10162 = vadd.f32 0.0, %v10161
  %10163 = vmatmul.f32.gmra.mxu0 %v9953
  %v10164 = vpop.f32.mrf.mxu0
  %v10165 = vadd.f32 0.0, %v10164
  %10166 = vmatmul.f32.gmra.mxu0 %v9956
  %v10167 = vpop.f32.mrf.mxu0
  %v10168 = vadd.f32 0.0, %v10167
  %10169 = vmatmul.f32.gmra.mxu0 %v9959
  %v10170 = vpop.f32.mrf.mxu0
  %v10171 = vadd.f32 0.0, %v10170
  %10172 = vmatmul.f32.gmra.mxu0 %v9962
  %v10173 = vpop.f32.mrf.mxu0
  %v10174 = vadd.f32 0.0, %v10173
  %10175 = vmatmul.f32.gmra.mxu0 %v9965
  %v10176 = vpop.f32.mrf.mxu0
  %v10177 = vadd.f32 0.0, %v10176
  %10178 = vmatmul.f32.gmra.mxu0 %v9968
  %v10179 = vpop.f32.mrf.mxu0
  %v10180 = vadd.f32 0.0, %v10179
  %10181 = vmatmul.f32.gmra.mxu0 %v9971
  %v10182 = vpop.f32.mrf.mxu0
  %v10183 = vadd.f32 0.0, %v10182
  %10184 = vmatmul.f32.gmra.mxu0 %v9974
  %v10185 = vpop.f32.mrf.mxu0
  %v10186 = vadd.f32 0.0, %v10185
  %10187 = vmatmul.f32.gmra.mxu0 %v9977
  %v10188 = vpop.f32.mrf.mxu0
  %v10189 = vadd.f32 0.0, %v10188
  %10190 = vmatmul.f32.gmra.mxu0 %v9980
  %v10191 = vpop.f32.mrf.mxu0
  %v10192 = vadd.f32 0.0, %v10191
  %10193 = vmatmul.f32.gmra.mxu0 %v9983
  %v10194 = vpop.f32.mrf.mxu0
  %v10195 = vadd.f32 0.0, %v10194
  %10196 = vmatmul.f32.gmra.mxu0 %v9986
  %v10197 = vpop.f32.mrf.mxu0
  %v10198 = vadd.f32 0.0, %v10197
  %10199 = vmatmul.f32.gmra.mxu0 %v9989
  %v10200 = vpop.f32.mrf.mxu0
  %v10201 = vadd.f32 0.0, %v10200
  %10202 = vmatmul.f32.gmra.mxu0 %v9992
  %v10203 = vpop.f32.mrf.mxu0
  %v10204 = vadd.f32 0.0, %v10203
  %10205 = vmatmul.f32.gmra.mxu0 %v9995
  %v10206 = vpop.f32.mrf.mxu0
  %v10207 = vadd.f32 0.0, %v10206
  %10208 = vmatmul.f32.gmra.mxu0 %v9998
  %v10209 = vpop.f32.mrf.mxu0
  %v10210 = vadd.f32 0.0, %v10209
  %10211 = vmatmul.f32.gmra.mxu0 %v10001
  %v10212 = vpop.f32.mrf.mxu0
  %v10213 = vadd.f32 0.0, %v10212
  %10214 = vmatmul.f32.gmra.mxu0 %v10004
  %v10215 = vpop.f32.mrf.mxu0
  %v10216 = vadd.f32 0.0, %v10215
  %10217 = vmatmul.f32.gmra.mxu0 %v10007
  %v10218 = vpop.f32.mrf.mxu0
  %v10219 = vadd.f32 0.0, %v10218
  %10220 = vmatmul.f32.gmra.mxu0 %v10010
  %v10221 = vpop.f32.mrf.mxu0
  %v10222 = vadd.f32 0.0, %v10221
  %10223 = vmatmul.f32.gmra.mxu0 %v10013
  %v10224 = vpop.f32.mrf.mxu0
  %v10225 = vadd.f32 0.0, %v10224
  %10226 = vmatmul.f32.gmra.mxu0 %v10016
  %v10227 = vpop.f32.mrf.mxu0
  %v10228 = vadd.f32 0.0, %v10227
  %10229 = vmatmul.f32.gmra.mxu0 %v10019
  %v10230 = vpop.f32.mrf.mxu0
  %v10231 = vadd.f32 0.0, %v10230
  %10232 = vdwg.mxu0
  %v10233 = vld [vmem:[%s5] sm:$0x1]
  %v10235 = vperm.slane %v10233, 0
  %v10237 = vmul.f32 %v10042, %v10235
  %v10238 = vmul.f32 %v10045, %v10235
  %v10239 = vmul.f32 %v10048, %v10235
  %v10240 = vmul.f32 %v10051, %v10235
  %v10241 = vmul.f32 %v10054, %v10235
  %v10242 = vmul.f32 %v10057, %v10235
  %v10243 = vmul.f32 %v10060, %v10235
  %v10244 = vmul.f32 %v10063, %v10235
  %v10245 = vmul.f32 %v10066, %v10235
  %v10246 = vmul.f32 %v10069, %v10235
  %v10247 = vmul.f32 %v10072, %v10235
  %v10248 = vmul.f32 %v10075, %v10235
  %v10249 = vmul.f32 %v10078, %v10235
  %v10250 = vmul.f32 %v10081, %v10235
  %v10251 = vmul.f32 %v10084, %v10235
  %v10252 = vmul.f32 %v10087, %v10235
  %v10253 = vmul.f32 %v10090, %v10235
  %v10254 = vmul.f32 %v10093, %v10235
  %v10255 = vmul.f32 %v10096, %v10235
  %v10256 = vmul.f32 %v10099, %v10235
  %v10257 = vmul.f32 %v10102, %v10235
  %v10258 = vmul.f32 %v10105, %v10235
  %v10259 = vmul.f32 %v10108, %v10235
  %v10260 = vmul.f32 %v10111, %v10235
  %v10261 = vmul.f32 %v10114, %v10235
  %v10262 = vmul.f32 %v10117, %v10235
  %v10263 = vmul.f32 %v10120, %v10235
  %v10264 = vmul.f32 %v10123, %v10235
  %v10265 = vmul.f32 %v10126, %v10235
  %v10266 = vmul.f32 %v10129, %v10235
  %v10267 = vmul.f32 %v10132, %v10235
  %v10268 = vmul.f32 %v10135, %v10235
  %v10269 = vmul.f32 %v10138, %v10235
  %v10270 = vmul.f32 %v10141, %v10235
  %v10271 = vmul.f32 %v10144, %v10235
  %v10272 = vmul.f32 %v10147, %v10235
  %v10273 = vmul.f32 %v10150, %v10235
  %v10274 = vmul.f32 %v10153, %v10235
  %v10275 = vmul.f32 %v10156, %v10235
  %v10276 = vmul.f32 %v10159, %v10235
  %v10277 = vmul.f32 %v10162, %v10235
  %v10278 = vmul.f32 %v10165, %v10235
  %v10279 = vmul.f32 %v10168, %v10235
  %v10280 = vmul.f32 %v10171, %v10235
  %v10281 = vmul.f32 %v10174, %v10235
  %v10282 = vmul.f32 %v10177, %v10235
  %v10283 = vmul.f32 %v10180, %v10235
  %v10284 = vmul.f32 %v10183, %v10235
  %v10285 = vmul.f32 %v10186, %v10235
  %v10286 = vmul.f32 %v10189, %v10235
  %v10287 = vmul.f32 %v10192, %v10235
  %v10288 = vmul.f32 %v10195, %v10235
  %v10289 = vmul.f32 %v10198, %v10235
  %v10290 = vmul.f32 %v10201, %v10235
  %v10291 = vmul.f32 %v10204, %v10235
  %v10292 = vmul.f32 %v10207, %v10235
  %v10293 = vmul.f32 %v10210, %v10235
  %v10294 = vmul.f32 %v10213, %v10235
  %v10295 = vmul.f32 %v10216, %v10235
  %v10296 = vmul.f32 %v10219, %v10235
  %v10297 = vmul.f32 %v10222, %v10235
  %v10298 = vmul.f32 %v10225, %v10235
  %v10299 = vmul.f32 %v10228, %v10235
  %v10300 = vmul.f32 %v10231, %v10235
  %v10301 = vld [vmem:[%s6] sm:$0x1]
  %v10303 = vperm.slane %v10301, 0
  %v10305 = vadd.f32 %v10237, %v10303
  %v10306 = vadd.f32 %v10238, %v10303
  %v10307 = vadd.f32 %v10239, %v10303
  %v10308 = vadd.f32 %v10240, %v10303
  %v10309 = vadd.f32 %v10241, %v10303
  %v10310 = vadd.f32 %v10242, %v10303
  %v10311 = vadd.f32 %v10243, %v10303
  %v10312 = vadd.f32 %v10244, %v10303
  %v10313 = vadd.f32 %v10245, %v10303
  %v10314 = vadd.f32 %v10246, %v10303
  %v10315 = vadd.f32 %v10247, %v10303
  %v10316 = vadd.f32 %v10248, %v10303
  %v10317 = vadd.f32 %v10249, %v10303
  %v10318 = vadd.f32 %v10250, %v10303
  %v10319 = vadd.f32 %v10251, %v10303
  %v10320 = vadd.f32 %v10252, %v10303
  %v10321 = vadd.f32 %v10253, %v10303
  %v10322 = vadd.f32 %v10254, %v10303
  %v10323 = vadd.f32 %v10255, %v10303
  %v10324 = vadd.f32 %v10256, %v10303
  %v10325 = vadd.f32 %v10257, %v10303
  %v10326 = vadd.f32 %v10258, %v10303
  %v10327 = vadd.f32 %v10259, %v10303
  %v10328 = vadd.f32 %v10260, %v10303
  %v10329 = vadd.f32 %v10261, %v10303
  %v10330 = vadd.f32 %v10262, %v10303
  %v10331 = vadd.f32 %v10263, %v10303
  %v10332 = vadd.f32 %v10264, %v10303
  %v10333 = vadd.f32 %v10265, %v10303
  %v10334 = vadd.f32 %v10266, %v10303
  %v10335 = vadd.f32 %v10267, %v10303
  %v10336 = vadd.f32 %v10268, %v10303
  %v10337 = vadd.f32 %v10269, %v10303
  %v10338 = vadd.f32 %v10270, %v10303
  %v10339 = vadd.f32 %v10271, %v10303
  %v10340 = vadd.f32 %v10272, %v10303
  %v10341 = vadd.f32 %v10273, %v10303
  %v10342 = vadd.f32 %v10274, %v10303
  %v10343 = vadd.f32 %v10275, %v10303
  %v10344 = vadd.f32 %v10276, %v10303
  %v10345 = vadd.f32 %v10277, %v10303
  %v10346 = vadd.f32 %v10278, %v10303
  %v10347 = vadd.f32 %v10279, %v10303
  %v10348 = vadd.f32 %v10280, %v10303
  %v10349 = vadd.f32 %v10281, %v10303
  %v10350 = vadd.f32 %v10282, %v10303
  %v10351 = vadd.f32 %v10283, %v10303
  %v10352 = vadd.f32 %v10284, %v10303
  %v10353 = vadd.f32 %v10285, %v10303
  %v10354 = vadd.f32 %v10286, %v10303
  %v10355 = vadd.f32 %v10287, %v10303
  %v10356 = vadd.f32 %v10288, %v10303
  %v10357 = vadd.f32 %v10289, %v10303
  %v10358 = vadd.f32 %v10290, %v10303
  %v10359 = vadd.f32 %v10291, %v10303
  %v10360 = vadd.f32 %v10292, %v10303
  %v10361 = vadd.f32 %v10293, %v10303
  %v10362 = vadd.f32 %v10294, %v10303
  %v10363 = vadd.f32 %v10295, %v10303
  %v10364 = vadd.f32 %v10296, %v10303
  %v10365 = vadd.f32 %v10297, %v10303
  %v10366 = vadd.f32 %v10298, %v10303
  %v10367 = vadd.f32 %v10299, %v10303
  %v10368 = vadd.f32 %v10300, %v10303
  %v10369 = vmul.f32 %v10305, 0.5
  %v10370 = vmul.f32 %v10306, 0.5
  %v10371 = vmul.f32 %v10307, 0.5
  %v10372 = vmul.f32 %v10308, 0.5
  %v10373 = vmul.f32 %v10309, 0.5
  %v10374 = vmul.f32 %v10310, 0.5
  %v10375 = vmul.f32 %v10311, 0.5
  %v10376 = vmul.f32 %v10312, 0.5
  %v10377 = vmul.f32 %v10313, 0.5
  %v10378 = vmul.f32 %v10314, 0.5
  %v10379 = vmul.f32 %v10315, 0.5
  %v10380 = vmul.f32 %v10316, 0.5
  %v10381 = vmul.f32 %v10317, 0.5
  %v10382 = vmul.f32 %v10318, 0.5
  %v10383 = vmul.f32 %v10319, 0.5
  %v10384 = vmul.f32 %v10320, 0.5
  %v10385 = vmul.f32 %v10321, 0.5
  %v10386 = vmul.f32 %v10322, 0.5
  %v10387 = vmul.f32 %v10323, 0.5
  %v10388 = vmul.f32 %v10324, 0.5
  %v10389 = vmul.f32 %v10325, 0.5
  %v10390 = vmul.f32 %v10326, 0.5
  %v10391 = vmul.f32 %v10327, 0.5
  %v10392 = vmul.f32 %v10328, 0.5
  %v10393 = vmul.f32 %v10329, 0.5
  %v10394 = vmul.f32 %v10330, 0.5
  %v10395 = vmul.f32 %v10331, 0.5
  %v10396 = vmul.f32 %v10332, 0.5
  %v10397 = vmul.f32 %v10333, 0.5
  %v10398 = vmul.f32 %v10334, 0.5
  %v10399 = vmul.f32 %v10335, 0.5
  %v10400 = vmul.f32 %v10336, 0.5
  %v10401 = vmul.f32 %v10337, 0.5
  %v10402 = vmul.f32 %v10338, 0.5
  %v10403 = vmul.f32 %v10339, 0.5
  %v10404 = vmul.f32 %v10340, 0.5
  %v10405 = vmul.f32 %v10341, 0.5
  %v10406 = vmul.f32 %v10342, 0.5
  %v10407 = vmul.f32 %v10343, 0.5
  %v10408 = vmul.f32 %v10344, 0.5
  %v10409 = vmul.f32 %v10345, 0.5
  %v10410 = vmul.f32 %v10346, 0.5
  %v10411 = vmul.f32 %v10347, 0.5
  %v10412 = vmul.f32 %v10348, 0.5
  %v10413 = vmul.f32 %v10349, 0.5
  %v10414 = vmul.f32 %v10350, 0.5
  %v10415 = vmul.f32 %v10351, 0.5
  %v10416 = vmul.f32 %v10352, 0.5
  %v10417 = vmul.f32 %v10353, 0.5
  %v10418 = vmul.f32 %v10354, 0.5
  %v10419 = vmul.f32 %v10355, 0.5
  %v10420 = vmul.f32 %v10356, 0.5
  %v10421 = vmul.f32 %v10357, 0.5
  %v10422 = vmul.f32 %v10358, 0.5
  %v10423 = vmul.f32 %v10359, 0.5
  %v10424 = vmul.f32 %v10360, 0.5
  %v10425 = vmul.f32 %v10361, 0.5
  %v10426 = vmul.f32 %v10362, 0.5
  %v10427 = vmul.f32 %v10363, 0.5
  %v10428 = vmul.f32 %v10364, 0.5
  %v10429 = vmul.f32 %v10365, 0.5
  %v10430 = vmul.f32 %v10366, 0.5
  %v10431 = vmul.f32 %v10367, 0.5
  %v10432 = vmul.f32 %v10368, 0.5
  %v10433 = vmul.f32 %v10305, 0.70710677
  %v10434 = vmul.f32 %v10306, 0.70710677
  %v10435 = vmul.f32 %v10307, 0.70710677
  %v10436 = vmul.f32 %v10308, 0.70710677
  %v10437 = vmul.f32 %v10309, 0.70710677
  %v10438 = vmul.f32 %v10310, 0.70710677
  %v10439 = vmul.f32 %v10311, 0.70710677
  %v10440 = vmul.f32 %v10312, 0.70710677
  %v10441 = vmul.f32 %v10313, 0.70710677
  %v10442 = vmul.f32 %v10314, 0.70710677
  %v10443 = vmul.f32 %v10315, 0.70710677
  %v10444 = vmul.f32 %v10316, 0.70710677
  %v10445 = vmul.f32 %v10317, 0.70710677
  %v10446 = vmul.f32 %v10318, 0.70710677
  %v10447 = vmul.f32 %v10319, 0.70710677
  %v10448 = vmul.f32 %v10320, 0.70710677
  %v10449 = vmul.f32 %v10321, 0.70710677
  %v10450 = vmul.f32 %v10322, 0.70710677
  %v10451 = vmul.f32 %v10323, 0.70710677
  %v10452 = vmul.f32 %v10324, 0.70710677
  %v10453 = vmul.f32 %v10325, 0.70710677
  %v10454 = vmul.f32 %v10326, 0.70710677
  %v10455 = vmul.f32 %v10327, 0.70710677
  %v10456 = vmul.f32 %v10328, 0.70710677
  %v10457 = vmul.f32 %v10329, 0.70710677
  %v10458 = vmul.f32 %v10330, 0.70710677
  %v10459 = vmul.f32 %v10331, 0.70710677
  %v10460 = vmul.f32 %v10332, 0.70710677
  %v10461 = vmul.f32 %v10333, 0.70710677
  %v10462 = vmul.f32 %v10334, 0.70710677
  %v10463 = vmul.f32 %v10335, 0.70710677
  %v10464 = vmul.f32 %v10336, 0.70710677
  %v10465 = vmul.f32 %v10337, 0.70710677
  %v10466 = vmul.f32 %v10338, 0.70710677
  %v10467 = vmul.f32 %v10339, 0.70710677
  %v10468 = vmul.f32 %v10340, 0.70710677
  %v10469 = vmul.f32 %v10341, 0.70710677
  %v10470 = vmul.f32 %v10342, 0.70710677
  %v10471 = vmul.f32 %v10343, 0.70710677
  %v10472 = vmul.f32 %v10344, 0.70710677
  %v10473 = vmul.f32 %v10345, 0.70710677
  %v10474 = vmul.f32 %v10346, 0.70710677
  %v10475 = vmul.f32 %v10347, 0.70710677
  %v10476 = vmul.f32 %v10348, 0.70710677
  %v10477 = vmul.f32 %v10349, 0.70710677
  %v10478 = vmul.f32 %v10350, 0.70710677
  %v10479 = vmul.f32 %v10351, 0.70710677
  %v10480 = vmul.f32 %v10352, 0.70710677
  %v10481 = vmul.f32 %v10353, 0.70710677
  %v10482 = vmul.f32 %v10354, 0.70710677
  %v10483 = vmul.f32 %v10355, 0.70710677
  %v10484 = vmul.f32 %v10356, 0.70710677
  %v10485 = vmul.f32 %v10357, 0.70710677
  %v10486 = vmul.f32 %v10358, 0.70710677
  %v10487 = vmul.f32 %v10359, 0.70710677
  %v10488 = vmul.f32 %v10360, 0.70710677
  %v10489 = vmul.f32 %v10361, 0.70710677
  %v10490 = vmul.f32 %v10362, 0.70710677
  %v10491 = vmul.f32 %v10363, 0.70710677
  %v10492 = vmul.f32 %v10364, 0.70710677
  %v10493 = vmul.f32 %v10365, 0.70710677
  %v10494 = vmul.f32 %v10366, 0.70710677
  %v10495 = vmul.f32 %v10367, 0.70710677
  %v10496 = vmul.f32 %v10368, 0.70710677
  %v10497 = vmul.f32 %v10433, %v10433
  %v10498 = vmin.f32 16.0, %v10497
  %v10499 = vmul.f32 %v10498, 2.1237322e-06
  %v10500 = vadd.f32 %v10499, 0.00028619796
  %v10501 = vmul.f32 %v10498, %v10500
  %v10502 = vadd.f32 %v10501, 0.0036580483
  %v10503 = vmul.f32 %v10498, %v10502
  %v10504 = vadd.f32 %v10503, 0.05243302
  %v10505 = vmul.f32 %v10498, %v10504
  %v10506 = vadd.f32 %v10505, 0.18741608
  %v10507 = vmul.f32 %v10498, %v10506
  %v10508 = vadd.f32 %v10507, 1.1283791
  %v10509 = vmul.f32 %v10433, %v10508
  %v10510 = vmul.f32 %v10498, 3.8918573e-05
  %v10511 = vadd.f32 %v10510, 0.001143296
  %v10512 = vmul.f32 %v10498, %v10511
  %v10513 = vadd.f32 %v10512, 0.014752088
  %v10514 = vmul.f32 %v10498, %v10513
  %v10515 = vadd.f32 %v10514, 0.112945676
  %v10516 = vmul.f32 %v10498, %v10515
  %v10517 = vadd.f32 %v10516, 0.4994258
  %v10518 = vmul.f32 %v10498, %v10517
  %v10519 = vadd.f32 %v10518, 1.0
  %v10520 = vrcp.pop %v10519
  %v10521 = vmul.f32 %v10519, %v10520
  %v10522 = vsub.f32 1.0, %v10521
  %v10523 = vmul.f32 %v10520, %v10522
  %v10524 = vadd.f32 %v10520, %v10523
  %vm10525 = vweird.f32 %v10519
  %vm10526 = vweird.f32 %v10520
  %vm10527 = vmor %vm10525, %vm10526
  %v10528 = vsel %vm10527, %v10520, %v10524
  %v10529 = vand.u32 2147483647, %v10519
  %vm10530 = vcmp.eq.f32.partialorder %v10529, 8.507059e+37
  %v10531 = vand.u32 %v10519, 2147483648
  %v10532 = vor.u32 1.1754944e-38, %v10531
  %v10533 = vsel %vm10530, %v10532, %v10528
  %v10534 = vmul.f32 %v10509, %v10533
  %v10535 = vmin.f32 %v10534, 1.0
  %v10536 = vmax.f32 %v10535, -1.0
  %v10537 = vmul.f32 %v10434, %v10434
  %v10538 = vmin.f32 16.0, %v10537
  %v10539 = vmul.f32 %v10538, 2.1237322e-06
  %v10540 = vadd.f32 %v10539, 0.00028619796
  %v10541 = vmul.f32 %v10538, %v10540
  %v10542 = vadd.f32 %v10541, 0.0036580483
  %v10543 = vmul.f32 %v10538, %v10542
  %v10544 = vadd.f32 %v10543, 0.05243302
  %v10545 = vmul.f32 %v10538, %v10544
  %v10546 = vadd.f32 %v10545, 0.18741608
  %v10547 = vmul.f32 %v10538, %v10546
  %v10548 = vadd.f32 %v10547, 1.1283791
  %v10549 = vmul.f32 %v10434, %v10548
  %v10550 = vmul.f32 %v10538, 3.8918573e-05
  %v10551 = vadd.f32 %v10550, 0.001143296
  %v10552 = vmul.f32 %v10538, %v10551
  %v10553 = vadd.f32 %v10552, 0.014752088
  %v10554 = vmul.f32 %v10538, %v10553
  %v10555 = vadd.f32 %v10554, 0.112945676
  %v10556 = vmul.f32 %v10538, %v10555
  %v10557 = vadd.f32 %v10556, 0.4994258
  %v10558 = vmul.f32 %v10538, %v10557
  %v10559 = vadd.f32 %v10558, 1.0
  %v10560 = vrcp.pop %v10559
  %v10561 = vmul.f32 %v10559, %v10560
  %v10562 = vsub.f32 1.0, %v10561
  %v10563 = vmul.f32 %v10560, %v10562
  %v10564 = vadd.f32 %v10560, %v10563
  %vm10565 = vweird.f32 %v10559
  %vm10566 = vweird.f32 %v10560
  %vm10567 = vmor %vm10565, %vm10566
  %v10568 = vsel %vm10567, %v10560, %v10564
  %v10569 = vand.u32 2147483647, %v10559
  %vm10570 = vcmp.eq.f32.partialorder %v10569, 8.507059e+37
  %v10571 = vand.u32 %v10559, 2147483648
  %v10572 = vor.u32 1.1754944e-38, %v10571
  %v10573 = vsel %vm10570, %v10572, %v10568
  %v10574 = vmul.f32 %v10549, %v10573
  %v10575 = vmin.f32 %v10574, 1.0
  %v10576 = vmax.f32 %v10575, -1.0
  %v10577 = vmul.f32 %v10435, %v10435
  %v10578 = vmin.f32 16.0, %v10577
  %v10579 = vmul.f32 %v10578, 2.1237322e-06
  %v10580 = vadd.f32 %v10579, 0.00028619796
  %v10581 = vmul.f32 %v10578, %v10580
  %v10582 = vadd.f32 %v10581, 0.0036580483
  %v10583 = vmul.f32 %v10578, %v10582
  %v10584 = vadd.f32 %v10583, 0.05243302
  %v10585 = vmul.f32 %v10578, %v10584
  %v10586 = vadd.f32 %v10585, 0.18741608
  %v10587 = vmul.f32 %v10578, %v10586
  %v10588 = vadd.f32 %v10587, 1.1283791
  %v10589 = vmul.f32 %v10435, %v10588
  %v10590 = vmul.f32 %v10578, 3.8918573e-05
  %v10591 = vadd.f32 %v10590, 0.001143296
  %v10592 = vmul.f32 %v10578, %v10591
  %v10593 = vadd.f32 %v10592, 0.014752088
  %v10594 = vmul.f32 %v10578, %v10593
  %v10595 = vadd.f32 %v10594, 0.112945676
  %v10596 = vmul.f32 %v10578, %v10595
  %v10597 = vadd.f32 %v10596, 0.4994258
  %v10598 = vmul.f32 %v10578, %v10597
  %v10599 = vadd.f32 %v10598, 1.0
  %v10600 = vrcp.pop %v10599
  %v10601 = vmul.f32 %v10599, %v10600
  %v10602 = vsub.f32 1.0, %v10601
  %v10603 = vmul.f32 %v10600, %v10602
  %v10604 = vadd.f32 %v10600, %v10603
  %vm10605 = vweird.f32 %v10599
  %vm10606 = vweird.f32 %v10600
  %vm10607 = vmor %vm10605, %vm10606
  %v10608 = vsel %vm10607, %v10600, %v10604
  %v10609 = vand.u32 2147483647, %v10599
  %vm10610 = vcmp.eq.f32.partialorder %v10609, 8.507059e+37
  %v10611 = vand.u32 %v10599, 2147483648
  %v10612 = vor.u32 1.1754944e-38, %v10611
  %v10613 = vsel %vm10610, %v10612, %v10608
  %v10614 = vmul.f32 %v10589, %v10613
  %v10615 = vmin.f32 %v10614, 1.0
  %v10616 = vmax.f32 %v10615, -1.0
  %v10617 = vmul.f32 %v10436, %v10436
  %v10618 = vmin.f32 16.0, %v10617
  %v10619 = vmul.f32 %v10618, 2.1237322e-06
  %v10620 = vadd.f32 %v10619, 0.00028619796
  %v10621 = vmul.f32 %v10618, %v10620
  %v10622 = vadd.f32 %v10621, 0.0036580483
  %v10623 = vmul.f32 %v10618, %v10622
  %v10624 = vadd.f32 %v10623, 0.05243302
  %v10625 = vmul.f32 %v10618, %v10624
  %v10626 = vadd.f32 %v10625, 0.18741608
  %v10627 = vmul.f32 %v10618, %v10626
  %v10628 = vadd.f32 %v10627, 1.1283791
  %v10629 = vmul.f32 %v10436, %v10628
  %v10630 = vmul.f32 %v10618, 3.8918573e-05
  %v10631 = vadd.f32 %v10630, 0.001143296
  %v10632 = vmul.f32 %v10618, %v10631
  %v10633 = vadd.f32 %v10632, 0.014752088
  %v10634 = vmul.f32 %v10618, %v10633
  %v10635 = vadd.f32 %v10634, 0.112945676
  %v10636 = vmul.f32 %v10618, %v10635
  %v10637 = vadd.f32 %v10636, 0.4994258
  %v10638 = vmul.f32 %v10618, %v10637
  %v10639 = vadd.f32 %v10638, 1.0
  %v10640 = vrcp.pop %v10639
  %v10641 = vmul.f32 %v10639, %v10640
  %v10642 = vsub.f32 1.0, %v10641
  %v10643 = vmul.f32 %v10640, %v10642
  %v10644 = vadd.f32 %v10640, %v10643
  %vm10645 = vweird.f32 %v10639
  %vm10646 = vweird.f32 %v10640
  %vm10647 = vmor %vm10645, %vm10646
  %v10648 = vsel %vm10647, %v10640, %v10644
  %v10649 = vand.u32 2147483647, %v10639
  %vm10650 = vcmp.eq.f32.partialorder %v10649, 8.507059e+37
  %v10651 = vand.u32 %v10639, 2147483648
  %v10652 = vor.u32 1.1754944e-38, %v10651
  %v10653 = vsel %vm10650, %v10652, %v10648
  %v10654 = vmul.f32 %v10629, %v10653
  %v10655 = vmin.f32 %v10654, 1.0
  %v10656 = vmax.f32 %v10655, -1.0
  %v10657 = vmul.f32 %v10437, %v10437
  %v10658 = vmin.f32 16.0, %v10657
  %v10659 = vmul.f32 %v10658, 2.1237322e-06
  %v10660 = vadd.f32 %v10659, 0.00028619796
  %v10661 = vmul.f32 %v10658, %v10660
  %v10662 = vadd.f32 %v10661, 0.0036580483
  %v10663 = vmul.f32 %v10658, %v10662
  %v10664 = vadd.f32 %v10663, 0.05243302
  %v10665 = vmul.f32 %v10658, %v10664
  %v10666 = vadd.f32 %v10665, 0.18741608
  %v10667 = vmul.f32 %v10658, %v10666
  %v10668 = vadd.f32 %v10667, 1.1283791
  %v10669 = vmul.f32 %v10437, %v10668
  %v10670 = vmul.f32 %v10658, 3.8918573e-05
  %v10671 = vadd.f32 %v10670, 0.001143296
  %v10672 = vmul.f32 %v10658, %v10671
  %v10673 = vadd.f32 %v10672, 0.014752088
  %v10674 = vmul.f32 %v10658, %v10673
  %v10675 = vadd.f32 %v10674, 0.112945676
  %v10676 = vmul.f32 %v10658, %v10675
  %v10677 = vadd.f32 %v10676, 0.4994258
  %v10678 = vmul.f32 %v10658, %v10677
  %v10679 = vadd.f32 %v10678, 1.0
  %v10680 = vrcp.pop %v10679
  %v10681 = vmul.f32 %v10679, %v10680
  %v10682 = vsub.f32 1.0, %v10681
  %v10683 = vmul.f32 %v10680, %v10682
  %v10684 = vadd.f32 %v10680, %v10683
  %vm10685 = vweird.f32 %v10679
  %vm10686 = vweird.f32 %v10680
  %vm10687 = vmor %vm10685, %vm10686
  %v10688 = vsel %vm10687, %v10680, %v10684
  %v10689 = vand.u32 2147483647, %v10679
  %vm10690 = vcmp.eq.f32.partialorder %v10689, 8.507059e+37
  %v10691 = vand.u32 %v10679, 2147483648
  %v10692 = vor.u32 1.1754944e-38, %v10691
  %v10693 = vsel %vm10690, %v10692, %v10688
  %v10694 = vmul.f32 %v10669, %v10693
  %v10695 = vmin.f32 %v10694, 1.0
  %v10696 = vmax.f32 %v10695, -1.0
  %v10697 = vmul.f32 %v10438, %v10438
  %v10698 = vmin.f32 16.0, %v10697
  %v10699 = vmul.f32 %v10698, 2.1237322e-06
  %v10700 = vadd.f32 %v10699, 0.00028619796
  %v10701 = vmul.f32 %v10698, %v10700
  %v10702 = vadd.f32 %v10701, 0.0036580483
  %v10703 = vmul.f32 %v10698, %v10702
  %v10704 = vadd.f32 %v10703, 0.05243302
  %v10705 = vmul.f32 %v10698, %v10704
  %v10706 = vadd.f32 %v10705, 0.18741608
  %v10707 = vmul.f32 %v10698, %v10706
  %v10708 = vadd.f32 %v10707, 1.1283791
  %v10709 = vmul.f32 %v10438, %v10708
  %v10710 = vmul.f32 %v10698, 3.8918573e-05
  %v10711 = vadd.f32 %v10710, 0.001143296
  %v10712 = vmul.f32 %v10698, %v10711
  %v10713 = vadd.f32 %v10712, 0.014752088
  %v10714 = vmul.f32 %v10698, %v10713
  %v10715 = vadd.f32 %v10714, 0.112945676
  %v10716 = vmul.f32 %v10698, %v10715
  %v10717 = vadd.f32 %v10716, 0.4994258
  %v10718 = vmul.f32 %v10698, %v10717
  %v10719 = vadd.f32 %v10718, 1.0
  %v10720 = vrcp.pop %v10719
  %v10721 = vmul.f32 %v10719, %v10720
  %v10722 = vsub.f32 1.0, %v10721
  %v10723 = vmul.f32 %v10720, %v10722
  %v10724 = vadd.f32 %v10720, %v10723
  %vm10725 = vweird.f32 %v10719
  %vm10726 = vweird.f32 %v10720
  %vm10727 = vmor %vm10725, %vm10726
  %v10728 = vsel %vm10727, %v10720, %v10724
  %v10729 = vand.u32 2147483647, %v10719
  %vm10730 = vcmp.eq.f32.partialorder %v10729, 8.507059e+37
  %v10731 = vand.u32 %v10719, 2147483648
  %v10732 = vor.u32 1.1754944e-38, %v10731
  %v10733 = vsel %vm10730, %v10732, %v10728
  %v10734 = vmul.f32 %v10709, %v10733
  %v10735 = vmin.f32 %v10734, 1.0
  %v10736 = vmax.f32 %v10735, -1.0
  %v10737 = vmul.f32 %v10439, %v10439
  %v10738 = vmin.f32 16.0, %v10737
  %v10739 = vmul.f32 %v10738, 2.1237322e-06
  %v10740 = vadd.f32 %v10739, 0.00028619796
  %v10741 = vmul.f32 %v10738, %v10740
  %v10742 = vadd.f32 %v10741, 0.0036580483
  %v10743 = vmul.f32 %v10738, %v10742
  %v10744 = vadd.f32 %v10743, 0.05243302
  %v10745 = vmul.f32 %v10738, %v10744
  %v10746 = vadd.f32 %v10745, 0.18741608
  %v10747 = vmul.f32 %v10738, %v10746
  %v10748 = vadd.f32 %v10747, 1.1283791
  %v10749 = vmul.f32 %v10439, %v10748
  %v10750 = vmul.f32 %v10738, 3.8918573e-05
  %v10751 = vadd.f32 %v10750, 0.001143296
  %v10752 = vmul.f32 %v10738, %v10751
  %v10753 = vadd.f32 %v10752, 0.014752088
  %v10754 = vmul.f32 %v10738, %v10753
  %v10755 = vadd.f32 %v10754, 0.112945676
  %v10756 = vmul.f32 %v10738, %v10755
  %v10757 = vadd.f32 %v10756, 0.4994258
  %v10758 = vmul.f32 %v10738, %v10757
  %v10759 = vadd.f32 %v10758, 1.0
  %v10760 = vrcp.pop %v10759
  %v10761 = vmul.f32 %v10759, %v10760
  %v10762 = vsub.f32 1.0, %v10761
  %v10763 = vmul.f32 %v10760, %v10762
  %v10764 = vadd.f32 %v10760, %v10763
  %vm10765 = vweird.f32 %v10759
  %vm10766 = vweird.f32 %v10760
  %vm10767 = vmor %vm10765, %vm10766
  %v10768 = vsel %vm10767, %v10760, %v10764
  %v10769 = vand.u32 2147483647, %v10759
  %vm10770 = vcmp.eq.f32.partialorder %v10769, 8.507059e+37
  %v10771 = vand.u32 %v10759, 2147483648
  %v10772 = vor.u32 1.1754944e-38, %v10771
  %v10773 = vsel %vm10770, %v10772, %v10768
  %v10774 = vmul.f32 %v10749, %v10773
  %v10775 = vmin.f32 %v10774, 1.0
  %v10776 = vmax.f32 %v10775, -1.0
  %v10777 = vmul.f32 %v10440, %v10440
  %v10778 = vmin.f32 16.0, %v10777
  %v10779 = vmul.f32 %v10778, 2.1237322e-06
  %v10780 = vadd.f32 %v10779, 0.00028619796
  %v10781 = vmul.f32 %v10778, %v10780
  %v10782 = vadd.f32 %v10781, 0.0036580483
  %v10783 = vmul.f32 %v10778, %v10782
  %v10784 = vadd.f32 %v10783, 0.05243302
  %v10785 = vmul.f32 %v10778, %v10784
  %v10786 = vadd.f32 %v10785, 0.18741608
  %v10787 = vmul.f32 %v10778, %v10786
  %v10788 = vadd.f32 %v10787, 1.1283791
  %v10789 = vmul.f32 %v10440, %v10788
  %v10790 = vmul.f32 %v10778, 3.8918573e-05
  %v10791 = vadd.f32 %v10790, 0.001143296
  %v10792 = vmul.f32 %v10778, %v10791
  %v10793 = vadd.f32 %v10792, 0.014752088
  %v10794 = vmul.f32 %v10778, %v10793
  %v10795 = vadd.f32 %v10794, 0.112945676
  %v10796 = vmul.f32 %v10778, %v10795
  %v10797 = vadd.f32 %v10796, 0.4994258
  %v10798 = vmul.f32 %v10778, %v10797
  %v10799 = vadd.f32 %v10798, 1.0
  %v10800 = vrcp.pop %v10799
  %v10801 = vmul.f32 %v10799, %v10800
  %v10802 = vsub.f32 1.0, %v10801
  %v10803 = vmul.f32 %v10800, %v10802
  %v10804 = vadd.f32 %v10800, %v10803
  %vm10805 = vweird.f32 %v10799
  %vm10806 = vweird.f32 %v10800
  %vm10807 = vmor %vm10805, %vm10806
  %v10808 = vsel %vm10807, %v10800, %v10804
  %v10809 = vand.u32 2147483647, %v10799
  %vm10810 = vcmp.eq.f32.partialorder %v10809, 8.507059e+37
  %v10811 = vand.u32 %v10799, 2147483648
  %v10812 = vor.u32 1.1754944e-38, %v10811
  %v10813 = vsel %vm10810, %v10812, %v10808
  %v10814 = vmul.f32 %v10789, %v10813
  %v10815 = vmin.f32 %v10814, 1.0
  %v10816 = vmax.f32 %v10815, -1.0
  %v10817 = vmul.f32 %v10441, %v10441
  %v10818 = vmin.f32 16.0, %v10817
  %v10819 = vmul.f32 %v10818, 2.1237322e-06
  %v10820 = vadd.f32 %v10819, 0.00028619796
  %v10821 = vmul.f32 %v10818, %v10820
  %v10822 = vadd.f32 %v10821, 0.0036580483
  %v10823 = vmul.f32 %v10818, %v10822
  %v10824 = vadd.f32 %v10823, 0.05243302
  %v10825 = vmul.f32 %v10818, %v10824
  %v10826 = vadd.f32 %v10825, 0.18741608
  %v10827 = vmul.f32 %v10818, %v10826
  %v10828 = vadd.f32 %v10827, 1.1283791
  %v10829 = vmul.f32 %v10441, %v10828
  %v10830 = vmul.f32 %v10818, 3.8918573e-05
  %v10831 = vadd.f32 %v10830, 0.001143296
  %v10832 = vmul.f32 %v10818, %v10831
  %v10833 = vadd.f32 %v10832, 0.014752088
  %v10834 = vmul.f32 %v10818, %v10833
  %v10835 = vadd.f32 %v10834, 0.112945676
  %v10836 = vmul.f32 %v10818, %v10835
  %v10837 = vadd.f32 %v10836, 0.4994258
  %v10838 = vmul.f32 %v10818, %v10837
  %v10839 = vadd.f32 %v10838, 1.0
  %v10840 = vrcp.pop %v10839
  %v10841 = vmul.f32 %v10839, %v10840
  %v10842 = vsub.f32 1.0, %v10841
  %v10843 = vmul.f32 %v10840, %v10842
  %v10844 = vadd.f32 %v10840, %v10843
  %vm10845 = vweird.f32 %v10839
  %vm10846 = vweird.f32 %v10840
  %vm10847 = vmor %vm10845, %vm10846
  %v10848 = vsel %vm10847, %v10840, %v10844
  %v10849 = vand.u32 2147483647, %v10839
  %vm10850 = vcmp.eq.f32.partialorder %v10849, 8.507059e+37
  %v10851 = vand.u32 %v10839, 2147483648
  %v10852 = vor.u32 1.1754944e-38, %v10851
  %v10853 = vsel %vm10850, %v10852, %v10848
  %v10854 = vmul.f32 %v10829, %v10853
  %v10855 = vmin.f32 %v10854, 1.0
  %v10856 = vmax.f32 %v10855, -1.0
  %v10857 = vmul.f32 %v10442, %v10442
  %v10858 = vmin.f32 16.0, %v10857
  %v10859 = vmul.f32 %v10858, 2.1237322e-06
  %v10860 = vadd.f32 %v10859, 0.00028619796
  %v10861 = vmul.f32 %v10858, %v10860
  %v10862 = vadd.f32 %v10861, 0.0036580483
  %v10863 = vmul.f32 %v10858, %v10862
  %v10864 = vadd.f32 %v10863, 0.05243302
  %v10865 = vmul.f32 %v10858, %v10864
  %v10866 = vadd.f32 %v10865, 0.18741608
  %v10867 = vmul.f32 %v10858, %v10866
  %v10868 = vadd.f32 %v10867, 1.1283791
  %v10869 = vmul.f32 %v10442, %v10868
  %v10870 = vmul.f32 %v10858, 3.8918573e-05
  %v10871 = vadd.f32 %v10870, 0.001143296
  %v10872 = vmul.f32 %v10858, %v10871
  %v10873 = vadd.f32 %v10872, 0.014752088
  %v10874 = vmul.f32 %v10858, %v10873
  %v10875 = vadd.f32 %v10874, 0.112945676
  %v10876 = vmul.f32 %v10858, %v10875
  %v10877 = vadd.f32 %v10876, 0.4994258
  %v10878 = vmul.f32 %v10858, %v10877
  %v10879 = vadd.f32 %v10878, 1.0
  %v10880 = vrcp.pop %v10879
  %v10881 = vmul.f32 %v10879, %v10880
  %v10882 = vsub.f32 1.0, %v10881
  %v10883 = vmul.f32 %v10880, %v10882
  %v10884 = vadd.f32 %v10880, %v10883
  %vm10885 = vweird.f32 %v10879
  %vm10886 = vweird.f32 %v10880
  %vm10887 = vmor %vm10885, %vm10886
  %v10888 = vsel %vm10887, %v10880, %v10884
  %v10889 = vand.u32 2147483647, %v10879
  %vm10890 = vcmp.eq.f32.partialorder %v10889, 8.507059e+37
  %v10891 = vand.u32 %v10879, 2147483648
  %v10892 = vor.u32 1.1754944e-38, %v10891
  %v10893 = vsel %vm10890, %v10892, %v10888
  %v10894 = vmul.f32 %v10869, %v10893
  %v10895 = vmin.f32 %v10894, 1.0
  %v10896 = vmax.f32 %v10895, -1.0
  %v10897 = vmul.f32 %v10443, %v10443
  %v10898 = vmin.f32 16.0, %v10897
  %v10899 = vmul.f32 %v10898, 2.1237322e-06
  %v10900 = vadd.f32 %v10899, 0.00028619796
  %v10901 = vmul.f32 %v10898, %v10900
  %v10902 = vadd.f32 %v10901, 0.0036580483
  %v10903 = vmul.f32 %v10898, %v10902
  %v10904 = vadd.f32 %v10903, 0.05243302
  %v10905 = vmul.f32 %v10898, %v10904
  %v10906 = vadd.f32 %v10905, 0.18741608
  %v10907 = vmul.f32 %v10898, %v10906
  %v10908 = vadd.f32 %v10907, 1.1283791
  %v10909 = vmul.f32 %v10443, %v10908
  %v10910 = vmul.f32 %v10898, 3.8918573e-05
  %v10911 = vadd.f32 %v10910, 0.001143296
  %v10912 = vmul.f32 %v10898, %v10911
  %v10913 = vadd.f32 %v10912, 0.014752088
  %v10914 = vmul.f32 %v10898, %v10913
  %v10915 = vadd.f32 %v10914, 0.112945676
  %v10916 = vmul.f32 %v10898, %v10915
  %v10917 = vadd.f32 %v10916, 0.4994258
  %v10918 = vmul.f32 %v10898, %v10917
  %v10919 = vadd.f32 %v10918, 1.0
  %v10920 = vrcp.pop %v10919
  %v10921 = vmul.f32 %v10919, %v10920
  %v10922 = vsub.f32 1.0, %v10921
  %v10923 = vmul.f32 %v10920, %v10922
  %v10924 = vadd.f32 %v10920, %v10923
  %vm10925 = vweird.f32 %v10919
  %vm10926 = vweird.f32 %v10920
  %vm10927 = vmor %vm10925, %vm10926
  %v10928 = vsel %vm10927, %v10920, %v10924
  %v10929 = vand.u32 2147483647, %v10919
  %vm10930 = vcmp.eq.f32.partialorder %v10929, 8.507059e+37
  %v10931 = vand.u32 %v10919, 2147483648
  %v10932 = vor.u32 1.1754944e-38, %v10931
  %v10933 = vsel %vm10930, %v10932, %v10928
  %v10934 = vmul.f32 %v10909, %v10933
  %v10935 = vmin.f32 %v10934, 1.0
  %v10936 = vmax.f32 %v10935, -1.0
  %v10937 = vmul.f32 %v10444, %v10444
  %v10938 = vmin.f32 16.0, %v10937
  %v10939 = vmul.f32 %v10938, 2.1237322e-06
  %v10940 = vadd.f32 %v10939, 0.00028619796
  %v10941 = vmul.f32 %v10938, %v10940
  %v10942 = vadd.f32 %v10941, 0.0036580483
  %v10943 = vmul.f32 %v10938, %v10942
  %v10944 = vadd.f32 %v10943, 0.05243302
  %v10945 = vmul.f32 %v10938, %v10944
  %v10946 = vadd.f32 %v10945, 0.18741608
  %v10947 = vmul.f32 %v10938, %v10946
  %v10948 = vadd.f32 %v10947, 1.1283791
  %v10949 = vmul.f32 %v10444, %v10948
  %v10950 = vmul.f32 %v10938, 3.8918573e-05
  %v10951 = vadd.f32 %v10950, 0.001143296
  %v10952 = vmul.f32 %v10938, %v10951
  %v10953 = vadd.f32 %v10952, 0.014752088
  %v10954 = vmul.f32 %v10938, %v10953
  %v10955 = vadd.f32 %v10954, 0.112945676
  %v10956 = vmul.f32 %v10938, %v10955
  %v10957 = vadd.f32 %v10956, 0.4994258
  %v10958 = vmul.f32 %v10938, %v10957
  %v10959 = vadd.f32 %v10958, 1.0
  %v10960 = vrcp.pop %v10959
  %v10961 = vmul.f32 %v10959, %v10960
  %v10962 = vsub.f32 1.0, %v10961
  %v10963 = vmul.f32 %v10960, %v10962
  %v10964 = vadd.f32 %v10960, %v10963
  %vm10965 = vweird.f32 %v10959
  %vm10966 = vweird.f32 %v10960
  %vm10967 = vmor %vm10965, %vm10966
  %v10968 = vsel %vm10967, %v10960, %v10964
  %v10969 = vand.u32 2147483647, %v10959
  %vm10970 = vcmp.eq.f32.partialorder %v10969, 8.507059e+37
  %v10971 = vand.u32 %v10959, 2147483648
  %v10972 = vor.u32 1.1754944e-38, %v10971
  %v10973 = vsel %vm10970, %v10972, %v10968
  %v10974 = vmul.f32 %v10949, %v10973
  %v10975 = vmin.f32 %v10974, 1.0
  %v10976 = vmax.f32 %v10975, -1.0
  %v10977 = vmul.f32 %v10445, %v10445
  %v10978 = vmin.f32 16.0, %v10977
  %v10979 = vmul.f32 %v10978, 2.1237322e-06
  %v10980 = vadd.f32 %v10979, 0.00028619796
  %v10981 = vmul.f32 %v10978, %v10980
  %v10982 = vadd.f32 %v10981, 0.0036580483
  %v10983 = vmul.f32 %v10978, %v10982
  %v10984 = vadd.f32 %v10983, 0.05243302
  %v10985 = vmul.f32 %v10978, %v10984
  %v10986 = vadd.f32 %v10985, 0.18741608
  %v10987 = vmul.f32 %v10978, %v10986
  %v10988 = vadd.f32 %v10987, 1.1283791
  %v10989 = vmul.f32 %v10445, %v10988
  %v10990 = vmul.f32 %v10978, 3.8918573e-05
  %v10991 = vadd.f32 %v10990, 0.001143296
  %v10992 = vmul.f32 %v10978, %v10991
  %v10993 = vadd.f32 %v10992, 0.014752088
  %v10994 = vmul.f32 %v10978, %v10993
  %v10995 = vadd.f32 %v10994, 0.112945676
  %v10996 = vmul.f32 %v10978, %v10995
  %v10997 = vadd.f32 %v10996, 0.4994258
  %v10998 = vmul.f32 %v10978, %v10997
  %v10999 = vadd.f32 %v10998, 1.0
  %v11000 = vrcp.pop %v10999
  %v11001 = vmul.f32 %v10999, %v11000
  %v11002 = vsub.f32 1.0, %v11001
  %v11003 = vmul.f32 %v11000, %v11002
  %v11004 = vadd.f32 %v11000, %v11003
  %vm11005 = vweird.f32 %v10999
  %vm11006 = vweird.f32 %v11000
  %vm11007 = vmor %vm11005, %vm11006
  %v11008 = vsel %vm11007, %v11000, %v11004
  %v11009 = vand.u32 2147483647, %v10999
  %vm11010 = vcmp.eq.f32.partialorder %v11009, 8.507059e+37
  %v11011 = vand.u32 %v10999, 2147483648
  %v11012 = vor.u32 1.1754944e-38, %v11011
  %v11013 = vsel %vm11010, %v11012, %v11008
  %v11014 = vmul.f32 %v10989, %v11013
  %v11015 = vmin.f32 %v11014, 1.0
  %v11016 = vmax.f32 %v11015, -1.0
  %v11017 = vmul.f32 %v10446, %v10446
  %v11018 = vmin.f32 16.0, %v11017
  %v11019 = vmul.f32 %v11018, 2.1237322e-06
  %v11020 = vadd.f32 %v11019, 0.00028619796
  %v11021 = vmul.f32 %v11018, %v11020
  %v11022 = vadd.f32 %v11021, 0.0036580483
  %v11023 = vmul.f32 %v11018, %v11022
  %v11024 = vadd.f32 %v11023, 0.05243302
  %v11025 = vmul.f32 %v11018, %v11024
  %v11026 = vadd.f32 %v11025, 0.18741608
  %v11027 = vmul.f32 %v11018, %v11026
  %v11028 = vadd.f32 %v11027, 1.1283791
  %v11029 = vmul.f32 %v10446, %v11028
  %v11030 = vmul.f32 %v11018, 3.8918573e-05
  %v11031 = vadd.f32 %v11030, 0.001143296
  %v11032 = vmul.f32 %v11018, %v11031
  %v11033 = vadd.f32 %v11032, 0.014752088
  %v11034 = vmul.f32 %v11018, %v11033
  %v11035 = vadd.f32 %v11034, 0.112945676
  %v11036 = vmul.f32 %v11018, %v11035
  %v11037 = vadd.f32 %v11036, 0.4994258
  %v11038 = vmul.f32 %v11018, %v11037
  %v11039 = vadd.f32 %v11038, 1.0
  %v11040 = vrcp.pop %v11039
  %v11041 = vmul.f32 %v11039, %v11040
  %v11042 = vsub.f32 1.0, %v11041
  %v11043 = vmul.f32 %v11040, %v11042
  %v11044 = vadd.f32 %v11040, %v11043
  %vm11045 = vweird.f32 %v11039
  %vm11046 = vweird.f32 %v11040
  %vm11047 = vmor %vm11045, %vm11046
  %v11048 = vsel %vm11047, %v11040, %v11044
  %v11049 = vand.u32 2147483647, %v11039
  %vm11050 = vcmp.eq.f32.partialorder %v11049, 8.507059e+37
  %v11051 = vand.u32 %v11039, 2147483648
  %v11052 = vor.u32 1.1754944e-38, %v11051
  %v11053 = vsel %vm11050, %v11052, %v11048
  %v11054 = vmul.f32 %v11029, %v11053
  %v11055 = vmin.f32 %v11054, 1.0
  %v11056 = vmax.f32 %v11055, -1.0
  %v11057 = vmul.f32 %v10447, %v10447
  %v11058 = vmin.f32 16.0, %v11057
  %v11059 = vmul.f32 %v11058, 2.1237322e-06
  %v11060 = vadd.f32 %v11059, 0.00028619796
  %v11061 = vmul.f32 %v11058, %v11060
  %v11062 = vadd.f32 %v11061, 0.0036580483
  %v11063 = vmul.f32 %v11058, %v11062
  %v11064 = vadd.f32 %v11063, 0.05243302
  %v11065 = vmul.f32 %v11058, %v11064
  %v11066 = vadd.f32 %v11065, 0.18741608
  %v11067 = vmul.f32 %v11058, %v11066
  %v11068 = vadd.f32 %v11067, 1.1283791
  %v11069 = vmul.f32 %v10447, %v11068
  %v11070 = vmul.f32 %v11058, 3.8918573e-05
  %v11071 = vadd.f32 %v11070, 0.001143296
  %v11072 = vmul.f32 %v11058, %v11071
  %v11073 = vadd.f32 %v11072, 0.014752088
  %v11074 = vmul.f32 %v11058, %v11073
  %v11075 = vadd.f32 %v11074, 0.112945676
  %v11076 = vmul.f32 %v11058, %v11075
  %v11077 = vadd.f32 %v11076, 0.4994258
  %v11078 = vmul.f32 %v11058, %v11077
  %v11079 = vadd.f32 %v11078, 1.0
  %v11080 = vrcp.pop %v11079
  %v11081 = vmul.f32 %v11079, %v11080
  %v11082 = vsub.f32 1.0, %v11081
  %v11083 = vmul.f32 %v11080, %v11082
  %v11084 = vadd.f32 %v11080, %v11083
  %vm11085 = vweird.f32 %v11079
  %vm11086 = vweird.f32 %v11080
  %vm11087 = vmor %vm11085, %vm11086
  %v11088 = vsel %vm11087, %v11080, %v11084
  %v11089 = vand.u32 2147483647, %v11079
  %vm11090 = vcmp.eq.f32.partialorder %v11089, 8.507059e+37
  %v11091 = vand.u32 %v11079, 2147483648
  %v11092 = vor.u32 1.1754944e-38, %v11091
  %v11093 = vsel %vm11090, %v11092, %v11088
  %v11094 = vmul.f32 %v11069, %v11093
  %v11095 = vmin.f32 %v11094, 1.0
  %v11096 = vmax.f32 %v11095, -1.0
  %v11097 = vmul.f32 %v10448, %v10448
  %v11098 = vmin.f32 16.0, %v11097
  %v11099 = vmul.f32 %v11098, 2.1237322e-06
  %v11100 = vadd.f32 %v11099, 0.00028619796
  %v11101 = vmul.f32 %v11098, %v11100
  %v11102 = vadd.f32 %v11101, 0.0036580483
  %v11103 = vmul.f32 %v11098, %v11102
  %v11104 = vadd.f32 %v11103, 0.05243302
  %v11105 = vmul.f32 %v11098, %v11104
  %v11106 = vadd.f32 %v11105, 0.18741608
  %v11107 = vmul.f32 %v11098, %v11106
  %v11108 = vadd.f32 %v11107, 1.1283791
  %v11109 = vmul.f32 %v10448, %v11108
  %v11110 = vmul.f32 %v11098, 3.8918573e-05
  %v11111 = vadd.f32 %v11110, 0.001143296
  %v11112 = vmul.f32 %v11098, %v11111
  %v11113 = vadd.f32 %v11112, 0.014752088
  %v11114 = vmul.f32 %v11098, %v11113
  %v11115 = vadd.f32 %v11114, 0.112945676
  %v11116 = vmul.f32 %v11098, %v11115
  %v11117 = vadd.f32 %v11116, 0.4994258
  %v11118 = vmul.f32 %v11098, %v11117
  %v11119 = vadd.f32 %v11118, 1.0
  %v11120 = vrcp.pop %v11119
  %v11121 = vmul.f32 %v11119, %v11120
  %v11122 = vsub.f32 1.0, %v11121
  %v11123 = vmul.f32 %v11120, %v11122
  %v11124 = vadd.f32 %v11120, %v11123
  %vm11125 = vweird.f32 %v11119
  %vm11126 = vweird.f32 %v11120
  %vm11127 = vmor %vm11125, %vm11126
  %v11128 = vsel %vm11127, %v11120, %v11124
  %v11129 = vand.u32 2147483647, %v11119
  %vm11130 = vcmp.eq.f32.partialorder %v11129, 8.507059e+37
  %v11131 = vand.u32 %v11119, 2147483648
  %v11132 = vor.u32 1.1754944e-38, %v11131
  %v11133 = vsel %vm11130, %v11132, %v11128
  %v11134 = vmul.f32 %v11109, %v11133
  %v11135 = vmin.f32 %v11134, 1.0
  %v11136 = vmax.f32 %v11135, -1.0
  %v11137 = vmul.f32 %v10449, %v10449
  %v11138 = vmin.f32 16.0, %v11137
  %v11139 = vmul.f32 %v11138, 2.1237322e-06
  %v11140 = vadd.f32 %v11139, 0.00028619796
  %v11141 = vmul.f32 %v11138, %v11140
  %v11142 = vadd.f32 %v11141, 0.0036580483
  %v11143 = vmul.f32 %v11138, %v11142
  %v11144 = vadd.f32 %v11143, 0.05243302
  %v11145 = vmul.f32 %v11138, %v11144
  %v11146 = vadd.f32 %v11145, 0.18741608
  %v11147 = vmul.f32 %v11138, %v11146
  %v11148 = vadd.f32 %v11147, 1.1283791
  %v11149 = vmul.f32 %v10449, %v11148
  %v11150 = vmul.f32 %v11138, 3.8918573e-05
  %v11151 = vadd.f32 %v11150, 0.001143296
  %v11152 = vmul.f32 %v11138, %v11151
  %v11153 = vadd.f32 %v11152, 0.014752088
  %v11154 = vmul.f32 %v11138, %v11153
  %v11155 = vadd.f32 %v11154, 0.112945676
  %v11156 = vmul.f32 %v11138, %v11155
  %v11157 = vadd.f32 %v11156, 0.4994258
  %v11158 = vmul.f32 %v11138, %v11157
  %v11159 = vadd.f32 %v11158, 1.0
  %v11160 = vrcp.pop %v11159
  %v11161 = vmul.f32 %v11159, %v11160
  %v11162 = vsub.f32 1.0, %v11161
  %v11163 = vmul.f32 %v11160, %v11162
  %v11164 = vadd.f32 %v11160, %v11163
  %vm11165 = vweird.f32 %v11159
  %vm11166 = vweird.f32 %v11160
  %vm11167 = vmor %vm11165, %vm11166
  %v11168 = vsel %vm11167, %v11160, %v11164
  %v11169 = vand.u32 2147483647, %v11159
  %vm11170 = vcmp.eq.f32.partialorder %v11169, 8.507059e+37
  %v11171 = vand.u32 %v11159, 2147483648
  %v11172 = vor.u32 1.1754944e-38, %v11171
  %v11173 = vsel %vm11170, %v11172, %v11168
  %v11174 = vmul.f32 %v11149, %v11173
  %v11175 = vmin.f32 %v11174, 1.0
  %v11176 = vmax.f32 %v11175, -1.0
  %v11177 = vmul.f32 %v10450, %v10450
  %v11178 = vmin.f32 16.0, %v11177
  %v11179 = vmul.f32 %v11178, 2.1237322e-06
  %v11180 = vadd.f32 %v11179, 0.00028619796
  %v11181 = vmul.f32 %v11178, %v11180
  %v11182 = vadd.f32 %v11181, 0.0036580483
  %v11183 = vmul.f32 %v11178, %v11182
  %v11184 = vadd.f32 %v11183, 0.05243302
  %v11185 = vmul.f32 %v11178, %v11184
  %v11186 = vadd.f32 %v11185, 0.18741608
  %v11187 = vmul.f32 %v11178, %v11186
  %v11188 = vadd.f32 %v11187, 1.1283791
  %v11189 = vmul.f32 %v10450, %v11188
  %v11190 = vmul.f32 %v11178, 3.8918573e-05
  %v11191 = vadd.f32 %v11190, 0.001143296
  %v11192 = vmul.f32 %v11178, %v11191
  %v11193 = vadd.f32 %v11192, 0.014752088
  %v11194 = vmul.f32 %v11178, %v11193
  %v11195 = vadd.f32 %v11194, 0.112945676
  %v11196 = vmul.f32 %v11178, %v11195
  %v11197 = vadd.f32 %v11196, 0.4994258
  %v11198 = vmul.f32 %v11178, %v11197
  %v11199 = vadd.f32 %v11198, 1.0
  %v11200 = vrcp.pop %v11199
  %v11201 = vmul.f32 %v11199, %v11200
  %v11202 = vsub.f32 1.0, %v11201
  %v11203 = vmul.f32 %v11200, %v11202
  %v11204 = vadd.f32 %v11200, %v11203
  %vm11205 = vweird.f32 %v11199
  %vm11206 = vweird.f32 %v11200
  %vm11207 = vmor %vm11205, %vm11206
  %v11208 = vsel %vm11207, %v11200, %v11204
  %v11209 = vand.u32 2147483647, %v11199
  %vm11210 = vcmp.eq.f32.partialorder %v11209, 8.507059e+37
  %v11211 = vand.u32 %v11199, 2147483648
  %v11212 = vor.u32 1.1754944e-38, %v11211
  %v11213 = vsel %vm11210, %v11212, %v11208
  %v11214 = vmul.f32 %v11189, %v11213
  %v11215 = vmin.f32 %v11214, 1.0
  %v11216 = vmax.f32 %v11215, -1.0
  %v11217 = vmul.f32 %v10451, %v10451
  %v11218 = vmin.f32 16.0, %v11217
  %v11219 = vmul.f32 %v11218, 2.1237322e-06
  %v11220 = vadd.f32 %v11219, 0.00028619796
  %v11221 = vmul.f32 %v11218, %v11220
  %v11222 = vadd.f32 %v11221, 0.0036580483
  %v11223 = vmul.f32 %v11218, %v11222
  %v11224 = vadd.f32 %v11223, 0.05243302
  %v11225 = vmul.f32 %v11218, %v11224
  %v11226 = vadd.f32 %v11225, 0.18741608
  %v11227 = vmul.f32 %v11218, %v11226
  %v11228 = vadd.f32 %v11227, 1.1283791
  %v11229 = vmul.f32 %v10451, %v11228
  %v11230 = vmul.f32 %v11218, 3.8918573e-05
  %v11231 = vadd.f32 %v11230, 0.001143296
  %v11232 = vmul.f32 %v11218, %v11231
  %v11233 = vadd.f32 %v11232, 0.014752088
  %v11234 = vmul.f32 %v11218, %v11233
  %v11235 = vadd.f32 %v11234, 0.112945676
  %v11236 = vmul.f32 %v11218, %v11235
  %v11237 = vadd.f32 %v11236, 0.4994258
  %v11238 = vmul.f32 %v11218, %v11237
  %v11239 = vadd.f32 %v11238, 1.0
  %v11240 = vrcp.pop %v11239
  %v11241 = vmul.f32 %v11239, %v11240
  %v11242 = vsub.f32 1.0, %v11241
  %v11243 = vmul.f32 %v11240, %v11242
  %v11244 = vadd.f32 %v11240, %v11243
  %vm11245 = vweird.f32 %v11239
  %vm11246 = vweird.f32 %v11240
  %vm11247 = vmor %vm11245, %vm11246
  %v11248 = vsel %vm11247, %v11240, %v11244
  %v11249 = vand.u32 2147483647, %v11239
  %vm11250 = vcmp.eq.f32.partialorder %v11249, 8.507059e+37
  %v11251 = vand.u32 %v11239, 2147483648
  %v11252 = vor.u32 1.1754944e-38, %v11251
  %v11253 = vsel %vm11250, %v11252, %v11248
  %v11254 = vmul.f32 %v11229, %v11253
  %v11255 = vmin.f32 %v11254, 1.0
  %v11256 = vmax.f32 %v11255, -1.0
  %v11257 = vmul.f32 %v10452, %v10452
  %v11258 = vmin.f32 16.0, %v11257
  %v11259 = vmul.f32 %v11258, 2.1237322e-06
  %v11260 = vadd.f32 %v11259, 0.00028619796
  %v11261 = vmul.f32 %v11258, %v11260
  %v11262 = vadd.f32 %v11261, 0.0036580483
  %v11263 = vmul.f32 %v11258, %v11262
  %v11264 = vadd.f32 %v11263, 0.05243302
  %v11265 = vmul.f32 %v11258, %v11264
  %v11266 = vadd.f32 %v11265, 0.18741608
  %v11267 = vmul.f32 %v11258, %v11266
  %v11268 = vadd.f32 %v11267, 1.1283791
  %v11269 = vmul.f32 %v10452, %v11268
  %v11270 = vmul.f32 %v11258, 3.8918573e-05
  %v11271 = vadd.f32 %v11270, 0.001143296
  %v11272 = vmul.f32 %v11258, %v11271
  %v11273 = vadd.f32 %v11272, 0.014752088
  %v11274 = vmul.f32 %v11258, %v11273
  %v11275 = vadd.f32 %v11274, 0.112945676
  %v11276 = vmul.f32 %v11258, %v11275
  %v11277 = vadd.f32 %v11276, 0.4994258
  %v11278 = vmul.f32 %v11258, %v11277
  %v11279 = vadd.f32 %v11278, 1.0
  %v11280 = vrcp.pop %v11279
  %v11281 = vmul.f32 %v11279, %v11280
  %v11282 = vsub.f32 1.0, %v11281
  %v11283 = vmul.f32 %v11280, %v11282
  %v11284 = vadd.f32 %v11280, %v11283
  %vm11285 = vweird.f32 %v11279
  %vm11286 = vweird.f32 %v11280
  %vm11287 = vmor %vm11285, %vm11286
  %v11288 = vsel %vm11287, %v11280, %v11284
  %v11289 = vand.u32 2147483647, %v11279
  %vm11290 = vcmp.eq.f32.partialorder %v11289, 8.507059e+37
  %v11291 = vand.u32 %v11279, 2147483648
  %v11292 = vor.u32 1.1754944e-38, %v11291
  %v11293 = vsel %vm11290, %v11292, %v11288
  %v11294 = vmul.f32 %v11269, %v11293
  %v11295 = vmin.f32 %v11294, 1.0
  %v11296 = vmax.f32 %v11295, -1.0
  %v11297 = vmul.f32 %v10453, %v10453
  %v11298 = vmin.f32 16.0, %v11297
  %v11299 = vmul.f32 %v11298, 2.1237322e-06
  %v11300 = vadd.f32 %v11299, 0.00028619796
  %v11301 = vmul.f32 %v11298, %v11300
  %v11302 = vadd.f32 %v11301, 0.0036580483
  %v11303 = vmul.f32 %v11298, %v11302
  %v11304 = vadd.f32 %v11303, 0.05243302
  %v11305 = vmul.f32 %v11298, %v11304
  %v11306 = vadd.f32 %v11305, 0.18741608
  %v11307 = vmul.f32 %v11298, %v11306
  %v11308 = vadd.f32 %v11307, 1.1283791
  %v11309 = vmul.f32 %v10453, %v11308
  %v11310 = vmul.f32 %v11298, 3.8918573e-05
  %v11311 = vadd.f32 %v11310, 0.001143296
  %v11312 = vmul.f32 %v11298, %v11311
  %v11313 = vadd.f32 %v11312, 0.014752088
  %v11314 = vmul.f32 %v11298, %v11313
  %v11315 = vadd.f32 %v11314, 0.112945676
  %v11316 = vmul.f32 %v11298, %v11315
  %v11317 = vadd.f32 %v11316, 0.4994258
  %v11318 = vmul.f32 %v11298, %v11317
  %v11319 = vadd.f32 %v11318, 1.0
  %v11320 = vrcp.pop %v11319
  %v11321 = vmul.f32 %v11319, %v11320
  %v11322 = vsub.f32 1.0, %v11321
  %v11323 = vmul.f32 %v11320, %v11322
  %v11324 = vadd.f32 %v11320, %v11323
  %vm11325 = vweird.f32 %v11319
  %vm11326 = vweird.f32 %v11320
  %vm11327 = vmor %vm11325, %vm11326
  %v11328 = vsel %vm11327, %v11320, %v11324
  %v11329 = vand.u32 2147483647, %v11319
  %vm11330 = vcmp.eq.f32.partialorder %v11329, 8.507059e+37
  %v11331 = vand.u32 %v11319, 2147483648
  %v11332 = vor.u32 1.1754944e-38, %v11331
  %v11333 = vsel %vm11330, %v11332, %v11328
  %v11334 = vmul.f32 %v11309, %v11333
  %v11335 = vmin.f32 %v11334, 1.0
  %v11336 = vmax.f32 %v11335, -1.0
  %v11337 = vmul.f32 %v10454, %v10454
  %v11338 = vmin.f32 16.0, %v11337
  %v11339 = vmul.f32 %v11338, 2.1237322e-06
  %v11340 = vadd.f32 %v11339, 0.00028619796
  %v11341 = vmul.f32 %v11338, %v11340
  %v11342 = vadd.f32 %v11341, 0.0036580483
  %v11343 = vmul.f32 %v11338, %v11342
  %v11344 = vadd.f32 %v11343, 0.05243302
  %v11345 = vmul.f32 %v11338, %v11344
  %v11346 = vadd.f32 %v11345, 0.18741608
  %v11347 = vmul.f32 %v11338, %v11346
  %v11348 = vadd.f32 %v11347, 1.1283791
  %v11349 = vmul.f32 %v10454, %v11348
  %v11350 = vmul.f32 %v11338, 3.8918573e-05
  %v11351 = vadd.f32 %v11350, 0.001143296
  %v11352 = vmul.f32 %v11338, %v11351
  %v11353 = vadd.f32 %v11352, 0.014752088
  %v11354 = vmul.f32 %v11338, %v11353
  %v11355 = vadd.f32 %v11354, 0.112945676
  %v11356 = vmul.f32 %v11338, %v11355
  %v11357 = vadd.f32 %v11356, 0.4994258
  %v11358 = vmul.f32 %v11338, %v11357
  %v11359 = vadd.f32 %v11358, 1.0
  %v11360 = vrcp.pop %v11359
  %v11361 = vmul.f32 %v11359, %v11360
  %v11362 = vsub.f32 1.0, %v11361
  %v11363 = vmul.f32 %v11360, %v11362
  %v11364 = vadd.f32 %v11360, %v11363
  %vm11365 = vweird.f32 %v11359
  %vm11366 = vweird.f32 %v11360
  %vm11367 = vmor %vm11365, %vm11366
  %v11368 = vsel %vm11367, %v11360, %v11364
  %v11369 = vand.u32 2147483647, %v11359
  %vm11370 = vcmp.eq.f32.partialorder %v11369, 8.507059e+37
  %v11371 = vand.u32 %v11359, 2147483648
  %v11372 = vor.u32 1.1754944e-38, %v11371
  %v11373 = vsel %vm11370, %v11372, %v11368
  %v11374 = vmul.f32 %v11349, %v11373
  %v11375 = vmin.f32 %v11374, 1.0
  %v11376 = vmax.f32 %v11375, -1.0
  %v11377 = vmul.f32 %v10455, %v10455
  %v11378 = vmin.f32 16.0, %v11377
  %v11379 = vmul.f32 %v11378, 2.1237322e-06
  %v11380 = vadd.f32 %v11379, 0.00028619796
  %v11381 = vmul.f32 %v11378, %v11380
  %v11382 = vadd.f32 %v11381, 0.0036580483
  %v11383 = vmul.f32 %v11378, %v11382
  %v11384 = vadd.f32 %v11383, 0.05243302
  %v11385 = vmul.f32 %v11378, %v11384
  %v11386 = vadd.f32 %v11385, 0.18741608
  %v11387 = vmul.f32 %v11378, %v11386
  %v11388 = vadd.f32 %v11387, 1.1283791
  %v11389 = vmul.f32 %v10455, %v11388
  %v11390 = vmul.f32 %v11378, 3.8918573e-05
  %v11391 = vadd.f32 %v11390, 0.001143296
  %v11392 = vmul.f32 %v11378, %v11391
  %v11393 = vadd.f32 %v11392, 0.014752088
  %v11394 = vmul.f32 %v11378, %v11393
  %v11395 = vadd.f32 %v11394, 0.112945676
  %v11396 = vmul.f32 %v11378, %v11395
  %v11397 = vadd.f32 %v11396, 0.4994258
  %v11398 = vmul.f32 %v11378, %v11397
  %v11399 = vadd.f32 %v11398, 1.0
  %v11400 = vrcp.pop %v11399
  %v11401 = vmul.f32 %v11399, %v11400
  %v11402 = vsub.f32 1.0, %v11401
  %v11403 = vmul.f32 %v11400, %v11402
  %v11404 = vadd.f32 %v11400, %v11403
  %vm11405 = vweird.f32 %v11399
  %vm11406 = vweird.f32 %v11400
  %vm11407 = vmor %vm11405, %vm11406
  %v11408 = vsel %vm11407, %v11400, %v11404
  %v11409 = vand.u32 2147483647, %v11399
  %vm11410 = vcmp.eq.f32.partialorder %v11409, 8.507059e+37
  %v11411 = vand.u32 %v11399, 2147483648
  %v11412 = vor.u32 1.1754944e-38, %v11411
  %v11413 = vsel %vm11410, %v11412, %v11408
  %v11414 = vmul.f32 %v11389, %v11413
  %v11415 = vmin.f32 %v11414, 1.0
  %v11416 = vmax.f32 %v11415, -1.0
  %v11417 = vmul.f32 %v10456, %v10456
  %v11418 = vmin.f32 16.0, %v11417
  %v11419 = vmul.f32 %v11418, 2.1237322e-06
  %v11420 = vadd.f32 %v11419, 0.00028619796
  %v11421 = vmul.f32 %v11418, %v11420
  %v11422 = vadd.f32 %v11421, 0.0036580483
  %v11423 = vmul.f32 %v11418, %v11422
  %v11424 = vadd.f32 %v11423, 0.05243302
  %v11425 = vmul.f32 %v11418, %v11424
  %v11426 = vadd.f32 %v11425, 0.18741608
  %v11427 = vmul.f32 %v11418, %v11426
  %v11428 = vadd.f32 %v11427, 1.1283791
  %v11429 = vmul.f32 %v10456, %v11428
  %v11430 = vmul.f32 %v11418, 3.8918573e-05
  %v11431 = vadd.f32 %v11430, 0.001143296
  %v11432 = vmul.f32 %v11418, %v11431
  %v11433 = vadd.f32 %v11432, 0.014752088
  %v11434 = vmul.f32 %v11418, %v11433
  %v11435 = vadd.f32 %v11434, 0.112945676
  %v11436 = vmul.f32 %v11418, %v11435
  %v11437 = vadd.f32 %v11436, 0.4994258
  %v11438 = vmul.f32 %v11418, %v11437
  %v11439 = vadd.f32 %v11438, 1.0
  %v11440 = vrcp.pop %v11439
  %v11441 = vmul.f32 %v11439, %v11440
  %v11442 = vsub.f32 1.0, %v11441
  %v11443 = vmul.f32 %v11440, %v11442
  %v11444 = vadd.f32 %v11440, %v11443
  %vm11445 = vweird.f32 %v11439
  %vm11446 = vweird.f32 %v11440
  %vm11447 = vmor %vm11445, %vm11446
  %v11448 = vsel %vm11447, %v11440, %v11444
  %v11449 = vand.u32 2147483647, %v11439
  %vm11450 = vcmp.eq.f32.partialorder %v11449, 8.507059e+37
  %v11451 = vand.u32 %v11439, 2147483648
  %v11452 = vor.u32 1.1754944e-38, %v11451
  %v11453 = vsel %vm11450, %v11452, %v11448
  %v11454 = vmul.f32 %v11429, %v11453
  %v11455 = vmin.f32 %v11454, 1.0
  %v11456 = vmax.f32 %v11455, -1.0
  %v11457 = vmul.f32 %v10457, %v10457
  %v11458 = vmin.f32 16.0, %v11457
  %v11459 = vmul.f32 %v11458, 2.1237322e-06
  %v11460 = vadd.f32 %v11459, 0.00028619796
  %v11461 = vmul.f32 %v11458, %v11460
  %v11462 = vadd.f32 %v11461, 0.0036580483
  %v11463 = vmul.f32 %v11458, %v11462
  %v11464 = vadd.f32 %v11463, 0.05243302
  %v11465 = vmul.f32 %v11458, %v11464
  %v11466 = vadd.f32 %v11465, 0.18741608
  %v11467 = vmul.f32 %v11458, %v11466
  %v11468 = vadd.f32 %v11467, 1.1283791
  %v11469 = vmul.f32 %v10457, %v11468
  %v11470 = vmul.f32 %v11458, 3.8918573e-05
  %v11471 = vadd.f32 %v11470, 0.001143296
  %v11472 = vmul.f32 %v11458, %v11471
  %v11473 = vadd.f32 %v11472, 0.014752088
  %v11474 = vmul.f32 %v11458, %v11473
  %v11475 = vadd.f32 %v11474, 0.112945676
  %v11476 = vmul.f32 %v11458, %v11475
  %v11477 = vadd.f32 %v11476, 0.4994258
  %v11478 = vmul.f32 %v11458, %v11477
  %v11479 = vadd.f32 %v11478, 1.0
  %v11480 = vrcp.pop %v11479
  %v11481 = vmul.f32 %v11479, %v11480
  %v11482 = vsub.f32 1.0, %v11481
  %v11483 = vmul.f32 %v11480, %v11482
  %v11484 = vadd.f32 %v11480, %v11483
  %vm11485 = vweird.f32 %v11479
  %vm11486 = vweird.f32 %v11480
  %vm11487 = vmor %vm11485, %vm11486
  %v11488 = vsel %vm11487, %v11480, %v11484
  %v11489 = vand.u32 2147483647, %v11479
  %vm11490 = vcmp.eq.f32.partialorder %v11489, 8.507059e+37
  %v11491 = vand.u32 %v11479, 2147483648
  %v11492 = vor.u32 1.1754944e-38, %v11491
  %v11493 = vsel %vm11490, %v11492, %v11488
  %v11494 = vmul.f32 %v11469, %v11493
  %v11495 = vmin.f32 %v11494, 1.0
  %v11496 = vmax.f32 %v11495, -1.0
  %v11497 = vmul.f32 %v10458, %v10458
  %v11498 = vmin.f32 16.0, %v11497
  %v11499 = vmul.f32 %v11498, 2.1237322e-06
  %v11500 = vadd.f32 %v11499, 0.00028619796
  %v11501 = vmul.f32 %v11498, %v11500
  %v11502 = vadd.f32 %v11501, 0.0036580483
  %v11503 = vmul.f32 %v11498, %v11502
  %v11504 = vadd.f32 %v11503, 0.05243302
  %v11505 = vmul.f32 %v11498, %v11504
  %v11506 = vadd.f32 %v11505, 0.18741608
  %v11507 = vmul.f32 %v11498, %v11506
  %v11508 = vadd.f32 %v11507, 1.1283791
  %v11509 = vmul.f32 %v10458, %v11508
  %v11510 = vmul.f32 %v11498, 3.8918573e-05
  %v11511 = vadd.f32 %v11510, 0.001143296
  %v11512 = vmul.f32 %v11498, %v11511
  %v11513 = vadd.f32 %v11512, 0.014752088
  %v11514 = vmul.f32 %v11498, %v11513
  %v11515 = vadd.f32 %v11514, 0.112945676
  %v11516 = vmul.f32 %v11498, %v11515
  %v11517 = vadd.f32 %v11516, 0.4994258
  %v11518 = vmul.f32 %v11498, %v11517
  %v11519 = vadd.f32 %v11518, 1.0
  %v11520 = vrcp.pop %v11519
  %v11521 = vmul.f32 %v11519, %v11520
  %v11522 = vsub.f32 1.0, %v11521
  %v11523 = vmul.f32 %v11520, %v11522
  %v11524 = vadd.f32 %v11520, %v11523
  %vm11525 = vweird.f32 %v11519
  %vm11526 = vweird.f32 %v11520
  %vm11527 = vmor %vm11525, %vm11526
  %v11528 = vsel %vm11527, %v11520, %v11524
  %v11529 = vand.u32 2147483647, %v11519
  %vm11530 = vcmp.eq.f32.partialorder %v11529, 8.507059e+37
  %v11531 = vand.u32 %v11519, 2147483648
  %v11532 = vor.u32 1.1754944e-38, %v11531
  %v11533 = vsel %vm11530, %v11532, %v11528
  %v11534 = vmul.f32 %v11509, %v11533
  %v11535 = vmin.f32 %v11534, 1.0
  %v11536 = vmax.f32 %v11535, -1.0
  %v11537 = vmul.f32 %v10459, %v10459
  %v11538 = vmin.f32 16.0, %v11537
  %v11539 = vmul.f32 %v11538, 2.1237322e-06
  %v11540 = vadd.f32 %v11539, 0.00028619796
  %v11541 = vmul.f32 %v11538, %v11540
  %v11542 = vadd.f32 %v11541, 0.0036580483
  %v11543 = vmul.f32 %v11538, %v11542
  %v11544 = vadd.f32 %v11543, 0.05243302
  %v11545 = vmul.f32 %v11538, %v11544
  %v11546 = vadd.f32 %v11545, 0.18741608
  %v11547 = vmul.f32 %v11538, %v11546
  %v11548 = vadd.f32 %v11547, 1.1283791
  %v11549 = vmul.f32 %v10459, %v11548
  %v11550 = vmul.f32 %v11538, 3.8918573e-05
  %v11551 = vadd.f32 %v11550, 0.001143296
  %v11552 = vmul.f32 %v11538, %v11551
  %v11553 = vadd.f32 %v11552, 0.014752088
  %v11554 = vmul.f32 %v11538, %v11553
  %v11555 = vadd.f32 %v11554, 0.112945676
  %v11556 = vmul.f32 %v11538, %v11555
  %v11557 = vadd.f32 %v11556, 0.4994258
  %v11558 = vmul.f32 %v11538, %v11557
  %v11559 = vadd.f32 %v11558, 1.0
  %v11560 = vrcp.pop %v11559
  %v11561 = vmul.f32 %v11559, %v11560
  %v11562 = vsub.f32 1.0, %v11561
  %v11563 = vmul.f32 %v11560, %v11562
  %v11564 = vadd.f32 %v11560, %v11563
  %vm11565 = vweird.f32 %v11559
  %vm11566 = vweird.f32 %v11560
  %vm11567 = vmor %vm11565, %vm11566
  %v11568 = vsel %vm11567, %v11560, %v11564
  %v11569 = vand.u32 2147483647, %v11559
  %vm11570 = vcmp.eq.f32.partialorder %v11569, 8.507059e+37
  %v11571 = vand.u32 %v11559, 2147483648
  %v11572 = vor.u32 1.1754944e-38, %v11571
  %v11573 = vsel %vm11570, %v11572, %v11568
  %v11574 = vmul.f32 %v11549, %v11573
  %v11575 = vmin.f32 %v11574, 1.0
  %v11576 = vmax.f32 %v11575, -1.0
  %v11577 = vmul.f32 %v10460, %v10460
  %v11578 = vmin.f32 16.0, %v11577
  %v11579 = vmul.f32 %v11578, 2.1237322e-06
  %v11580 = vadd.f32 %v11579, 0.00028619796
  %v11581 = vmul.f32 %v11578, %v11580
  %v11582 = vadd.f32 %v11581, 0.0036580483
  %v11583 = vmul.f32 %v11578, %v11582
  %v11584 = vadd.f32 %v11583, 0.05243302
  %v11585 = vmul.f32 %v11578, %v11584
  %v11586 = vadd.f32 %v11585, 0.18741608
  %v11587 = vmul.f32 %v11578, %v11586
  %v11588 = vadd.f32 %v11587, 1.1283791
  %v11589 = vmul.f32 %v10460, %v11588
  %v11590 = vmul.f32 %v11578, 3.8918573e-05
  %v11591 = vadd.f32 %v11590, 0.001143296
  %v11592 = vmul.f32 %v11578, %v11591
  %v11593 = vadd.f32 %v11592, 0.014752088
  %v11594 = vmul.f32 %v11578, %v11593
  %v11595 = vadd.f32 %v11594, 0.112945676
  %v11596 = vmul.f32 %v11578, %v11595
  %v11597 = vadd.f32 %v11596, 0.4994258
  %v11598 = vmul.f32 %v11578, %v11597
  %v11599 = vadd.f32 %v11598, 1.0
  %v11600 = vrcp.pop %v11599
  %v11601 = vmul.f32 %v11599, %v11600
  %v11602 = vsub.f32 1.0, %v11601
  %v11603 = vmul.f32 %v11600, %v11602
  %v11604 = vadd.f32 %v11600, %v11603
  %vm11605 = vweird.f32 %v11599
  %vm11606 = vweird.f32 %v11600
  %vm11607 = vmor %vm11605, %vm11606
  %v11608 = vsel %vm11607, %v11600, %v11604
  %v11609 = vand.u32 2147483647, %v11599
  %vm11610 = vcmp.eq.f32.partialorder %v11609, 8.507059e+37
  %v11611 = vand.u32 %v11599, 2147483648
  %v11612 = vor.u32 1.1754944e-38, %v11611
  %v11613 = vsel %vm11610, %v11612, %v11608
  %v11614 = vmul.f32 %v11589, %v11613
  %v11615 = vmin.f32 %v11614, 1.0
  %v11616 = vmax.f32 %v11615, -1.0
  %v11617 = vmul.f32 %v10461, %v10461
  %v11618 = vmin.f32 16.0, %v11617
  %v11619 = vmul.f32 %v11618, 2.1237322e-06
  %v11620 = vadd.f32 %v11619, 0.00028619796
  %v11621 = vmul.f32 %v11618, %v11620
  %v11622 = vadd.f32 %v11621, 0.0036580483
  %v11623 = vmul.f32 %v11618, %v11622
  %v11624 = vadd.f32 %v11623, 0.05243302
  %v11625 = vmul.f32 %v11618, %v11624
  %v11626 = vadd.f32 %v11625, 0.18741608
  %v11627 = vmul.f32 %v11618, %v11626
  %v11628 = vadd.f32 %v11627, 1.1283791
  %v11629 = vmul.f32 %v10461, %v11628
  %v11630 = vmul.f32 %v11618, 3.8918573e-05
  %v11631 = vadd.f32 %v11630, 0.001143296
  %v11632 = vmul.f32 %v11618, %v11631
  %v11633 = vadd.f32 %v11632, 0.014752088
  %v11634 = vmul.f32 %v11618, %v11633
  %v11635 = vadd.f32 %v11634, 0.112945676
  %v11636 = vmul.f32 %v11618, %v11635
  %v11637 = vadd.f32 %v11636, 0.4994258
  %v11638 = vmul.f32 %v11618, %v11637
  %v11639 = vadd.f32 %v11638, 1.0
  %v11640 = vrcp.pop %v11639
  %v11641 = vmul.f32 %v11639, %v11640
  %v11642 = vsub.f32 1.0, %v11641
  %v11643 = vmul.f32 %v11640, %v11642
  %v11644 = vadd.f32 %v11640, %v11643
  %vm11645 = vweird.f32 %v11639
  %vm11646 = vweird.f32 %v11640
  %vm11647 = vmor %vm11645, %vm11646
  %v11648 = vsel %vm11647, %v11640, %v11644
  %v11649 = vand.u32 2147483647, %v11639
  %vm11650 = vcmp.eq.f32.partialorder %v11649, 8.507059e+37
  %v11651 = vand.u32 %v11639, 2147483648
  %v11652 = vor.u32 1.1754944e-38, %v11651
  %v11653 = vsel %vm11650, %v11652, %v11648
  %v11654 = vmul.f32 %v11629, %v11653
  %v11655 = vmin.f32 %v11654, 1.0
  %v11656 = vmax.f32 %v11655, -1.0
  %v11657 = vmul.f32 %v10462, %v10462
  %v11658 = vmin.f32 16.0, %v11657
  %v11659 = vmul.f32 %v11658, 2.1237322e-06
  %v11660 = vadd.f32 %v11659, 0.00028619796
  %v11661 = vmul.f32 %v11658, %v11660
  %v11662 = vadd.f32 %v11661, 0.0036580483
  %v11663 = vmul.f32 %v11658, %v11662
  %v11664 = vadd.f32 %v11663, 0.05243302
  %v11665 = vmul.f32 %v11658, %v11664
  %v11666 = vadd.f32 %v11665, 0.18741608
  %v11667 = vmul.f32 %v11658, %v11666
  %v11668 = vadd.f32 %v11667, 1.1283791
  %v11669 = vmul.f32 %v10462, %v11668
  %v11670 = vmul.f32 %v11658, 3.8918573e-05
  %v11671 = vadd.f32 %v11670, 0.001143296
  %v11672 = vmul.f32 %v11658, %v11671
  %v11673 = vadd.f32 %v11672, 0.014752088
  %v11674 = vmul.f32 %v11658, %v11673
  %v11675 = vadd.f32 %v11674, 0.112945676
  %v11676 = vmul.f32 %v11658, %v11675
  %v11677 = vadd.f32 %v11676, 0.4994258
  %v11678 = vmul.f32 %v11658, %v11677
  %v11679 = vadd.f32 %v11678, 1.0
  %v11680 = vrcp.pop %v11679
  %v11681 = vmul.f32 %v11679, %v11680
  %v11682 = vsub.f32 1.0, %v11681
  %v11683 = vmul.f32 %v11680, %v11682
  %v11684 = vadd.f32 %v11680, %v11683
  %vm11685 = vweird.f32 %v11679
  %vm11686 = vweird.f32 %v11680
  %vm11687 = vmor %vm11685, %vm11686
  %v11688 = vsel %vm11687, %v11680, %v11684
  %v11689 = vand.u32 2147483647, %v11679
  %vm11690 = vcmp.eq.f32.partialorder %v11689, 8.507059e+37
  %v11691 = vand.u32 %v11679, 2147483648
  %v11692 = vor.u32 1.1754944e-38, %v11691
  %v11693 = vsel %vm11690, %v11692, %v11688
  %v11694 = vmul.f32 %v11669, %v11693
  %v11695 = vmin.f32 %v11694, 1.0
  %v11696 = vmax.f32 %v11695, -1.0
  %v11697 = vmul.f32 %v10463, %v10463
  %v11698 = vmin.f32 16.0, %v11697
  %v11699 = vmul.f32 %v11698, 2.1237322e-06
  %v11700 = vadd.f32 %v11699, 0.00028619796
  %v11701 = vmul.f32 %v11698, %v11700
  %v11702 = vadd.f32 %v11701, 0.0036580483
  %v11703 = vmul.f32 %v11698, %v11702
  %v11704 = vadd.f32 %v11703, 0.05243302
  %v11705 = vmul.f32 %v11698, %v11704
  %v11706 = vadd.f32 %v11705, 0.18741608
  %v11707 = vmul.f32 %v11698, %v11706
  %v11708 = vadd.f32 %v11707, 1.1283791
  %v11709 = vmul.f32 %v10463, %v11708
  %v11710 = vmul.f32 %v11698, 3.8918573e-05
  %v11711 = vadd.f32 %v11710, 0.001143296
  %v11712 = vmul.f32 %v11698, %v11711
  %v11713 = vadd.f32 %v11712, 0.014752088
  %v11714 = vmul.f32 %v11698, %v11713
  %v11715 = vadd.f32 %v11714, 0.112945676
  %v11716 = vmul.f32 %v11698, %v11715
  %v11717 = vadd.f32 %v11716, 0.4994258
  %v11718 = vmul.f32 %v11698, %v11717
  %v11719 = vadd.f32 %v11718, 1.0
  %v11720 = vrcp.pop %v11719
  %v11721 = vmul.f32 %v11719, %v11720
  %v11722 = vsub.f32 1.0, %v11721
  %v11723 = vmul.f32 %v11720, %v11722
  %v11724 = vadd.f32 %v11720, %v11723
  %vm11725 = vweird.f32 %v11719
  %vm11726 = vweird.f32 %v11720
  %vm11727 = vmor %vm11725, %vm11726
  %v11728 = vsel %vm11727, %v11720, %v11724
  %v11729 = vand.u32 2147483647, %v11719
  %vm11730 = vcmp.eq.f32.partialorder %v11729, 8.507059e+37
  %v11731 = vand.u32 %v11719, 2147483648
  %v11732 = vor.u32 1.1754944e-38, %v11731
  %v11733 = vsel %vm11730, %v11732, %v11728
  %v11734 = vmul.f32 %v11709, %v11733
  %v11735 = vmin.f32 %v11734, 1.0
  %v11736 = vmax.f32 %v11735, -1.0
  %v11737 = vmul.f32 %v10464, %v10464
  %v11738 = vmin.f32 16.0, %v11737
  %v11739 = vmul.f32 %v11738, 2.1237322e-06
  %v11740 = vadd.f32 %v11739, 0.00028619796
  %v11741 = vmul.f32 %v11738, %v11740
  %v11742 = vadd.f32 %v11741, 0.0036580483
  %v11743 = vmul.f32 %v11738, %v11742
  %v11744 = vadd.f32 %v11743, 0.05243302
  %v11745 = vmul.f32 %v11738, %v11744
  %v11746 = vadd.f32 %v11745, 0.18741608
  %v11747 = vmul.f32 %v11738, %v11746
  %v11748 = vadd.f32 %v11747, 1.1283791
  %v11749 = vmul.f32 %v10464, %v11748
  %v11750 = vmul.f32 %v11738, 3.8918573e-05
  %v11751 = vadd.f32 %v11750, 0.001143296
  %v11752 = vmul.f32 %v11738, %v11751
  %v11753 = vadd.f32 %v11752, 0.014752088
  %v11754 = vmul.f32 %v11738, %v11753
  %v11755 = vadd.f32 %v11754, 0.112945676
  %v11756 = vmul.f32 %v11738, %v11755
  %v11757 = vadd.f32 %v11756, 0.4994258
  %v11758 = vmul.f32 %v11738, %v11757
  %v11759 = vadd.f32 %v11758, 1.0
  %v11760 = vrcp.pop %v11759
  %v11761 = vmul.f32 %v11759, %v11760
  %v11762 = vsub.f32 1.0, %v11761
  %v11763 = vmul.f32 %v11760, %v11762
  %v11764 = vadd.f32 %v11760, %v11763
  %vm11765 = vweird.f32 %v11759
  %vm11766 = vweird.f32 %v11760
  %vm11767 = vmor %vm11765, %vm11766
  %v11768 = vsel %vm11767, %v11760, %v11764
  %v11769 = vand.u32 2147483647, %v11759
  %vm11770 = vcmp.eq.f32.partialorder %v11769, 8.507059e+37
  %v11771 = vand.u32 %v11759, 2147483648
  %v11772 = vor.u32 1.1754944e-38, %v11771
  %v11773 = vsel %vm11770, %v11772, %v11768
  %v11774 = vmul.f32 %v11749, %v11773
  %v11775 = vmin.f32 %v11774, 1.0
  %v11776 = vmax.f32 %v11775, -1.0
  %v11777 = vmul.f32 %v10465, %v10465
  %v11778 = vmin.f32 16.0, %v11777
  %v11779 = vmul.f32 %v11778, 2.1237322e-06
  %v11780 = vadd.f32 %v11779, 0.00028619796
  %v11781 = vmul.f32 %v11778, %v11780
  %v11782 = vadd.f32 %v11781, 0.0036580483
  %v11783 = vmul.f32 %v11778, %v11782
  %v11784 = vadd.f32 %v11783, 0.05243302
  %v11785 = vmul.f32 %v11778, %v11784
  %v11786 = vadd.f32 %v11785, 0.18741608
  %v11787 = vmul.f32 %v11778, %v11786
  %v11788 = vadd.f32 %v11787, 1.1283791
  %v11789 = vmul.f32 %v10465, %v11788
  %v11790 = vmul.f32 %v11778, 3.8918573e-05
  %v11791 = vadd.f32 %v11790, 0.001143296
  %v11792 = vmul.f32 %v11778, %v11791
  %v11793 = vadd.f32 %v11792, 0.014752088
  %v11794 = vmul.f32 %v11778, %v11793
  %v11795 = vadd.f32 %v11794, 0.112945676
  %v11796 = vmul.f32 %v11778, %v11795
  %v11797 = vadd.f32 %v11796, 0.4994258
  %v11798 = vmul.f32 %v11778, %v11797
  %v11799 = vadd.f32 %v11798, 1.0
  %v11800 = vrcp.pop %v11799
  %v11801 = vmul.f32 %v11799, %v11800
  %v11802 = vsub.f32 1.0, %v11801
  %v11803 = vmul.f32 %v11800, %v11802
  %v11804 = vadd.f32 %v11800, %v11803
  %vm11805 = vweird.f32 %v11799
  %vm11806 = vweird.f32 %v11800
  %vm11807 = vmor %vm11805, %vm11806
  %v11808 = vsel %vm11807, %v11800, %v11804
  %v11809 = vand.u32 2147483647, %v11799
  %vm11810 = vcmp.eq.f32.partialorder %v11809, 8.507059e+37
  %v11811 = vand.u32 %v11799, 2147483648
  %v11812 = vor.u32 1.1754944e-38, %v11811
  %v11813 = vsel %vm11810, %v11812, %v11808
  %v11814 = vmul.f32 %v11789, %v11813
  %v11815 = vmin.f32 %v11814, 1.0
  %v11816 = vmax.f32 %v11815, -1.0
  %v11817 = vmul.f32 %v10466, %v10466
  %v11818 = vmin.f32 16.0, %v11817
  %v11819 = vmul.f32 %v11818, 2.1237322e-06
  %v11820 = vadd.f32 %v11819, 0.00028619796
  %v11821 = vmul.f32 %v11818, %v11820
  %v11822 = vadd.f32 %v11821, 0.0036580483
  %v11823 = vmul.f32 %v11818, %v11822
  %v11824 = vadd.f32 %v11823, 0.05243302
  %v11825 = vmul.f32 %v11818, %v11824
  %v11826 = vadd.f32 %v11825, 0.18741608
  %v11827 = vmul.f32 %v11818, %v11826
  %v11828 = vadd.f32 %v11827, 1.1283791
  %v11829 = vmul.f32 %v10466, %v11828
  %v11830 = vmul.f32 %v11818, 3.8918573e-05
  %v11831 = vadd.f32 %v11830, 0.001143296
  %v11832 = vmul.f32 %v11818, %v11831
  %v11833 = vadd.f32 %v11832, 0.014752088
  %v11834 = vmul.f32 %v11818, %v11833
  %v11835 = vadd.f32 %v11834, 0.112945676
  %v11836 = vmul.f32 %v11818, %v11835
  %v11837 = vadd.f32 %v11836, 0.4994258
  %v11838 = vmul.f32 %v11818, %v11837
  %v11839 = vadd.f32 %v11838, 1.0
  %v11840 = vrcp.pop %v11839
  %v11841 = vmul.f32 %v11839, %v11840
  %v11842 = vsub.f32 1.0, %v11841
  %v11843 = vmul.f32 %v11840, %v11842
  %v11844 = vadd.f32 %v11840, %v11843
  %vm11845 = vweird.f32 %v11839
  %vm11846 = vweird.f32 %v11840
  %vm11847 = vmor %vm11845, %vm11846
  %v11848 = vsel %vm11847, %v11840, %v11844
  %v11849 = vand.u32 2147483647, %v11839
  %vm11850 = vcmp.eq.f32.partialorder %v11849, 8.507059e+37
  %v11851 = vand.u32 %v11839, 2147483648
  %v11852 = vor.u32 1.1754944e-38, %v11851
  %v11853 = vsel %vm11850, %v11852, %v11848
  %v11854 = vmul.f32 %v11829, %v11853
  %v11855 = vmin.f32 %v11854, 1.0
  %v11856 = vmax.f32 %v11855, -1.0
  %v11857 = vmul.f32 %v10467, %v10467
  %v11858 = vmin.f32 16.0, %v11857
  %v11859 = vmul.f32 %v11858, 2.1237322e-06
  %v11860 = vadd.f32 %v11859, 0.00028619796
  %v11861 = vmul.f32 %v11858, %v11860
  %v11862 = vadd.f32 %v11861, 0.0036580483
  %v11863 = vmul.f32 %v11858, %v11862
  %v11864 = vadd.f32 %v11863, 0.05243302
  %v11865 = vmul.f32 %v11858, %v11864
  %v11866 = vadd.f32 %v11865, 0.18741608
  %v11867 = vmul.f32 %v11858, %v11866
  %v11868 = vadd.f32 %v11867, 1.1283791
  %v11869 = vmul.f32 %v10467, %v11868
  %v11870 = vmul.f32 %v11858, 3.8918573e-05
  %v11871 = vadd.f32 %v11870, 0.001143296
  %v11872 = vmul.f32 %v11858, %v11871
  %v11873 = vadd.f32 %v11872, 0.014752088
  %v11874 = vmul.f32 %v11858, %v11873
  %v11875 = vadd.f32 %v11874, 0.112945676
  %v11876 = vmul.f32 %v11858, %v11875
  %v11877 = vadd.f32 %v11876, 0.4994258
  %v11878 = vmul.f32 %v11858, %v11877
  %v11879 = vadd.f32 %v11878, 1.0
  %v11880 = vrcp.pop %v11879
  %v11881 = vmul.f32 %v11879, %v11880
  %v11882 = vsub.f32 1.0, %v11881
  %v11883 = vmul.f32 %v11880, %v11882
  %v11884 = vadd.f32 %v11880, %v11883
  %vm11885 = vweird.f32 %v11879
  %vm11886 = vweird.f32 %v11880
  %vm11887 = vmor %vm11885, %vm11886
  %v11888 = vsel %vm11887, %v11880, %v11884
  %v11889 = vand.u32 2147483647, %v11879
  %vm11890 = vcmp.eq.f32.partialorder %v11889, 8.507059e+37
  %v11891 = vand.u32 %v11879, 2147483648
  %v11892 = vor.u32 1.1754944e-38, %v11891
  %v11893 = vsel %vm11890, %v11892, %v11888
  %v11894 = vmul.f32 %v11869, %v11893
  %v11895 = vmin.f32 %v11894, 1.0
  %v11896 = vmax.f32 %v11895, -1.0
  %v11897 = vmul.f32 %v10468, %v10468
  %v11898 = vmin.f32 16.0, %v11897
  %v11899 = vmul.f32 %v11898, 2.1237322e-06
  %v11900 = vadd.f32 %v11899, 0.00028619796
  %v11901 = vmul.f32 %v11898, %v11900
  %v11902 = vadd.f32 %v11901, 0.0036580483
  %v11903 = vmul.f32 %v11898, %v11902
  %v11904 = vadd.f32 %v11903, 0.05243302
  %v11905 = vmul.f32 %v11898, %v11904
  %v11906 = vadd.f32 %v11905, 0.18741608
  %v11907 = vmul.f32 %v11898, %v11906
  %v11908 = vadd.f32 %v11907, 1.1283791
  %v11909 = vmul.f32 %v10468, %v11908
  %v11910 = vmul.f32 %v11898, 3.8918573e-05
  %v11911 = vadd.f32 %v11910, 0.001143296
  %v11912 = vmul.f32 %v11898, %v11911
  %v11913 = vadd.f32 %v11912, 0.014752088
  %v11914 = vmul.f32 %v11898, %v11913
  %v11915 = vadd.f32 %v11914, 0.112945676
  %v11916 = vmul.f32 %v11898, %v11915
  %v11917 = vadd.f32 %v11916, 0.4994258
  %v11918 = vmul.f32 %v11898, %v11917
  %v11919 = vadd.f32 %v11918, 1.0
  %v11920 = vrcp.pop %v11919
  %v11921 = vmul.f32 %v11919, %v11920
  %v11922 = vsub.f32 1.0, %v11921
  %v11923 = vmul.f32 %v11920, %v11922
  %v11924 = vadd.f32 %v11920, %v11923
  %vm11925 = vweird.f32 %v11919
  %vm11926 = vweird.f32 %v11920
  %vm11927 = vmor %vm11925, %vm11926
  %v11928 = vsel %vm11927, %v11920, %v11924
  %v11929 = vand.u32 2147483647, %v11919
  %vm11930 = vcmp.eq.f32.partialorder %v11929, 8.507059e+37
  %v11931 = vand.u32 %v11919, 2147483648
  %v11932 = vor.u32 1.1754944e-38, %v11931
  %v11933 = vsel %vm11930, %v11932, %v11928
  %v11934 = vmul.f32 %v11909, %v11933
  %v11935 = vmin.f32 %v11934, 1.0
  %v11936 = vmax.f32 %v11935, -1.0
  %v11937 = vmul.f32 %v10469, %v10469
  %v11938 = vmin.f32 16.0, %v11937
  %v11939 = vmul.f32 %v11938, 2.1237322e-06
  %v11940 = vadd.f32 %v11939, 0.00028619796
  %v11941 = vmul.f32 %v11938, %v11940
  %v11942 = vadd.f32 %v11941, 0.0036580483
  %v11943 = vmul.f32 %v11938, %v11942
  %v11944 = vadd.f32 %v11943, 0.05243302
  %v11945 = vmul.f32 %v11938, %v11944
  %v11946 = vadd.f32 %v11945, 0.18741608
  %v11947 = vmul.f32 %v11938, %v11946
  %v11948 = vadd.f32 %v11947, 1.1283791
  %v11949 = vmul.f32 %v10469, %v11948
  %v11950 = vmul.f32 %v11938, 3.8918573e-05
  %v11951 = vadd.f32 %v11950, 0.001143296
  %v11952 = vmul.f32 %v11938, %v11951
  %v11953 = vadd.f32 %v11952, 0.014752088
  %v11954 = vmul.f32 %v11938, %v11953
  %v11955 = vadd.f32 %v11954, 0.112945676
  %v11956 = vmul.f32 %v11938, %v11955
  %v11957 = vadd.f32 %v11956, 0.4994258
  %v11958 = vmul.f32 %v11938, %v11957
  %v11959 = vadd.f32 %v11958, 1.0
  %v11960 = vrcp.pop %v11959
  %v11961 = vmul.f32 %v11959, %v11960
  %v11962 = vsub.f32 1.0, %v11961
  %v11963 = vmul.f32 %v11960, %v11962
  %v11964 = vadd.f32 %v11960, %v11963
  %vm11965 = vweird.f32 %v11959
  %vm11966 = vweird.f32 %v11960
  %vm11967 = vmor %vm11965, %vm11966
  %v11968 = vsel %vm11967, %v11960, %v11964
  %v11969 = vand.u32 2147483647, %v11959
  %vm11970 = vcmp.eq.f32.partialorder %v11969, 8.507059e+37
  %v11971 = vand.u32 %v11959, 2147483648
  %v11972 = vor.u32 1.1754944e-38, %v11971
  %v11973 = vsel %vm11970, %v11972, %v11968
  %v11974 = vmul.f32 %v11949, %v11973
  %v11975 = vmin.f32 %v11974, 1.0
  %v11976 = vmax.f32 %v11975, -1.0
  %v11977 = vmul.f32 %v10470, %v10470
  %v11978 = vmin.f32 16.0, %v11977
  %v11979 = vmul.f32 %v11978, 2.1237322e-06
  %v11980 = vadd.f32 %v11979, 0.00028619796
  %v11981 = vmul.f32 %v11978, %v11980
  %v11982 = vadd.f32 %v11981, 0.0036580483
  %v11983 = vmul.f32 %v11978, %v11982
  %v11984 = vadd.f32 %v11983, 0.05243302
  %v11985 = vmul.f32 %v11978, %v11984
  %v11986 = vadd.f32 %v11985, 0.18741608
  %v11987 = vmul.f32 %v11978, %v11986
  %v11988 = vadd.f32 %v11987, 1.1283791
  %v11989 = vmul.f32 %v10470, %v11988
  %v11990 = vmul.f32 %v11978, 3.8918573e-05
  %v11991 = vadd.f32 %v11990, 0.001143296
  %v11992 = vmul.f32 %v11978, %v11991
  %v11993 = vadd.f32 %v11992, 0.014752088
  %v11994 = vmul.f32 %v11978, %v11993
  %v11995 = vadd.f32 %v11994, 0.112945676
  %v11996 = vmul.f32 %v11978, %v11995
  %v11997 = vadd.f32 %v11996, 0.4994258
  %v11998 = vmul.f32 %v11978, %v11997
  %v11999 = vadd.f32 %v11998, 1.0
  %v12000 = vrcp.pop %v11999
  %v12001 = vmul.f32 %v11999, %v12000
  %v12002 = vsub.f32 1.0, %v12001
  %v12003 = vmul.f32 %v12000, %v12002
  %v12004 = vadd.f32 %v12000, %v12003
  %vm12005 = vweird.f32 %v11999
  %vm12006 = vweird.f32 %v12000
  %vm12007 = vmor %vm12005, %vm12006
  %v12008 = vsel %vm12007, %v12000, %v12004
  %v12009 = vand.u32 2147483647, %v11999
  %vm12010 = vcmp.eq.f32.partialorder %v12009, 8.507059e+37
  %v12011 = vand.u32 %v11999, 2147483648
  %v12012 = vor.u32 1.1754944e-38, %v12011
  %v12013 = vsel %vm12010, %v12012, %v12008
  %v12014 = vmul.f32 %v11989, %v12013
  %v12015 = vmin.f32 %v12014, 1.0
  %v12016 = vmax.f32 %v12015, -1.0
  %v12017 = vmul.f32 %v10471, %v10471
  %v12018 = vmin.f32 16.0, %v12017
  %v12019 = vmul.f32 %v12018, 2.1237322e-06
  %v12020 = vadd.f32 %v12019, 0.00028619796
  %v12021 = vmul.f32 %v12018, %v12020
  %v12022 = vadd.f32 %v12021, 0.0036580483
  %v12023 = vmul.f32 %v12018, %v12022
  %v12024 = vadd.f32 %v12023, 0.05243302
  %v12025 = vmul.f32 %v12018, %v12024
  %v12026 = vadd.f32 %v12025, 0.18741608
  %v12027 = vmul.f32 %v12018, %v12026
  %v12028 = vadd.f32 %v12027, 1.1283791
  %v12029 = vmul.f32 %v10471, %v12028
  %v12030 = vmul.f32 %v12018, 3.8918573e-05
  %v12031 = vadd.f32 %v12030, 0.001143296
  %v12032 = vmul.f32 %v12018, %v12031
  %v12033 = vadd.f32 %v12032, 0.014752088
  %v12034 = vmul.f32 %v12018, %v12033
  %v12035 = vadd.f32 %v12034, 0.112945676
  %v12036 = vmul.f32 %v12018, %v12035
  %v12037 = vadd.f32 %v12036, 0.4994258
  %v12038 = vmul.f32 %v12018, %v12037
  %v12039 = vadd.f32 %v12038, 1.0
  %v12040 = vrcp.pop %v12039
  %v12041 = vmul.f32 %v12039, %v12040
  %v12042 = vsub.f32 1.0, %v12041
  %v12043 = vmul.f32 %v12040, %v12042
  %v12044 = vadd.f32 %v12040, %v12043
  %vm12045 = vweird.f32 %v12039
  %vm12046 = vweird.f32 %v12040
  %vm12047 = vmor %vm12045, %vm12046
  %v12048 = vsel %vm12047, %v12040, %v12044
  %v12049 = vand.u32 2147483647, %v12039
  %vm12050 = vcmp.eq.f32.partialorder %v12049, 8.507059e+37
  %v12051 = vand.u32 %v12039, 2147483648
  %v12052 = vor.u32 1.1754944e-38, %v12051
  %v12053 = vsel %vm12050, %v12052, %v12048
  %v12054 = vmul.f32 %v12029, %v12053
  %v12055 = vmin.f32 %v12054, 1.0
  %v12056 = vmax.f32 %v12055, -1.0
  %v12057 = vmul.f32 %v10472, %v10472
  %v12058 = vmin.f32 16.0, %v12057
  %v12059 = vmul.f32 %v12058, 2.1237322e-06
  %v12060 = vadd.f32 %v12059, 0.00028619796
  %v12061 = vmul.f32 %v12058, %v12060
  %v12062 = vadd.f32 %v12061, 0.0036580483
  %v12063 = vmul.f32 %v12058, %v12062
  %v12064 = vadd.f32 %v12063, 0.05243302
  %v12065 = vmul.f32 %v12058, %v12064
  %v12066 = vadd.f32 %v12065, 0.18741608
  %v12067 = vmul.f32 %v12058, %v12066
  %v12068 = vadd.f32 %v12067, 1.1283791
  %v12069 = vmul.f32 %v10472, %v12068
  %v12070 = vmul.f32 %v12058, 3.8918573e-05
  %v12071 = vadd.f32 %v12070, 0.001143296
  %v12072 = vmul.f32 %v12058, %v12071
  %v12073 = vadd.f32 %v12072, 0.014752088
  %v12074 = vmul.f32 %v12058, %v12073
  %v12075 = vadd.f32 %v12074, 0.112945676
  %v12076 = vmul.f32 %v12058, %v12075
  %v12077 = vadd.f32 %v12076, 0.4994258
  %v12078 = vmul.f32 %v12058, %v12077
  %v12079 = vadd.f32 %v12078, 1.0
  %v12080 = vrcp.pop %v12079
  %v12081 = vmul.f32 %v12079, %v12080
  %v12082 = vsub.f32 1.0, %v12081
  %v12083 = vmul.f32 %v12080, %v12082
  %v12084 = vadd.f32 %v12080, %v12083
  %vm12085 = vweird.f32 %v12079
  %vm12086 = vweird.f32 %v12080
  %vm12087 = vmor %vm12085, %vm12086
  %v12088 = vsel %vm12087, %v12080, %v12084
  %v12089 = vand.u32 2147483647, %v12079
  %vm12090 = vcmp.eq.f32.partialorder %v12089, 8.507059e+37
  %v12091 = vand.u32 %v12079, 2147483648
  %v12092 = vor.u32 1.1754944e-38, %v12091
  %v12093 = vsel %vm12090, %v12092, %v12088
  %v12094 = vmul.f32 %v12069, %v12093
  %v12095 = vmin.f32 %v12094, 1.0
  %v12096 = vmax.f32 %v12095, -1.0
  %v12097 = vmul.f32 %v10473, %v10473
  %v12098 = vmin.f32 16.0, %v12097
  %v12099 = vmul.f32 %v12098, 2.1237322e-06
  %v12100 = vadd.f32 %v12099, 0.00028619796
  %v12101 = vmul.f32 %v12098, %v12100
  %v12102 = vadd.f32 %v12101, 0.0036580483
  %v12103 = vmul.f32 %v12098, %v12102
  %v12104 = vadd.f32 %v12103, 0.05243302
  %v12105 = vmul.f32 %v12098, %v12104
  %v12106 = vadd.f32 %v12105, 0.18741608
  %v12107 = vmul.f32 %v12098, %v12106
  %v12108 = vadd.f32 %v12107, 1.1283791
  %v12109 = vmul.f32 %v10473, %v12108
  %v12110 = vmul.f32 %v12098, 3.8918573e-05
  %v12111 = vadd.f32 %v12110, 0.001143296
  %v12112 = vmul.f32 %v12098, %v12111
  %v12113 = vadd.f32 %v12112, 0.014752088
  %v12114 = vmul.f32 %v12098, %v12113
  %v12115 = vadd.f32 %v12114, 0.112945676
  %v12116 = vmul.f32 %v12098, %v12115
  %v12117 = vadd.f32 %v12116, 0.4994258
  %v12118 = vmul.f32 %v12098, %v12117
  %v12119 = vadd.f32 %v12118, 1.0
  %v12120 = vrcp.pop %v12119
  %v12121 = vmul.f32 %v12119, %v12120
  %v12122 = vsub.f32 1.0, %v12121
  %v12123 = vmul.f32 %v12120, %v12122
  %v12124 = vadd.f32 %v12120, %v12123
  %vm12125 = vweird.f32 %v12119
  %vm12126 = vweird.f32 %v12120
  %vm12127 = vmor %vm12125, %vm12126
  %v12128 = vsel %vm12127, %v12120, %v12124
  %v12129 = vand.u32 2147483647, %v12119
  %vm12130 = vcmp.eq.f32.partialorder %v12129, 8.507059e+37
  %v12131 = vand.u32 %v12119, 2147483648
  %v12132 = vor.u32 1.1754944e-38, %v12131
  %v12133 = vsel %vm12130, %v12132, %v12128
  %v12134 = vmul.f32 %v12109, %v12133
  %v12135 = vmin.f32 %v12134, 1.0
  %v12136 = vmax.f32 %v12135, -1.0
  %v12137 = vmul.f32 %v10474, %v10474
  %v12138 = vmin.f32 16.0, %v12137
  %v12139 = vmul.f32 %v12138, 2.1237322e-06
  %v12140 = vadd.f32 %v12139, 0.00028619796
  %v12141 = vmul.f32 %v12138, %v12140
  %v12142 = vadd.f32 %v12141, 0.0036580483
  %v12143 = vmul.f32 %v12138, %v12142
  %v12144 = vadd.f32 %v12143, 0.05243302
  %v12145 = vmul.f32 %v12138, %v12144
  %v12146 = vadd.f32 %v12145, 0.18741608
  %v12147 = vmul.f32 %v12138, %v12146
  %v12148 = vadd.f32 %v12147, 1.1283791
  %v12149 = vmul.f32 %v10474, %v12148
  %v12150 = vmul.f32 %v12138, 3.8918573e-05
  %v12151 = vadd.f32 %v12150, 0.001143296
  %v12152 = vmul.f32 %v12138, %v12151
  %v12153 = vadd.f32 %v12152, 0.014752088
  %v12154 = vmul.f32 %v12138, %v12153
  %v12155 = vadd.f32 %v12154, 0.112945676
  %v12156 = vmul.f32 %v12138, %v12155
  %v12157 = vadd.f32 %v12156, 0.4994258
  %v12158 = vmul.f32 %v12138, %v12157
  %v12159 = vadd.f32 %v12158, 1.0
  %v12160 = vrcp.pop %v12159
  %v12161 = vmul.f32 %v12159, %v12160
  %v12162 = vsub.f32 1.0, %v12161
  %v12163 = vmul.f32 %v12160, %v12162
  %v12164 = vadd.f32 %v12160, %v12163
  %vm12165 = vweird.f32 %v12159
  %vm12166 = vweird.f32 %v12160
  %vm12167 = vmor %vm12165, %vm12166
  %v12168 = vsel %vm12167, %v12160, %v12164
  %v12169 = vand.u32 2147483647, %v12159
  %vm12170 = vcmp.eq.f32.partialorder %v12169, 8.507059e+37
  %v12171 = vand.u32 %v12159, 2147483648
  %v12172 = vor.u32 1.1754944e-38, %v12171
  %v12173 = vsel %vm12170, %v12172, %v12168
  %v12174 = vmul.f32 %v12149, %v12173
  %v12175 = vmin.f32 %v12174, 1.0
  %v12176 = vmax.f32 %v12175, -1.0
  %v12177 = vmul.f32 %v10475, %v10475
  %v12178 = vmin.f32 16.0, %v12177
  %v12179 = vmul.f32 %v12178, 2.1237322e-06
  %v12180 = vadd.f32 %v12179, 0.00028619796
  %v12181 = vmul.f32 %v12178, %v12180
  %v12182 = vadd.f32 %v12181, 0.0036580483
  %v12183 = vmul.f32 %v12178, %v12182
  %v12184 = vadd.f32 %v12183, 0.05243302
  %v12185 = vmul.f32 %v12178, %v12184
  %v12186 = vadd.f32 %v12185, 0.18741608
  %v12187 = vmul.f32 %v12178, %v12186
  %v12188 = vadd.f32 %v12187, 1.1283791
  %v12189 = vmul.f32 %v10475, %v12188
  %v12190 = vmul.f32 %v12178, 3.8918573e-05
  %v12191 = vadd.f32 %v12190, 0.001143296
  %v12192 = vmul.f32 %v12178, %v12191
  %v12193 = vadd.f32 %v12192, 0.014752088
  %v12194 = vmul.f32 %v12178, %v12193
  %v12195 = vadd.f32 %v12194, 0.112945676
  %v12196 = vmul.f32 %v12178, %v12195
  %v12197 = vadd.f32 %v12196, 0.4994258
  %v12198 = vmul.f32 %v12178, %v12197
  %v12199 = vadd.f32 %v12198, 1.0
  %v12200 = vrcp.pop %v12199
  %v12201 = vmul.f32 %v12199, %v12200
  %v12202 = vsub.f32 1.0, %v12201
  %v12203 = vmul.f32 %v12200, %v12202
  %v12204 = vadd.f32 %v12200, %v12203
  %vm12205 = vweird.f32 %v12199
  %vm12206 = vweird.f32 %v12200
  %vm12207 = vmor %vm12205, %vm12206
  %v12208 = vsel %vm12207, %v12200, %v12204
  %v12209 = vand.u32 2147483647, %v12199
  %vm12210 = vcmp.eq.f32.partialorder %v12209, 8.507059e+37
  %v12211 = vand.u32 %v12199, 2147483648
  %v12212 = vor.u32 1.1754944e-38, %v12211
  %v12213 = vsel %vm12210, %v12212, %v12208
  %v12214 = vmul.f32 %v12189, %v12213
  %v12215 = vmin.f32 %v12214, 1.0
  %v12216 = vmax.f32 %v12215, -1.0
  %v12217 = vmul.f32 %v10476, %v10476
  %v12218 = vmin.f32 16.0, %v12217
  %v12219 = vmul.f32 %v12218, 2.1237322e-06
  %v12220 = vadd.f32 %v12219, 0.00028619796
  %v12221 = vmul.f32 %v12218, %v12220
  %v12222 = vadd.f32 %v12221, 0.0036580483
  %v12223 = vmul.f32 %v12218, %v12222
  %v12224 = vadd.f32 %v12223, 0.05243302
  %v12225 = vmul.f32 %v12218, %v12224
  %v12226 = vadd.f32 %v12225, 0.18741608
  %v12227 = vmul.f32 %v12218, %v12226
  %v12228 = vadd.f32 %v12227, 1.1283791
  %v12229 = vmul.f32 %v10476, %v12228
  %v12230 = vmul.f32 %v12218, 3.8918573e-05
  %v12231 = vadd.f32 %v12230, 0.001143296
  %v12232 = vmul.f32 %v12218, %v12231
  %v12233 = vadd.f32 %v12232, 0.014752088
  %v12234 = vmul.f32 %v12218, %v12233
  %v12235 = vadd.f32 %v12234, 0.112945676
  %v12236 = vmul.f32 %v12218, %v12235
  %v12237 = vadd.f32 %v12236, 0.4994258
  %v12238 = vmul.f32 %v12218, %v12237
  %v12239 = vadd.f32 %v12238, 1.0
  %v12240 = vrcp.pop %v12239
  %v12241 = vmul.f32 %v12239, %v12240
  %v12242 = vsub.f32 1.0, %v12241
  %v12243 = vmul.f32 %v12240, %v12242
  %v12244 = vadd.f32 %v12240, %v12243
  %vm12245 = vweird.f32 %v12239
  %vm12246 = vweird.f32 %v12240
  %vm12247 = vmor %vm12245, %vm12246
  %v12248 = vsel %vm12247, %v12240, %v12244
  %v12249 = vand.u32 2147483647, %v12239
  %vm12250 = vcmp.eq.f32.partialorder %v12249, 8.507059e+37
  %v12251 = vand.u32 %v12239, 2147483648
  %v12252 = vor.u32 1.1754944e-38, %v12251
  %v12253 = vsel %vm12250, %v12252, %v12248
  %v12254 = vmul.f32 %v12229, %v12253
  %v12255 = vmin.f32 %v12254, 1.0
  %v12256 = vmax.f32 %v12255, -1.0
  %v12257 = vmul.f32 %v10477, %v10477
  %v12258 = vmin.f32 16.0, %v12257
  %v12259 = vmul.f32 %v12258, 2.1237322e-06
  %v12260 = vadd.f32 %v12259, 0.00028619796
  %v12261 = vmul.f32 %v12258, %v12260
  %v12262 = vadd.f32 %v12261, 0.0036580483
  %v12263 = vmul.f32 %v12258, %v12262
  %v12264 = vadd.f32 %v12263, 0.05243302
  %v12265 = vmul.f32 %v12258, %v12264
  %v12266 = vadd.f32 %v12265, 0.18741608
  %v12267 = vmul.f32 %v12258, %v12266
  %v12268 = vadd.f32 %v12267, 1.1283791
  %v12269 = vmul.f32 %v10477, %v12268
  %v12270 = vmul.f32 %v12258, 3.8918573e-05
  %v12271 = vadd.f32 %v12270, 0.001143296
  %v12272 = vmul.f32 %v12258, %v12271
  %v12273 = vadd.f32 %v12272, 0.014752088
  %v12274 = vmul.f32 %v12258, %v12273
  %v12275 = vadd.f32 %v12274, 0.112945676
  %v12276 = vmul.f32 %v12258, %v12275
  %v12277 = vadd.f32 %v12276, 0.4994258
  %v12278 = vmul.f32 %v12258, %v12277
  %v12279 = vadd.f32 %v12278, 1.0
  %v12280 = vrcp.pop %v12279
  %v12281 = vmul.f32 %v12279, %v12280
  %v12282 = vsub.f32 1.0, %v12281
  %v12283 = vmul.f32 %v12280, %v12282
  %v12284 = vadd.f32 %v12280, %v12283
  %vm12285 = vweird.f32 %v12279
  %vm12286 = vweird.f32 %v12280
  %vm12287 = vmor %vm12285, %vm12286
  %v12288 = vsel %vm12287, %v12280, %v12284
  %v12289 = vand.u32 2147483647, %v12279
  %vm12290 = vcmp.eq.f32.partialorder %v12289, 8.507059e+37
  %v12291 = vand.u32 %v12279, 2147483648
  %v12292 = vor.u32 1.1754944e-38, %v12291
  %v12293 = vsel %vm12290, %v12292, %v12288
  %v12294 = vmul.f32 %v12269, %v12293
  %v12295 = vmin.f32 %v12294, 1.0
  %v12296 = vmax.f32 %v12295, -1.0
  %v12297 = vmul.f32 %v10478, %v10478
  %v12298 = vmin.f32 16.0, %v12297
  %v12299 = vmul.f32 %v12298, 2.1237322e-06
  %v12300 = vadd.f32 %v12299, 0.00028619796
  %v12301 = vmul.f32 %v12298, %v12300
  %v12302 = vadd.f32 %v12301, 0.0036580483
  %v12303 = vmul.f32 %v12298, %v12302
  %v12304 = vadd.f32 %v12303, 0.05243302
  %v12305 = vmul.f32 %v12298, %v12304
  %v12306 = vadd.f32 %v12305, 0.18741608
  %v12307 = vmul.f32 %v12298, %v12306
  %v12308 = vadd.f32 %v12307, 1.1283791
  %v12309 = vmul.f32 %v10478, %v12308
  %v12310 = vmul.f32 %v12298, 3.8918573e-05
  %v12311 = vadd.f32 %v12310, 0.001143296
  %v12312 = vmul.f32 %v12298, %v12311
  %v12313 = vadd.f32 %v12312, 0.014752088
  %v12314 = vmul.f32 %v12298, %v12313
  %v12315 = vadd.f32 %v12314, 0.112945676
  %v12316 = vmul.f32 %v12298, %v12315
  %v12317 = vadd.f32 %v12316, 0.4994258
  %v12318 = vmul.f32 %v12298, %v12317
  %v12319 = vadd.f32 %v12318, 1.0
  %v12320 = vrcp.pop %v12319
  %v12321 = vmul.f32 %v12319, %v12320
  %v12322 = vsub.f32 1.0, %v12321
  %v12323 = vmul.f32 %v12320, %v12322
  %v12324 = vadd.f32 %v12320, %v12323
  %vm12325 = vweird.f32 %v12319
  %vm12326 = vweird.f32 %v12320
  %vm12327 = vmor %vm12325, %vm12326
  %v12328 = vsel %vm12327, %v12320, %v12324
  %v12329 = vand.u32 2147483647, %v12319
  %vm12330 = vcmp.eq.f32.partialorder %v12329, 8.507059e+37
  %v12331 = vand.u32 %v12319, 2147483648
  %v12332 = vor.u32 1.1754944e-38, %v12331
  %v12333 = vsel %vm12330, %v12332, %v12328
  %v12334 = vmul.f32 %v12309, %v12333
  %v12335 = vmin.f32 %v12334, 1.0
  %v12336 = vmax.f32 %v12335, -1.0
  %v12337 = vmul.f32 %v10479, %v10479
  %v12338 = vmin.f32 16.0, %v12337
  %v12339 = vmul.f32 %v12338, 2.1237322e-06
  %v12340 = vadd.f32 %v12339, 0.00028619796
  %v12341 = vmul.f32 %v12338, %v12340
  %v12342 = vadd.f32 %v12341, 0.0036580483
  %v12343 = vmul.f32 %v12338, %v12342
  %v12344 = vadd.f32 %v12343, 0.05243302
  %v12345 = vmul.f32 %v12338, %v12344
  %v12346 = vadd.f32 %v12345, 0.18741608
  %v12347 = vmul.f32 %v12338, %v12346
  %v12348 = vadd.f32 %v12347, 1.1283791
  %v12349 = vmul.f32 %v10479, %v12348
  %v12350 = vmul.f32 %v12338, 3.8918573e-05
  %v12351 = vadd.f32 %v12350, 0.001143296
  %v12352 = vmul.f32 %v12338, %v12351
  %v12353 = vadd.f32 %v12352, 0.014752088
  %v12354 = vmul.f32 %v12338, %v12353
  %v12355 = vadd.f32 %v12354, 0.112945676
  %v12356 = vmul.f32 %v12338, %v12355
  %v12357 = vadd.f32 %v12356, 0.4994258
  %v12358 = vmul.f32 %v12338, %v12357
  %v12359 = vadd.f32 %v12358, 1.0
  %v12360 = vrcp.pop %v12359
  %v12361 = vmul.f32 %v12359, %v12360
  %v12362 = vsub.f32 1.0, %v12361
  %v12363 = vmul.f32 %v12360, %v12362
  %v12364 = vadd.f32 %v12360, %v12363
  %vm12365 = vweird.f32 %v12359
  %vm12366 = vweird.f32 %v12360
  %vm12367 = vmor %vm12365, %vm12366
  %v12368 = vsel %vm12367, %v12360, %v12364
  %v12369 = vand.u32 2147483647, %v12359
  %vm12370 = vcmp.eq.f32.partialorder %v12369, 8.507059e+37
  %v12371 = vand.u32 %v12359, 2147483648
  %v12372 = vor.u32 1.1754944e-38, %v12371
  %v12373 = vsel %vm12370, %v12372, %v12368
  %v12374 = vmul.f32 %v12349, %v12373
  %v12375 = vmin.f32 %v12374, 1.0
  %v12376 = vmax.f32 %v12375, -1.0
  %v12377 = vmul.f32 %v10480, %v10480
  %v12378 = vmin.f32 16.0, %v12377
  %v12379 = vmul.f32 %v12378, 2.1237322e-06
  %v12380 = vadd.f32 %v12379, 0.00028619796
  %v12381 = vmul.f32 %v12378, %v12380
  %v12382 = vadd.f32 %v12381, 0.0036580483
  %v12383 = vmul.f32 %v12378, %v12382
  %v12384 = vadd.f32 %v12383, 0.05243302
  %v12385 = vmul.f32 %v12378, %v12384
  %v12386 = vadd.f32 %v12385, 0.18741608
  %v12387 = vmul.f32 %v12378, %v12386
  %v12388 = vadd.f32 %v12387, 1.1283791
  %v12389 = vmul.f32 %v10480, %v12388
  %v12390 = vmul.f32 %v12378, 3.8918573e-05
  %v12391 = vadd.f32 %v12390, 0.001143296
  %v12392 = vmul.f32 %v12378, %v12391
  %v12393 = vadd.f32 %v12392, 0.014752088
  %v12394 = vmul.f32 %v12378, %v12393
  %v12395 = vadd.f32 %v12394, 0.112945676
  %v12396 = vmul.f32 %v12378, %v12395
  %v12397 = vadd.f32 %v12396, 0.4994258
  %v12398 = vmul.f32 %v12378, %v12397
  %v12399 = vadd.f32 %v12398, 1.0
  %v12400 = vrcp.pop %v12399
  %v12401 = vmul.f32 %v12399, %v12400
  %v12402 = vsub.f32 1.0, %v12401
  %v12403 = vmul.f32 %v12400, %v12402
  %v12404 = vadd.f32 %v12400, %v12403
  %vm12405 = vweird.f32 %v12399
  %vm12406 = vweird.f32 %v12400
  %vm12407 = vmor %vm12405, %vm12406
  %v12408 = vsel %vm12407, %v12400, %v12404
  %v12409 = vand.u32 2147483647, %v12399
  %vm12410 = vcmp.eq.f32.partialorder %v12409, 8.507059e+37
  %v12411 = vand.u32 %v12399, 2147483648
  %v12412 = vor.u32 1.1754944e-38, %v12411
  %v12413 = vsel %vm12410, %v12412, %v12408
  %v12414 = vmul.f32 %v12389, %v12413
  %v12415 = vmin.f32 %v12414, 1.0
  %v12416 = vmax.f32 %v12415, -1.0
  %v12417 = vmul.f32 %v10481, %v10481
  %v12418 = vmin.f32 16.0, %v12417
  %v12419 = vmul.f32 %v12418, 2.1237322e-06
  %v12420 = vadd.f32 %v12419, 0.00028619796
  %v12421 = vmul.f32 %v12418, %v12420
  %v12422 = vadd.f32 %v12421, 0.0036580483
  %v12423 = vmul.f32 %v12418, %v12422
  %v12424 = vadd.f32 %v12423, 0.05243302
  %v12425 = vmul.f32 %v12418, %v12424
  %v12426 = vadd.f32 %v12425, 0.18741608
  %v12427 = vmul.f32 %v12418, %v12426
  %v12428 = vadd.f32 %v12427, 1.1283791
  %v12429 = vmul.f32 %v10481, %v12428
  %v12430 = vmul.f32 %v12418, 3.8918573e-05
  %v12431 = vadd.f32 %v12430, 0.001143296
  %v12432 = vmul.f32 %v12418, %v12431
  %v12433 = vadd.f32 %v12432, 0.014752088
  %v12434 = vmul.f32 %v12418, %v12433
  %v12435 = vadd.f32 %v12434, 0.112945676
  %v12436 = vmul.f32 %v12418, %v12435
  %v12437 = vadd.f32 %v12436, 0.4994258
  %v12438 = vmul.f32 %v12418, %v12437
  %v12439 = vadd.f32 %v12438, 1.0
  %v12440 = vrcp.pop %v12439
  %v12441 = vmul.f32 %v12439, %v12440
  %v12442 = vsub.f32 1.0, %v12441
  %v12443 = vmul.f32 %v12440, %v12442
  %v12444 = vadd.f32 %v12440, %v12443
  %vm12445 = vweird.f32 %v12439
  %vm12446 = vweird.f32 %v12440
  %vm12447 = vmor %vm12445, %vm12446
  %v12448 = vsel %vm12447, %v12440, %v12444
  %v12449 = vand.u32 2147483647, %v12439
  %vm12450 = vcmp.eq.f32.partialorder %v12449, 8.507059e+37
  %v12451 = vand.u32 %v12439, 2147483648
  %v12452 = vor.u32 1.1754944e-38, %v12451
  %v12453 = vsel %vm12450, %v12452, %v12448
  %v12454 = vmul.f32 %v12429, %v12453
  %v12455 = vmin.f32 %v12454, 1.0
  %v12456 = vmax.f32 %v12455, -1.0
  %v12457 = vmul.f32 %v10482, %v10482
  %v12458 = vmin.f32 16.0, %v12457
  %v12459 = vmul.f32 %v12458, 2.1237322e-06
  %v12460 = vadd.f32 %v12459, 0.00028619796
  %v12461 = vmul.f32 %v12458, %v12460
  %v12462 = vadd.f32 %v12461, 0.0036580483
  %v12463 = vmul.f32 %v12458, %v12462
  %v12464 = vadd.f32 %v12463, 0.05243302
  %v12465 = vmul.f32 %v12458, %v12464
  %v12466 = vadd.f32 %v12465, 0.18741608
  %v12467 = vmul.f32 %v12458, %v12466
  %v12468 = vadd.f32 %v12467, 1.1283791
  %v12469 = vmul.f32 %v10482, %v12468
  %v12470 = vmul.f32 %v12458, 3.8918573e-05
  %v12471 = vadd.f32 %v12470, 0.001143296
  %v12472 = vmul.f32 %v12458, %v12471
  %v12473 = vadd.f32 %v12472, 0.014752088
  %v12474 = vmul.f32 %v12458, %v12473
  %v12475 = vadd.f32 %v12474, 0.112945676
  %v12476 = vmul.f32 %v12458, %v12475
  %v12477 = vadd.f32 %v12476, 0.4994258
  %v12478 = vmul.f32 %v12458, %v12477
  %v12479 = vadd.f32 %v12478, 1.0
  %v12480 = vrcp.pop %v12479
  %v12481 = vmul.f32 %v12479, %v12480
  %v12482 = vsub.f32 1.0, %v12481
  %v12483 = vmul.f32 %v12480, %v12482
  %v12484 = vadd.f32 %v12480, %v12483
  %vm12485 = vweird.f32 %v12479
  %vm12486 = vweird.f32 %v12480
  %vm12487 = vmor %vm12485, %vm12486
  %v12488 = vsel %vm12487, %v12480, %v12484
  %v12489 = vand.u32 2147483647, %v12479
  %vm12490 = vcmp.eq.f32.partialorder %v12489, 8.507059e+37
  %v12491 = vand.u32 %v12479, 2147483648
  %v12492 = vor.u32 1.1754944e-38, %v12491
  %v12493 = vsel %vm12490, %v12492, %v12488
  %v12494 = vmul.f32 %v12469, %v12493
  %v12495 = vmin.f32 %v12494, 1.0
  %v12496 = vmax.f32 %v12495, -1.0
  %v12497 = vmul.f32 %v10483, %v10483
  %v12498 = vmin.f32 16.0, %v12497
  %v12499 = vmul.f32 %v12498, 2.1237322e-06
  %v12500 = vadd.f32 %v12499, 0.00028619796
  %v12501 = vmul.f32 %v12498, %v12500
  %v12502 = vadd.f32 %v12501, 0.0036580483
  %v12503 = vmul.f32 %v12498, %v12502
  %v12504 = vadd.f32 %v12503, 0.05243302
  %v12505 = vmul.f32 %v12498, %v12504
  %v12506 = vadd.f32 %v12505, 0.18741608
  %v12507 = vmul.f32 %v12498, %v12506
  %v12508 = vadd.f32 %v12507, 1.1283791
  %v12509 = vmul.f32 %v10483, %v12508
  %v12510 = vmul.f32 %v12498, 3.8918573e-05
  %v12511 = vadd.f32 %v12510, 0.001143296
  %v12512 = vmul.f32 %v12498, %v12511
  %v12513 = vadd.f32 %v12512, 0.014752088
  %v12514 = vmul.f32 %v12498, %v12513
  %v12515 = vadd.f32 %v12514, 0.112945676
  %v12516 = vmul.f32 %v12498, %v12515
  %v12517 = vadd.f32 %v12516, 0.4994258
  %v12518 = vmul.f32 %v12498, %v12517
  %v12519 = vadd.f32 %v12518, 1.0
  %v12520 = vrcp.pop %v12519
  %v12521 = vmul.f32 %v12519, %v12520
  %v12522 = vsub.f32 1.0, %v12521
  %v12523 = vmul.f32 %v12520, %v12522
  %v12524 = vadd.f32 %v12520, %v12523
  %vm12525 = vweird.f32 %v12519
  %vm12526 = vweird.f32 %v12520
  %vm12527 = vmor %vm12525, %vm12526
  %v12528 = vsel %vm12527, %v12520, %v12524
  %v12529 = vand.u32 2147483647, %v12519
  %vm12530 = vcmp.eq.f32.partialorder %v12529, 8.507059e+37
  %v12531 = vand.u32 %v12519, 2147483648
  %v12532 = vor.u32 1.1754944e-38, %v12531
  %v12533 = vsel %vm12530, %v12532, %v12528
  %v12534 = vmul.f32 %v12509, %v12533
  %v12535 = vmin.f32 %v12534, 1.0
  %v12536 = vmax.f32 %v12535, -1.0
  %v12537 = vmul.f32 %v10484, %v10484
  %v12538 = vmin.f32 16.0, %v12537
  %v12539 = vmul.f32 %v12538, 2.1237322e-06
  %v12540 = vadd.f32 %v12539, 0.00028619796
  %v12541 = vmul.f32 %v12538, %v12540
  %v12542 = vadd.f32 %v12541, 0.0036580483
  %v12543 = vmul.f32 %v12538, %v12542
  %v12544 = vadd.f32 %v12543, 0.05243302
  %v12545 = vmul.f32 %v12538, %v12544
  %v12546 = vadd.f32 %v12545, 0.18741608
  %v12547 = vmul.f32 %v12538, %v12546
  %v12548 = vadd.f32 %v12547, 1.1283791
  %v12549 = vmul.f32 %v10484, %v12548
  %v12550 = vmul.f32 %v12538, 3.8918573e-05
  %v12551 = vadd.f32 %v12550, 0.001143296
  %v12552 = vmul.f32 %v12538, %v12551
  %v12553 = vadd.f32 %v12552, 0.014752088
  %v12554 = vmul.f32 %v12538, %v12553
  %v12555 = vadd.f32 %v12554, 0.112945676
  %v12556 = vmul.f32 %v12538, %v12555
  %v12557 = vadd.f32 %v12556, 0.4994258
  %v12558 = vmul.f32 %v12538, %v12557
  %v12559 = vadd.f32 %v12558, 1.0
  %v12560 = vrcp.pop %v12559
  %v12561 = vmul.f32 %v12559, %v12560
  %v12562 = vsub.f32 1.0, %v12561
  %v12563 = vmul.f32 %v12560, %v12562
  %v12564 = vadd.f32 %v12560, %v12563
  %vm12565 = vweird.f32 %v12559
  %vm12566 = vweird.f32 %v12560
  %vm12567 = vmor %vm12565, %vm12566
  %v12568 = vsel %vm12567, %v12560, %v12564
  %v12569 = vand.u32 2147483647, %v12559
  %vm12570 = vcmp.eq.f32.partialorder %v12569, 8.507059e+37
  %v12571 = vand.u32 %v12559, 2147483648
  %v12572 = vor.u32 1.1754944e-38, %v12571
  %v12573 = vsel %vm12570, %v12572, %v12568
  %v12574 = vmul.f32 %v12549, %v12573
  %v12575 = vmin.f32 %v12574, 1.0
  %v12576 = vmax.f32 %v12575, -1.0
  %v12577 = vmul.f32 %v10485, %v10485
  %v12578 = vmin.f32 16.0, %v12577
  %v12579 = vmul.f32 %v12578, 2.1237322e-06
  %v12580 = vadd.f32 %v12579, 0.00028619796
  %v12581 = vmul.f32 %v12578, %v12580
  %v12582 = vadd.f32 %v12581, 0.0036580483
  %v12583 = vmul.f32 %v12578, %v12582
  %v12584 = vadd.f32 %v12583, 0.05243302
  %v12585 = vmul.f32 %v12578, %v12584
  %v12586 = vadd.f32 %v12585, 0.18741608
  %v12587 = vmul.f32 %v12578, %v12586
  %v12588 = vadd.f32 %v12587, 1.1283791
  %v12589 = vmul.f32 %v10485, %v12588
  %v12590 = vmul.f32 %v12578, 3.8918573e-05
  %v12591 = vadd.f32 %v12590, 0.001143296
  %v12592 = vmul.f32 %v12578, %v12591
  %v12593 = vadd.f32 %v12592, 0.014752088
  %v12594 = vmul.f32 %v12578, %v12593
  %v12595 = vadd.f32 %v12594, 0.112945676
  %v12596 = vmul.f32 %v12578, %v12595
  %v12597 = vadd.f32 %v12596, 0.4994258
  %v12598 = vmul.f32 %v12578, %v12597
  %v12599 = vadd.f32 %v12598, 1.0
  %v12600 = vrcp.pop %v12599
  %v12601 = vmul.f32 %v12599, %v12600
  %v12602 = vsub.f32 1.0, %v12601
  %v12603 = vmul.f32 %v12600, %v12602
  %v12604 = vadd.f32 %v12600, %v12603
  %vm12605 = vweird.f32 %v12599
  %vm12606 = vweird.f32 %v12600
  %vm12607 = vmor %vm12605, %vm12606
  %v12608 = vsel %vm12607, %v12600, %v12604
  %v12609 = vand.u32 2147483647, %v12599
  %vm12610 = vcmp.eq.f32.partialorder %v12609, 8.507059e+37
  %v12611 = vand.u32 %v12599, 2147483648
  %v12612 = vor.u32 1.1754944e-38, %v12611
  %v12613 = vsel %vm12610, %v12612, %v12608
  %v12614 = vmul.f32 %v12589, %v12613
  %v12615 = vmin.f32 %v12614, 1.0
  %v12616 = vmax.f32 %v12615, -1.0
  %v12617 = vmul.f32 %v10486, %v10486
  %v12618 = vmin.f32 16.0, %v12617
  %v12619 = vmul.f32 %v12618, 2.1237322e-06
  %v12620 = vadd.f32 %v12619, 0.00028619796
  %v12621 = vmul.f32 %v12618, %v12620
  %v12622 = vadd.f32 %v12621, 0.0036580483
  %v12623 = vmul.f32 %v12618, %v12622
  %v12624 = vadd.f32 %v12623, 0.05243302
  %v12625 = vmul.f32 %v12618, %v12624
  %v12626 = vadd.f32 %v12625, 0.18741608
  %v12627 = vmul.f32 %v12618, %v12626
  %v12628 = vadd.f32 %v12627, 1.1283791
  %v12629 = vmul.f32 %v10486, %v12628
  %v12630 = vmul.f32 %v12618, 3.8918573e-05
  %v12631 = vadd.f32 %v12630, 0.001143296
  %v12632 = vmul.f32 %v12618, %v12631
  %v12633 = vadd.f32 %v12632, 0.014752088
  %v12634 = vmul.f32 %v12618, %v12633
  %v12635 = vadd.f32 %v12634, 0.112945676
  %v12636 = vmul.f32 %v12618, %v12635
  %v12637 = vadd.f32 %v12636, 0.4994258
  %v12638 = vmul.f32 %v12618, %v12637
  %v12639 = vadd.f32 %v12638, 1.0
  %v12640 = vrcp.pop %v12639
  %v12641 = vmul.f32 %v12639, %v12640
  %v12642 = vsub.f32 1.0, %v12641
  %v12643 = vmul.f32 %v12640, %v12642
  %v12644 = vadd.f32 %v12640, %v12643
  %vm12645 = vweird.f32 %v12639
  %vm12646 = vweird.f32 %v12640
  %vm12647 = vmor %vm12645, %vm12646
  %v12648 = vsel %vm12647, %v12640, %v12644
  %v12649 = vand.u32 2147483647, %v12639
  %vm12650 = vcmp.eq.f32.partialorder %v12649, 8.507059e+37
  %v12651 = vand.u32 %v12639, 2147483648
  %v12652 = vor.u32 1.1754944e-38, %v12651
  %v12653 = vsel %vm12650, %v12652, %v12648
  %v12654 = vmul.f32 %v12629, %v12653
  %v12655 = vmin.f32 %v12654, 1.0
  %v12656 = vmax.f32 %v12655, -1.0
  %v12657 = vmul.f32 %v10487, %v10487
  %v12658 = vmin.f32 16.0, %v12657
  %v12659 = vmul.f32 %v12658, 2.1237322e-06
  %v12660 = vadd.f32 %v12659, 0.00028619796
  %v12661 = vmul.f32 %v12658, %v12660
  %v12662 = vadd.f32 %v12661, 0.0036580483
  %v12663 = vmul.f32 %v12658, %v12662
  %v12664 = vadd.f32 %v12663, 0.05243302
  %v12665 = vmul.f32 %v12658, %v12664
  %v12666 = vadd.f32 %v12665, 0.18741608
  %v12667 = vmul.f32 %v12658, %v12666
  %v12668 = vadd.f32 %v12667, 1.1283791
  %v12669 = vmul.f32 %v10487, %v12668
  %v12670 = vmul.f32 %v12658, 3.8918573e-05
  %v12671 = vadd.f32 %v12670, 0.001143296
  %v12672 = vmul.f32 %v12658, %v12671
  %v12673 = vadd.f32 %v12672, 0.014752088
  %v12674 = vmul.f32 %v12658, %v12673
  %v12675 = vadd.f32 %v12674, 0.112945676
  %v12676 = vmul.f32 %v12658, %v12675
  %v12677 = vadd.f32 %v12676, 0.4994258
  %v12678 = vmul.f32 %v12658, %v12677
  %v12679 = vadd.f32 %v12678, 1.0
  %v12680 = vrcp.pop %v12679
  %v12681 = vmul.f32 %v12679, %v12680
  %v12682 = vsub.f32 1.0, %v12681
  %v12683 = vmul.f32 %v12680, %v12682
  %v12684 = vadd.f32 %v12680, %v12683
  %vm12685 = vweird.f32 %v12679
  %vm12686 = vweird.f32 %v12680
  %vm12687 = vmor %vm12685, %vm12686
  %v12688 = vsel %vm12687, %v12680, %v12684
  %v12689 = vand.u32 2147483647, %v12679
  %vm12690 = vcmp.eq.f32.partialorder %v12689, 8.507059e+37
  %v12691 = vand.u32 %v12679, 2147483648
  %v12692 = vor.u32 1.1754944e-38, %v12691
  %v12693 = vsel %vm12690, %v12692, %v12688
  %v12694 = vmul.f32 %v12669, %v12693
  %v12695 = vmin.f32 %v12694, 1.0
  %v12696 = vmax.f32 %v12695, -1.0
  %v12697 = vmul.f32 %v10488, %v10488
  %v12698 = vmin.f32 16.0, %v12697
  %v12699 = vmul.f32 %v12698, 2.1237322e-06
  %v12700 = vadd.f32 %v12699, 0.00028619796
  %v12701 = vmul.f32 %v12698, %v12700
  %v12702 = vadd.f32 %v12701, 0.0036580483
  %v12703 = vmul.f32 %v12698, %v12702
  %v12704 = vadd.f32 %v12703, 0.05243302
  %v12705 = vmul.f32 %v12698, %v12704
  %v12706 = vadd.f32 %v12705, 0.18741608
  %v12707 = vmul.f32 %v12698, %v12706
  %v12708 = vadd.f32 %v12707, 1.1283791
  %v12709 = vmul.f32 %v10488, %v12708
  %v12710 = vmul.f32 %v12698, 3.8918573e-05
  %v12711 = vadd.f32 %v12710, 0.001143296
  %v12712 = vmul.f32 %v12698, %v12711
  %v12713 = vadd.f32 %v12712, 0.014752088
  %v12714 = vmul.f32 %v12698, %v12713
  %v12715 = vadd.f32 %v12714, 0.112945676
  %v12716 = vmul.f32 %v12698, %v12715
  %v12717 = vadd.f32 %v12716, 0.4994258
  %v12718 = vmul.f32 %v12698, %v12717
  %v12719 = vadd.f32 %v12718, 1.0
  %v12720 = vrcp.pop %v12719
  %v12721 = vmul.f32 %v12719, %v12720
  %v12722 = vsub.f32 1.0, %v12721
  %v12723 = vmul.f32 %v12720, %v12722
  %v12724 = vadd.f32 %v12720, %v12723
  %vm12725 = vweird.f32 %v12719
  %vm12726 = vweird.f32 %v12720
  %vm12727 = vmor %vm12725, %vm12726
  %v12728 = vsel %vm12727, %v12720, %v12724
  %v12729 = vand.u32 2147483647, %v12719
  %vm12730 = vcmp.eq.f32.partialorder %v12729, 8.507059e+37
  %v12731 = vand.u32 %v12719, 2147483648
  %v12732 = vor.u32 1.1754944e-38, %v12731
  %v12733 = vsel %vm12730, %v12732, %v12728
  %v12734 = vmul.f32 %v12709, %v12733
  %v12735 = vmin.f32 %v12734, 1.0
  %v12736 = vmax.f32 %v12735, -1.0
  %v12737 = vmul.f32 %v10489, %v10489
  %v12738 = vmin.f32 16.0, %v12737
  %v12739 = vmul.f32 %v12738, 2.1237322e-06
  %v12740 = vadd.f32 %v12739, 0.00028619796
  %v12741 = vmul.f32 %v12738, %v12740
  %v12742 = vadd.f32 %v12741, 0.0036580483
  %v12743 = vmul.f32 %v12738, %v12742
  %v12744 = vadd.f32 %v12743, 0.05243302
  %v12745 = vmul.f32 %v12738, %v12744
  %v12746 = vadd.f32 %v12745, 0.18741608
  %v12747 = vmul.f32 %v12738, %v12746
  %v12748 = vadd.f32 %v12747, 1.1283791
  %v12749 = vmul.f32 %v10489, %v12748
  %v12750 = vmul.f32 %v12738, 3.8918573e-05
  %v12751 = vadd.f32 %v12750, 0.001143296
  %v12752 = vmul.f32 %v12738, %v12751
  %v12753 = vadd.f32 %v12752, 0.014752088
  %v12754 = vmul.f32 %v12738, %v12753
  %v12755 = vadd.f32 %v12754, 0.112945676
  %v12756 = vmul.f32 %v12738, %v12755
  %v12757 = vadd.f32 %v12756, 0.4994258
  %v12758 = vmul.f32 %v12738, %v12757
  %v12759 = vadd.f32 %v12758, 1.0
  %v12760 = vrcp.pop %v12759
  %v12761 = vmul.f32 %v12759, %v12760
  %v12762 = vsub.f32 1.0, %v12761
  %v12763 = vmul.f32 %v12760, %v12762
  %v12764 = vadd.f32 %v12760, %v12763
  %vm12765 = vweird.f32 %v12759
  %vm12766 = vweird.f32 %v12760
  %vm12767 = vmor %vm12765, %vm12766
  %v12768 = vsel %vm12767, %v12760, %v12764
  %v12769 = vand.u32 2147483647, %v12759
  %vm12770 = vcmp.eq.f32.partialorder %v12769, 8.507059e+37
  %v12771 = vand.u32 %v12759, 2147483648
  %v12772 = vor.u32 1.1754944e-38, %v12771
  %v12773 = vsel %vm12770, %v12772, %v12768
  %v12774 = vmul.f32 %v12749, %v12773
  %v12775 = vmin.f32 %v12774, 1.0
  %v12776 = vmax.f32 %v12775, -1.0
  %v12777 = vmul.f32 %v10490, %v10490
  %v12778 = vmin.f32 16.0, %v12777
  %v12779 = vmul.f32 %v12778, 2.1237322e-06
  %v12780 = vadd.f32 %v12779, 0.00028619796
  %v12781 = vmul.f32 %v12778, %v12780
  %v12782 = vadd.f32 %v12781, 0.0036580483
  %v12783 = vmul.f32 %v12778, %v12782
  %v12784 = vadd.f32 %v12783, 0.05243302
  %v12785 = vmul.f32 %v12778, %v12784
  %v12786 = vadd.f32 %v12785, 0.18741608
  %v12787 = vmul.f32 %v12778, %v12786
  %v12788 = vadd.f32 %v12787, 1.1283791
  %v12789 = vmul.f32 %v10490, %v12788
  %v12790 = vmul.f32 %v12778, 3.8918573e-05
  %v12791 = vadd.f32 %v12790, 0.001143296
  %v12792 = vmul.f32 %v12778, %v12791
  %v12793 = vadd.f32 %v12792, 0.014752088
  %v12794 = vmul.f32 %v12778, %v12793
  %v12795 = vadd.f32 %v12794, 0.112945676
  %v12796 = vmul.f32 %v12778, %v12795
  %v12797 = vadd.f32 %v12796, 0.4994258
  %v12798 = vmul.f32 %v12778, %v12797
  %v12799 = vadd.f32 %v12798, 1.0
  %v12800 = vrcp.pop %v12799
  %v12801 = vmul.f32 %v12799, %v12800
  %v12802 = vsub.f32 1.0, %v12801
  %v12803 = vmul.f32 %v12800, %v12802
  %v12804 = vadd.f32 %v12800, %v12803
  %vm12805 = vweird.f32 %v12799
  %vm12806 = vweird.f32 %v12800
  %vm12807 = vmor %vm12805, %vm12806
  %v12808 = vsel %vm12807, %v12800, %v12804
  %v12809 = vand.u32 2147483647, %v12799
  %vm12810 = vcmp.eq.f32.partialorder %v12809, 8.507059e+37
  %v12811 = vand.u32 %v12799, 2147483648
  %v12812 = vor.u32 1.1754944e-38, %v12811
  %v12813 = vsel %vm12810, %v12812, %v12808
  %v12814 = vmul.f32 %v12789, %v12813
  %v12815 = vmin.f32 %v12814, 1.0
  %v12816 = vmax.f32 %v12815, -1.0
  %v12817 = vmul.f32 %v10491, %v10491
  %v12818 = vmin.f32 16.0, %v12817
  %v12819 = vmul.f32 %v12818, 2.1237322e-06
  %v12820 = vadd.f32 %v12819, 0.00028619796
  %v12821 = vmul.f32 %v12818, %v12820
  %v12822 = vadd.f32 %v12821, 0.0036580483
  %v12823 = vmul.f32 %v12818, %v12822
  %v12824 = vadd.f32 %v12823, 0.05243302
  %v12825 = vmul.f32 %v12818, %v12824
  %v12826 = vadd.f32 %v12825, 0.18741608
  %v12827 = vmul.f32 %v12818, %v12826
  %v12828 = vadd.f32 %v12827, 1.1283791
  %v12829 = vmul.f32 %v10491, %v12828
  %v12830 = vmul.f32 %v12818, 3.8918573e-05
  %v12831 = vadd.f32 %v12830, 0.001143296
  %v12832 = vmul.f32 %v12818, %v12831
  %v12833 = vadd.f32 %v12832, 0.014752088
  %v12834 = vmul.f32 %v12818, %v12833
  %v12835 = vadd.f32 %v12834, 0.112945676
  %v12836 = vmul.f32 %v12818, %v12835
  %v12837 = vadd.f32 %v12836, 0.4994258
  %v12838 = vmul.f32 %v12818, %v12837
  %v12839 = vadd.f32 %v12838, 1.0
  %v12840 = vrcp.pop %v12839
  %v12841 = vmul.f32 %v12839, %v12840
  %v12842 = vsub.f32 1.0, %v12841
  %v12843 = vmul.f32 %v12840, %v12842
  %v12844 = vadd.f32 %v12840, %v12843
  %vm12845 = vweird.f32 %v12839
  %vm12846 = vweird.f32 %v12840
  %vm12847 = vmor %vm12845, %vm12846
  %v12848 = vsel %vm12847, %v12840, %v12844
  %v12849 = vand.u32 2147483647, %v12839
  %vm12850 = vcmp.eq.f32.partialorder %v12849, 8.507059e+37
  %v12851 = vand.u32 %v12839, 2147483648
  %v12852 = vor.u32 1.1754944e-38, %v12851
  %v12853 = vsel %vm12850, %v12852, %v12848
  %v12854 = vmul.f32 %v12829, %v12853
  %v12855 = vmin.f32 %v12854, 1.0
  %v12856 = vmax.f32 %v12855, -1.0
  %v12857 = vmul.f32 %v10492, %v10492
  %v12858 = vmin.f32 16.0, %v12857
  %v12859 = vmul.f32 %v12858, 2.1237322e-06
  %v12860 = vadd.f32 %v12859, 0.00028619796
  %v12861 = vmul.f32 %v12858, %v12860
  %v12862 = vadd.f32 %v12861, 0.0036580483
  %v12863 = vmul.f32 %v12858, %v12862
  %v12864 = vadd.f32 %v12863, 0.05243302
  %v12865 = vmul.f32 %v12858, %v12864
  %v12866 = vadd.f32 %v12865, 0.18741608
  %v12867 = vmul.f32 %v12858, %v12866
  %v12868 = vadd.f32 %v12867, 1.1283791
  %v12869 = vmul.f32 %v10492, %v12868
  %v12870 = vmul.f32 %v12858, 3.8918573e-05
  %v12871 = vadd.f32 %v12870, 0.001143296
  %v12872 = vmul.f32 %v12858, %v12871
  %v12873 = vadd.f32 %v12872, 0.014752088
  %v12874 = vmul.f32 %v12858, %v12873
  %v12875 = vadd.f32 %v12874, 0.112945676
  %v12876 = vmul.f32 %v12858, %v12875
  %v12877 = vadd.f32 %v12876, 0.4994258
  %v12878 = vmul.f32 %v12858, %v12877
  %v12879 = vadd.f32 %v12878, 1.0
  %v12880 = vrcp.pop %v12879
  %v12881 = vmul.f32 %v12879, %v12880
  %v12882 = vsub.f32 1.0, %v12881
  %v12883 = vmul.f32 %v12880, %v12882
  %v12884 = vadd.f32 %v12880, %v12883
  %vm12885 = vweird.f32 %v12879
  %vm12886 = vweird.f32 %v12880
  %vm12887 = vmor %vm12885, %vm12886
  %v12888 = vsel %vm12887, %v12880, %v12884
  %v12889 = vand.u32 2147483647, %v12879
  %vm12890 = vcmp.eq.f32.partialorder %v12889, 8.507059e+37
  %v12891 = vand.u32 %v12879, 2147483648
  %v12892 = vor.u32 1.1754944e-38, %v12891
  %v12893 = vsel %vm12890, %v12892, %v12888
  %v12894 = vmul.f32 %v12869, %v12893
  %v12895 = vmin.f32 %v12894, 1.0
  %v12896 = vmax.f32 %v12895, -1.0
  %v12897 = vmul.f32 %v10493, %v10493
  %v12898 = vmin.f32 16.0, %v12897
  %v12899 = vmul.f32 %v12898, 2.1237322e-06
  %v12900 = vadd.f32 %v12899, 0.00028619796
  %v12901 = vmul.f32 %v12898, %v12900
  %v12902 = vadd.f32 %v12901, 0.0036580483
  %v12903 = vmul.f32 %v12898, %v12902
  %v12904 = vadd.f32 %v12903, 0.05243302
  %v12905 = vmul.f32 %v12898, %v12904
  %v12906 = vadd.f32 %v12905, 0.18741608
  %v12907 = vmul.f32 %v12898, %v12906
  %v12908 = vadd.f32 %v12907, 1.1283791
  %v12909 = vmul.f32 %v10493, %v12908
  %v12910 = vmul.f32 %v12898, 3.8918573e-05
  %v12911 = vadd.f32 %v12910, 0.001143296
  %v12912 = vmul.f32 %v12898, %v12911
  %v12913 = vadd.f32 %v12912, 0.014752088
  %v12914 = vmul.f32 %v12898, %v12913
  %v12915 = vadd.f32 %v12914, 0.112945676
  %v12916 = vmul.f32 %v12898, %v12915
  %v12917 = vadd.f32 %v12916, 0.4994258
  %v12918 = vmul.f32 %v12898, %v12917
  %v12919 = vadd.f32 %v12918, 1.0
  %v12920 = vrcp.pop %v12919
  %v12921 = vmul.f32 %v12919, %v12920
  %v12922 = vsub.f32 1.0, %v12921
  %v12923 = vmul.f32 %v12920, %v12922
  %v12924 = vadd.f32 %v12920, %v12923
  %vm12925 = vweird.f32 %v12919
  %vm12926 = vweird.f32 %v12920
  %vm12927 = vmor %vm12925, %vm12926
  %v12928 = vsel %vm12927, %v12920, %v12924
  %v12929 = vand.u32 2147483647, %v12919
  %vm12930 = vcmp.eq.f32.partialorder %v12929, 8.507059e+37
  %v12931 = vand.u32 %v12919, 2147483648
  %v12932 = vor.u32 1.1754944e-38, %v12931
  %v12933 = vsel %vm12930, %v12932, %v12928
  %v12934 = vmul.f32 %v12909, %v12933
  %v12935 = vmin.f32 %v12934, 1.0
  %v12936 = vmax.f32 %v12935, -1.0
  %v12937 = vmul.f32 %v10494, %v10494
  %v12938 = vmin.f32 16.0, %v12937
  %v12939 = vmul.f32 %v12938, 2.1237322e-06
  %v12940 = vadd.f32 %v12939, 0.00028619796
  %v12941 = vmul.f32 %v12938, %v12940
  %v12942 = vadd.f32 %v12941, 0.0036580483
  %v12943 = vmul.f32 %v12938, %v12942
  %v12944 = vadd.f32 %v12943, 0.05243302
  %v12945 = vmul.f32 %v12938, %v12944
  %v12946 = vadd.f32 %v12945, 0.18741608
  %v12947 = vmul.f32 %v12938, %v12946
  %v12948 = vadd.f32 %v12947, 1.1283791
  %v12949 = vmul.f32 %v10494, %v12948
  %v12950 = vmul.f32 %v12938, 3.8918573e-05
  %v12951 = vadd.f32 %v12950, 0.001143296
  %v12952 = vmul.f32 %v12938, %v12951
  %v12953 = vadd.f32 %v12952, 0.014752088
  %v12954 = vmul.f32 %v12938, %v12953
  %v12955 = vadd.f32 %v12954, 0.112945676
  %v12956 = vmul.f32 %v12938, %v12955
  %v12957 = vadd.f32 %v12956, 0.4994258
  %v12958 = vmul.f32 %v12938, %v12957
  %v12959 = vadd.f32 %v12958, 1.0
  %v12960 = vrcp.pop %v12959
  %v12961 = vmul.f32 %v12959, %v12960
  %v12962 = vsub.f32 1.0, %v12961
  %v12963 = vmul.f32 %v12960, %v12962
  %v12964 = vadd.f32 %v12960, %v12963
  %vm12965 = vweird.f32 %v12959
  %vm12966 = vweird.f32 %v12960
  %vm12967 = vmor %vm12965, %vm12966
  %v12968 = vsel %vm12967, %v12960, %v12964
  %v12969 = vand.u32 2147483647, %v12959
  %vm12970 = vcmp.eq.f32.partialorder %v12969, 8.507059e+37
  %v12971 = vand.u32 %v12959, 2147483648
  %v12972 = vor.u32 1.1754944e-38, %v12971
  %v12973 = vsel %vm12970, %v12972, %v12968
  %v12974 = vmul.f32 %v12949, %v12973
  %v12975 = vmin.f32 %v12974, 1.0
  %v12976 = vmax.f32 %v12975, -1.0
  %v12977 = vmul.f32 %v10495, %v10495
  %v12978 = vmin.f32 16.0, %v12977
  %v12979 = vmul.f32 %v12978, 2.1237322e-06
  %v12980 = vadd.f32 %v12979, 0.00028619796
  %v12981 = vmul.f32 %v12978, %v12980
  %v12982 = vadd.f32 %v12981, 0.0036580483
  %v12983 = vmul.f32 %v12978, %v12982
  %v12984 = vadd.f32 %v12983, 0.05243302
  %v12985 = vmul.f32 %v12978, %v12984
  %v12986 = vadd.f32 %v12985, 0.18741608
  %v12987 = vmul.f32 %v12978, %v12986
  %v12988 = vadd.f32 %v12987, 1.1283791
  %v12989 = vmul.f32 %v10495, %v12988
  %v12990 = vmul.f32 %v12978, 3.8918573e-05
  %v12991 = vadd.f32 %v12990, 0.001143296
  %v12992 = vmul.f32 %v12978, %v12991
  %v12993 = vadd.f32 %v12992, 0.014752088
  %v12994 = vmul.f32 %v12978, %v12993
  %v12995 = vadd.f32 %v12994, 0.112945676
  %v12996 = vmul.f32 %v12978, %v12995
  %v12997 = vadd.f32 %v12996, 0.4994258
  %v12998 = vmul.f32 %v12978, %v12997
  %v12999 = vadd.f32 %v12998, 1.0
  %v13000 = vrcp.pop %v12999
  %v13001 = vmul.f32 %v12999, %v13000
  %v13002 = vsub.f32 1.0, %v13001
  %v13003 = vmul.f32 %v13000, %v13002
  %v13004 = vadd.f32 %v13000, %v13003
  %vm13005 = vweird.f32 %v12999
  %vm13006 = vweird.f32 %v13000
  %vm13007 = vmor %vm13005, %vm13006
  %v13008 = vsel %vm13007, %v13000, %v13004
  %v13009 = vand.u32 2147483647, %v12999
  %vm13010 = vcmp.eq.f32.partialorder %v13009, 8.507059e+37
  %v13011 = vand.u32 %v12999, 2147483648
  %v13012 = vor.u32 1.1754944e-38, %v13011
  %v13013 = vsel %vm13010, %v13012, %v13008
  %v13014 = vmul.f32 %v12989, %v13013
  %v13015 = vmin.f32 %v13014, 1.0
  %v13016 = vmax.f32 %v13015, -1.0
  %v13017 = vmul.f32 %v10496, %v10496
  %v13018 = vmin.f32 16.0, %v13017
  %v13019 = vmul.f32 %v13018, 2.1237322e-06
  %v13020 = vadd.f32 %v13019, 0.00028619796
  %v13021 = vmul.f32 %v13018, %v13020
  %v13022 = vadd.f32 %v13021, 0.0036580483
  %v13023 = vmul.f32 %v13018, %v13022
  %v13024 = vadd.f32 %v13023, 0.05243302
  %v13025 = vmul.f32 %v13018, %v13024
  %v13026 = vadd.f32 %v13025, 0.18741608
  %v13027 = vmul.f32 %v13018, %v13026
  %v13028 = vadd.f32 %v13027, 1.1283791
  %v13029 = vmul.f32 %v10496, %v13028
  %v13030 = vmul.f32 %v13018, 3.8918573e-05
  %v13031 = vadd.f32 %v13030, 0.001143296
  %v13032 = vmul.f32 %v13018, %v13031
  %v13033 = vadd.f32 %v13032, 0.014752088
  %v13034 = vmul.f32 %v13018, %v13033
  %v13035 = vadd.f32 %v13034, 0.112945676
  %v13036 = vmul.f32 %v13018, %v13035
  %v13037 = vadd.f32 %v13036, 0.4994258
  %v13038 = vmul.f32 %v13018, %v13037
  %v13039 = vadd.f32 %v13038, 1.0
  %v13040 = vrcp.pop %v13039
  %v13041 = vmul.f32 %v13039, %v13040
  %v13042 = vsub.f32 1.0, %v13041
  %v13043 = vmul.f32 %v13040, %v13042
  %v13044 = vadd.f32 %v13040, %v13043
  %vm13045 = vweird.f32 %v13039
  %vm13046 = vweird.f32 %v13040
  %vm13047 = vmor %vm13045, %vm13046
  %v13048 = vsel %vm13047, %v13040, %v13044
  %v13049 = vand.u32 2147483647, %v13039
  %vm13050 = vcmp.eq.f32.partialorder %v13049, 8.507059e+37
  %v13051 = vand.u32 %v13039, 2147483648
  %v13052 = vor.u32 1.1754944e-38, %v13051
  %v13053 = vsel %vm13050, %v13052, %v13048
  %v13054 = vmul.f32 %v13029, %v13053
  %v13055 = vmin.f32 %v13054, 1.0
  %v13056 = vmax.f32 %v13055, -1.0
  %v13057 = vadd.f32 %v10536, 1.0
  %v13058 = vadd.f32 %v10576, 1.0
  %v13059 = vadd.f32 %v10616, 1.0
  %v13060 = vadd.f32 %v10656, 1.0
  %v13061 = vadd.f32 %v10696, 1.0
  %v13062 = vadd.f32 %v10736, 1.0
  %v13063 = vadd.f32 %v10776, 1.0
  %v13064 = vadd.f32 %v10816, 1.0
  %v13065 = vadd.f32 %v10856, 1.0
  %v13066 = vadd.f32 %v10896, 1.0
  %v13067 = vadd.f32 %v10936, 1.0
  %v13068 = vadd.f32 %v10976, 1.0
  %v13069 = vadd.f32 %v11016, 1.0
  %v13070 = vadd.f32 %v11056, 1.0
  %v13071 = vadd.f32 %v11096, 1.0
  %v13072 = vadd.f32 %v11136, 1.0
  %v13073 = vadd.f32 %v11176, 1.0
  %v13074 = vadd.f32 %v11216, 1.0
  %v13075 = vadd.f32 %v11256, 1.0
  %v13076 = vadd.f32 %v11296, 1.0
  %v13077 = vadd.f32 %v11336, 1.0
  %v13078 = vadd.f32 %v11376, 1.0
  %v13079 = vadd.f32 %v11416, 1.0
  %v13080 = vadd.f32 %v11456, 1.0
  %v13081 = vadd.f32 %v11496, 1.0
  %v13082 = vadd.f32 %v11536, 1.0
  %v13083 = vadd.f32 %v11576, 1.0
  %v13084 = vadd.f32 %v11616, 1.0
  %v13085 = vadd.f32 %v11656, 1.0
  %v13086 = vadd.f32 %v11696, 1.0
  %v13087 = vadd.f32 %v11736, 1.0
  %v13088 = vadd.f32 %v11776, 1.0
  %v13089 = vadd.f32 %v11816, 1.0
  %v13090 = vadd.f32 %v11856, 1.0
  %v13091 = vadd.f32 %v11896, 1.0
  %v13092 = vadd.f32 %v11936, 1.0
  %v13093 = vadd.f32 %v11976, 1.0
  %v13094 = vadd.f32 %v12016, 1.0
  %v13095 = vadd.f32 %v12056, 1.0
  %v13096 = vadd.f32 %v12096, 1.0
  %v13097 = vadd.f32 %v12136, 1.0
  %v13098 = vadd.f32 %v12176, 1.0
  %v13099 = vadd.f32 %v12216, 1.0
  %v13100 = vadd.f32 %v12256, 1.0
  %v13101 = vadd.f32 %v12296, 1.0
  %v13102 = vadd.f32 %v12336, 1.0
  %v13103 = vadd.f32 %v12376, 1.0
  %v13104 = vadd.f32 %v12416, 1.0
  %v13105 = vadd.f32 %v12456, 1.0
  %v13106 = vadd.f32 %v12496, 1.0
  %v13107 = vadd.f32 %v12536, 1.0
  %v13108 = vadd.f32 %v12576, 1.0
  %v13109 = vadd.f32 %v12616, 1.0
  %v13110 = vadd.f32 %v12656, 1.0
  %v13111 = vadd.f32 %v12696, 1.0
  %v13112 = vadd.f32 %v12736, 1.0
  %v13113 = vadd.f32 %v12776, 1.0
  %v13114 = vadd.f32 %v12816, 1.0
  %v13115 = vadd.f32 %v12856, 1.0
  %v13116 = vadd.f32 %v12896, 1.0
  %v13117 = vadd.f32 %v12936, 1.0
  %v13118 = vadd.f32 %v12976, 1.0
  %v13119 = vadd.f32 %v13016, 1.0
  %v13120 = vadd.f32 %v13056, 1.0
  %v13121 = vmul.f32 %v10369, %v13057
  %v13122 = vmul.f32 %v10370, %v13058
  %v13123 = vmul.f32 %v10371, %v13059
  %v13124 = vmul.f32 %v10372, %v13060
  %v13125 = vmul.f32 %v10373, %v13061
  %v13126 = vmul.f32 %v10374, %v13062
  %v13127 = vmul.f32 %v10375, %v13063
  %v13128 = vmul.f32 %v10376, %v13064
  %v13129 = vmul.f32 %v10377, %v13065
  %v13130 = vmul.f32 %v10378, %v13066
  %v13131 = vmul.f32 %v10379, %v13067
  %v13132 = vmul.f32 %v10380, %v13068
  %v13133 = vmul.f32 %v10381, %v13069
  %v13134 = vmul.f32 %v10382, %v13070
  %v13135 = vmul.f32 %v10383, %v13071
  %v13136 = vmul.f32 %v10384, %v13072
  %v13137 = vmul.f32 %v10385, %v13073
  %v13138 = vmul.f32 %v10386, %v13074
  %v13139 = vmul.f32 %v10387, %v13075
  %v13140 = vmul.f32 %v10388, %v13076
  %v13141 = vmul.f32 %v10389, %v13077
  %v13142 = vmul.f32 %v10390, %v13078
  %v13143 = vmul.f32 %v10391, %v13079
  %v13144 = vmul.f32 %v10392, %v13080
  %v13145 = vmul.f32 %v10393, %v13081
  %v13146 = vmul.f32 %v10394, %v13082
  %v13147 = vmul.f32 %v10395, %v13083
  %v13148 = vmul.f32 %v10396, %v13084
  %v13149 = vmul.f32 %v10397, %v13085
  %v13150 = vmul.f32 %v10398, %v13086
  %v13151 = vmul.f32 %v10399, %v13087
  %v13152 = vmul.f32 %v10400, %v13088
  %v13153 = vmul.f32 %v10401, %v13089
  %v13154 = vmul.f32 %v10402, %v13090
  %v13155 = vmul.f32 %v10403, %v13091
  %v13156 = vmul.f32 %v10404, %v13092
  %v13157 = vmul.f32 %v10405, %v13093
  %v13158 = vmul.f32 %v10406, %v13094
  %v13159 = vmul.f32 %v10407, %v13095
  %v13160 = vmul.f32 %v10408, %v13096
  %v13161 = vmul.f32 %v10409, %v13097
  %v13162 = vmul.f32 %v10410, %v13098
  %v13163 = vmul.f32 %v10411, %v13099
  %v13164 = vmul.f32 %v10412, %v13100
  %v13165 = vmul.f32 %v10413, %v13101
  %v13166 = vmul.f32 %v10414, %v13102
  %v13167 = vmul.f32 %v10415, %v13103
  %v13168 = vmul.f32 %v10416, %v13104
  %v13169 = vmul.f32 %v10417, %v13105
  %v13170 = vmul.f32 %v10418, %v13106
  %v13171 = vmul.f32 %v10419, %v13107
  %v13172 = vmul.f32 %v10420, %v13108
  %v13173 = vmul.f32 %v10421, %v13109
  %v13174 = vmul.f32 %v10422, %v13110
  %v13175 = vmul.f32 %v10423, %v13111
  %v13176 = vmul.f32 %v10424, %v13112
  %v13177 = vmul.f32 %v10425, %v13113
  %v13178 = vmul.f32 %v10426, %v13114
  %v13179 = vmul.f32 %v10427, %v13115
  %v13180 = vmul.f32 %v10428, %v13116
  %v13181 = vmul.f32 %v10429, %v13117
  %v13182 = vmul.f32 %v10430, %v13118
  %v13183 = vmul.f32 %v10431, %v13119
  %v13184 = vmul.f32 %v10432, %v13120
  %13185 = vst.msk [vmem:[%s7] sm:$0xff] %vm26, %v13121
  %13186 = vst.msk [vmem:[%s7 + $0x8] sm:$0xff] %vm26, %v13122
  %13187 = vst.msk [vmem:[%s7 + $0x10] sm:$0xff] %vm26, %v13123
  %13188 = vst.msk [vmem:[%s7 + $0x18] sm:$0xff] %vm26, %v13124
  %13189 = vst.msk [vmem:[%s7 + $0x20] sm:$0xff] %vm26, %v13125
  %13190 = vst.msk [vmem:[%s7 + $0x28] sm:$0xff] %vm26, %v13126
  %13191 = vst.msk [vmem:[%s7 + $0x30] sm:$0xff] %vm26, %v13127
  %13192 = vst.msk [vmem:[%s7 + $0x38] sm:$0xff] %vm26, %v13128
  %13193 = vst.msk [vmem:[%s7 + $0x40] sm:$0xff] %vm26, %v13129
  %13194 = vst.msk [vmem:[%s7 + $0x48] sm:$0xff] %vm26, %v13130
  %13195 = vst.msk [vmem:[%s7 + $0x50] sm:$0xff] %vm26, %v13131
  %13196 = vst.msk [vmem:[%s7 + $0x58] sm:$0xff] %vm26, %v13132
  %13197 = vst.msk [vmem:[%s7 + $0x60] sm:$0xff] %vm26, %v13133
  %13198 = vst.msk [vmem:[%s7 + $0x68] sm:$0xff] %vm26, %v13134
  %13199 = vst.msk [vmem:[%s7 + $0x70] sm:$0xff] %vm26, %v13135
  %13200 = vst.msk [vmem:[%s7 + $0x78] sm:$0xff] %vm26, %v13136
  %13201 = vst.msk [vmem:[%s7 + $0x80] sm:$0xff] %vm26, %v13137
  %13202 = vst.msk [vmem:[%s7 + $0x88] sm:$0xff] %vm26, %v13138
  %13203 = vst.msk [vmem:[%s7 + $0x90] sm:$0xff] %vm26, %v13139
  %13204 = vst.msk [vmem:[%s7 + $0x98] sm:$0xff] %vm26, %v13140
  %13205 = vst.msk [vmem:[%s7 + $0xa0] sm:$0xff] %vm26, %v13141
  %13206 = vst.msk [vmem:[%s7 + $0xa8] sm:$0xff] %vm26, %v13142
  %13207 = vst.msk [vmem:[%s7 + $0xb0] sm:$0xff] %vm26, %v13143
  %13208 = vst.msk [vmem:[%s7 + $0xb8] sm:$0xff] %vm26, %v13144
  %13209 = vst.msk [vmem:[%s7 + $0xc0] sm:$0xff] %vm26, %v13145
  %13210 = vst.msk [vmem:[%s7 + $0xc8] sm:$0xff] %vm26, %v13146
  %13211 = vst.msk [vmem:[%s7 + $0xd0] sm:$0xff] %vm26, %v13147
  %13212 = vst.msk [vmem:[%s7 + $0xd8] sm:$0xff] %vm26, %v13148
  %13213 = vst.msk [vmem:[%s7 + $0xe0] sm:$0xff] %vm26, %v13149
  %13214 = vst.msk [vmem:[%s7 + $0xe8] sm:$0xff] %vm26, %v13150
  %13215 = vst.msk [vmem:[%s7 + $0xf0] sm:$0xff] %vm26, %v13151
  %13216 = vst.msk [vmem:[%s7 + $0xf8] sm:$0xff] %vm26, %v13152
  %13217 = vst.msk [vmem:[%s7 + $0x100] sm:$0xff] %vm26, %v13153
  %13218 = vst.msk [vmem:[%s7 + $0x108] sm:$0xff] %vm26, %v13154
  %13219 = vst.msk [vmem:[%s7 + $0x110] sm:$0xff] %vm26, %v13155
  %13220 = vst.msk [vmem:[%s7 + $0x118] sm:$0xff] %vm26, %v13156
  %13221 = vst.msk [vmem:[%s7 + $0x120] sm:$0xff] %vm26, %v13157
  %13222 = vst.msk [vmem:[%s7 + $0x128] sm:$0xff] %vm26, %v13158
  %13223 = vst.msk [vmem:[%s7 + $0x130] sm:$0xff] %vm26, %v13159
  %13224 = vst.msk [vmem:[%s7 + $0x138] sm:$0xff] %vm26, %v13160
  %13225 = vst.msk [vmem:[%s7 + $0x140] sm:$0xff] %vm26, %v13161
  %13226 = vst.msk [vmem:[%s7 + $0x148] sm:$0xff] %vm26, %v13162
  %13227 = vst.msk [vmem:[%s7 + $0x150] sm:$0xff] %vm26, %v13163
  %13228 = vst.msk [vmem:[%s7 + $0x158] sm:$0xff] %vm26, %v13164
  %13229 = vst.msk [vmem:[%s7 + $0x160] sm:$0xff] %vm26, %v13165
  %13230 = vst.msk [vmem:[%s7 + $0x168] sm:$0xff] %vm26, %v13166
  %13231 = vst.msk [vmem:[%s7 + $0x170] sm:$0xff] %vm26, %v13167
  %13232 = vst.msk [vmem:[%s7 + $0x178] sm:$0xff] %vm26, %v13168
  %13233 = vst.msk [vmem:[%s7 + $0x180] sm:$0xff] %vm26, %v13169
  %13234 = vst.msk [vmem:[%s7 + $0x188] sm:$0xff] %vm26, %v13170
  %13235 = vst.msk [vmem:[%s7 + $0x190] sm:$0xff] %vm26, %v13171
  %13236 = vst.msk [vmem:[%s7 + $0x198] sm:$0xff] %vm26, %v13172
  %13237 = vst.msk [vmem:[%s7 + $0x1a0] sm:$0xff] %vm26, %v13173
  %13238 = vst.msk [vmem:[%s7 + $0x1a8] sm:$0xff] %vm26, %v13174
  %13239 = vst.msk [vmem:[%s7 + $0x1b0] sm:$0xff] %vm26, %v13175
  %13240 = vst.msk [vmem:[%s7 + $0x1b8] sm:$0xff] %vm26, %v13176
  %13241 = vst.msk [vmem:[%s7 + $0x1c0] sm:$0xff] %vm26, %v13177
  %13242 = vst.msk [vmem:[%s7 + $0x1c8] sm:$0xff] %vm26, %v13178
  %13243 = vst.msk [vmem:[%s7 + $0x1d0] sm:$0xff] %vm26, %v13179
  %13244 = vst.msk [vmem:[%s7 + $0x1d8] sm:$0xff] %vm26, %v13180
  %13245 = vst.msk [vmem:[%s7 + $0x1e0] sm:$0xff] %vm26, %v13181
  %13246 = vst.msk [vmem:[%s7 + $0x1e8] sm:$0xff] %vm26, %v13182
  %13247 = vst.msk [vmem:[%s7 + $0x1f0] sm:$0xff] %vm26, %v13183
  %13248 = vst.msk [vmem:[%s7 + $0x1f8] sm:$0xff] %vm26, %v13184
  // Predicated region
  $region30: #{tpu_custom_call.1} parent=0 // pred_check
    _
  $region31: #{tpu_custom_call.1} parent=0 // pred_check_branch
    %13250 = sbr.rel (0) target = $region33
  $region32: #{tpu_custom_call.1} parent=0 // pred_region
    _
  $region33: #{tpu_custom_call.1} parent=0 // pred_fallthru
    _
  // Predicated region
  $region34: #{tpu_custom_call.1} parent=0 // pred_check
    _
  $region35: #{tpu_custom_call.1} parent=0 // pred_check_branch
    %13252 = sbr.rel (0) target = $region37
  $region36: #{tpu_custom_call.1} parent=0 // pred_region
    _
  $region37: #{tpu_custom_call.1} parent=0 // pred_fallthru
    _

</llo_original>
